<compile_context>
chip_gen: v7x
topology: tpu7x:2x2x1
jax: 0.10.0
libtpu: 0.0.40
codegen_flags: <defaults>
</compile_context>

<pallas_src>
import functools

import jax
import jax.numpy as jnp
from jax import lax
from jax.experimental import pallas as pl
from jax.experimental.pallas import tpu as pltpu


# ------------------------------ fused kernel --------------------------------

def net5_fused_kernel(x_ref, w1_ref, t1_ref, w2_ref, t2_ref,
                      wl1_ref, bl1_ref, wl2_ref, bl2_ref, wl3_ref, bl3_ref,
                      o_ref, pad_ref, *, pool1):
    """One image end-to-end.  All activations stay in VMEM.

    x_ref  : (1, H+2, W+2, 3)   zero-padded NHWC input tile
    w1_ref : (3, 3, 3, n1)      conv1 weights (BN scale folded, bf16)
    t1_ref : (1, n1)            conv1 folded bias/shift (f32)
    w2_ref : (3, 3, n1, n2)     conv2 weights (BN scale folded, bf16)
    t2_ref : (1, n2)
    wl*/bl*: MLP weights/biases (f32)
    o_ref  : (1, 1, n_class)
    pad_ref: ((h2+2)*(w2+2), n1) VMEM scratch: zero-padded conv2 input,
             flattened as (spatial, channel).
    """
    _, hpad, wpad_in, cin = x_ref.shape
    h1, w1s = hpad - 2, wpad_in - 2
    n1 = w1_ref.shape[3]
    n2 = w2_ref.shape[3]
    h2, w2s = h1 // pool1, w1s // pool1
    wp2 = w2s + 2                                 # padded width of conv2 input
    nrows = (h2 - 1) * wp2 + w2s                  # rows of shifted-accum slab

    # ---- conv1 (3x3 SAME) + folded BN/bias + ReLU: 9 shifted bf16 matmuls ----
    acc1 = jnp.zeros((h1 * w1s, n1), jnp.float32)
    for dy in range(3):
        for dx in range(3):
            xs = x_ref[0, dy:dy + h1, dx:dx + w1s, :]
            xs = xs.reshape(h1 * w1s, cin).astype(jnp.bfloat16)
            acc1 = acc1 + jnp.dot(xs, w1_ref[dy, dx],
                                  preferred_element_type=jnp.float32)
    y1 = jnp.maximum(acc1 + t1_ref[...], 0.0)                 # (h1*w1s, n1)

    # ---- maxpool pool1 x pool1, vectorized (tile-aligned reshape + reduce) ----
    a = jnp.max(y1.reshape(h2, pool1, w1s, n1), axis=1)       # (h2, w1s, n1)
    z1 = jnp.max(a.reshape(h2 * w2s, pool1, n1), axis=1)      # (h2*w2s, n1)

    # ---- zero-padded conv2 input, flattened (spatial, channel), in VMEM ----
    pad_ref[...] = jnp.zeros_like(pad_ref)
    for hb in range(h2):
        r0 = (hb + 1) * wp2 + 1
        pad_ref[r0:r0 + w2s, :] = z1[hb * w2s:(hb + 1) * w2s, :]

    # ---- conv2 (3x3 SAME) + folded BN/bias + ReLU: 9 shifted bf16 matmuls ----
    acc2 = jnp.zeros((nrows, n2), jnp.float32)
    for dy in range(3):
        for dx in range(3):
            off = dy * wp2 + dx
            xs = pad_ref[off:off + nrows, :].astype(jnp.bfloat16)
            acc2 = acc2 + jnp.dot(xs, w2_ref[dy, dx],
                                  preferred_element_type=jnp.float32)
    y2 = jnp.maximum(acc2 + t2_ref[...], 0.0)                 # (nrows, n2)

    # ---- maxpool pool2 x pool2 == global max (wrapper asserts h2==w2s==pool2).
    # Row s = h*wp2 + w is a real conv2 output only when (s mod wp2) < w2s; the
    # other rows are wrap-around garbage.  ReLU output is >= 0, so masking the
    # garbage rows to 0 cannot change the max.
    row = lax.broadcasted_iota(jnp.int32, (nrows, 1), 0)
    valid = row < w2s
    for hb in range(1, h2):
        lo = hb * wp2
        valid = valid | ((row >= lo) & (row < lo + w2s))
    z = jnp.max(jnp.where(valid, y2, 0.0), axis=0, keepdims=True)   # (1, n2)

    # ---- classifier: Linear -> (Dropout=id) -> ReLU -> Linear -> (Dropout=id)
    #      -> ReLU -> Linear   (f32 dots; tiny, accuracy over MXU rate)
    h = jnp.maximum(
        jnp.dot(z, wl1_ref[...], preferred_element_type=jnp.float32)
        + bl1_ref[...], 0.0)
    h = jnp.maximum(
        jnp.dot(h, wl2_ref[...], preferred_element_type=jnp.float32)
        + bl2_ref[...], 0.0)
    y = jnp.dot(h, wl3_ref[...], preferred_element_type=jnp.float32) + bl3_ref[...]
    o_ref[0] = y.astype(o_ref.dtype)


# ------------------------------- wrapper -------------------------------------

def net5_forward(x_nchw, p, *, pool1=8, pool2=4):
    n, cin, h, w = x_nchw.shape
    n1 = p["w_c1"].shape[3]
    n2 = p["w_c2"].shape[3]
    n3 = p["w_l1"].shape[1]
    n_class = p["w_l3"].shape[1]
    h2, w2s = h // pool1, w // pool1
    # TODO(synk): fused kernel assumes the 2nd pool covers the whole conv2 map
    # (image_size == 32), so flatten is 1x1 spatial; general image_size would
    # need windowed pool2 + NCHW-order flatten handling.
    assert h2 == pool2 and w2s == pool2, "fused kernel requires image_size == 32"
    assert p["w_l1"].shape[0] == n2

    # layout glue: NCHW -> NHWC, and SAME padding for conv1 (cheap, one-time)
    x = jnp.transpose(x_nchw, (0, 2, 3, 1))
    xp = jnp.pad(x, ((0, 0), (1, 1), (1, 1), (0, 0)))

    # fold conv bias + eval-mode BatchNorm into the weights (wrapper-side, free)
    w1f = (p["w_c1"] * p["s_bn1"]).astype(jnp.bfloat16)
    t1f = (p["b_c1"] * p["s_bn1"] + p["t_bn1"]).reshape(1, n1).astype(jnp.float32)
    w2f = (p["w_c2"] * p["s_bn2"]).astype(jnp.bfloat16)
    t2f = (p["b_c2"] * p["s_bn2"] + p["t_bn2"]).reshape(1, n2).astype(jnp.float32)

    hp_, wp_ = h + 2, w + 2
    kern = functools.partial(net5_fused_kernel, pool1=pool1)

    out = pl.pallas_call(
        kern,
        out_shape=jax.ShapeDtypeStruct((n, 1, n_class), jnp.float32),
        grid=(n,),
        in_specs=[
            pl.BlockSpec((1, hp_, wp_, cin), lambda i: (i, 0, 0, 0)),
            pl.BlockSpec((3, 3, cin, n1), lambda i: (0, 0, 0, 0)),
            pl.BlockSpec((1, n1), lambda i: (0, 0)),
            pl.BlockSpec((3, 3, n1, n2), lambda i: (0, 0, 0, 0)),
            pl.BlockSpec((1, n2), lambda i: (0, 0)),
            pl.BlockSpec((n2, n3), lambda i: (0, 0)),
            pl.BlockSpec((1, n3), lambda i: (0, 0)),
            pl.BlockSpec((n3, n3), lambda i: (0, 0)),
            pl.BlockSpec((1, n3), lambda i: (0, 0)),
            pl.BlockSpec((n3, n_class), lambda i: (0, 0)),
            pl.BlockSpec((1, n_class), lambda i: (0, 0)),
        ],
        out_specs=pl.BlockSpec((1, 1, n_class), lambda i: (i, 0, 0)),
        scratch_shapes=[pltpu.VMEM(((h2 + 2) * (w2s + 2), n1), jnp.float32)],
        compiler_params=pltpu.CompilerParams(
            dimension_semantics=("parallel",),          # v7x: one image per TC
            vmem_limit_bytes=32 * 1024 * 1024),
    )(xp, w1f, t1f, w2f, t2f,
      p["w_l1"], p["b_l1"].reshape(1, n3),
      p["w_l2"], p["b_l2"].reshape(1, n3),
      p["w_l3"], p["b_l3"].reshape(1, n_class))
    return out.reshape(n, n_class)


# --------------------------- pure-JAX reference ------------------------------

def reference_forward(x_nchw, p):
    hp = lax.Precision.HIGHEST
    x = jnp.transpose(x_nchw, (0, 2, 3, 1))

    def conv(x, w, b, s, t):
        y = lax.conv_general_dilated(x, w, (1, 1), "SAME",
                                     dimension_numbers=("NHWC", "HWIO", "NHWC"),
                                     precision=hp)
        return jnp.maximum((y + b) * s + t, 0.0)

    def pool(x, k):
        return lax.reduce_window(x, -jnp.inf, lax.max,
                                 (1, k, k, 1), (1, k, k, 1), "VALID")

    z = pool(conv(x, p["w_c1"], p["b_c1"], p["s_bn1"], p["t_bn1"]), 8)
    z = pool(conv(z, p["w_c2"], p["b_c2"], p["s_bn2"], p["t_bn2"]), 4)
    z = jnp.transpose(z, (0, 3, 1, 2)).reshape(z.shape[0], -1)
    h = jnp.maximum(jnp.dot(z, p["w_l1"], precision=hp) + p["b_l1"], 0.0)
    h = jnp.maximum(jnp.dot(h, p["w_l2"], precision=hp) + p["b_l2"], 0.0)
    return jnp.dot(h, p["w_l3"], precision=hp) + p["b_l3"]


# --------------------------------- main ---------------------------------------

if __name__ == "__main__":
    # Small, structure-faithful config: image_size=32 => flatten dim = n2.
    n1, n2, n3, n_class, image_size, B = 16, 32, 64, 10, 32, 2
    eps = 1e-5

    keys = jax.random.split(jax.random.PRNGKey(0), 20)

    def init_w(k, shape, fan_in):
        return jax.random.normal(k, shape, jnp.float32) * (2.0 / fan_in) ** 0.5

    f_in = n2 * (image_size // 32) * (image_size // 32)
    params = dict(
        w_c1=init_w(keys[0], (3, 3, 3, n1), 27),
        b_c1=0.01 * jax.random.normal(keys[1], (n1,), jnp.float32),
        w_c2=init_w(keys[2], (3, 3, n1, n2), 9 * n1),
        b_c2=0.01 * jax.random.normal(keys[3], (n2,), jnp.float32),
        w_l1=init_w(keys[4], (f_in, n3), f_in),
        b_l1=0.01 * jax.random.normal(keys[5], (n3,), jnp.float32),
        w_l2=init_w(keys[6], (n3, n3), n3),
        b_l2=0.01 * jax.random.normal(keys[7], (n3,), jnp.float32),
        w_l3=init_w(keys[8], (n3, n_class), n3),
        b_l3=0.01 * jax.random.normal(keys[9], (n_class,), jnp.float32),
    )
    # Eval-mode BatchNorm folded into per-channel scale/shift.
    for idx, (name, c) in enumerate([("bn1", n1), ("bn2", n2)]):
        gamma = 1.0 + 0.1 * jax.random.normal(keys[10 + 2 * idx], (c,), jnp.float32)
        beta = 0.1 * jax.random.normal(keys[11 + 2 * idx], (c,), jnp.float32)
        mean = 0.1 * jax.random.normal(keys[14 + idx], (c,), jnp.float32)
        var = jnp.abs(1.0 + 0.1 * jax.random.normal(keys[16 + idx], (c,), jnp.float32))
        scale = gamma / jnp.sqrt(var + eps)
        params[f"s_{name}"] = scale
        params[f"t_{name}"] = beta - mean * scale

    x = jax.random.normal(keys[18], (B, 3, image_size, image_size), jnp.float32)

    y = jax.block_until_ready(net5_forward(x, params))
    y_ref = reference_forward(x, params)

    assert y.shape == (B, n_class), y.shape
    # Kernel uses bf16 MXU inputs for the convs (f32 accumulate); compare
    # against a HIGHEST-precision reference with a scale-normalized bound.
    scale = float(jnp.maximum(1.0, jnp.max(jnp.abs(y_ref))))
    max_err = float(jnp.max(jnp.abs(y - y_ref)))
    assert max_err <= 4e-2 * scale, (max_err, scale)
    print("KERNEL_OK")
</pallas_src>

<mosaic_0001>
module attributes {stable_mosaic.version = 11 : i64} {
  func.func @net5_fused_kernel(%arg0: i32, %arg1: memref<1x34x34x3xf32, #tpu.memory_space<vmem>>, %arg2: memref<3x3x3x16xbf16, #tpu.memory_space<vmem>>, %arg3: memref<1x16xf32, #tpu.memory_space<vmem>>, %arg4: memref<3x3x16x32xbf16, #tpu.memory_space<vmem>>, %arg5: memref<1x32xf32, #tpu.memory_space<vmem>>, %arg6: memref<32x64xf32, #tpu.memory_space<vmem>>, %arg7: memref<1x64xf32, #tpu.memory_space<vmem>>, %arg8: memref<64x64xf32, #tpu.memory_space<vmem>>, %arg9: memref<1x64xf32, #tpu.memory_space<vmem>>, %arg10: memref<64x10xf32, #tpu.memory_space<vmem>>, %arg11: memref<1x10xf32, #tpu.memory_space<vmem>>, %arg12: memref<1x1x10xf32, #tpu.memory_space<vmem>>, %arg13: memref<36x16xf32, #tpu.memory_space<vmem>>) attributes {dimension_semantics = [#tpu.dimension_semantics<parallel>], iteration_bounds = array<i64: 2>, scalar_prefetch = 0 : i64, scratch_operands = 1 : i64, tpu.core_type = #tpu.core_type<tc>, window_params = [{transform_indices = @transform_0, window_bounds = array<i64: 1, 34, 34, 3>}, {pipeline_mode = #tpu.pipeline_mode<synchronous>, transform_indices = @transform_1, window_bounds = array<i64: 3, 3, 3, 16>}, {pipeline_mode = #tpu.pipeline_mode<synchronous>, transform_indices = @transform_2, window_bounds = array<i64: 1, 16>}, {pipeline_mode = #tpu.pipeline_mode<synchronous>, transform_indices = @transform_3, window_bounds = array<i64: 3, 3, 16, 32>}, {pipeline_mode = #tpu.pipeline_mode<synchronous>, transform_indices = @transform_4, window_bounds = array<i64: 1, 32>}, {pipeline_mode = #tpu.pipeline_mode<synchronous>, transform_indices = @transform_5, window_bounds = array<i64: 32, 64>}, {pipeline_mode = #tpu.pipeline_mode<synchronous>, transform_indices = @transform_6, window_bounds = array<i64: 1, 64>}, {pipeline_mode = #tpu.pipeline_mode<synchronous>, transform_indices = @transform_7, window_bounds = array<i64: 64, 64>}, {pipeline_mode = #tpu.pipeline_mode<synchronous>, transform_indices = @transform_8, window_bounds = array<i64: 1, 64>}, {pipeline_mode = #tpu.pipeline_mode<synchronous>, transform_indices = @transform_9, window_bounds = array<i64: 64, 10>}, {pipeline_mode = #tpu.pipeline_mode<synchronous>, transform_indices = @transform_10, window_bounds = array<i64: 1, 10>}, {transform_indices = @transform_11, window_bounds = array<i64: 1, 1, 10>}]} {
    %cst = arith.constant 0.000000e+00 : f32
    %0 = vector.broadcast %cst : f32 to vector<1024x16xf32>
    %c0 = arith.constant 0 : index
    %c0_0 = arith.constant 0 : index
    %c0_1 = arith.constant 0 : index
    %c0_2 = arith.constant 0 : index
    %1 = vector.load %arg1[%c0, %c0_0, %c0_1, %c0_2] : memref<1x34x34x3xf32, #tpu.memory_space<vmem>>, vector<1x32x32x3xf32>
    %2 = vector.shape_cast %1 : vector<1x32x32x3xf32> to vector<32x32x3xf32>
    %3 = vector.shape_cast %2 : vector<32x32x3xf32> to vector<1024x3xf32>
    %4 = arith.truncf %3 : vector<1024x3xf32> to vector<1024x3xbf16>
    %c0_3 = arith.constant 0 : index
    %c0_4 = arith.constant 0 : index
    %c0_5 = arith.constant 0 : index
    %c0_6 = arith.constant 0 : index
    %5 = vector.load %arg2[%c0_3, %c0_4, %c0_5, %c0_6] : memref<3x3x3x16xbf16, #tpu.memory_space<vmem>>, vector<1x1x3x16xbf16>
    %6 = vector.shape_cast %5 : vector<1x1x3x16xbf16> to vector<3x16xbf16>
    %cst_7 = arith.constant dense<0.000000e+00> : vector<1024x16xf32>
    %7 = tpu.matmul %4, %6, %cst_7 {dimension_numbers = #tpu.dot_dimension_numbers<[1], [0], [0], [1], [0, 0, 1, 1], [], []>} : vector<1024x3xbf16>, vector<3x16xbf16>, vector<1024x16xf32> -> vector<1024x16xf32>
    %8 = arith.addf %0, %7 : vector<1024x16xf32>
    %c0_8 = arith.constant 0 : index
    %c0_9 = arith.constant 0 : index
    %c1 = arith.constant 1 : index
    %c0_10 = arith.constant 0 : index
    %9 = vector.load %arg1[%c0_8, %c0_9, %c1, %c0_10] : memref<1x34x34x3xf32, #tpu.memory_space<vmem>>, vector<1x32x32x3xf32>
    %10 = vector.shape_cast %9 : vector<1x32x32x3xf32> to vector<32x32x3xf32>
    %11 = vector.shape_cast %10 : vector<32x32x3xf32> to vector<1024x3xf32>
    %12 = arith.truncf %11 : vector<1024x3xf32> to vector<1024x3xbf16>
    %c0_11 = arith.constant 0 : index
    %c1_12 = arith.constant 1 : index
    %c0_13 = arith.constant 0 : index
    %c0_14 = arith.constant 0 : index
    %13 = vector.load %arg2[%c0_11, %c1_12, %c0_13, %c0_14] : memref<3x3x3x16xbf16, #tpu.memory_space<vmem>>, vector<1x1x3x16xbf16>
    %14 = vector.shape_cast %13 : vector<1x1x3x16xbf16> to vector<3x16xbf16>
    %cst_15 = arith.constant dense<0.000000e+00> : vector<1024x16xf32>
    %15 = tpu.matmul %12, %14, %cst_15 {dimension_numbers = #tpu.dot_dimension_numbers<[1], [0], [0], [1], [0, 0, 1, 1], [], []>} : vector<1024x3xbf16>, vector<3x16xbf16>, vector<1024x16xf32> -> vector<1024x16xf32>
    %16 = arith.addf %8, %15 : vector<1024x16xf32>
    %c0_16 = arith.constant 0 : index
    %c0_17 = arith.constant 0 : index
    %c2 = arith.constant 2 : index
    %c0_18 = arith.constant 0 : index
    %17 = vector.load %arg1[%c0_16, %c0_17, %c2, %c0_18] : memref<1x34x34x3xf32, #tpu.memory_space<vmem>>, vector<1x32x32x3xf32>
    %18 = vector.shape_cast %17 : vector<1x32x32x3xf32> to vector<32x32x3xf32>
    %19 = vector.shape_cast %18 : vector<32x32x3xf32> to vector<1024x3xf32>
    %20 = arith.truncf %19 : vector<1024x3xf32> to vector<1024x3xbf16>
    %c0_19 = arith.constant 0 : index
    %c2_20 = arith.constant 2 : index
    %c0_21 = arith.constant 0 : index
    %c0_22 = arith.constant 0 : index
    %21 = vector.load %arg2[%c0_19, %c2_20, %c0_21, %c0_22] : memref<3x3x3x16xbf16, #tpu.memory_space<vmem>>, vector<1x1x3x16xbf16>
    %22 = vector.shape_cast %21 : vector<1x1x3x16xbf16> to vector<3x16xbf16>
    %cst_23 = arith.constant dense<0.000000e+00> : vector<1024x16xf32>
    %23 = tpu.matmul %20, %22, %cst_23 {dimension_numbers = #tpu.dot_dimension_numbers<[1], [0], [0], [1], [0, 0, 1, 1], [], []>} : vector<1024x3xbf16>, vector<3x16xbf16>, vector<1024x16xf32> -> vector<1024x16xf32>
    %24 = arith.addf %16, %23 : vector<1024x16xf32>
    %c0_24 = arith.constant 0 : index
    %c1_25 = arith.constant 1 : index
    %c0_26 = arith.constant 0 : index
    %c0_27 = arith.constant 0 : index
    %25 = vector.load %arg1[%c0_24, %c1_25, %c0_26, %c0_27] : memref<1x34x34x3xf32, #tpu.memory_space<vmem>>, vector<1x32x32x3xf32>
    %26 = vector.shape_cast %25 : vector<1x32x32x3xf32> to vector<32x32x3xf32>
    %27 = vector.shape_cast %26 : vector<32x32x3xf32> to vector<1024x3xf32>
    %28 = arith.truncf %27 : vector<1024x3xf32> to vector<1024x3xbf16>
    %c1_28 = arith.constant 1 : index
    %c0_29 = arith.constant 0 : index
    %c0_30 = arith.constant 0 : index
    %c0_31 = arith.constant 0 : index
    %29 = vector.load %arg2[%c1_28, %c0_29, %c0_30, %c0_31] : memref<3x3x3x16xbf16, #tpu.memory_space<vmem>>, vector<1x1x3x16xbf16>
    %30 = vector.shape_cast %29 : vector<1x1x3x16xbf16> to vector<3x16xbf16>
    %cst_32 = arith.constant dense<0.000000e+00> : vector<1024x16xf32>
    %31 = tpu.matmul %28, %30, %cst_32 {dimension_numbers = #tpu.dot_dimension_numbers<[1], [0], [0], [1], [0, 0, 1, 1], [], []>} : vector<1024x3xbf16>, vector<3x16xbf16>, vector<1024x16xf32> -> vector<1024x16xf32>
    %32 = arith.addf %24, %31 : vector<1024x16xf32>
    %c0_33 = arith.constant 0 : index
    %c1_34 = arith.constant 1 : index
    %c1_35 = arith.constant 1 : index
    %c0_36 = arith.constant 0 : index
    %33 = vector.load %arg1[%c0_33, %c1_34, %c1_35, %c0_36] : memref<1x34x34x3xf32, #tpu.memory_space<vmem>>, vector<1x32x32x3xf32>
    %34 = vector.shape_cast %33 : vector<1x32x32x3xf32> to vector<32x32x3xf32>
    %35 = vector.shape_cast %34 : vector<32x32x3xf32> to vector<1024x3xf32>
    %36 = arith.truncf %35 : vector<1024x3xf32> to vector<1024x3xbf16>
    %c1_37 = arith.constant 1 : index
    %c1_38 = arith.constant 1 : index
    %c0_39 = arith.constant 0 : index
    %c0_40 = arith.constant 0 : index
    %37 = vector.load %arg2[%c1_37, %c1_38, %c0_39, %c0_40] : memref<3x3x3x16xbf16, #tpu.memory_space<vmem>>, vector<1x1x3x16xbf16>
    %38 = vector.shape_cast %37 : vector<1x1x3x16xbf16> to vector<3x16xbf16>
    %cst_41 = arith.constant dense<0.000000e+00> : vector<1024x16xf32>
    %39 = tpu.matmul %36, %38, %cst_41 {dimension_numbers = #tpu.dot_dimension_numbers<[1], [0], [0], [1], [0, 0, 1, 1], [], []>} : vector<1024x3xbf16>, vector<3x16xbf16>, vector<1024x16xf32> -> vector<1024x16xf32>
    %40 = arith.addf %32, %39 : vector<1024x16xf32>
    %c0_42 = arith.constant 0 : index
    %c1_43 = arith.constant 1 : index
    %c2_44 = arith.constant 2 : index
    %c0_45 = arith.constant 0 : index
    %41 = vector.load %arg1[%c0_42, %c1_43, %c2_44, %c0_45] : memref<1x34x34x3xf32, #tpu.memory_space<vmem>>, vector<1x32x32x3xf32>
    %42 = vector.shape_cast %41 : vector<1x32x32x3xf32> to vector<32x32x3xf32>
    %43 = vector.shape_cast %42 : vector<32x32x3xf32> to vector<1024x3xf32>
    %44 = arith.truncf %43 : vector<1024x3xf32> to vector<1024x3xbf16>
    %c1_46 = arith.constant 1 : index
    %c2_47 = arith.constant 2 : index
    %c0_48 = arith.constant 0 : index
    %c0_49 = arith.constant 0 : index
    %45 = vector.load %arg2[%c1_46, %c2_47, %c0_48, %c0_49] : memref<3x3x3x16xbf16, #tpu.memory_space<vmem>>, vector<1x1x3x16xbf16>
    %46 = vector.shape_cast %45 : vector<1x1x3x16xbf16> to vector<3x16xbf16>
    %cst_50 = arith.constant dense<0.000000e+00> : vector<1024x16xf32>
    %47 = tpu.matmul %44, %46, %cst_50 {dimension_numbers = #tpu.dot_dimension_numbers<[1], [0], [0], [1], [0, 0, 1, 1], [], []>} : vector<1024x3xbf16>, vector<3x16xbf16>, vector<1024x16xf32> -> vector<1024x16xf32>
    %48 = arith.addf %40, %47 : vector<1024x16xf32>
    %c0_51 = arith.constant 0 : index
    %c2_52 = arith.constant 2 : index
    %c0_53 = arith.constant 0 : index
    %c0_54 = arith.constant 0 : index
    %49 = vector.load %arg1[%c0_51, %c2_52, %c0_53, %c0_54] : memref<1x34x34x3xf32, #tpu.memory_space<vmem>>, vector<1x32x32x3xf32>
    %50 = vector.shape_cast %49 : vector<1x32x32x3xf32> to vector<32x32x3xf32>
    %51 = vector.shape_cast %50 : vector<32x32x3xf32> to vector<1024x3xf32>
    %52 = arith.truncf %51 : vector<1024x3xf32> to vector<1024x3xbf16>
    %c2_55 = arith.constant 2 : index
    %c0_56 = arith.constant 0 : index
    %c0_57 = arith.constant 0 : index
    %c0_58 = arith.constant 0 : index
    %53 = vector.load %arg2[%c2_55, %c0_56, %c0_57, %c0_58] : memref<3x3x3x16xbf16, #tpu.memory_space<vmem>>, vector<1x1x3x16xbf16>
    %54 = vector.shape_cast %53 : vector<1x1x3x16xbf16> to vector<3x16xbf16>
    %cst_59 = arith.constant dense<0.000000e+00> : vector<1024x16xf32>
    %55 = tpu.matmul %52, %54, %cst_59 {dimension_numbers = #tpu.dot_dimension_numbers<[1], [0], [0], [1], [0, 0, 1, 1], [], []>} : vector<1024x3xbf16>, vector<3x16xbf16>, vector<1024x16xf32> -> vector<1024x16xf32>
    %56 = arith.addf %48, %55 : vector<1024x16xf32>
    %c0_60 = arith.constant 0 : index
    %c2_61 = arith.constant 2 : index
    %c1_62 = arith.constant 1 : index
    %c0_63 = arith.constant 0 : index
    %57 = vector.load %arg1[%c0_60, %c2_61, %c1_62, %c0_63] : memref<1x34x34x3xf32, #tpu.memory_space<vmem>>, vector<1x32x32x3xf32>
    %58 = vector.shape_cast %57 : vector<1x32x32x3xf32> to vector<32x32x3xf32>
    %59 = vector.shape_cast %58 : vector<32x32x3xf32> to vector<1024x3xf32>
    %60 = arith.truncf %59 : vector<1024x3xf32> to vector<1024x3xbf16>
    %c2_64 = arith.constant 2 : index
    %c1_65 = arith.constant 1 : index
    %c0_66 = arith.constant 0 : index
    %c0_67 = arith.constant 0 : index
    %61 = vector.load %arg2[%c2_64, %c1_65, %c0_66, %c0_67] : memref<3x3x3x16xbf16, #tpu.memory_space<vmem>>, vector<1x1x3x16xbf16>
    %62 = vector.shape_cast %61 : vector<1x1x3x16xbf16> to vector<3x16xbf16>
    %cst_68 = arith.constant dense<0.000000e+00> : vector<1024x16xf32>
    %63 = tpu.matmul %60, %62, %cst_68 {dimension_numbers = #tpu.dot_dimension_numbers<[1], [0], [0], [1], [0, 0, 1, 1], [], []>} : vector<1024x3xbf16>, vector<3x16xbf16>, vector<1024x16xf32> -> vector<1024x16xf32>
    %64 = arith.addf %56, %63 : vector<1024x16xf32>
    %c0_69 = arith.constant 0 : index
    %c2_70 = arith.constant 2 : index
    %c2_71 = arith.constant 2 : index
    %c0_72 = arith.constant 0 : index
    %65 = vector.load %arg1[%c0_69, %c2_70, %c2_71, %c0_72] : memref<1x34x34x3xf32, #tpu.memory_space<vmem>>, vector<1x32x32x3xf32>
    %66 = vector.shape_cast %65 : vector<1x32x32x3xf32> to vector<32x32x3xf32>
    %67 = vector.shape_cast %66 : vector<32x32x3xf32> to vector<1024x3xf32>
    %68 = arith.truncf %67 : vector<1024x3xf32> to vector<1024x3xbf16>
    %c2_73 = arith.constant 2 : index
    %c2_74 = arith.constant 2 : index
    %c0_75 = arith.constant 0 : index
    %c0_76 = arith.constant 0 : index
    %69 = vector.load %arg2[%c2_73, %c2_74, %c0_75, %c0_76] : memref<3x3x3x16xbf16, #tpu.memory_space<vmem>>, vector<1x1x3x16xbf16>
    %70 = vector.shape_cast %69 : vector<1x1x3x16xbf16> to vector<3x16xbf16>
    %cst_77 = arith.constant dense<0.000000e+00> : vector<1024x16xf32>
    %71 = tpu.matmul %68, %70, %cst_77 {dimension_numbers = #tpu.dot_dimension_numbers<[1], [0], [0], [1], [0, 0, 1, 1], [], []>} : vector<1024x3xbf16>, vector<3x16xbf16>, vector<1024x16xf32> -> vector<1024x16xf32>
    %72 = arith.addf %64, %71 : vector<1024x16xf32>
    %c0_78 = arith.constant 0 : index
    %c0_79 = arith.constant 0 : index
    %73 = vector.load %arg3[%c0_78, %c0_79] : memref<1x16xf32, #tpu.memory_space<vmem>>, vector<1x16xf32>
    %74 = vector.broadcast %73 : vector<1x16xf32> to vector<1024x16xf32>
    %75 = arith.addf %72, %74 : vector<1024x16xf32>
    %cst_80 = arith.constant 0.000000e+00 : f32
    %76 = vector.broadcast %cst_80 : f32 to vector<1024x16xf32>
    %77 = arith.maximumf %75, %76 : vector<1024x16xf32>
    %78 = vector.shape_cast %77 : vector<1024x16xf32> to vector<4x8x32x16xf32>
    %cst_81 = arith.constant dense<0xFF800000> : vector<4x32x16xf32>
    %79 = vector.multi_reduction <maximumf>, %78, %cst_81 [1] : vector<4x8x32x16xf32> to vector<4x32x16xf32>
    %80 = vector.shape_cast %79 : vector<4x32x16xf32> to vector<16x8x16xf32>
    %cst_82 = arith.constant dense<0xFF800000> : vector<16x16xf32>
    %81 = vector.multi_reduction <maximumf>, %80, %cst_82 [1] : vector<16x8x16xf32> to vector<16x16xf32>
    %cst_83 = arith.constant 0.000000e+00 : f32
    %82 = vector.broadcast %cst_83 : f32 to vector<36x16xf32>
    %c0_84 = arith.constant 0 : index
    %c0_85 = arith.constant 0 : index
    %83 = vector.load %arg13[%c0_84, %c0_85] : memref<36x16xf32, #tpu.memory_space<vmem>>, vector<36x16xf32>
    tpu.vector_store %arg13[%c0_84, %c0_85], %82 {strides = array<i32>} : memref<36x16xf32, #tpu.memory_space<vmem>>, vector<36x16xf32>,
    %84 = vector.extract_strided_slice %81 {offsets = [0, 0], sizes = [4, 16], strides = [1, 1]} : vector<16x16xf32> to vector<4x16xf32>
    %c7 = arith.constant 7 : index
    %c0_86 = arith.constant 0 : index
    %85 = vector.load %arg13[%c7, %c0_86] : memref<36x16xf32, #tpu.memory_space<vmem>>, vector<4x16xf32>
    tpu.vector_store %arg13[%c7, %c0_86], %84 {strides = array<i32>} : memref<36x16xf32, #tpu.memory_space<vmem>>, vector<4x16xf32>,
    %86 = vector.extract_strided_slice %81 {offsets = [4, 0], sizes = [4, 16], strides = [1, 1]} : vector<16x16xf32> to vector<4x16xf32>
    %c13 = arith.constant 13 : index
    %c0_87 = arith.constant 0 : index
    %87 = vector.load %arg13[%c13, %c0_87] : memref<36x16xf32, #tpu.memory_space<vmem>>, vector<4x16xf32>
    tpu.vector_store %arg13[%c13, %c0_87], %86 {strides = array<i32>} : memref<36x16xf32, #tpu.memory_space<vmem>>, vector<4x16xf32>,
    %88 = vector.extract_strided_slice %81 {offsets = [8, 0], sizes = [4, 16], strides = [1, 1]} : vector<16x16xf32> to vector<4x16xf32>
    %c19 = arith.constant 19 : index
    %c0_88 = arith.constant 0 : index
    %89 = vector.load %arg13[%c19, %c0_88] : memref<36x16xf32, #tpu.memory_space<vmem>>, vector<4x16xf32>
    tpu.vector_store %arg13[%c19, %c0_88], %88 {strides = array<i32>} : memref<36x16xf32, #tpu.memory_space<vmem>>, vector<4x16xf32>,
    %90 = vector.extract_strided_slice %81 {offsets = [12, 0], sizes = [4, 16], strides = [1, 1]} : vector<16x16xf32> to vector<4x16xf32>
    %c25 = arith.constant 25 : index
    %c0_89 = arith.constant 0 : index
    %91 = vector.load %arg13[%c25, %c0_89] : memref<36x16xf32, #tpu.memory_space<vmem>>, vector<4x16xf32>
    tpu.vector_store %arg13[%c25, %c0_89], %90 {strides = array<i32>} : memref<36x16xf32, #tpu.memory_space<vmem>>, vector<4x16xf32>,
    %cst_90 = arith.constant 0.000000e+00 : f32
    %92 = vector.broadcast %cst_90 : f32 to vector<22x32xf32>
    %c0_91 = arith.constant 0 : index
    %c0_92 = arith.constant 0 : index
    %93 = vector.load %arg13[%c0_91, %c0_92] : memref<36x16xf32, #tpu.memory_space<vmem>>, vector<22x16xf32>
    %94 = arith.truncf %93 : vector<22x16xf32> to vector<22x16xbf16>
    %c0_93 = arith.constant 0 : index
    %c0_94 = arith.constant 0 : index
    %c0_95 = arith.constant 0 : index
    %c0_96 = arith.constant 0 : index
    %95 = vector.load %arg4[%c0_93, %c0_94, %c0_95, %c0_96] : memref<3x3x16x32xbf16, #tpu.memory_space<vmem>>, vector<1x1x16x32xbf16>
    %96 = vector.shape_cast %95 : vector<1x1x16x32xbf16> to vector<16x32xbf16>
    %cst_97 = arith.constant dense<0.000000e+00> : vector<22x32xf32>
    %97 = tpu.matmul %94, %96, %cst_97 {dimension_numbers = #tpu.dot_dimension_numbers<[1], [0], [0], [1], [0, 0, 1, 1], [], []>} : vector<22x16xbf16>, vector<16x32xbf16>, vector<22x32xf32> -> vector<22x32xf32>
    %98 = arith.addf %92, %97 : vector<22x32xf32>
    %c1_98 = arith.constant 1 : index
    %c0_99 = arith.constant 0 : index
    %99 = vector.load %arg13[%c1_98, %c0_99] : memref<36x16xf32, #tpu.memory_space<vmem>>, vector<22x16xf32>
    %100 = arith.truncf %99 : vector<22x16xf32> to vector<22x16xbf16>
    %c0_100 = arith.constant 0 : index
    %c1_101 = arith.constant 1 : index
    %c0_102 = arith.constant 0 : index
    %c0_103 = arith.constant 0 : index
    %101 = vector.load %arg4[%c0_100, %c1_101, %c0_102, %c0_103] : memref<3x3x16x32xbf16, #tpu.memory_space<vmem>>, vector<1x1x16x32xbf16>
    %102 = vector.shape_cast %101 : vector<1x1x16x32xbf16> to vector<16x32xbf16>
    %cst_104 = arith.constant dense<0.000000e+00> : vector<22x32xf32>
    %103 = tpu.matmul %100, %102, %cst_104 {dimension_numbers = #tpu.dot_dimension_numbers<[1], [0], [0], [1], [0, 0, 1, 1], [], []>} : vector<22x16xbf16>, vector<16x32xbf16>, vector<22x32xf32> -> vector<22x32xf32>
    %104 = arith.addf %98, %103 : vector<22x32xf32>
    %c2_105 = arith.constant 2 : index
    %c0_106 = arith.constant 0 : index
    %105 = vector.load %arg13[%c2_105, %c0_106] : memref<36x16xf32, #tpu.memory_space<vmem>>, vector<22x16xf32>
    %106 = arith.truncf %105 : vector<22x16xf32> to vector<22x16xbf16>
    %c0_107 = arith.constant 0 : index
    %c2_108 = arith.constant 2 : index
    %c0_109 = arith.constant 0 : index
    %c0_110 = arith.constant 0 : index
    %107 = vector.load %arg4[%c0_107, %c2_108, %c0_109, %c0_110] : memref<3x3x16x32xbf16, #tpu.memory_space<vmem>>, vector<1x1x16x32xbf16>
    %108 = vector.shape_cast %107 : vector<1x1x16x32xbf16> to vector<16x32xbf16>
    %cst_111 = arith.constant dense<0.000000e+00> : vector<22x32xf32>
    %109 = tpu.matmul %106, %108, %cst_111 {dimension_numbers = #tpu.dot_dimension_numbers<[1], [0], [0], [1], [0, 0, 1, 1], [], []>} : vector<22x16xbf16>, vector<16x32xbf16>, vector<22x32xf32> -> vector<22x32xf32>
    %110 = arith.addf %104, %109 : vector<22x32xf32>
    %c6 = arith.constant 6 : index
    %c0_112 = arith.constant 0 : index
    %111 = vector.load %arg13[%c6, %c0_112] : memref<36x16xf32, #tpu.memory_space<vmem>>, vector<22x16xf32>
    %112 = arith.truncf %111 : vector<22x16xf32> to vector<22x16xbf16>
    %c1_113 = arith.constant 1 : index
    %c0_114 = arith.constant 0 : index
    %c0_115 = arith.constant 0 : index
    %c0_116 = arith.constant 0 : index
    %113 = vector.load %arg4[%c1_113, %c0_114, %c0_115, %c0_116] : memref<3x3x16x32xbf16, #tpu.memory_space<vmem>>, vector<1x1x16x32xbf16>
    %114 = vector.shape_cast %113 : vector<1x1x16x32xbf16> to vector<16x32xbf16>
    %cst_117 = arith.constant dense<0.000000e+00> : vector<22x32xf32>
    %115 = tpu.matmul %112, %114, %cst_117 {dimension_numbers = #tpu.dot_dimension_numbers<[1], [0], [0], [1], [0, 0, 1, 1], [], []>} : vector<22x16xbf16>, vector<16x32xbf16>, vector<22x32xf32> -> vector<22x32xf32>
    %116 = arith.addf %110, %115 : vector<22x32xf32>
    %c7_118 = arith.constant 7 : index
    %c0_119 = arith.constant 0 : index
    %117 = vector.load %arg13[%c7_118, %c0_119] : memref<36x16xf32, #tpu.memory_space<vmem>>, vector<22x16xf32>
    %118 = arith.truncf %117 : vector<22x16xf32> to vector<22x16xbf16>
    %c1_120 = arith.constant 1 : index
    %c1_121 = arith.constant 1 : index
    %c0_122 = arith.constant 0 : index
    %c0_123 = arith.constant 0 : index
    %119 = vector.load %arg4[%c1_120, %c1_121, %c0_122, %c0_123] : memref<3x3x16x32xbf16, #tpu.memory_space<vmem>>, vector<1x1x16x32xbf16>
    %120 = vector.shape_cast %119 : vector<1x1x16x32xbf16> to vector<16x32xbf16>
    %cst_124 = arith.constant dense<0.000000e+00> : vector<22x32xf32>
    %121 = tpu.matmul %118, %120, %cst_124 {dimension_numbers = #tpu.dot_dimension_numbers<[1], [0], [0], [1], [0, 0, 1, 1], [], []>} : vector<22x16xbf16>, vector<16x32xbf16>, vector<22x32xf32> -> vector<22x32xf32>
    %122 = arith.addf %116, %121 : vector<22x32xf32>
    %c8 = arith.constant 8 : index
    %c0_125 = arith.constant 0 : index
    %123 = vector.load %arg13[%c8, %c0_125] : memref<36x16xf32, #tpu.memory_space<vmem>>, vector<22x16xf32>
    %124 = arith.truncf %123 : vector<22x16xf32> to vector<22x16xbf16>
    %c1_126 = arith.constant 1 : index
    %c2_127 = arith.constant 2 : index
    %c0_128 = arith.constant 0 : index
    %c0_129 = arith.constant 0 : index
    %125 = vector.load %arg4[%c1_126, %c2_127, %c0_128, %c0_129] : memref<3x3x16x32xbf16, #tpu.memory_space<vmem>>, vector<1x1x16x32xbf16>
    %126 = vector.shape_cast %125 : vector<1x1x16x32xbf16> to vector<16x32xbf16>
    %cst_130 = arith.constant dense<0.000000e+00> : vector<22x32xf32>
    %127 = tpu.matmul %124, %126, %cst_130 {dimension_numbers = #tpu.dot_dimension_numbers<[1], [0], [0], [1], [0, 0, 1, 1], [], []>} : vector<22x16xbf16>, vector<16x32xbf16>, vector<22x32xf32> -> vector<22x32xf32>
    %128 = arith.addf %122, %127 : vector<22x32xf32>
    %c12 = arith.constant 12 : index
    %c0_131 = arith.constant 0 : index
    %129 = vector.load %arg13[%c12, %c0_131] : memref<36x16xf32, #tpu.memory_space<vmem>>, vector<22x16xf32>
    %130 = arith.truncf %129 : vector<22x16xf32> to vector<22x16xbf16>
    %c2_132 = arith.constant 2 : index
    %c0_133 = arith.constant 0 : index
    %c0_134 = arith.constant 0 : index
    %c0_135 = arith.constant 0 : index
    %131 = vector.load %arg4[%c2_132, %c0_133, %c0_134, %c0_135] : memref<3x3x16x32xbf16, #tpu.memory_space<vmem>>, vector<1x1x16x32xbf16>
    %132 = vector.shape_cast %131 : vector<1x1x16x32xbf16> to vector<16x32xbf16>
    %cst_136 = arith.constant dense<0.000000e+00> : vector<22x32xf32>
    %133 = tpu.matmul %130, %132, %cst_136 {dimension_numbers = #tpu.dot_dimension_numbers<[1], [0], [0], [1], [0, 0, 1, 1], [], []>} : vector<22x16xbf16>, vector<16x32xbf16>, vector<22x32xf32> -> vector<22x32xf32>
    %134 = arith.addf %128, %133 : vector<22x32xf32>
    %c13_137 = arith.constant 13 : index
    %c0_138 = arith.constant 0 : index
    %135 = vector.load %arg13[%c13_137, %c0_138] : memref<36x16xf32, #tpu.memory_space<vmem>>, vector<22x16xf32>
    %136 = arith.truncf %135 : vector<22x16xf32> to vector<22x16xbf16>
    %c2_139 = arith.constant 2 : index
    %c1_140 = arith.constant 1 : index
    %c0_141 = arith.constant 0 : index
    %c0_142 = arith.constant 0 : index
    %137 = vector.load %arg4[%c2_139, %c1_140, %c0_141, %c0_142] : memref<3x3x16x32xbf16, #tpu.memory_space<vmem>>, vector<1x1x16x32xbf16>
    %138 = vector.shape_cast %137 : vector<1x1x16x32xbf16> to vector<16x32xbf16>
    %cst_143 = arith.constant dense<0.000000e+00> : vector<22x32xf32>
    %139 = tpu.matmul %136, %138, %cst_143 {dimension_numbers = #tpu.dot_dimension_numbers<[1], [0], [0], [1], [0, 0, 1, 1], [], []>} : vector<22x16xbf16>, vector<16x32xbf16>, vector<22x32xf32> -> vector<22x32xf32>
    %140 = arith.addf %134, %139 : vector<22x32xf32>
    %c14 = arith.constant 14 : index
    %c0_144 = arith.constant 0 : index
    %141 = vector.load %arg13[%c14, %c0_144] : memref<36x16xf32, #tpu.memory_space<vmem>>, vector<22x16xf32>
    %142 = arith.truncf %141 : vector<22x16xf32> to vector<22x16xbf16>
    %c2_145 = arith.constant 2 : index
    %c2_146 = arith.constant 2 : index
    %c0_147 = arith.constant 0 : index
    %c0_148 = arith.constant 0 : index
    %143 = vector.load %arg4[%c2_145, %c2_146, %c0_147, %c0_148] : memref<3x3x16x32xbf16, #tpu.memory_space<vmem>>, vector<1x1x16x32xbf16>
    %144 = vector.shape_cast %143 : vector<1x1x16x32xbf16> to vector<16x32xbf16>
    %cst_149 = arith.constant dense<0.000000e+00> : vector<22x32xf32>
    %145 = tpu.matmul %142, %144, %cst_149 {dimension_numbers = #tpu.dot_dimension_numbers<[1], [0], [0], [1], [0, 0, 1, 1], [], []>} : vector<22x16xbf16>, vector<16x32xbf16>, vector<22x32xf32> -> vector<22x32xf32>
    %146 = arith.addf %140, %145 : vector<22x32xf32>
    %c0_150 = arith.constant 0 : index
    %c0_151 = arith.constant 0 : index
    %147 = vector.load %arg5[%c0_150, %c0_151] : memref<1x32xf32, #tpu.memory_space<vmem>>, vector<1x32xf32>
    %148 = vector.broadcast %147 : vector<1x32xf32> to vector<22x32xf32>
    %149 = arith.addf %146, %148 : vector<22x32xf32>
    %cst_152 = arith.constant 0.000000e+00 : f32
    %150 = vector.broadcast %cst_152 : f32 to vector<22x32xf32>
    %151 = arith.maximumf %149, %150 : vector<22x32xf32>
    %152 = tpu.iota {dimensions = array<i32: 0>} : vector<22x1xi32>
    %c4_i32 = arith.constant 4 : i32
    %153 = vector.broadcast %c4_i32 : i32 to vector<22x1xi32>
    %154 = arith.cmpi slt, %152, %153 : vector<22x1xi32>
    %c6_i32 = arith.constant 6 : i32
    %155 = vector.broadcast %c6_i32 : i32 to vector<22x1xi32>
    %156 = arith.cmpi sge, %152, %155 : vector<22x1xi32>
    %c10_i32 = arith.constant 10 : i32
    %157 = vector.broadcast %c10_i32 : i32 to vector<22x1xi32>
    %158 = arith.cmpi slt, %152, %157 : vector<22x1xi32>
    %159 = arith.andi %156, %158 : vector<22x1xi1>
    %160 = arith.ori %154, %159 : vector<22x1xi1>
    %c12_i32 = arith.constant 12 : i32
    %161 = vector.broadcast %c12_i32 : i32 to vector<22x1xi32>
    %162 = arith.cmpi sge, %152, %161 : vector<22x1xi32>
    %c16_i32 = arith.constant 16 : i32
    %163 = vector.broadcast %c16_i32 : i32 to vector<22x1xi32>
    %164 = arith.cmpi slt, %152, %163 : vector<22x1xi32>
    %165 = arith.andi %162, %164 : vector<22x1xi1>
    %166 = arith.ori %160, %165 : vector<22x1xi1>
    %c18_i32 = arith.constant 18 : i32
    %167 = vector.broadcast %c18_i32 : i32 to vector<22x1xi32>
    %168 = arith.cmpi sge, %152, %167 : vector<22x1xi32>
    %c22_i32 = arith.constant 22 : i32
    %169 = vector.broadcast %c22_i32 : i32 to vector<22x1xi32>
    %170 = arith.cmpi slt, %152, %169 : vector<22x1xi32>
    %171 = arith.andi %168, %170 : vector<22x1xi1>
    %172 = arith.ori %166, %171 : vector<22x1xi1>
    %cst_153 = arith.constant 0.000000e+00 : f32
    %173 = vector.shape_cast %172 : vector<22x1xi1> to vector<22x1xi1>
    %174 = vector.broadcast %173 : vector<22x1xi1> to vector<22x32xi1>
    %175 = vector.broadcast %cst_153 : f32 to vector<22x32xf32>
    %176 = arith.select %174, %151, %175 : vector<22x32xi1>, vector<22x32xf32>
    %cst_154 = arith.constant dense<0xFF800000> : vector<32xf32>
    %177 = vector.multi_reduction <maximumf>, %176, %cst_154 [0] : vector<22x32xf32> to vector<32xf32>
    %178 = vector.shape_cast %177 : vector<32xf32> to vector<1x32xf32>
    %c0_155 = arith.constant 0 : index
    %c0_156 = arith.constant 0 : index
    %179 = vector.load %arg6[%c0_155, %c0_156] : memref<32x64xf32, #tpu.memory_space<vmem>>, vector<32x64xf32>
    %cst_157 = arith.constant dense<0.000000e+00> : vector<1x64xf32>
    %180 = tpu.matmul %178, %179, %cst_157 {dimension_numbers = #tpu.dot_dimension_numbers<[1], [0], [0], [1], [0, 0, 1, 1], [], []>} : vector<1x32xf32>, vector<32x64xf32>, vector<1x64xf32> -> vector<1x64xf32>
    %c0_158 = arith.constant 0 : index
    %c0_159 = arith.constant 0 : index
    %181 = vector.load %arg7[%c0_158, %c0_159] : memref<1x64xf32, #tpu.memory_space<vmem>>, vector<1x64xf32>
    %182 = arith.addf %180, %181 : vector<1x64xf32>
    %cst_160 = arith.constant 0.000000e+00 : f32
    %183 = vector.broadcast %cst_160 : f32 to vector<1x64xf32>
    %184 = arith.maximumf %182, %183 : vector<1x64xf32>
    %c0_161 = arith.constant 0 : index
    %c0_162 = arith.constant 0 : index
    %185 = vector.load %arg8[%c0_161, %c0_162] : memref<64x64xf32, #tpu.memory_space<vmem>>, vector<64x64xf32>
    %cst_163 = arith.constant dense<0.000000e+00> : vector<1x64xf32>
    %186 = tpu.matmul %184, %185, %cst_163 {dimension_numbers = #tpu.dot_dimension_numbers<[1], [0], [0], [1], [0, 0, 1, 1], [], []>} : vector<1x64xf32>, vector<64x64xf32>, vector<1x64xf32> -> vector<1x64xf32>
    %c0_164 = arith.constant 0 : index
    %c0_165 = arith.constant 0 : index
    %187 = vector.load %arg9[%c0_164, %c0_165] : memref<1x64xf32, #tpu.memory_space<vmem>>, vector<1x64xf32>
    %188 = arith.addf %186, %187 : vector<1x64xf32>
    %cst_166 = arith.constant 0.000000e+00 : f32
    %189 = vector.broadcast %cst_166 : f32 to vector<1x64xf32>
    %190 = arith.maximumf %188, %189 : vector<1x64xf32>
    %c0_167 = arith.constant 0 : index
    %c0_168 = arith.constant 0 : index
    %191 = vector.load %arg10[%c0_167, %c0_168] : memref<64x10xf32, #tpu.memory_space<vmem>>, vector<64x10xf32>
    %cst_169 = arith.constant dense<0.000000e+00> : vector<1x10xf32>
    %192 = tpu.matmul %190, %191, %cst_169 {dimension_numbers = #tpu.dot_dimension_numbers<[1], [0], [0], [1], [0, 0, 1, 1], [], []>} : vector<1x64xf32>, vector<64x10xf32>, vector<1x10xf32> -> vector<1x10xf32>
    %c0_170 = arith.constant 0 : index
    %c0_171 = arith.constant 0 : index
    %193 = vector.load %arg11[%c0_170, %c0_171] : memref<1x10xf32, #tpu.memory_space<vmem>>, vector<1x10xf32>
    %194 = arith.addf %192, %193 : vector<1x10xf32>
    %c0_172 = arith.constant 0 : index
    %c0_173 = arith.constant 0 : index
    %c0_174 = arith.constant 0 : index
    %195 = vector.load %arg12[%c0_172, %c0_173, %c0_174] : memref<1x1x10xf32, #tpu.memory_space<vmem>>, vector<1x1x10xf32>
    %196 = vector.shape_cast %195 : vector<1x1x10xf32> to vector<1x10xf32>
    %197 = vector.shape_cast %194 : vector<1x10xf32> to vector<1x1x10xf32>
    tpu.vector_store %arg12[%c0_172, %c0_173, %c0_174], %197 {strides = array<i32>} : memref<1x1x10xf32, #tpu.memory_space<vmem>>, vector<1x1x10xf32>,
    return
  }
  func.func @transform_0(%arg0: i32) -> (i32, i32, i32, i32) {
    %c0_i32 = arith.constant 0 : i32
    %c0_i32_0 = arith.constant 0 : i32
    %c0_i32_1 = arith.constant 0 : i32
    %c0_i32_2 = arith.constant 0 : i32
    return %arg0, %c0_i32, %c0_i32_0, %c0_i32_1 : i32, i32, i32, i32
  }
  func.func @transform_1(%arg0: i32) -> (i32, i32, i32, i32) {
    %c0_i32 = arith.constant 0 : i32
    %c0_i32_0 = arith.constant 0 : i32
    %c0_i32_1 = arith.constant 0 : i32
    %c0_i32_2 = arith.constant 0 : i32
    %c0_i32_3 = arith.constant 0 : i32
    return %c0_i32, %c0_i32_0, %c0_i32_1, %c0_i32_2 : i32, i32, i32, i32
  }
  func.func @transform_2(%arg0: i32) -> (i32, i32) {
    %c0_i32 = arith.constant 0 : i32
    %c0_i32_0 = arith.constant 0 : i32
    %c0_i32_1 = arith.constant 0 : i32
    return %c0_i32, %c0_i32_0 : i32, i32
  }
  func.func @transform_3(%arg0: i32) -> (i32, i32, i32, i32) {
    %c0_i32 = arith.constant 0 : i32
    %c0_i32_0 = arith.constant 0 : i32
    %c0_i32_1 = arith.constant 0 : i32
    %c0_i32_2 = arith.constant 0 : i32
    %c0_i32_3 = arith.constant 0 : i32
    return %c0_i32, %c0_i32_0, %c0_i32_1, %c0_i32_2 : i32, i32, i32, i32
  }
  func.func @transform_4(%arg0: i32) -> (i32, i32) {
    %c0_i32 = arith.constant 0 : i32
    %c0_i32_0 = arith.constant 0 : i32
    %c0_i32_1 = arith.constant 0 : i32
    return %c0_i32, %c0_i32_0 : i32, i32
  }
  func.func @transform_5(%arg0: i32) -> (i32, i32) {
    %c0_i32 = arith.constant 0 : i32
    %c0_i32_0 = arith.constant 0 : i32
    %c0_i32_1 = arith.constant 0 : i32
    return %c0_i32, %c0_i32_0 : i32, i32
  }
  func.func @transform_6(%arg0: i32) -> (i32, i32) {
    %c0_i32 = arith.constant 0 : i32
    %c0_i32_0 = arith.constant 0 : i32
    %c0_i32_1 = arith.constant 0 : i32
    return %c0_i32, %c0_i32_0 : i32, i32
  }
  func.func @transform_7(%arg0: i32) -> (i32, i32) {
    %c0_i32 = arith.constant 0 : i32
    %c0_i32_0 = arith.constant 0 : i32
    %c0_i32_1 = arith.constant 0 : i32
    return %c0_i32, %c0_i32_0 : i32, i32
  }
  func.func @transform_8(%arg0: i32) -> (i32, i32) {
    %c0_i32 = arith.constant 0 : i32
    %c0_i32_0 = arith.constant 0 : i32
    %c0_i32_1 = arith.constant 0 : i32
    return %c0_i32, %c0_i32_0 : i32, i32
  }
  func.func @transform_9(%arg0: i32) -> (i32, i32) {
    %c0_i32 = arith.constant 0 : i32
    %c0_i32_0 = arith.constant 0 : i32
    %c0_i32_1 = arith.constant 0 : i32
    return %c0_i32, %c0_i32_0 : i32, i32
  }
  func.func @transform_10(%arg0: i32) -> (i32, i32) {
    %c0_i32 = arith.constant 0 : i32
    %c0_i32_0 = arith.constant 0 : i32
    %c0_i32_1 = arith.constant 0 : i32
    return %c0_i32, %c0_i32_0 : i32, i32
  }
  func.func @transform_11(%arg0: i32) -> (i32, i32, i32) {
    %c0_i32 = arith.constant 0 : i32
    %c0_i32_0 = arith.constant 0 : i32
    %c0_i32_1 = arith.constant 0 : i32
    return %arg0, %c0_i32, %c0_i32_0 : i32, i32, i32
  }
}

</mosaic_0001>

<llo_original>
// kernel: tpu_custom_call.1
$region0: #{tpu_custom_call.1}
  #allocation0 [shape = 'u32[]', space=smem, size = 0x4, offset = 0x4, fixed_abs, tag = 'smem constant byte address 0x4 - core index']
  #allocation1 [shape = 'u32[144,128]{1,0:T(1,128)}', space=vmem, size = 0x12000, scoped, tag = 'internal scratch']
  #allocation2 [shape = 'f32[36,16]{1,0:T(8,128)}', space=vmem, size = 0x5000, scoped, tag = 'scratch operand']
  %s0 = inlined_call_operand.vmem [shape: f32[2,34,34,3], index: 0, kind: input, shape index: {}]
  %s1 = inlined_call_operand.vmem [shape: bf16[3,3,3,16], index: 1, kind: input, shape index: {}]
  %s2 = inlined_call_operand.vmem [shape: f32[1,16], index: 2, kind: input, shape index: {}]
  %s3 = inlined_call_operand.vmem [shape: bf16[3,3,16,32], index: 3, kind: input, shape index: {}]
  %s4 = inlined_call_operand.vmem [shape: f32[1,32], index: 4, kind: input, shape index: {}]
  %s5 = inlined_call_operand.vmem [shape: f32[32,64], index: 5, kind: input, shape index: {}]
  %s6 = inlined_call_operand.vmem [shape: f32[1,64], index: 6, kind: input, shape index: {}]
  %s7 = inlined_call_operand.vmem [shape: f32[64,64], index: 7, kind: input, shape index: {}]
  %s8 = inlined_call_operand.vmem [shape: f32[1,64], index: 8, kind: input, shape index: {}]
  %s9 = inlined_call_operand.vmem [shape: f32[64,10], index: 9, kind: input, shape index: {}]
  %s10 = inlined_call_operand.vmem [shape: f32[1,10], index: 10, kind: input, shape index: {}]
  %s11 = inlined_call_operand.hbm [shape: f32[2,1,10], index: 11, kind: output, shape index: {}]
  %s12 = sld [smem:[#allocation0]]
  $region77: #{tpu_custom_call.1} parent=0
    _
  %s14 = ssub.s32 1, %s12
  %s15 = scalar_select 0, %s14, %s12
  $region1: #{tpu_custom_call.1} parent=0
    #allocation3 [shape = 'u8[1024]{0}', space=vmem, size = 0x400, scoped, tag = 'output window, operand 0']
    #allocation4 [shape = 's32[2]{0}', space=sflag, size = 0x8, scoped, tag = 'scoped memory for tpu_custom_call.1']
    %16 = vsyncpa [#allocation4], 0
    %s17 = scalar_lea.sflag [#allocation4], 1
    %18 = vsyncpa %s17, 0
    loop: start=0, step=1, limit=4
    $region2: #{tpu_custom_call.1} parent=1 // loop_pre_header
      _
    $region3: #{tpu_custom_call.1} parent=1 // loop_header
      %s20 = sphi 0, %s24
      %p21 = scmp.ge.s32.totalorder %s20, 4
      %s30 = sphi 0, %s32
      %s33 = sphi 0, %s30
      %s34 = sphi 0, %s33
      %s50 = sphi 0, %s34
      %s54 = sphi 0, %s54
      %s56 = sphi 0, %s54
      %s57 = sphi 0, %s56
      %s71 = sphi 0, %s57
      %s75 = sphi 0, %s75
      %s77 = sphi 0, %s75
      %s78 = sphi 0, %s77
      %s92 = sphi 0, %s78
      %s96 = sphi 0, %s96
      %s98 = sphi 0, %s96
      %s99 = sphi 0, %s98
      %s113 = sphi 0, %s99
      %s117 = sphi 0, %s117
      %s119 = sphi 0, %s117
      %s120 = sphi 0, %s119
      %s134 = sphi 0, %s120
      %s138 = sphi 0, %s138
      %s140 = sphi 0, %s138
      %s141 = sphi 0, %s140
      %s155 = sphi 0, %s141
      %s159 = sphi 0, %s159
      %s161 = sphi 0, %s159
      %s162 = sphi 0, %s161
      %s176 = sphi 0, %s162
      %s180 = sphi 0, %s180
      %s182 = sphi 0, %s180
      %s183 = sphi 0, %s182
      %s197 = sphi 0, %s183
      %s201 = sphi 0, %s201
      %s203 = sphi 0, %s201
      %s204 = sphi 0, %s203
      %s218 = sphi 0, %s204
      %s222 = sphi 0, %s222
      %s224 = sphi 0, %s222
      %s225 = sphi 0, %s224
      %s239 = sphi 0, %s225
      %s243 = sphi 0, %s243
      %s245 = sphi 0, %s243
      %s246 = sphi 0, %s245
      %s260 = sphi 0, %s246
      %s266 = sphi 0, %s268
      %s269 = sphi 0, %s266
      %s270 = sphi 0, %s269
      %s286 = sphi 0, %s270
    $region4: #{tpu_custom_call.1} parent=1 // loop_header_branch
      %23 = sbr.rel (%p21) target = $region8
    $region5: #{tpu_custom_call.1} parent=1 // loop_body
      %s25 = ssub.s32 %s20, 1
      %s26 = ssub.s32 %s20, 2
      %s27 = sadd.s32 %s20, 1
      %s28 = ssub.s32 %s20, %s27
      %p29 = scmp.eq.s32.totalorder %s28, 0
      %s31 = sadd.s32 %s30, 1
      %s32 = scalar_select %p29, %s30, %s31
      %p35 = pneg %p29
      %p36 = scmp.eq.s32.totalorder %s20, 1
      %p37 = por %p35, %p36
      %p38 = scmp.ne.s32.totalorder %s30, %s33
      %p39 = scmp.eq.s32.totalorder %s20, 0
      %p40 = por %p38, %p39
      %p41 = scmp.ne.s32.totalorder %s30, %s33
      %p42 = scmp.eq.s32.totalorder %s25, 1
      %p43 = por %p41, %p42
      %p44 = scmp.ne.s32.totalorder %s33, %s34
      %p45 = scmp.eq.s32.totalorder %s25, 0
      %p46 = por %p44, %p45
      %p47 = scmp.ne.s32.totalorder %s33, %s34
      %p48 = scmp.eq.s32.totalorder %s26, 1
      %p49 = por %p47, %p48
      %p51 = scmp.ne.s32.totalorder %s34, %s50
      %p52 = scmp.eq.s32.totalorder %s26, 0
      %p53 = por %p51, %p52
      %s55 = sadd.s32 %s54, 1
      %p58 = scmp.eq.s32.totalorder %s20, 1
      %p59 = scmp.ne.s32.totalorder %s54, %s56
      %p60 = scmp.eq.s32.totalorder %s20, 0
      %p61 = por %p59, %p60
      %p62 = scmp.ne.s32.totalorder %s54, %s56
      %p63 = scmp.eq.s32.totalorder %s25, 1
      %p64 = por %p62, %p63
      %p65 = scmp.ne.s32.totalorder %s56, %s57
      %p66 = scmp.eq.s32.totalorder %s25, 0
      %p67 = por %p65, %p66
      %p68 = scmp.ne.s32.totalorder %s56, %s57
      %p69 = scmp.eq.s32.totalorder %s26, 1
      %p70 = por %p68, %p69
      %p72 = scmp.ne.s32.totalorder %s57, %s71
      %p73 = scmp.eq.s32.totalorder %s26, 0
      %p74 = por %p72, %p73
      %s76 = sadd.s32 %s75, 1
      %p79 = scmp.eq.s32.totalorder %s20, 1
      %p80 = scmp.ne.s32.totalorder %s75, %s77
      %p81 = scmp.eq.s32.totalorder %s20, 0
      %p82 = por %p80, %p81
      %p83 = scmp.ne.s32.totalorder %s75, %s77
      %p84 = scmp.eq.s32.totalorder %s25, 1
      %p85 = por %p83, %p84
      %p86 = scmp.ne.s32.totalorder %s77, %s78
      %p87 = scmp.eq.s32.totalorder %s25, 0
      %p88 = por %p86, %p87
      %p89 = scmp.ne.s32.totalorder %s77, %s78
      %p90 = scmp.eq.s32.totalorder %s26, 1
      %p91 = por %p89, %p90
      %p93 = scmp.ne.s32.totalorder %s78, %s92
      %p94 = scmp.eq.s32.totalorder %s26, 0
      %p95 = por %p93, %p94
      %s97 = sadd.s32 %s96, 1
      %p100 = scmp.eq.s32.totalorder %s20, 1
      %p101 = scmp.ne.s32.totalorder %s96, %s98
      %p102 = scmp.eq.s32.totalorder %s20, 0
      %p103 = por %p101, %p102
      %p104 = scmp.ne.s32.totalorder %s96, %s98
      %p105 = scmp.eq.s32.totalorder %s25, 1
      %p106 = por %p104, %p105
      %p107 = scmp.ne.s32.totalorder %s98, %s99
      %p108 = scmp.eq.s32.totalorder %s25, 0
      %p109 = por %p107, %p108
      %p110 = scmp.ne.s32.totalorder %s98, %s99
      %p111 = scmp.eq.s32.totalorder %s26, 1
      %p112 = por %p110, %p111
      %p114 = scmp.ne.s32.totalorder %s99, %s113
      %p115 = scmp.eq.s32.totalorder %s26, 0
      %p116 = por %p114, %p115
      %s118 = sadd.s32 %s117, 1
      %p121 = scmp.eq.s32.totalorder %s20, 1
      %p122 = scmp.ne.s32.totalorder %s117, %s119
      %p123 = scmp.eq.s32.totalorder %s20, 0
      %p124 = por %p122, %p123
      %p125 = scmp.ne.s32.totalorder %s117, %s119
      %p126 = scmp.eq.s32.totalorder %s25, 1
      %p127 = por %p125, %p126
      %p128 = scmp.ne.s32.totalorder %s119, %s120
      %p129 = scmp.eq.s32.totalorder %s25, 0
      %p130 = por %p128, %p129
      %p131 = scmp.ne.s32.totalorder %s119, %s120
      %p132 = scmp.eq.s32.totalorder %s26, 1
      %p133 = por %p131, %p132
      %p135 = scmp.ne.s32.totalorder %s120, %s134
      %p136 = scmp.eq.s32.totalorder %s26, 0
      %p137 = por %p135, %p136
      %s139 = sadd.s32 %s138, 1
      %p142 = scmp.eq.s32.totalorder %s20, 1
      %p143 = scmp.ne.s32.totalorder %s138, %s140
      %p144 = scmp.eq.s32.totalorder %s20, 0
      %p145 = por %p143, %p144
      %p146 = scmp.ne.s32.totalorder %s138, %s140
      %p147 = scmp.eq.s32.totalorder %s25, 1
      %p148 = por %p146, %p147
      %p149 = scmp.ne.s32.totalorder %s140, %s141
      %p150 = scmp.eq.s32.totalorder %s25, 0
      %p151 = por %p149, %p150
      %p152 = scmp.ne.s32.totalorder %s140, %s141
      %p153 = scmp.eq.s32.totalorder %s26, 1
      %p154 = por %p152, %p153
      %p156 = scmp.ne.s32.totalorder %s141, %s155
      %p157 = scmp.eq.s32.totalorder %s26, 0
      %p158 = por %p156, %p157
      %s160 = sadd.s32 %s159, 1
      %p163 = scmp.eq.s32.totalorder %s20, 1
      %p164 = scmp.ne.s32.totalorder %s159, %s161
      %p165 = scmp.eq.s32.totalorder %s20, 0
      %p166 = por %p164, %p165
      %p167 = scmp.ne.s32.totalorder %s159, %s161
      %p168 = scmp.eq.s32.totalorder %s25, 1
      %p169 = por %p167, %p168
      %p170 = scmp.ne.s32.totalorder %s161, %s162
      %p171 = scmp.eq.s32.totalorder %s25, 0
      %p172 = por %p170, %p171
      %p173 = scmp.ne.s32.totalorder %s161, %s162
      %p174 = scmp.eq.s32.totalorder %s26, 1
      %p175 = por %p173, %p174
      %p177 = scmp.ne.s32.totalorder %s162, %s176
      %p178 = scmp.eq.s32.totalorder %s26, 0
      %p179 = por %p177, %p178
      %s181 = sadd.s32 %s180, 1
      %p184 = scmp.eq.s32.totalorder %s20, 1
      %p185 = scmp.ne.s32.totalorder %s180, %s182
      %p186 = scmp.eq.s32.totalorder %s20, 0
      %p187 = por %p185, %p186
      %p188 = scmp.ne.s32.totalorder %s180, %s182
      %p189 = scmp.eq.s32.totalorder %s25, 1
      %p190 = por %p188, %p189
      %p191 = scmp.ne.s32.totalorder %s182, %s183
      %p192 = scmp.eq.s32.totalorder %s25, 0
      %p193 = por %p191, %p192
      %p194 = scmp.ne.s32.totalorder %s182, %s183
      %p195 = scmp.eq.s32.totalorder %s26, 1
      %p196 = por %p194, %p195
      %p198 = scmp.ne.s32.totalorder %s183, %s197
      %p199 = scmp.eq.s32.totalorder %s26, 0
      %p200 = por %p198, %p199
      %s202 = sadd.s32 %s201, 1
      %p205 = scmp.eq.s32.totalorder %s20, 1
      %p206 = scmp.ne.s32.totalorder %s201, %s203
      %p207 = scmp.eq.s32.totalorder %s20, 0
      %p208 = por %p206, %p207
      %p209 = scmp.ne.s32.totalorder %s201, %s203
      %p210 = scmp.eq.s32.totalorder %s25, 1
      %p211 = por %p209, %p210
      %p212 = scmp.ne.s32.totalorder %s203, %s204
      %p213 = scmp.eq.s32.totalorder %s25, 0
      %p214 = por %p212, %p213
      %p215 = scmp.ne.s32.totalorder %s203, %s204
      %p216 = scmp.eq.s32.totalorder %s26, 1
      %p217 = por %p215, %p216
      %p219 = scmp.ne.s32.totalorder %s204, %s218
      %p220 = scmp.eq.s32.totalorder %s26, 0
      %p221 = por %p219, %p220
      %s223 = sadd.s32 %s222, 1
      %p226 = scmp.eq.s32.totalorder %s20, 1
      %p227 = scmp.ne.s32.totalorder %s222, %s224
      %p228 = scmp.eq.s32.totalorder %s20, 0
      %p229 = por %p227, %p228
      %p230 = scmp.ne.s32.totalorder %s222, %s224
      %p231 = scmp.eq.s32.totalorder %s25, 1
      %p232 = por %p230, %p231
      %p233 = scmp.ne.s32.totalorder %s224, %s225
      %p234 = scmp.eq.s32.totalorder %s25, 0
      %p235 = por %p233, %p234
      %p236 = scmp.ne.s32.totalorder %s224, %s225
      %p237 = scmp.eq.s32.totalorder %s26, 1
      %p238 = por %p236, %p237
      %p240 = scmp.ne.s32.totalorder %s225, %s239
      %p241 = scmp.eq.s32.totalorder %s26, 0
      %p242 = por %p240, %p241
      %s244 = sadd.s32 %s243, 1
      %p247 = scmp.eq.s32.totalorder %s20, 1
      %p248 = scmp.ne.s32.totalorder %s243, %s245
      %p249 = scmp.eq.s32.totalorder %s20, 0
      %p250 = por %p248, %p249
      %p251 = scmp.ne.s32.totalorder %s243, %s245
      %p252 = scmp.eq.s32.totalorder %s25, 1
      %p253 = por %p251, %p252
      %p254 = scmp.ne.s32.totalorder %s245, %s246
      %p255 = scmp.eq.s32.totalorder %s25, 0
      %p256 = por %p254, %p255
      %p257 = scmp.ne.s32.totalorder %s245, %s246
      %p258 = scmp.eq.s32.totalorder %s26, 1
      %p259 = por %p257, %p258
      %p261 = scmp.ne.s32.totalorder %s246, %s260
      %p262 = scmp.eq.s32.totalorder %s26, 0
      %p263 = por %p261, %p262
      %s264 = ssub.s32 %s20, %s27
      %p265 = scmp.eq.s32.totalorder %s264, 0
      %s267 = sadd.s32 %s266, 1
      %s268 = scalar_select %p265, %s266, %s267
      %p271 = pneg %p265
      %p272 = scmp.eq.s32.totalorder %s20, 1
      %p273 = por %p271, %p272
      %p274 = scmp.ne.s32.totalorder %s266, %s269
      %p275 = scmp.eq.s32.totalorder %s20, 0
      %p276 = por %p274, %p275
      %p277 = scmp.ne.s32.totalorder %s266, %s269
      %p278 = scmp.eq.s32.totalorder %s25, 1
      %p279 = por %p277, %p278
      %p280 = scmp.ne.s32.totalorder %s269, %s270
      %p281 = scmp.eq.s32.totalorder %s25, 0
      %p282 = por %p280, %p281
      %p283 = scmp.ne.s32.totalorder %s269, %s270
      %p284 = scmp.eq.s32.totalorder %s26, 1
      %p285 = por %p283, %p284
      %p287 = scmp.ne.s32.totalorder %s270, %s286
      %p288 = scmp.eq.s32.totalorder %s26, 0
      %p289 = por %p287, %p288
      %p290 = scmp.le.s32.totalorder 1, %s20
      %p291 = scmp.lt.s32.totalorder %s20, 3
      %p292 = pnand %p290, %p291
      %p293 = pneg %p292
      // Predicated region
      $region9: #{tpu_custom_call.1} parent=5 // pred_check
        _
      $region10: #{tpu_custom_call.1} parent=5 // pred_check_branch
        %295 = sbr.rel (%p292) target = $region12
      $region11: #{tpu_custom_call.1} parent=5 // pred_region
        %s296 = ssub.s32 %s20, 1
        // Predicated region
        $region13: #{tpu_custom_call.1} parent=11 // pred_check
          %p297 = pneg %p67
        $region14: #{tpu_custom_call.1} parent=11 // pred_check_branch
          %299 = sbr.rel (%p297) target = $region16
        $region15: #{tpu_custom_call.1} parent=11 // pred_region
          _
        $region16: #{tpu_custom_call.1} parent=11 // pred_fallthru
          _
        // Predicated region
        $region17: #{tpu_custom_call.1} parent=11 // pred_check
          %p300 = pneg %p88
        $region18: #{tpu_custom_call.1} parent=11 // pred_check_branch
          %302 = sbr.rel (%p300) target = $region20
        $region19: #{tpu_custom_call.1} parent=11 // pred_region
          _
        $region20: #{tpu_custom_call.1} parent=11 // pred_fallthru
          _
        // Predicated region
        $region21: #{tpu_custom_call.1} parent=11 // pred_check
          %p303 = pneg %p109
        $region22: #{tpu_custom_call.1} parent=11 // pred_check_branch
          %305 = sbr.rel (%p303) target = $region24
        $region23: #{tpu_custom_call.1} parent=11 // pred_region
          _
        $region24: #{tpu_custom_call.1} parent=11 // pred_fallthru
          _
        // Predicated region
        $region25: #{tpu_custom_call.1} parent=11 // pred_check
          %p306 = pneg %p130
        $region26: #{tpu_custom_call.1} parent=11 // pred_check_branch
          %308 = sbr.rel (%p306) target = $region28
        $region27: #{tpu_custom_call.1} parent=11 // pred_region
          _
        $region28: #{tpu_custom_call.1} parent=11 // pred_fallthru
          _
        // Predicated region
        $region29: #{tpu_custom_call.1} parent=11 // pred_check
          %p309 = pneg %p151
        $region30: #{tpu_custom_call.1} parent=11 // pred_check_branch
          %311 = sbr.rel (%p309) target = $region32
        $region31: #{tpu_custom_call.1} parent=11 // pred_region
          _
        $region32: #{tpu_custom_call.1} parent=11 // pred_fallthru
          _
        // Predicated region
        $region33: #{tpu_custom_call.1} parent=11 // pred_check
          %p312 = pneg %p172
        $region34: #{tpu_custom_call.1} parent=11 // pred_check_branch
          %314 = sbr.rel (%p312) target = $region36
        $region35: #{tpu_custom_call.1} parent=11 // pred_region
          _
        $region36: #{tpu_custom_call.1} parent=11 // pred_fallthru
          _
        // Predicated region
        $region37: #{tpu_custom_call.1} parent=11 // pred_check
          %p315 = pneg %p193
        $region38: #{tpu_custom_call.1} parent=11 // pred_check_branch
          %317 = sbr.rel (%p315) target = $region40
        $region39: #{tpu_custom_call.1} parent=11 // pred_region
          _
        $region40: #{tpu_custom_call.1} parent=11 // pred_fallthru
          _
        // Predicated region
        $region41: #{tpu_custom_call.1} parent=11 // pred_check
          %p318 = pneg %p214
        $region42: #{tpu_custom_call.1} parent=11 // pred_check_branch
          %320 = sbr.rel (%p318) target = $region44
        $region43: #{tpu_custom_call.1} parent=11 // pred_region
          _
        $region44: #{tpu_custom_call.1} parent=11 // pred_fallthru
          _
        // Predicated region
        $region45: #{tpu_custom_call.1} parent=11 // pred_check
          %p321 = pneg %p235
        $region46: #{tpu_custom_call.1} parent=11 // pred_check_branch
          %323 = sbr.rel (%p321) target = $region48
        $region47: #{tpu_custom_call.1} parent=11 // pred_region
          _
        $region48: #{tpu_custom_call.1} parent=11 // pred_fallthru
          _
        // Predicated region
        $region49: #{tpu_custom_call.1} parent=11 // pred_check
          %p324 = pneg %p256
        $region50: #{tpu_custom_call.1} parent=11 // pred_check_branch
          %326 = sbr.rel (%p324) target = $region52
        $region51: #{tpu_custom_call.1} parent=11 // pred_region
          _
        $region52: #{tpu_custom_call.1} parent=11 // pred_fallthru
          _
      $region12: #{tpu_custom_call.1} parent=5 // pred_fallthru
        _
      %p327 = scmp.lt.s32.totalorder %s20, 2
      // Predicated region
      $region53: #{tpu_custom_call.1} parent=5 // pred_check
        %p328 = pneg %p327
      $region54: #{tpu_custom_call.1} parent=5 // pred_check_branch
        %330 = sbr.rel (%p328) target = $region56
      $region55: #{tpu_custom_call.1} parent=5 // pred_region
        // Predicated region
        $region57: #{tpu_custom_call.1} parent=55 // pred_check
          %p331 = pneg %p40
        $region58: #{tpu_custom_call.1} parent=55 // pred_check_branch
          %333 = sbr.rel (%p331) target = $region60
        $region59: #{tpu_custom_call.1} parent=55 // pred_region
          %p334 = scmp.lt.s32.totalorder %s20, 1
          %s335 = scalar_select %p334, %s20, 1
          %s336 = smul.addr %s335, 170
          %s337 = smul.addr %s336, 8
          %s338 = scalar_lea.vmem %s0, %s337
        $region60: #{tpu_custom_call.1} parent=55 // pred_fallthru
          _
      $region56: #{tpu_custom_call.1} parent=5 // pred_fallthru
        _
      %p339 = scmp.le.s32.totalorder 1, %s20
      %p340 = scmp.lt.s32.totalorder %s20, 3
      %p341 = pnand %p339, %p340
      %p342 = pneg %p341
      // Predicated region
      $region61: #{tpu_custom_call.1} parent=5 // pred_check
        _
      $region62: #{tpu_custom_call.1} parent=5 // pred_check_branch
        %344 = sbr.rel (%p341) target = $region64
      $region63: #{tpu_custom_call.1} parent=5 // pred_region
        %s345 = ssub.s32 %s20, 1
        %p346 = scmp.lt.s32.totalorder %s25, 1
        %s347 = scalar_select %p346, %s25, 1
        %s348 = smul.addr %s347, 170
        %s349 = smul.addr %s348, 8
        %s350 = scalar_lea.vmem %s0, %s349
        %p351 = pneg %p46
        %p352 = pneg %p43
        %p353 = pneg %p67
        %p354 = pneg %p64
        %p355 = pneg %p88
        %p356 = pneg %p85
        %p357 = pneg %p109
        %p358 = pneg %p106
        %p359 = pneg %p130
        %p360 = pneg %p127
        %p361 = pneg %p151
        %p362 = pneg %p148
        %p363 = pneg %p172
        %p364 = pneg %p169
        %p365 = pneg %p193
        %p366 = pneg %p190
        %p367 = pneg %p214
        %p368 = pneg %p211
        %p369 = pneg %p235
        %p370 = pneg %p232
        %p371 = pneg %p256
        %p372 = pneg %p253
        %p373 = pneg %p282
        %p374 = pneg %p279
        %s375 = sand.u32 %s269, 1
        %s376 = scalar_lea.sflag [#allocation4], %s375
        %s377 = sand.u32 %s269, 1
        %s378 = scalar_lea.vmem [#allocation3], %s377
        %p379 = scmp.lt.s32.totalorder %s25, 1
        %s380 = scalar_select %p379, %s25, 1
        %s381 = smul.addr %s380, 170
        %s382 = smul.addr %s381, 8
        %s383 = scalar_lea.vmem %s0, %s382
        %v385 = vld [vmem:[%s383] sm:$0xff]
        %v386 = vld [vmem:[%s383 + $0x8] sm:$0xff]
        %v387 = vld [vmem:[%s383 + $0x10] sm:$0xff]
        %v388 = vld [vmem:[%s383 + $0x18] sm:$0xff]
        %v389 = vld [vmem:[%s383 + $0x28] sm:$0xff]
        %v390 = vld [vmem:[%s383 + $0x30] sm:$0xff]
        %v391 = vld [vmem:[%s383 + $0x38] sm:$0xff]
        %v392 = vld [vmem:[%s383 + $0x40] sm:$0xff]
        %v393 = vld [vmem:[%s383 + $0x50] sm:$0xff]
        %v394 = vld [vmem:[%s383 + $0x58] sm:$0xff]
        %v395 = vld [vmem:[%s383 + $0x60] sm:$0xff]
        %v396 = vld [vmem:[%s383 + $0x68] sm:$0xff]
        %v397 = vld [vmem:[%s383 + $0x78] sm:$0xff]
        %v398 = vld [vmem:[%s383 + $0x80] sm:$0xff]
        %v399 = vld [vmem:[%s383 + $0x88] sm:$0xff]
        %v400 = vld [vmem:[%s383 + $0x90] sm:$0xff]
        %v401 = vld [vmem:[%s383 + $0xa0] sm:$0xff]
        %v402 = vld [vmem:[%s383 + $0xa8] sm:$0xff]
        %v403 = vld [vmem:[%s383 + $0xb0] sm:$0xff]
        %v404 = vld [vmem:[%s383 + $0xb8] sm:$0xff]
        %v405 = vld [vmem:[%s383 + $0xc8] sm:$0xff]
        %v406 = vld [vmem:[%s383 + $0xd0] sm:$0xff]
        %v407 = vld [vmem:[%s383 + $0xd8] sm:$0xff]
        %v408 = vld [vmem:[%s383 + $0xe0] sm:$0xff]
        %v409 = vld [vmem:[%s383 + $0xf0] sm:$0xff]
        %v410 = vld [vmem:[%s383 + $0xf8] sm:$0xff]
        %v411 = vld [vmem:[%s383 + $0x100] sm:$0xff]
        %v412 = vld [vmem:[%s383 + $0x108] sm:$0xff]
        %v413 = vld [vmem:[%s383 + $0x118] sm:$0xff]
        %v414 = vld [vmem:[%s383 + $0x120] sm:$0xff]
        %v415 = vld [vmem:[%s383 + $0x128] sm:$0xff]
        %v416 = vld [vmem:[%s383 + $0x130] sm:$0xff]
        %v417 = vld [vmem:[%s383 + $0x140] sm:$0xff]
        %v418 = vld [vmem:[%s383 + $0x148] sm:$0xff]
        %v419 = vld [vmem:[%s383 + $0x150] sm:$0xff]
        %v420 = vld [vmem:[%s383 + $0x158] sm:$0xff]
        %v421 = vld [vmem:[%s383 + $0x168] sm:$0xff]
        %v422 = vld [vmem:[%s383 + $0x170] sm:$0xff]
        %v423 = vld [vmem:[%s383 + $0x178] sm:$0xff]
        %v424 = vld [vmem:[%s383 + $0x180] sm:$0xff]
        %v425 = vld [vmem:[%s383 + $0x190] sm:$0xff]
        %v426 = vld [vmem:[%s383 + $0x198] sm:$0xff]
        %v427 = vld [vmem:[%s383 + $0x1a0] sm:$0xff]
        %v428 = vld [vmem:[%s383 + $0x1a8] sm:$0xff]
        %v429 = vld [vmem:[%s383 + $0x1b8] sm:$0xff]
        %v430 = vld [vmem:[%s383 + $0x1c0] sm:$0xff]
        %v431 = vld [vmem:[%s383 + $0x1c8] sm:$0xff]
        %v432 = vld [vmem:[%s383 + $0x1d0] sm:$0xff]
        %v433 = vld [vmem:[%s383 + $0x1e0] sm:$0xff]
        %v434 = vld [vmem:[%s383 + $0x1e8] sm:$0xff]
        %v435 = vld [vmem:[%s383 + $0x1f0] sm:$0xff]
        %v436 = vld [vmem:[%s383 + $0x1f8] sm:$0xff]
        %v437 = vld [vmem:[%s383 + $0x208] sm:$0xff]
        %v438 = vld [vmem:[%s383 + $0x210] sm:$0xff]
        %v439 = vld [vmem:[%s383 + $0x218] sm:$0xff]
        %v440 = vld [vmem:[%s383 + $0x220] sm:$0xff]
        %v441 = vld [vmem:[%s383 + $0x230] sm:$0xff]
        %v442 = vld [vmem:[%s383 + $0x238] sm:$0xff]
        %v443 = vld [vmem:[%s383 + $0x240] sm:$0xff]
        %v444 = vld [vmem:[%s383 + $0x248] sm:$0xff]
        %v445 = vld [vmem:[%s383 + $0x258] sm:$0xff]
        %v446 = vld [vmem:[%s383 + $0x260] sm:$0xff]
        %v447 = vld [vmem:[%s383 + $0x268] sm:$0xff]
        %v448 = vld [vmem:[%s383 + $0x270] sm:$0xff]
        %v449 = vld [vmem:[%s383 + $0x280] sm:$0xff]
        %v450 = vld [vmem:[%s383 + $0x288] sm:$0xff]
        %v451 = vld [vmem:[%s383 + $0x290] sm:$0xff]
        %v452 = vld [vmem:[%s383 + $0x298] sm:$0xff]
        %v453 = vld [vmem:[%s383 + $0x2a8] sm:$0xff]
        %v454 = vld [vmem:[%s383 + $0x2b0] sm:$0xff]
        %v455 = vld [vmem:[%s383 + $0x2b8] sm:$0xff]
        %v456 = vld [vmem:[%s383 + $0x2c0] sm:$0xff]
        %v457 = vld [vmem:[%s383 + $0x2d0] sm:$0xff]
        %v458 = vld [vmem:[%s383 + $0x2d8] sm:$0xff]
        %v459 = vld [vmem:[%s383 + $0x2e0] sm:$0xff]
        %v460 = vld [vmem:[%s383 + $0x2e8] sm:$0xff]
        %v461 = vld [vmem:[%s383 + $0x2f8] sm:$0xff]
        %v462 = vld [vmem:[%s383 + $0x300] sm:$0xff]
        %v463 = vld [vmem:[%s383 + $0x308] sm:$0xff]
        %v464 = vld [vmem:[%s383 + $0x310] sm:$0xff]
        %v465 = vld [vmem:[%s383 + $0x320] sm:$0xff]
        %v466 = vld [vmem:[%s383 + $0x328] sm:$0xff]
        %v467 = vld [vmem:[%s383 + $0x330] sm:$0xff]
        %v468 = vld [vmem:[%s383 + $0x338] sm:$0xff]
        %v469 = vld [vmem:[%s383 + $0x348] sm:$0xff]
        %v470 = vld [vmem:[%s383 + $0x350] sm:$0xff]
        %v471 = vld [vmem:[%s383 + $0x358] sm:$0xff]
        %v472 = vld [vmem:[%s383 + $0x360] sm:$0xff]
        %v473 = vld [vmem:[%s383 + $0x370] sm:$0xff]
        %v474 = vld [vmem:[%s383 + $0x378] sm:$0xff]
        %v475 = vld [vmem:[%s383 + $0x380] sm:$0xff]
        %v476 = vld [vmem:[%s383 + $0x388] sm:$0xff]
        %v477 = vld [vmem:[%s383 + $0x398] sm:$0xff]
        %v478 = vld [vmem:[%s383 + $0x3a0] sm:$0xff]
        %v479 = vld [vmem:[%s383 + $0x3a8] sm:$0xff]
        %v480 = vld [vmem:[%s383 + $0x3b0] sm:$0xff]
        %v481 = vld [vmem:[%s383 + $0x3c0] sm:$0xff]
        %v482 = vld [vmem:[%s383 + $0x3c8] sm:$0xff]
        %v483 = vld [vmem:[%s383 + $0x3d0] sm:$0xff]
        %v484 = vld [vmem:[%s383 + $0x3d8] sm:$0xff]
        %v485 = vld [vmem:[%s383 + $0x3e8] sm:$0xff]
        %v486 = vld [vmem:[%s383 + $0x3f0] sm:$0xff]
        %v487 = vld [vmem:[%s383 + $0x3f8] sm:$0xff]
        %v488 = vld [vmem:[%s383 + $0x400] sm:$0xff]
        %v489 = vld [vmem:[%s383 + $0x410] sm:$0xff]
        %v490 = vld [vmem:[%s383 + $0x418] sm:$0xff]
        %v491 = vld [vmem:[%s383 + $0x420] sm:$0xff]
        %v492 = vld [vmem:[%s383 + $0x428] sm:$0xff]
        %v493 = vld [vmem:[%s383 + $0x438] sm:$0xff]
        %v494 = vld [vmem:[%s383 + $0x440] sm:$0xff]
        %v495 = vld [vmem:[%s383 + $0x448] sm:$0xff]
        %v496 = vld [vmem:[%s383 + $0x450] sm:$0xff]
        %v497 = vld [vmem:[%s383 + $0x460] sm:$0xff]
        %v498 = vld [vmem:[%s383 + $0x468] sm:$0xff]
        %v499 = vld [vmem:[%s383 + $0x470] sm:$0xff]
        %v500 = vld [vmem:[%s383 + $0x478] sm:$0xff]
        %v501 = vld [vmem:[%s383 + $0x488] sm:$0xff]
        %v502 = vld [vmem:[%s383 + $0x490] sm:$0xff]
        %v503 = vld [vmem:[%s383 + $0x498] sm:$0xff]
        %v504 = vld [vmem:[%s383 + $0x4a0] sm:$0xff]
        %v505 = vld [vmem:[%s383 + $0x4b0] sm:$0xff]
        %v506 = vld [vmem:[%s383 + $0x4b8] sm:$0xff]
        %v507 = vld [vmem:[%s383 + $0x4c0] sm:$0xff]
        %v508 = vld [vmem:[%s383 + $0x4c8] sm:$0xff]
        %v509 = vld [vmem:[%s383 + $0x4d8] sm:$0xff]
        %v510 = vld [vmem:[%s383 + $0x4e0] sm:$0xff]
        %v511 = vld [vmem:[%s383 + $0x4e8] sm:$0xff]
        %v512 = vld [vmem:[%s383 + $0x4f0] sm:$0xff]
        %v513 = vpack.c.bf16 %v386, %v385
        %v514 = vpack.c.bf16 %v388, %v387
        %v515 = vpack.c.bf16 %v390, %v389
        %v516 = vpack.c.bf16 %v392, %v391
        %v517 = vpack.c.bf16 %v394, %v393
        %v518 = vpack.c.bf16 %v396, %v395
        %v519 = vpack.c.bf16 %v398, %v397
        %v520 = vpack.c.bf16 %v400, %v399
        %v521 = vpack.c.bf16 %v402, %v401
        %v522 = vpack.c.bf16 %v404, %v403
        %v523 = vpack.c.bf16 %v406, %v405
        %v524 = vpack.c.bf16 %v408, %v407
        %v525 = vpack.c.bf16 %v410, %v409
        %v526 = vpack.c.bf16 %v412, %v411
        %v527 = vpack.c.bf16 %v414, %v413
        %v528 = vpack.c.bf16 %v416, %v415
        %v529 = vpack.c.bf16 %v418, %v417
        %v530 = vpack.c.bf16 %v420, %v419
        %v531 = vpack.c.bf16 %v422, %v421
        %v532 = vpack.c.bf16 %v424, %v423
        %v533 = vpack.c.bf16 %v426, %v425
        %v534 = vpack.c.bf16 %v428, %v427
        %v535 = vpack.c.bf16 %v430, %v429
        %v536 = vpack.c.bf16 %v432, %v431
        %v537 = vpack.c.bf16 %v434, %v433
        %v538 = vpack.c.bf16 %v436, %v435
        %v539 = vpack.c.bf16 %v438, %v437
        %v540 = vpack.c.bf16 %v440, %v439
        %v541 = vpack.c.bf16 %v442, %v441
        %v542 = vpack.c.bf16 %v444, %v443
        %v543 = vpack.c.bf16 %v446, %v445
        %v544 = vpack.c.bf16 %v448, %v447
        %v545 = vpack.c.bf16 %v450, %v449
        %v546 = vpack.c.bf16 %v452, %v451
        %v547 = vpack.c.bf16 %v454, %v453
        %v548 = vpack.c.bf16 %v456, %v455
        %v549 = vpack.c.bf16 %v458, %v457
        %v550 = vpack.c.bf16 %v460, %v459
        %v551 = vpack.c.bf16 %v462, %v461
        %v552 = vpack.c.bf16 %v464, %v463
        %v553 = vpack.c.bf16 %v466, %v465
        %v554 = vpack.c.bf16 %v468, %v467
        %v555 = vpack.c.bf16 %v470, %v469
        %v556 = vpack.c.bf16 %v472, %v471
        %v557 = vpack.c.bf16 %v474, %v473
        %v558 = vpack.c.bf16 %v476, %v475
        %v559 = vpack.c.bf16 %v478, %v477
        %v560 = vpack.c.bf16 %v480, %v479
        %v561 = vpack.c.bf16 %v482, %v481
        %v562 = vpack.c.bf16 %v484, %v483
        %v563 = vpack.c.bf16 %v486, %v485
        %v564 = vpack.c.bf16 %v488, %v487
        %v565 = vpack.c.bf16 %v490, %v489
        %v566 = vpack.c.bf16 %v492, %v491
        %v567 = vpack.c.bf16 %v494, %v493
        %v568 = vpack.c.bf16 %v496, %v495
        %v569 = vpack.c.bf16 %v498, %v497
        %v570 = vpack.c.bf16 %v500, %v499
        %v571 = vpack.c.bf16 %v502, %v501
        %v572 = vpack.c.bf16 %v504, %v503
        %v573 = vpack.c.bf16 %v506, %v505
        %v574 = vpack.c.bf16 %v508, %v507
        %v575 = vpack.c.bf16 %v510, %v509
        %v576 = vpack.c.bf16 %v512, %v511
        %v577 = vld [vmem:[%s1] sm:$0x3]
        %v578 = vld [vmem:[%s383 + $0x1] sm:$0xff]
        %v579 = vld [vmem:[%s383 + $0x9] sm:$0xff]
        %v580 = vld [vmem:[%s383 + $0x11] sm:$0xff]
        %v581 = vld [vmem:[%s383 + $0x19] sm:$0xff]
        %v582 = vld [vmem:[%s383 + $0x29] sm:$0xff]
        %v583 = vld [vmem:[%s383 + $0x31] sm:$0xff]
        %v584 = vld [vmem:[%s383 + $0x39] sm:$0xff]
        %v585 = vld [vmem:[%s383 + $0x41] sm:$0xff]
        %v586 = vld [vmem:[%s383 + $0x51] sm:$0xff]
        %v587 = vld [vmem:[%s383 + $0x59] sm:$0xff]
        %v588 = vld [vmem:[%s383 + $0x61] sm:$0xff]
        %v589 = vld [vmem:[%s383 + $0x69] sm:$0xff]
        %v590 = vld [vmem:[%s383 + $0x79] sm:$0xff]
        %v591 = vld [vmem:[%s383 + $0x81] sm:$0xff]
        %v592 = vld [vmem:[%s383 + $0x89] sm:$0xff]
        %v593 = vld [vmem:[%s383 + $0x91] sm:$0xff]
        %v594 = vld [vmem:[%s383 + $0xa1] sm:$0xff]
        %v595 = vld [vmem:[%s383 + $0xa9] sm:$0xff]
        %v596 = vld [vmem:[%s383 + $0xb1] sm:$0xff]
        %v597 = vld [vmem:[%s383 + $0xb9] sm:$0xff]
        %v598 = vld [vmem:[%s383 + $0xc9] sm:$0xff]
        %v599 = vld [vmem:[%s383 + $0xd1] sm:$0xff]
        %v600 = vld [vmem:[%s383 + $0xd9] sm:$0xff]
        %v601 = vld [vmem:[%s383 + $0xe1] sm:$0xff]
        %v602 = vld [vmem:[%s383 + $0xf1] sm:$0xff]
        %v603 = vld [vmem:[%s383 + $0xf9] sm:$0xff]
        %v604 = vld [vmem:[%s383 + $0x101] sm:$0xff]
        %v605 = vld [vmem:[%s383 + $0x109] sm:$0xff]
        %v606 = vld [vmem:[%s383 + $0x119] sm:$0xff]
        %v607 = vld [vmem:[%s383 + $0x121] sm:$0xff]
        %v608 = vld [vmem:[%s383 + $0x129] sm:$0xff]
        %v609 = vld [vmem:[%s383 + $0x131] sm:$0xff]
        %v610 = vld [vmem:[%s383 + $0x141] sm:$0xff]
        %v611 = vld [vmem:[%s383 + $0x149] sm:$0xff]
        %v612 = vld [vmem:[%s383 + $0x151] sm:$0xff]
        %v613 = vld [vmem:[%s383 + $0x159] sm:$0xff]
        %v614 = vld [vmem:[%s383 + $0x169] sm:$0xff]
        %v615 = vld [vmem:[%s383 + $0x171] sm:$0xff]
        %v616 = vld [vmem:[%s383 + $0x179] sm:$0xff]
        %v617 = vld [vmem:[%s383 + $0x181] sm:$0xff]
        %v618 = vld [vmem:[%s383 + $0x191] sm:$0xff]
        %v619 = vld [vmem:[%s383 + $0x199] sm:$0xff]
        %v620 = vld [vmem:[%s383 + $0x1a1] sm:$0xff]
        %v621 = vld [vmem:[%s383 + $0x1a9] sm:$0xff]
        %v622 = vld [vmem:[%s383 + $0x1b9] sm:$0xff]
        %v623 = vld [vmem:[%s383 + $0x1c1] sm:$0xff]
        %v624 = vld [vmem:[%s383 + $0x1c9] sm:$0xff]
        %v625 = vld [vmem:[%s383 + $0x1d1] sm:$0xff]
        %v626 = vld [vmem:[%s383 + $0x1e1] sm:$0xff]
        %v627 = vld [vmem:[%s383 + $0x1e9] sm:$0xff]
        %v628 = vld [vmem:[%s383 + $0x1f1] sm:$0xff]
        %v629 = vld [vmem:[%s383 + $0x1f9] sm:$0xff]
        %v630 = vld [vmem:[%s383 + $0x209] sm:$0xff]
        %v631 = vld [vmem:[%s383 + $0x211] sm:$0xff]
        %v632 = vld [vmem:[%s383 + $0x219] sm:$0xff]
        %v633 = vld [vmem:[%s383 + $0x221] sm:$0xff]
        %v634 = vld [vmem:[%s383 + $0x231] sm:$0xff]
        %v635 = vld [vmem:[%s383 + $0x239] sm:$0xff]
        %v636 = vld [vmem:[%s383 + $0x241] sm:$0xff]
        %v637 = vld [vmem:[%s383 + $0x249] sm:$0xff]
        %v638 = vld [vmem:[%s383 + $0x259] sm:$0xff]
        %v639 = vld [vmem:[%s383 + $0x261] sm:$0xff]
        %v640 = vld [vmem:[%s383 + $0x269] sm:$0xff]
        %v641 = vld [vmem:[%s383 + $0x271] sm:$0xff]
        %v642 = vld [vmem:[%s383 + $0x281] sm:$0xff]
        %v643 = vld [vmem:[%s383 + $0x289] sm:$0xff]
        %v644 = vld [vmem:[%s383 + $0x291] sm:$0xff]
        %v645 = vld [vmem:[%s383 + $0x299] sm:$0xff]
        %v646 = vld [vmem:[%s383 + $0x2a9] sm:$0xff]
        %v647 = vld [vmem:[%s383 + $0x2b1] sm:$0xff]
        %v648 = vld [vmem:[%s383 + $0x2b9] sm:$0xff]
        %v649 = vld [vmem:[%s383 + $0x2c1] sm:$0xff]
        %v650 = vld [vmem:[%s383 + $0x2d1] sm:$0xff]
        %v651 = vld [vmem:[%s383 + $0x2d9] sm:$0xff]
        %v652 = vld [vmem:[%s383 + $0x2e1] sm:$0xff]
        %v653 = vld [vmem:[%s383 + $0x2e9] sm:$0xff]
        %v654 = vld [vmem:[%s383 + $0x2f9] sm:$0xff]
        %v655 = vld [vmem:[%s383 + $0x301] sm:$0xff]
        %v656 = vld [vmem:[%s383 + $0x309] sm:$0xff]
        %v657 = vld [vmem:[%s383 + $0x311] sm:$0xff]
        %v658 = vld [vmem:[%s383 + $0x321] sm:$0xff]
        %v659 = vld [vmem:[%s383 + $0x329] sm:$0xff]
        %v660 = vld [vmem:[%s383 + $0x331] sm:$0xff]
        %v661 = vld [vmem:[%s383 + $0x339] sm:$0xff]
        %v662 = vld [vmem:[%s383 + $0x349] sm:$0xff]
        %v663 = vld [vmem:[%s383 + $0x351] sm:$0xff]
        %v664 = vld [vmem:[%s383 + $0x359] sm:$0xff]
        %v665 = vld [vmem:[%s383 + $0x361] sm:$0xff]
        %v666 = vld [vmem:[%s383 + $0x371] sm:$0xff]
        %v667 = vld [vmem:[%s383 + $0x379] sm:$0xff]
        %v668 = vld [vmem:[%s383 + $0x381] sm:$0xff]
        %v669 = vld [vmem:[%s383 + $0x389] sm:$0xff]
        %v670 = vld [vmem:[%s383 + $0x399] sm:$0xff]
        %v671 = vld [vmem:[%s383 + $0x3a1] sm:$0xff]
        %v672 = vld [vmem:[%s383 + $0x3a9] sm:$0xff]
        %v673 = vld [vmem:[%s383 + $0x3b1] sm:$0xff]
        %v674 = vld [vmem:[%s383 + $0x3c1] sm:$0xff]
        %v675 = vld [vmem:[%s383 + $0x3c9] sm:$0xff]
        %v676 = vld [vmem:[%s383 + $0x3d1] sm:$0xff]
        %v677 = vld [vmem:[%s383 + $0x3d9] sm:$0xff]
        %v678 = vld [vmem:[%s383 + $0x3e9] sm:$0xff]
        %v679 = vld [vmem:[%s383 + $0x3f1] sm:$0xff]
        %v680 = vld [vmem:[%s383 + $0x3f9] sm:$0xff]
        %v681 = vld [vmem:[%s383 + $0x401] sm:$0xff]
        %v682 = vld [vmem:[%s383 + $0x411] sm:$0xff]
        %v683 = vld [vmem:[%s383 + $0x419] sm:$0xff]
        %v684 = vld [vmem:[%s383 + $0x421] sm:$0xff]
        %v685 = vld [vmem:[%s383 + $0x429] sm:$0xff]
        %v686 = vld [vmem:[%s383 + $0x439] sm:$0xff]
        %v687 = vld [vmem:[%s383 + $0x441] sm:$0xff]
        %v688 = vld [vmem:[%s383 + $0x449] sm:$0xff]
        %v689 = vld [vmem:[%s383 + $0x451] sm:$0xff]
        %v690 = vld [vmem:[%s383 + $0x461] sm:$0xff]
        %v691 = vld [vmem:[%s383 + $0x469] sm:$0xff]
        %v692 = vld [vmem:[%s383 + $0x471] sm:$0xff]
        %v693 = vld [vmem:[%s383 + $0x479] sm:$0xff]
        %v694 = vld [vmem:[%s383 + $0x489] sm:$0xff]
        %v695 = vld [vmem:[%s383 + $0x491] sm:$0xff]
        %v696 = vld [vmem:[%s383 + $0x499] sm:$0xff]
        %v697 = vld [vmem:[%s383 + $0x4a1] sm:$0xff]
        %v698 = vld [vmem:[%s383 + $0x4b1] sm:$0xff]
        %v699 = vld [vmem:[%s383 + $0x4b9] sm:$0xff]
        %v700 = vld [vmem:[%s383 + $0x4c1] sm:$0xff]
        %v701 = vld [vmem:[%s383 + $0x4c9] sm:$0xff]
        %v702 = vld [vmem:[%s383 + $0x4d9] sm:$0xff]
        %v703 = vld [vmem:[%s383 + $0x4e1] sm:$0xff]
        %v704 = vld [vmem:[%s383 + $0x4e9] sm:$0xff]
        %v705 = vld [vmem:[%s383 + $0x4f1] sm:$0xff]
        %v706 = vpack.c.bf16 %v579, %v578
        %v707 = vpack.c.bf16 %v581, %v580
        %v708 = vpack.c.bf16 %v583, %v582
        %v709 = vpack.c.bf16 %v585, %v584
        %v710 = vpack.c.bf16 %v587, %v586
        %v711 = vpack.c.bf16 %v589, %v588
        %v712 = vpack.c.bf16 %v591, %v590
        %v713 = vpack.c.bf16 %v593, %v592
        %v714 = vpack.c.bf16 %v595, %v594
        %v715 = vpack.c.bf16 %v597, %v596
        %v716 = vpack.c.bf16 %v599, %v598
        %v717 = vpack.c.bf16 %v601, %v600
        %v718 = vpack.c.bf16 %v603, %v602
        %v719 = vpack.c.bf16 %v605, %v604
        %v720 = vpack.c.bf16 %v607, %v606
        %v721 = vpack.c.bf16 %v609, %v608
        %v722 = vpack.c.bf16 %v611, %v610
        %v723 = vpack.c.bf16 %v613, %v612
        %v724 = vpack.c.bf16 %v615, %v614
        %v725 = vpack.c.bf16 %v617, %v616
        %v726 = vpack.c.bf16 %v619, %v618
        %v727 = vpack.c.bf16 %v621, %v620
        %v728 = vpack.c.bf16 %v623, %v622
        %v729 = vpack.c.bf16 %v625, %v624
        %v730 = vpack.c.bf16 %v627, %v626
        %v731 = vpack.c.bf16 %v629, %v628
        %v732 = vpack.c.bf16 %v631, %v630
        %v733 = vpack.c.bf16 %v633, %v632
        %v734 = vpack.c.bf16 %v635, %v634
        %v735 = vpack.c.bf16 %v637, %v636
        %v736 = vpack.c.bf16 %v639, %v638
        %v737 = vpack.c.bf16 %v641, %v640
        %v738 = vpack.c.bf16 %v643, %v642
        %v739 = vpack.c.bf16 %v645, %v644
        %v740 = vpack.c.bf16 %v647, %v646
        %v741 = vpack.c.bf16 %v649, %v648
        %v742 = vpack.c.bf16 %v651, %v650
        %v743 = vpack.c.bf16 %v653, %v652
        %v744 = vpack.c.bf16 %v655, %v654
        %v745 = vpack.c.bf16 %v657, %v656
        %v746 = vpack.c.bf16 %v659, %v658
        %v747 = vpack.c.bf16 %v661, %v660
        %v748 = vpack.c.bf16 %v663, %v662
        %v749 = vpack.c.bf16 %v665, %v664
        %v750 = vpack.c.bf16 %v667, %v666
        %v751 = vpack.c.bf16 %v669, %v668
        %v752 = vpack.c.bf16 %v671, %v670
        %v753 = vpack.c.bf16 %v673, %v672
        %v754 = vpack.c.bf16 %v675, %v674
        %v755 = vpack.c.bf16 %v677, %v676
        %v756 = vpack.c.bf16 %v679, %v678
        %v757 = vpack.c.bf16 %v681, %v680
        %v758 = vpack.c.bf16 %v683, %v682
        %v759 = vpack.c.bf16 %v685, %v684
        %v760 = vpack.c.bf16 %v687, %v686
        %v761 = vpack.c.bf16 %v689, %v688
        %v762 = vpack.c.bf16 %v691, %v690
        %v763 = vpack.c.bf16 %v693, %v692
        %v764 = vpack.c.bf16 %v695, %v694
        %v765 = vpack.c.bf16 %v697, %v696
        %v766 = vpack.c.bf16 %v699, %v698
        %v767 = vpack.c.bf16 %v701, %v700
        %v768 = vpack.c.bf16 %v703, %v702
        %v769 = vpack.c.bf16 %v705, %v704
        %s770 = scalar_lea.vmem %s1, 2
        %v771 = vld [vmem:[%s770] sm:$0x3]
        %vm772 = vcmask 23552
        %v774 = vsel %vm772, %v706, 0
        %v777 = vsel %vm772, %v707, 0
        %v780 = vsel %vm772, %v708, 0
        %v783 = vsel %vm772, %v709, 0
        %v786 = vsel %vm772, %v710, 0
        %v789 = vsel %vm772, %v711, 0
        %v792 = vsel %vm772, %v712, 0
        %v795 = vsel %vm772, %v713, 0
        %v798 = vsel %vm772, %v714, 0
        %v801 = vsel %vm772, %v715, 0
        %v804 = vsel %vm772, %v716, 0
        %v807 = vsel %vm772, %v717, 0
        %v810 = vsel %vm772, %v718, 0
        %v813 = vsel %vm772, %v719, 0
        %v816 = vsel %vm772, %v720, 0
        %v819 = vsel %vm772, %v721, 0
        %v822 = vsel %vm772, %v722, 0
        %v825 = vsel %vm772, %v723, 0
        %v828 = vsel %vm772, %v724, 0
        %v831 = vsel %vm772, %v725, 0
        %v834 = vsel %vm772, %v726, 0
        %v837 = vsel %vm772, %v727, 0
        %v840 = vsel %vm772, %v728, 0
        %v843 = vsel %vm772, %v729, 0
        %v846 = vsel %vm772, %v730, 0
        %v849 = vsel %vm772, %v731, 0
        %v852 = vsel %vm772, %v732, 0
        %v855 = vsel %vm772, %v733, 0
        %v858 = vsel %vm772, %v734, 0
        %v861 = vsel %vm772, %v735, 0
        %v864 = vsel %vm772, %v736, 0
        %v867 = vsel %vm772, %v737, 0
        %v870 = vsel %vm772, %v738, 0
        %v873 = vsel %vm772, %v739, 0
        %v876 = vsel %vm772, %v740, 0
        %v879 = vsel %vm772, %v741, 0
        %v882 = vsel %vm772, %v742, 0
        %v885 = vsel %vm772, %v743, 0
        %v888 = vsel %vm772, %v744, 0
        %v891 = vsel %vm772, %v745, 0
        %v894 = vsel %vm772, %v746, 0
        %v897 = vsel %vm772, %v747, 0
        %v900 = vsel %vm772, %v748, 0
        %v903 = vsel %vm772, %v749, 0
        %v906 = vsel %vm772, %v750, 0
        %v909 = vsel %vm772, %v751, 0
        %v912 = vsel %vm772, %v752, 0
        %v915 = vsel %vm772, %v753, 0
        %v918 = vsel %vm772, %v754, 0
        %v921 = vsel %vm772, %v755, 0
        %v924 = vsel %vm772, %v756, 0
        %v927 = vsel %vm772, %v757, 0
        %v930 = vsel %vm772, %v758, 0
        %v933 = vsel %vm772, %v759, 0
        %v936 = vsel %vm772, %v760, 0
        %v939 = vsel %vm772, %v761, 0
        %v942 = vsel %vm772, %v762, 0
        %v945 = vsel %vm772, %v763, 0
        %v948 = vsel %vm772, %v764, 0
        %v951 = vsel %vm772, %v765, 0
        %v954 = vsel %vm772, %v766, 0
        %v957 = vsel %vm772, %v767, 0
        %v960 = vsel %vm772, %v768, 0
        %v963 = vsel %vm772, %v769, 0
        %vm965 = vcmask 1040384
        %vm966 = vcmask 1041408
        %v967 = vsel %vm965, 4294967295, 65535
        %v968 = vsel %vm966, %v967, 0
        %v970 = vand.u32 %v771, %v968
        %972 = vmatprep.subr.bf16.mxu0 0
        %973 = vmatpush1.bf16.msra.mxu0 %v970
        %974 = vmatprep.subr.bf16.mxu0 0
        %975 = vmatpush1.bf16.msra.mxu0 0
        %976 = vmatprep.subr.bf16.mxu0 0
        %977 = vmatpush1.bf16.msra.mxu0 0
        %978 = vmatprep.subr.bf16.mxu0 0
        %979 = vmatpush1.bf16.msra.mxu0 0
        %980 = vmatprep.subr.bf16.mxu0 0
        %981 = vmatpush1.bf16.msra.mxu0 0
        %982 = vmatprep.subr.bf16.mxu0 0
        %983 = vmatpush1.bf16.msra.mxu0 0
        %984 = vmatprep.subr.bf16.mxu0 0
        %985 = vmatpush1.bf16.msra.mxu0 0
        %986 = vmatprep.subr.bf16.mxu0 0
        %987 = vmatpush1.bf16.msra.mxu0 0
        %988 = vmatprep.subr.bf16.mxu0 0
        %989 = vmatpush1.bf16.msra.mxu0 0
        %990 = vmatprep.subr.bf16.mxu0 0
        %991 = vmatpush1.bf16.msra.mxu0 0
        %992 = vmatprep.subr.bf16.mxu0 0
        %993 = vmatpush1.bf16.msra.mxu0 0
        %994 = vmatprep.subr.bf16.mxu0 0
        %995 = vmatpush1.bf16.msra.mxu0 0
        %996 = vmatprep.subr.bf16.mxu0 0
        %997 = vmatpush1.bf16.msra.mxu0 0
        %998 = vmatprep.subr.bf16.mxu0 0
        %999 = vmatpush1.bf16.msra.mxu0 0
        %1000 = vmatprep.subr.bf16.mxu0 0
        %1001 = vmatpush1.bf16.msra.mxu0 0
        %1002 = vmatprep.subr.bf16.mxu0 0
        %1003 = vmatpush1.bf16.msra.mxu0 0
        %1004 = vmatprep.mubr.bf16.mxu0 0
        %1005 = vmatmul.mubr.bf16.gmra.mrb[0].mxu0 %v774
        %v1006 = vpop.f32.mrb[0].mxu0
        %v1007 = vadd.f32 0.0, %v1006
        %v1008 = vpop.f32.mrb[0].mxu0
        %v1009 = vpop.f32.mrb[0].mxu0
        %v1010 = vadd.f32 0.0, %v1009
        %v1011 = vpop.f32.mrb[0].mxu0
        %1012 = vmatprep.mubr.bf16.mxu0 0
        %1013 = vmatmul.mubr.bf16.gmra.mrb[0].mxu0 %v777
        %v1014 = vpop.f32.mrb[0].mxu0
        %v1015 = vadd.f32 0.0, %v1014
        %v1016 = vpop.f32.mrb[0].mxu0
        %v1017 = vpop.f32.mrb[0].mxu0
        %v1018 = vadd.f32 0.0, %v1017
        %v1019 = vpop.f32.mrb[0].mxu0
        %1020 = vmatprep.mubr.bf16.mxu0 0
        %1021 = vmatmul.mubr.bf16.gmra.mrb[0].mxu0 %v780
        %v1022 = vpop.f32.mrb[0].mxu0
        %v1023 = vadd.f32 0.0, %v1022
        %v1024 = vpop.f32.mrb[0].mxu0
        %v1025 = vpop.f32.mrb[0].mxu0
        %v1026 = vadd.f32 0.0, %v1025
        %v1027 = vpop.f32.mrb[0].mxu0
        %1028 = vmatprep.mubr.bf16.mxu0 0
        %1029 = vmatmul.mubr.bf16.gmra.mrb[0].mxu0 %v783
        %v1030 = vpop.f32.mrb[0].mxu0
        %v1031 = vadd.f32 0.0, %v1030
        %v1032 = vpop.f32.mrb[0].mxu0
        %v1033 = vpop.f32.mrb[0].mxu0
        %v1034 = vadd.f32 0.0, %v1033
        %v1035 = vpop.f32.mrb[0].mxu0
        %1036 = vmatprep.mubr.bf16.mxu0 0
        %1037 = vmatmul.mubr.bf16.gmra.mrb[0].mxu0 %v786
        %v1038 = vpop.f32.mrb[0].mxu0
        %v1039 = vadd.f32 0.0, %v1038
        %v1040 = vpop.f32.mrb[0].mxu0
        %v1041 = vpop.f32.mrb[0].mxu0
        %v1042 = vadd.f32 0.0, %v1041
        %v1043 = vpop.f32.mrb[0].mxu0
        %1044 = vmatprep.mubr.bf16.mxu0 0
        %1045 = vmatmul.mubr.bf16.gmra.mrb[0].mxu0 %v789
        %v1046 = vpop.f32.mrb[0].mxu0
        %v1047 = vadd.f32 0.0, %v1046
        %v1048 = vpop.f32.mrb[0].mxu0
        %v1049 = vpop.f32.mrb[0].mxu0
        %v1050 = vadd.f32 0.0, %v1049
        %v1051 = vpop.f32.mrb[0].mxu0
        %1052 = vmatprep.mubr.bf16.mxu0 0
        %1053 = vmatmul.mubr.bf16.gmra.mrb[0].mxu0 %v792
        %v1054 = vpop.f32.mrb[0].mxu0
        %v1055 = vadd.f32 0.0, %v1054
        %v1056 = vpop.f32.mrb[0].mxu0
        %v1057 = vpop.f32.mrb[0].mxu0
        %v1058 = vadd.f32 0.0, %v1057
        %v1059 = vpop.f32.mrb[0].mxu0
        %1060 = vmatprep.mubr.bf16.mxu0 0
        %1061 = vmatmul.mubr.bf16.gmra.mrb[0].mxu0 %v795
        %v1062 = vpop.f32.mrb[0].mxu0
        %v1063 = vadd.f32 0.0, %v1062
        %v1064 = vpop.f32.mrb[0].mxu0
        %v1065 = vpop.f32.mrb[0].mxu0
        %v1066 = vadd.f32 0.0, %v1065
        %v1067 = vpop.f32.mrb[0].mxu0
        %1068 = vmatprep.mubr.bf16.mxu0 0
        %1069 = vmatmul.mubr.bf16.gmra.mrb[0].mxu0 %v798
        %v1070 = vpop.f32.mrb[0].mxu0
        %v1071 = vadd.f32 0.0, %v1070
        %v1072 = vpop.f32.mrb[0].mxu0
        %v1073 = vpop.f32.mrb[0].mxu0
        %v1074 = vadd.f32 0.0, %v1073
        %v1075 = vpop.f32.mrb[0].mxu0
        %1076 = vmatprep.mubr.bf16.mxu0 0
        %1077 = vmatmul.mubr.bf16.gmra.mrb[0].mxu0 %v801
        %v1078 = vpop.f32.mrb[0].mxu0
        %v1079 = vadd.f32 0.0, %v1078
        %v1080 = vpop.f32.mrb[0].mxu0
        %v1081 = vpop.f32.mrb[0].mxu0
        %v1082 = vadd.f32 0.0, %v1081
        %v1083 = vpop.f32.mrb[0].mxu0
        %1084 = vmatprep.mubr.bf16.mxu0 0
        %1085 = vmatmul.mubr.bf16.gmra.mrb[0].mxu0 %v804
        %v1086 = vpop.f32.mrb[0].mxu0
        %v1087 = vadd.f32 0.0, %v1086
        %v1088 = vpop.f32.mrb[0].mxu0
        %v1089 = vpop.f32.mrb[0].mxu0
        %v1090 = vadd.f32 0.0, %v1089
        %v1091 = vpop.f32.mrb[0].mxu0
        %1092 = vmatprep.mubr.bf16.mxu0 0
        %1093 = vmatmul.mubr.bf16.gmra.mrb[0].mxu0 %v807
        %v1094 = vpop.f32.mrb[0].mxu0
        %v1095 = vadd.f32 0.0, %v1094
        %v1096 = vpop.f32.mrb[0].mxu0
        %v1097 = vpop.f32.mrb[0].mxu0
        %v1098 = vadd.f32 0.0, %v1097
        %v1099 = vpop.f32.mrb[0].mxu0
        %1100 = vmatprep.mubr.bf16.mxu0 0
        %1101 = vmatmul.mubr.bf16.gmra.mrb[0].mxu0 %v810
        %v1102 = vpop.f32.mrb[0].mxu0
        %v1103 = vadd.f32 0.0, %v1102
        %v1104 = vpop.f32.mrb[0].mxu0
        %v1105 = vpop.f32.mrb[0].mxu0
        %v1106 = vadd.f32 0.0, %v1105
        %v1107 = vpop.f32.mrb[0].mxu0
        %1108 = vmatprep.mubr.bf16.mxu0 0
        %1109 = vmatmul.mubr.bf16.gmra.mrb[0].mxu0 %v813
        %v1110 = vpop.f32.mrb[0].mxu0
        %v1111 = vadd.f32 0.0, %v1110
        %v1112 = vpop.f32.mrb[0].mxu0
        %v1113 = vpop.f32.mrb[0].mxu0
        %v1114 = vadd.f32 0.0, %v1113
        %v1115 = vpop.f32.mrb[0].mxu0
        %1116 = vmatprep.mubr.bf16.mxu0 0
        %1117 = vmatmul.mubr.bf16.gmra.mrb[0].mxu0 %v816
        %v1118 = vpop.f32.mrb[0].mxu0
        %v1119 = vadd.f32 0.0, %v1118
        %v1120 = vpop.f32.mrb[0].mxu0
        %v1121 = vpop.f32.mrb[0].mxu0
        %v1122 = vadd.f32 0.0, %v1121
        %v1123 = vpop.f32.mrb[0].mxu0
        %1124 = vmatprep.mubr.bf16.mxu0 0
        %1125 = vmatmul.mubr.bf16.gmra.mrb[0].mxu0 %v819
        %v1126 = vpop.f32.mrb[0].mxu0
        %v1127 = vadd.f32 0.0, %v1126
        %v1128 = vpop.f32.mrb[0].mxu0
        %v1129 = vpop.f32.mrb[0].mxu0
        %v1130 = vadd.f32 0.0, %v1129
        %v1131 = vpop.f32.mrb[0].mxu0
        %1132 = vmatprep.mubr.bf16.mxu0 0
        %1133 = vmatmul.mubr.bf16.gmra.mrb[0].mxu0 %v822
        %v1134 = vpop.f32.mrb[0].mxu0
        %v1135 = vadd.f32 0.0, %v1134
        %v1136 = vpop.f32.mrb[0].mxu0
        %v1137 = vpop.f32.mrb[0].mxu0
        %v1138 = vadd.f32 0.0, %v1137
        %v1139 = vpop.f32.mrb[0].mxu0
        %1140 = vmatprep.mubr.bf16.mxu0 0
        %1141 = vmatmul.mubr.bf16.gmra.mrb[0].mxu0 %v825
        %v1142 = vpop.f32.mrb[0].mxu0
        %v1143 = vadd.f32 0.0, %v1142
        %v1144 = vpop.f32.mrb[0].mxu0
        %v1145 = vpop.f32.mrb[0].mxu0
        %v1146 = vadd.f32 0.0, %v1145
        %v1147 = vpop.f32.mrb[0].mxu0
        %1148 = vmatprep.mubr.bf16.mxu0 0
        %1149 = vmatmul.mubr.bf16.gmra.mrb[0].mxu0 %v828
        %v1150 = vpop.f32.mrb[0].mxu0
        %v1151 = vadd.f32 0.0, %v1150
        %v1152 = vpop.f32.mrb[0].mxu0
        %v1153 = vpop.f32.mrb[0].mxu0
        %v1154 = vadd.f32 0.0, %v1153
        %v1155 = vpop.f32.mrb[0].mxu0
        %1156 = vmatprep.mubr.bf16.mxu0 0
        %1157 = vmatmul.mubr.bf16.gmra.mrb[0].mxu0 %v831
        %v1158 = vpop.f32.mrb[0].mxu0
        %v1159 = vadd.f32 0.0, %v1158
        %v1160 = vpop.f32.mrb[0].mxu0
        %v1161 = vpop.f32.mrb[0].mxu0
        %v1162 = vadd.f32 0.0, %v1161
        %v1163 = vpop.f32.mrb[0].mxu0
        %1164 = vmatprep.mubr.bf16.mxu0 0
        %1165 = vmatmul.mubr.bf16.gmra.mrb[0].mxu0 %v834
        %v1166 = vpop.f32.mrb[0].mxu0
        %v1167 = vadd.f32 0.0, %v1166
        %v1168 = vpop.f32.mrb[0].mxu0
        %v1169 = vpop.f32.mrb[0].mxu0
        %v1170 = vadd.f32 0.0, %v1169
        %v1171 = vpop.f32.mrb[0].mxu0
        %1172 = vmatprep.mubr.bf16.mxu0 0
        %1173 = vmatmul.mubr.bf16.gmra.mrb[0].mxu0 %v837
        %v1174 = vpop.f32.mrb[0].mxu0
        %v1175 = vadd.f32 0.0, %v1174
        %v1176 = vpop.f32.mrb[0].mxu0
        %v1177 = vpop.f32.mrb[0].mxu0
        %v1178 = vadd.f32 0.0, %v1177
        %v1179 = vpop.f32.mrb[0].mxu0
        %1180 = vmatprep.mubr.bf16.mxu0 0
        %1181 = vmatmul.mubr.bf16.gmra.mrb[0].mxu0 %v840
        %v1182 = vpop.f32.mrb[0].mxu0
        %v1183 = vadd.f32 0.0, %v1182
        %v1184 = vpop.f32.mrb[0].mxu0
        %v1185 = vpop.f32.mrb[0].mxu0
        %v1186 = vadd.f32 0.0, %v1185
        %v1187 = vpop.f32.mrb[0].mxu0
        %1188 = vmatprep.mubr.bf16.mxu0 0
        %1189 = vmatmul.mubr.bf16.gmra.mrb[0].mxu0 %v843
        %v1190 = vpop.f32.mrb[0].mxu0
        %v1191 = vadd.f32 0.0, %v1190
        %v1192 = vpop.f32.mrb[0].mxu0
        %v1193 = vpop.f32.mrb[0].mxu0
        %v1194 = vadd.f32 0.0, %v1193
        %v1195 = vpop.f32.mrb[0].mxu0
        %1196 = vmatprep.mubr.bf16.mxu0 0
        %1197 = vmatmul.mubr.bf16.gmra.mrb[0].mxu0 %v846
        %v1198 = vpop.f32.mrb[0].mxu0
        %v1199 = vadd.f32 0.0, %v1198
        %v1200 = vpop.f32.mrb[0].mxu0
        %v1201 = vpop.f32.mrb[0].mxu0
        %v1202 = vadd.f32 0.0, %v1201
        %v1203 = vpop.f32.mrb[0].mxu0
        %1204 = vmatprep.mubr.bf16.mxu0 0
        %1205 = vmatmul.mubr.bf16.gmra.mrb[0].mxu0 %v849
        %v1206 = vpop.f32.mrb[0].mxu0
        %v1207 = vadd.f32 0.0, %v1206
        %v1208 = vpop.f32.mrb[0].mxu0
        %v1209 = vpop.f32.mrb[0].mxu0
        %v1210 = vadd.f32 0.0, %v1209
        %v1211 = vpop.f32.mrb[0].mxu0
        %1212 = vmatprep.mubr.bf16.mxu0 0
        %1213 = vmatmul.mubr.bf16.gmra.mrb[0].mxu0 %v852
        %v1214 = vpop.f32.mrb[0].mxu0
        %v1215 = vadd.f32 0.0, %v1214
        %v1216 = vpop.f32.mrb[0].mxu0
        %v1217 = vpop.f32.mrb[0].mxu0
        %v1218 = vadd.f32 0.0, %v1217
        %v1219 = vpop.f32.mrb[0].mxu0
        %1220 = vmatprep.mubr.bf16.mxu0 0
        %1221 = vmatmul.mubr.bf16.gmra.mrb[0].mxu0 %v855
        %v1222 = vpop.f32.mrb[0].mxu0
        %v1223 = vadd.f32 0.0, %v1222
        %v1224 = vpop.f32.mrb[0].mxu0
        %v1225 = vpop.f32.mrb[0].mxu0
        %v1226 = vadd.f32 0.0, %v1225
        %v1227 = vpop.f32.mrb[0].mxu0
        %1228 = vmatprep.mubr.bf16.mxu0 0
        %1229 = vmatmul.mubr.bf16.gmra.mrb[0].mxu0 %v858
        %v1230 = vpop.f32.mrb[0].mxu0
        %v1231 = vadd.f32 0.0, %v1230
        %v1232 = vpop.f32.mrb[0].mxu0
        %v1233 = vpop.f32.mrb[0].mxu0
        %v1234 = vadd.f32 0.0, %v1233
        %v1235 = vpop.f32.mrb[0].mxu0
        %1236 = vmatprep.mubr.bf16.mxu0 0
        %1237 = vmatmul.mubr.bf16.gmra.mrb[0].mxu0 %v861
        %v1238 = vpop.f32.mrb[0].mxu0
        %v1239 = vadd.f32 0.0, %v1238
        %v1240 = vpop.f32.mrb[0].mxu0
        %v1241 = vpop.f32.mrb[0].mxu0
        %v1242 = vadd.f32 0.0, %v1241
        %v1243 = vpop.f32.mrb[0].mxu0
        %1244 = vmatprep.mubr.bf16.mxu0 0
        %1245 = vmatmul.mubr.bf16.gmra.mrb[0].mxu0 %v864
        %v1246 = vpop.f32.mrb[0].mxu0
        %v1247 = vadd.f32 0.0, %v1246
        %v1248 = vpop.f32.mrb[0].mxu0
        %v1249 = vpop.f32.mrb[0].mxu0
        %v1250 = vadd.f32 0.0, %v1249
        %v1251 = vpop.f32.mrb[0].mxu0
        %1252 = vmatprep.mubr.bf16.mxu0 0
        %1253 = vmatmul.mubr.bf16.gmra.mrb[0].mxu0 %v867
        %v1254 = vpop.f32.mrb[0].mxu0
        %v1255 = vadd.f32 0.0, %v1254
        %v1256 = vpop.f32.mrb[0].mxu0
        %v1257 = vpop.f32.mrb[0].mxu0
        %v1258 = vadd.f32 0.0, %v1257
        %v1259 = vpop.f32.mrb[0].mxu0
        %1260 = vmatprep.mubr.bf16.mxu0 0
        %1261 = vmatmul.mubr.bf16.gmra.mrb[0].mxu0 %v870
        %v1262 = vpop.f32.mrb[0].mxu0
        %v1263 = vadd.f32 0.0, %v1262
        %v1264 = vpop.f32.mrb[0].mxu0
        %v1265 = vpop.f32.mrb[0].mxu0
        %v1266 = vadd.f32 0.0, %v1265
        %v1267 = vpop.f32.mrb[0].mxu0
        %1268 = vmatprep.mubr.bf16.mxu0 0
        %1269 = vmatmul.mubr.bf16.gmra.mrb[0].mxu0 %v873
        %v1270 = vpop.f32.mrb[0].mxu0
        %v1271 = vadd.f32 0.0, %v1270
        %v1272 = vpop.f32.mrb[0].mxu0
        %v1273 = vpop.f32.mrb[0].mxu0
        %v1274 = vadd.f32 0.0, %v1273
        %v1275 = vpop.f32.mrb[0].mxu0
        %1276 = vmatprep.mubr.bf16.mxu0 0
        %1277 = vmatmul.mubr.bf16.gmra.mrb[0].mxu0 %v876
        %v1278 = vpop.f32.mrb[0].mxu0
        %v1279 = vadd.f32 0.0, %v1278
        %v1280 = vpop.f32.mrb[0].mxu0
        %v1281 = vpop.f32.mrb[0].mxu0
        %v1282 = vadd.f32 0.0, %v1281
        %v1283 = vpop.f32.mrb[0].mxu0
        %1284 = vmatprep.mubr.bf16.mxu0 0
        %1285 = vmatmul.mubr.bf16.gmra.mrb[0].mxu0 %v879
        %v1286 = vpop.f32.mrb[0].mxu0
        %v1287 = vadd.f32 0.0, %v1286
        %v1288 = vpop.f32.mrb[0].mxu0
        %v1289 = vpop.f32.mrb[0].mxu0
        %v1290 = vadd.f32 0.0, %v1289
        %v1291 = vpop.f32.mrb[0].mxu0
        %1292 = vmatprep.mubr.bf16.mxu0 0
        %1293 = vmatmul.mubr.bf16.gmra.mrb[0].mxu0 %v882
        %v1294 = vpop.f32.mrb[0].mxu0
        %v1295 = vadd.f32 0.0, %v1294
        %v1296 = vpop.f32.mrb[0].mxu0
        %v1297 = vpop.f32.mrb[0].mxu0
        %v1298 = vadd.f32 0.0, %v1297
        %v1299 = vpop.f32.mrb[0].mxu0
        %1300 = vmatprep.mubr.bf16.mxu0 0
        %1301 = vmatmul.mubr.bf16.gmra.mrb[0].mxu0 %v885
        %v1302 = vpop.f32.mrb[0].mxu0
        %v1303 = vadd.f32 0.0, %v1302
        %v1304 = vpop.f32.mrb[0].mxu0
        %v1305 = vpop.f32.mrb[0].mxu0
        %v1306 = vadd.f32 0.0, %v1305
        %v1307 = vpop.f32.mrb[0].mxu0
        %1308 = vmatprep.mubr.bf16.mxu0 0
        %1309 = vmatmul.mubr.bf16.gmra.mrb[0].mxu0 %v888
        %v1310 = vpop.f32.mrb[0].mxu0
        %v1311 = vadd.f32 0.0, %v1310
        %v1312 = vpop.f32.mrb[0].mxu0
        %v1313 = vpop.f32.mrb[0].mxu0
        %v1314 = vadd.f32 0.0, %v1313
        %v1315 = vpop.f32.mrb[0].mxu0
        %1316 = vmatprep.mubr.bf16.mxu0 0
        %1317 = vmatmul.mubr.bf16.gmra.mrb[0].mxu0 %v891
        %v1318 = vpop.f32.mrb[0].mxu0
        %v1319 = vadd.f32 0.0, %v1318
        %v1320 = vpop.f32.mrb[0].mxu0
        %v1321 = vpop.f32.mrb[0].mxu0
        %v1322 = vadd.f32 0.0, %v1321
        %v1323 = vpop.f32.mrb[0].mxu0
        %1324 = vmatprep.mubr.bf16.mxu0 0
        %1325 = vmatmul.mubr.bf16.gmra.mrb[0].mxu0 %v894
        %v1326 = vpop.f32.mrb[0].mxu0
        %v1327 = vadd.f32 0.0, %v1326
        %v1328 = vpop.f32.mrb[0].mxu0
        %v1329 = vpop.f32.mrb[0].mxu0
        %v1330 = vadd.f32 0.0, %v1329
        %v1331 = vpop.f32.mrb[0].mxu0
        %1332 = vmatprep.mubr.bf16.mxu0 0
        %1333 = vmatmul.mubr.bf16.gmra.mrb[0].mxu0 %v897
        %v1334 = vpop.f32.mrb[0].mxu0
        %v1335 = vadd.f32 0.0, %v1334
        %v1336 = vpop.f32.mrb[0].mxu0
        %v1337 = vpop.f32.mrb[0].mxu0
        %v1338 = vadd.f32 0.0, %v1337
        %v1339 = vpop.f32.mrb[0].mxu0
        %1340 = vmatprep.mubr.bf16.mxu0 0
        %1341 = vmatmul.mubr.bf16.gmra.mrb[0].mxu0 %v900
        %v1342 = vpop.f32.mrb[0].mxu0
        %v1343 = vadd.f32 0.0, %v1342
        %v1344 = vpop.f32.mrb[0].mxu0
        %v1345 = vpop.f32.mrb[0].mxu0
        %v1346 = vadd.f32 0.0, %v1345
        %v1347 = vpop.f32.mrb[0].mxu0
        %1348 = vmatprep.mubr.bf16.mxu0 0
        %1349 = vmatmul.mubr.bf16.gmra.mrb[0].mxu0 %v903
        %v1350 = vpop.f32.mrb[0].mxu0
        %v1351 = vadd.f32 0.0, %v1350
        %v1352 = vpop.f32.mrb[0].mxu0
        %v1353 = vpop.f32.mrb[0].mxu0
        %v1354 = vadd.f32 0.0, %v1353
        %v1355 = vpop.f32.mrb[0].mxu0
        %1356 = vmatprep.mubr.bf16.mxu0 0
        %1357 = vmatmul.mubr.bf16.gmra.mrb[0].mxu0 %v906
        %v1358 = vpop.f32.mrb[0].mxu0
        %v1359 = vadd.f32 0.0, %v1358
        %v1360 = vpop.f32.mrb[0].mxu0
        %v1361 = vpop.f32.mrb[0].mxu0
        %v1362 = vadd.f32 0.0, %v1361
        %v1363 = vpop.f32.mrb[0].mxu0
        %1364 = vmatprep.mubr.bf16.mxu0 0
        %1365 = vmatmul.mubr.bf16.gmra.mrb[0].mxu0 %v909
        %v1366 = vpop.f32.mrb[0].mxu0
        %v1367 = vadd.f32 0.0, %v1366
        %v1368 = vpop.f32.mrb[0].mxu0
        %v1369 = vpop.f32.mrb[0].mxu0
        %v1370 = vadd.f32 0.0, %v1369
        %v1371 = vpop.f32.mrb[0].mxu0
        %1372 = vmatprep.mubr.bf16.mxu0 0
        %1373 = vmatmul.mubr.bf16.gmra.mrb[0].mxu0 %v912
        %v1374 = vpop.f32.mrb[0].mxu0
        %v1375 = vadd.f32 0.0, %v1374
        %v1376 = vpop.f32.mrb[0].mxu0
        %v1377 = vpop.f32.mrb[0].mxu0
        %v1378 = vadd.f32 0.0, %v1377
        %v1379 = vpop.f32.mrb[0].mxu0
        %1380 = vmatprep.mubr.bf16.mxu0 0
        %1381 = vmatmul.mubr.bf16.gmra.mrb[0].mxu0 %v915
        %v1382 = vpop.f32.mrb[0].mxu0
        %v1383 = vadd.f32 0.0, %v1382
        %v1384 = vpop.f32.mrb[0].mxu0
        %v1385 = vpop.f32.mrb[0].mxu0
        %v1386 = vadd.f32 0.0, %v1385
        %v1387 = vpop.f32.mrb[0].mxu0
        %1388 = vmatprep.mubr.bf16.mxu0 0
        %1389 = vmatmul.mubr.bf16.gmra.mrb[0].mxu0 %v918
        %v1390 = vpop.f32.mrb[0].mxu0
        %v1391 = vadd.f32 0.0, %v1390
        %v1392 = vpop.f32.mrb[0].mxu0
        %v1393 = vpop.f32.mrb[0].mxu0
        %v1394 = vadd.f32 0.0, %v1393
        %v1395 = vpop.f32.mrb[0].mxu0
        %1396 = vmatprep.mubr.bf16.mxu0 0
        %1397 = vmatmul.mubr.bf16.gmra.mrb[0].mxu0 %v921
        %v1398 = vpop.f32.mrb[0].mxu0
        %v1399 = vadd.f32 0.0, %v1398
        %v1400 = vpop.f32.mrb[0].mxu0
        %v1401 = vpop.f32.mrb[0].mxu0
        %v1402 = vadd.f32 0.0, %v1401
        %v1403 = vpop.f32.mrb[0].mxu0
        %1404 = vmatprep.mubr.bf16.mxu0 0
        %1405 = vmatmul.mubr.bf16.gmra.mrb[0].mxu0 %v924
        %v1406 = vpop.f32.mrb[0].mxu0
        %v1407 = vadd.f32 0.0, %v1406
        %v1408 = vpop.f32.mrb[0].mxu0
        %v1409 = vpop.f32.mrb[0].mxu0
        %v1410 = vadd.f32 0.0, %v1409
        %v1411 = vpop.f32.mrb[0].mxu0
        %1412 = vmatprep.mubr.bf16.mxu0 0
        %1413 = vmatmul.mubr.bf16.gmra.mrb[0].mxu0 %v927
        %v1414 = vpop.f32.mrb[0].mxu0
        %v1415 = vadd.f32 0.0, %v1414
        %v1416 = vpop.f32.mrb[0].mxu0
        %v1417 = vpop.f32.mrb[0].mxu0
        %v1418 = vadd.f32 0.0, %v1417
        %v1419 = vpop.f32.mrb[0].mxu0
        %1420 = vmatprep.mubr.bf16.mxu0 0
        %1421 = vmatmul.mubr.bf16.gmra.mrb[0].mxu0 %v930
        %v1422 = vpop.f32.mrb[0].mxu0
        %v1423 = vadd.f32 0.0, %v1422
        %v1424 = vpop.f32.mrb[0].mxu0
        %v1425 = vpop.f32.mrb[0].mxu0
        %v1426 = vadd.f32 0.0, %v1425
        %v1427 = vpop.f32.mrb[0].mxu0
        %1428 = vmatprep.mubr.bf16.mxu0 0
        %1429 = vmatmul.mubr.bf16.gmra.mrb[0].mxu0 %v933
        %v1430 = vpop.f32.mrb[0].mxu0
        %v1431 = vadd.f32 0.0, %v1430
        %v1432 = vpop.f32.mrb[0].mxu0
        %v1433 = vpop.f32.mrb[0].mxu0
        %v1434 = vadd.f32 0.0, %v1433
        %v1435 = vpop.f32.mrb[0].mxu0
        %1436 = vmatprep.mubr.bf16.mxu0 0
        %1437 = vmatmul.mubr.bf16.gmra.mrb[0].mxu0 %v936
        %v1438 = vpop.f32.mrb[0].mxu0
        %v1439 = vadd.f32 0.0, %v1438
        %v1440 = vpop.f32.mrb[0].mxu0
        %v1441 = vpop.f32.mrb[0].mxu0
        %v1442 = vadd.f32 0.0, %v1441
        %v1443 = vpop.f32.mrb[0].mxu0
        %1444 = vmatprep.mubr.bf16.mxu0 0
        %1445 = vmatmul.mubr.bf16.gmra.mrb[0].mxu0 %v939
        %v1446 = vpop.f32.mrb[0].mxu0
        %v1447 = vadd.f32 0.0, %v1446
        %v1448 = vpop.f32.mrb[0].mxu0
        %v1449 = vpop.f32.mrb[0].mxu0
        %v1450 = vadd.f32 0.0, %v1449
        %v1451 = vpop.f32.mrb[0].mxu0
        %1452 = vmatprep.mubr.bf16.mxu0 0
        %1453 = vmatmul.mubr.bf16.gmra.mrb[0].mxu0 %v942
        %v1454 = vpop.f32.mrb[0].mxu0
        %v1455 = vadd.f32 0.0, %v1454
        %v1456 = vpop.f32.mrb[0].mxu0
        %v1457 = vpop.f32.mrb[0].mxu0
        %v1458 = vadd.f32 0.0, %v1457
        %v1459 = vpop.f32.mrb[0].mxu0
        %1460 = vmatprep.mubr.bf16.mxu0 0
        %1461 = vmatmul.mubr.bf16.gmra.mrb[0].mxu0 %v945
        %v1462 = vpop.f32.mrb[0].mxu0
        %v1463 = vadd.f32 0.0, %v1462
        %v1464 = vpop.f32.mrb[0].mxu0
        %v1465 = vpop.f32.mrb[0].mxu0
        %v1466 = vadd.f32 0.0, %v1465
        %v1467 = vpop.f32.mrb[0].mxu0
        %1468 = vmatprep.mubr.bf16.mxu0 0
        %1469 = vmatmul.mubr.bf16.gmra.mrb[0].mxu0 %v948
        %v1470 = vpop.f32.mrb[0].mxu0
        %v1471 = vadd.f32 0.0, %v1470
        %v1472 = vpop.f32.mrb[0].mxu0
        %v1473 = vpop.f32.mrb[0].mxu0
        %v1474 = vadd.f32 0.0, %v1473
        %v1475 = vpop.f32.mrb[0].mxu0
        %1476 = vmatprep.mubr.bf16.mxu0 0
        %1477 = vmatmul.mubr.bf16.gmra.mrb[0].mxu0 %v951
        %v1478 = vpop.f32.mrb[0].mxu0
        %v1479 = vadd.f32 0.0, %v1478
        %v1480 = vpop.f32.mrb[0].mxu0
        %v1481 = vpop.f32.mrb[0].mxu0
        %v1482 = vadd.f32 0.0, %v1481
        %v1483 = vpop.f32.mrb[0].mxu0
        %1484 = vmatprep.mubr.bf16.mxu0 0
        %1485 = vmatmul.mubr.bf16.gmra.mrb[0].mxu0 %v954
        %v1486 = vpop.f32.mrb[0].mxu0
        %v1487 = vadd.f32 0.0, %v1486
        %v1488 = vpop.f32.mrb[0].mxu0
        %v1489 = vpop.f32.mrb[0].mxu0
        %v1490 = vadd.f32 0.0, %v1489
        %v1491 = vpop.f32.mrb[0].mxu0
        %1492 = vmatprep.mubr.bf16.mxu0 0
        %1493 = vmatmul.mubr.bf16.gmra.mrb[0].mxu0 %v957
        %v1494 = vpop.f32.mrb[0].mxu0
        %v1495 = vadd.f32 0.0, %v1494
        %v1496 = vpop.f32.mrb[0].mxu0
        %v1497 = vpop.f32.mrb[0].mxu0
        %v1498 = vadd.f32 0.0, %v1497
        %v1499 = vpop.f32.mrb[0].mxu0
        %1500 = vmatprep.mubr.bf16.mxu0 0
        %1501 = vmatmul.mubr.bf16.gmra.mrb[0].mxu0 %v960
        %v1502 = vpop.f32.mrb[0].mxu0
        %v1503 = vadd.f32 0.0, %v1502
        %v1504 = vpop.f32.mrb[0].mxu0
        %v1505 = vpop.f32.mrb[0].mxu0
        %v1506 = vadd.f32 0.0, %v1505
        %v1507 = vpop.f32.mrb[0].mxu0
        %1508 = vmatprep.mubr.bf16.mxu0 0
        %1509 = vmatmul.mubr.bf16.gmra.mrb[0].mxu0 %v963
        %v1510 = vpop.f32.mrb[0].mxu0
        %v1511 = vadd.f32 0.0, %v1510
        %v1512 = vpop.f32.mrb[0].mxu0
        %v1513 = vpop.f32.mrb[0].mxu0
        %v1514 = vadd.f32 0.0, %v1513
        %v1515 = vpop.f32.mrb[0].mxu0
        %1516 = vdwg.mxu0
        %v1518 = vsel %vm772, %v513, 0
        %v1521 = vsel %vm772, %v514, 0
        %v1524 = vsel %vm772, %v515, 0
        %v1527 = vsel %vm772, %v516, 0
        %v1530 = vsel %vm772, %v517, 0
        %v1533 = vsel %vm772, %v518, 0
        %v1536 = vsel %vm772, %v519, 0
        %v1539 = vsel %vm772, %v520, 0
        %v1542 = vsel %vm772, %v521, 0
        %v1545 = vsel %vm772, %v522, 0
        %v1548 = vsel %vm772, %v523, 0
        %v1551 = vsel %vm772, %v524, 0
        %v1554 = vsel %vm772, %v525, 0
        %v1557 = vsel %vm772, %v526, 0
        %v1560 = vsel %vm772, %v527, 0
        %v1563 = vsel %vm772, %v528, 0
        %v1566 = vsel %vm772, %v529, 0
        %v1569 = vsel %vm772, %v530, 0
        %v1572 = vsel %vm772, %v531, 0
        %v1575 = vsel %vm772, %v532, 0
        %v1578 = vsel %vm772, %v533, 0
        %v1581 = vsel %vm772, %v534, 0
        %v1584 = vsel %vm772, %v535, 0
        %v1587 = vsel %vm772, %v536, 0
        %v1590 = vsel %vm772, %v537, 0
        %v1593 = vsel %vm772, %v538, 0
        %v1596 = vsel %vm772, %v539, 0
        %v1599 = vsel %vm772, %v540, 0
        %v1602 = vsel %vm772, %v541, 0
        %v1605 = vsel %vm772, %v542, 0
        %v1608 = vsel %vm772, %v543, 0
        %v1611 = vsel %vm772, %v544, 0
        %v1614 = vsel %vm772, %v545, 0
        %v1617 = vsel %vm772, %v546, 0
        %v1620 = vsel %vm772, %v547, 0
        %v1623 = vsel %vm772, %v548, 0
        %v1626 = vsel %vm772, %v549, 0
        %v1629 = vsel %vm772, %v550, 0
        %v1632 = vsel %vm772, %v551, 0
        %v1635 = vsel %vm772, %v552, 0
        %v1638 = vsel %vm772, %v553, 0
        %v1641 = vsel %vm772, %v554, 0
        %v1644 = vsel %vm772, %v555, 0
        %v1647 = vsel %vm772, %v556, 0
        %v1650 = vsel %vm772, %v557, 0
        %v1653 = vsel %vm772, %v558, 0
        %v1656 = vsel %vm772, %v559, 0
        %v1659 = vsel %vm772, %v560, 0
        %v1662 = vsel %vm772, %v561, 0
        %v1665 = vsel %vm772, %v562, 0
        %v1668 = vsel %vm772, %v563, 0
        %v1671 = vsel %vm772, %v564, 0
        %v1674 = vsel %vm772, %v565, 0
        %v1677 = vsel %vm772, %v566, 0
        %v1680 = vsel %vm772, %v567, 0
        %v1683 = vsel %vm772, %v568, 0
        %v1686 = vsel %vm772, %v569, 0
        %v1689 = vsel %vm772, %v570, 0
        %v1692 = vsel %vm772, %v571, 0
        %v1695 = vsel %vm772, %v572, 0
        %v1698 = vsel %vm772, %v573, 0
        %v1701 = vsel %vm772, %v574, 0
        %v1704 = vsel %vm772, %v575, 0
        %v1707 = vsel %vm772, %v576, 0
        %v1710 = vand.u32 %v577, %v968
        %1712 = vmatprep.subr.bf16.mxu0 0
        %1713 = vmatpush1.bf16.msra.mxu0 %v1710
        %1714 = vmatprep.subr.bf16.mxu0 0
        %1715 = vmatpush1.bf16.msra.mxu0 0
        %1716 = vmatprep.subr.bf16.mxu0 0
        %1717 = vmatpush1.bf16.msra.mxu0 0
        %1718 = vmatprep.subr.bf16.mxu0 0
        %1719 = vmatpush1.bf16.msra.mxu0 0
        %1720 = vmatprep.subr.bf16.mxu0 0
        %1721 = vmatpush1.bf16.msra.mxu0 0
        %1722 = vmatprep.subr.bf16.mxu0 0
        %1723 = vmatpush1.bf16.msra.mxu0 0
        %1724 = vmatprep.subr.bf16.mxu0 0
        %1725 = vmatpush1.bf16.msra.mxu0 0
        %1726 = vmatprep.subr.bf16.mxu0 0
        %1727 = vmatpush1.bf16.msra.mxu0 0
        %1728 = vmatprep.subr.bf16.mxu0 0
        %1729 = vmatpush1.bf16.msra.mxu0 0
        %1730 = vmatprep.subr.bf16.mxu0 0
        %1731 = vmatpush1.bf16.msra.mxu0 0
        %1732 = vmatprep.subr.bf16.mxu0 0
        %1733 = vmatpush1.bf16.msra.mxu0 0
        %1734 = vmatprep.subr.bf16.mxu0 0
        %1735 = vmatpush1.bf16.msra.mxu0 0
        %1736 = vmatprep.subr.bf16.mxu0 0
        %1737 = vmatpush1.bf16.msra.mxu0 0
        %1738 = vmatprep.subr.bf16.mxu0 0
        %1739 = vmatpush1.bf16.msra.mxu0 0
        %1740 = vmatprep.subr.bf16.mxu0 0
        %1741 = vmatpush1.bf16.msra.mxu0 0
        %1742 = vmatprep.subr.bf16.mxu0 0
        %1743 = vmatpush1.bf16.msra.mxu0 0
        %1744 = vmatprep.mubr.bf16.mxu0 0
        %1745 = vmatmul.mubr.bf16.gmra.mrb[0].mxu0 %v1518
        %v1746 = vpop.f32.mrb[0].mxu0
        %v1747 = vadd.f32 %v1007, %v1746
        %v1748 = vpop.f32.mrb[0].mxu0
        %v1749 = vpop.f32.mrb[0].mxu0
        %v1750 = vadd.f32 %v1010, %v1749
        %v1751 = vpop.f32.mrb[0].mxu0
        %1752 = vmatprep.mubr.bf16.mxu0 0
        %1753 = vmatmul.mubr.bf16.gmra.mrb[0].mxu0 %v1521
        %v1754 = vpop.f32.mrb[0].mxu0
        %v1755 = vadd.f32 %v1015, %v1754
        %v1756 = vpop.f32.mrb[0].mxu0
        %v1757 = vpop.f32.mrb[0].mxu0
        %v1758 = vadd.f32 %v1018, %v1757
        %v1759 = vpop.f32.mrb[0].mxu0
        %1760 = vmatprep.mubr.bf16.mxu0 0
        %1761 = vmatmul.mubr.bf16.gmra.mrb[0].mxu0 %v1524
        %v1762 = vpop.f32.mrb[0].mxu0
        %v1763 = vadd.f32 %v1023, %v1762
        %v1764 = vpop.f32.mrb[0].mxu0
        %v1765 = vpop.f32.mrb[0].mxu0
        %v1766 = vadd.f32 %v1026, %v1765
        %v1767 = vpop.f32.mrb[0].mxu0
        %1768 = vmatprep.mubr.bf16.mxu0 0
        %1769 = vmatmul.mubr.bf16.gmra.mrb[0].mxu0 %v1527
        %v1770 = vpop.f32.mrb[0].mxu0
        %v1771 = vadd.f32 %v1031, %v1770
        %v1772 = vpop.f32.mrb[0].mxu0
        %v1773 = vpop.f32.mrb[0].mxu0
        %v1774 = vadd.f32 %v1034, %v1773
        %v1775 = vpop.f32.mrb[0].mxu0
        %1776 = vmatprep.mubr.bf16.mxu0 0
        %1777 = vmatmul.mubr.bf16.gmra.mrb[0].mxu0 %v1530
        %v1778 = vpop.f32.mrb[0].mxu0
        %v1779 = vadd.f32 %v1039, %v1778
        %v1780 = vpop.f32.mrb[0].mxu0
        %v1781 = vpop.f32.mrb[0].mxu0
        %v1782 = vadd.f32 %v1042, %v1781
        %v1783 = vpop.f32.mrb[0].mxu0
        %1784 = vmatprep.mubr.bf16.mxu0 0
        %1785 = vmatmul.mubr.bf16.gmra.mrb[0].mxu0 %v1533
        %v1786 = vpop.f32.mrb[0].mxu0
        %v1787 = vadd.f32 %v1047, %v1786
        %v1788 = vpop.f32.mrb[0].mxu0
        %v1789 = vpop.f32.mrb[0].mxu0
        %v1790 = vadd.f32 %v1050, %v1789
        %v1791 = vpop.f32.mrb[0].mxu0
        %1792 = vmatprep.mubr.bf16.mxu0 0
        %1793 = vmatmul.mubr.bf16.gmra.mrb[0].mxu0 %v1536
        %v1794 = vpop.f32.mrb[0].mxu0
        %v1795 = vadd.f32 %v1055, %v1794
        %v1796 = vpop.f32.mrb[0].mxu0
        %v1797 = vpop.f32.mrb[0].mxu0
        %v1798 = vadd.f32 %v1058, %v1797
        %v1799 = vpop.f32.mrb[0].mxu0
        %1800 = vmatprep.mubr.bf16.mxu0 0
        %1801 = vmatmul.mubr.bf16.gmra.mrb[0].mxu0 %v1539
        %v1802 = vpop.f32.mrb[0].mxu0
        %v1803 = vadd.f32 %v1063, %v1802
        %v1804 = vpop.f32.mrb[0].mxu0
        %v1805 = vpop.f32.mrb[0].mxu0
        %v1806 = vadd.f32 %v1066, %v1805
        %v1807 = vpop.f32.mrb[0].mxu0
        %1808 = vmatprep.mubr.bf16.mxu0 0
        %1809 = vmatmul.mubr.bf16.gmra.mrb[0].mxu0 %v1542
        %v1810 = vpop.f32.mrb[0].mxu0
        %v1811 = vadd.f32 %v1071, %v1810
        %v1812 = vpop.f32.mrb[0].mxu0
        %v1813 = vpop.f32.mrb[0].mxu0
        %v1814 = vadd.f32 %v1074, %v1813
        %v1815 = vpop.f32.mrb[0].mxu0
        %1816 = vmatprep.mubr.bf16.mxu0 0
        %1817 = vmatmul.mubr.bf16.gmra.mrb[0].mxu0 %v1545
        %v1818 = vpop.f32.mrb[0].mxu0
        %v1819 = vadd.f32 %v1079, %v1818
        %v1820 = vpop.f32.mrb[0].mxu0
        %v1821 = vpop.f32.mrb[0].mxu0
        %v1822 = vadd.f32 %v1082, %v1821
        %v1823 = vpop.f32.mrb[0].mxu0
        %1824 = vmatprep.mubr.bf16.mxu0 0
        %1825 = vmatmul.mubr.bf16.gmra.mrb[0].mxu0 %v1548
        %v1826 = vpop.f32.mrb[0].mxu0
        %v1827 = vadd.f32 %v1087, %v1826
        %v1828 = vpop.f32.mrb[0].mxu0
        %v1829 = vpop.f32.mrb[0].mxu0
        %v1830 = vadd.f32 %v1090, %v1829
        %v1831 = vpop.f32.mrb[0].mxu0
        %1832 = vmatprep.mubr.bf16.mxu0 0
        %1833 = vmatmul.mubr.bf16.gmra.mrb[0].mxu0 %v1551
        %v1834 = vpop.f32.mrb[0].mxu0
        %v1835 = vadd.f32 %v1095, %v1834
        %v1836 = vpop.f32.mrb[0].mxu0
        %v1837 = vpop.f32.mrb[0].mxu0
        %v1838 = vadd.f32 %v1098, %v1837
        %v1839 = vpop.f32.mrb[0].mxu0
        %1840 = vmatprep.mubr.bf16.mxu0 0
        %1841 = vmatmul.mubr.bf16.gmra.mrb[0].mxu0 %v1554
        %v1842 = vpop.f32.mrb[0].mxu0
        %v1843 = vadd.f32 %v1103, %v1842
        %v1844 = vpop.f32.mrb[0].mxu0
        %v1845 = vpop.f32.mrb[0].mxu0
        %v1846 = vadd.f32 %v1106, %v1845
        %v1847 = vpop.f32.mrb[0].mxu0
        %1848 = vmatprep.mubr.bf16.mxu0 0
        %1849 = vmatmul.mubr.bf16.gmra.mrb[0].mxu0 %v1557
        %v1850 = vpop.f32.mrb[0].mxu0
        %v1851 = vadd.f32 %v1111, %v1850
        %v1852 = vpop.f32.mrb[0].mxu0
        %v1853 = vpop.f32.mrb[0].mxu0
        %v1854 = vadd.f32 %v1114, %v1853
        %v1855 = vpop.f32.mrb[0].mxu0
        %1856 = vmatprep.mubr.bf16.mxu0 0
        %1857 = vmatmul.mubr.bf16.gmra.mrb[0].mxu0 %v1560
        %v1858 = vpop.f32.mrb[0].mxu0
        %v1859 = vadd.f32 %v1119, %v1858
        %v1860 = vpop.f32.mrb[0].mxu0
        %v1861 = vpop.f32.mrb[0].mxu0
        %v1862 = vadd.f32 %v1122, %v1861
        %v1863 = vpop.f32.mrb[0].mxu0
        %1864 = vmatprep.mubr.bf16.mxu0 0
        %1865 = vmatmul.mubr.bf16.gmra.mrb[0].mxu0 %v1563
        %v1866 = vpop.f32.mrb[0].mxu0
        %v1867 = vadd.f32 %v1127, %v1866
        %v1868 = vpop.f32.mrb[0].mxu0
        %v1869 = vpop.f32.mrb[0].mxu0
        %v1870 = vadd.f32 %v1130, %v1869
        %v1871 = vpop.f32.mrb[0].mxu0
        %1872 = vmatprep.mubr.bf16.mxu0 0
        %1873 = vmatmul.mubr.bf16.gmra.mrb[0].mxu0 %v1566
        %v1874 = vpop.f32.mrb[0].mxu0
        %v1875 = vadd.f32 %v1135, %v1874
        %v1876 = vpop.f32.mrb[0].mxu0
        %v1877 = vpop.f32.mrb[0].mxu0
        %v1878 = vadd.f32 %v1138, %v1877
        %v1879 = vpop.f32.mrb[0].mxu0
        %1880 = vmatprep.mubr.bf16.mxu0 0
        %1881 = vmatmul.mubr.bf16.gmra.mrb[0].mxu0 %v1569
        %v1882 = vpop.f32.mrb[0].mxu0
        %v1883 = vadd.f32 %v1143, %v1882
        %v1884 = vpop.f32.mrb[0].mxu0
        %v1885 = vpop.f32.mrb[0].mxu0
        %v1886 = vadd.f32 %v1146, %v1885
        %v1887 = vpop.f32.mrb[0].mxu0
        %1888 = vmatprep.mubr.bf16.mxu0 0
        %1889 = vmatmul.mubr.bf16.gmra.mrb[0].mxu0 %v1572
        %v1890 = vpop.f32.mrb[0].mxu0
        %v1891 = vadd.f32 %v1151, %v1890
        %v1892 = vpop.f32.mrb[0].mxu0
        %v1893 = vpop.f32.mrb[0].mxu0
        %v1894 = vadd.f32 %v1154, %v1893
        %v1895 = vpop.f32.mrb[0].mxu0
        %1896 = vmatprep.mubr.bf16.mxu0 0
        %1897 = vmatmul.mubr.bf16.gmra.mrb[0].mxu0 %v1575
        %v1898 = vpop.f32.mrb[0].mxu0
        %v1899 = vadd.f32 %v1159, %v1898
        %v1900 = vpop.f32.mrb[0].mxu0
        %v1901 = vpop.f32.mrb[0].mxu0
        %v1902 = vadd.f32 %v1162, %v1901
        %v1903 = vpop.f32.mrb[0].mxu0
        %1904 = vmatprep.mubr.bf16.mxu0 0
        %1905 = vmatmul.mubr.bf16.gmra.mrb[0].mxu0 %v1578
        %v1906 = vpop.f32.mrb[0].mxu0
        %v1907 = vadd.f32 %v1167, %v1906
        %v1908 = vpop.f32.mrb[0].mxu0
        %v1909 = vpop.f32.mrb[0].mxu0
        %v1910 = vadd.f32 %v1170, %v1909
        %v1911 = vpop.f32.mrb[0].mxu0
        %1912 = vmatprep.mubr.bf16.mxu0 0
        %1913 = vmatmul.mubr.bf16.gmra.mrb[0].mxu0 %v1581
        %v1914 = vpop.f32.mrb[0].mxu0
        %v1915 = vadd.f32 %v1175, %v1914
        %v1916 = vpop.f32.mrb[0].mxu0
        %v1917 = vpop.f32.mrb[0].mxu0
        %v1918 = vadd.f32 %v1178, %v1917
        %v1919 = vpop.f32.mrb[0].mxu0
        %1920 = vmatprep.mubr.bf16.mxu0 0
        %1921 = vmatmul.mubr.bf16.gmra.mrb[0].mxu0 %v1584
        %v1922 = vpop.f32.mrb[0].mxu0
        %v1923 = vadd.f32 %v1183, %v1922
        %v1924 = vpop.f32.mrb[0].mxu0
        %v1925 = vpop.f32.mrb[0].mxu0
        %v1926 = vadd.f32 %v1186, %v1925
        %v1927 = vpop.f32.mrb[0].mxu0
        %1928 = vmatprep.mubr.bf16.mxu0 0
        %1929 = vmatmul.mubr.bf16.gmra.mrb[0].mxu0 %v1587
        %v1930 = vpop.f32.mrb[0].mxu0
        %v1931 = vadd.f32 %v1191, %v1930
        %v1932 = vpop.f32.mrb[0].mxu0
        %v1933 = vpop.f32.mrb[0].mxu0
        %v1934 = vadd.f32 %v1194, %v1933
        %v1935 = vpop.f32.mrb[0].mxu0
        %1936 = vmatprep.mubr.bf16.mxu0 0
        %1937 = vmatmul.mubr.bf16.gmra.mrb[0].mxu0 %v1590
        %v1938 = vpop.f32.mrb[0].mxu0
        %v1939 = vadd.f32 %v1199, %v1938
        %v1940 = vpop.f32.mrb[0].mxu0
        %v1941 = vpop.f32.mrb[0].mxu0
        %v1942 = vadd.f32 %v1202, %v1941
        %v1943 = vpop.f32.mrb[0].mxu0
        %1944 = vmatprep.mubr.bf16.mxu0 0
        %1945 = vmatmul.mubr.bf16.gmra.mrb[0].mxu0 %v1593
        %v1946 = vpop.f32.mrb[0].mxu0
        %v1947 = vadd.f32 %v1207, %v1946
        %v1948 = vpop.f32.mrb[0].mxu0
        %v1949 = vpop.f32.mrb[0].mxu0
        %v1950 = vadd.f32 %v1210, %v1949
        %v1951 = vpop.f32.mrb[0].mxu0
        %1952 = vmatprep.mubr.bf16.mxu0 0
        %1953 = vmatmul.mubr.bf16.gmra.mrb[0].mxu0 %v1596
        %v1954 = vpop.f32.mrb[0].mxu0
        %v1955 = vadd.f32 %v1215, %v1954
        %v1956 = vpop.f32.mrb[0].mxu0
        %v1957 = vpop.f32.mrb[0].mxu0
        %v1958 = vadd.f32 %v1218, %v1957
        %v1959 = vpop.f32.mrb[0].mxu0
        %1960 = vmatprep.mubr.bf16.mxu0 0
        %1961 = vmatmul.mubr.bf16.gmra.mrb[0].mxu0 %v1599
        %v1962 = vpop.f32.mrb[0].mxu0
        %v1963 = vadd.f32 %v1223, %v1962
        %v1964 = vpop.f32.mrb[0].mxu0
        %v1965 = vpop.f32.mrb[0].mxu0
        %v1966 = vadd.f32 %v1226, %v1965
        %v1967 = vpop.f32.mrb[0].mxu0
        %1968 = vmatprep.mubr.bf16.mxu0 0
        %1969 = vmatmul.mubr.bf16.gmra.mrb[0].mxu0 %v1602
        %v1970 = vpop.f32.mrb[0].mxu0
        %v1971 = vadd.f32 %v1231, %v1970
        %v1972 = vpop.f32.mrb[0].mxu0
        %v1973 = vpop.f32.mrb[0].mxu0
        %v1974 = vadd.f32 %v1234, %v1973
        %v1975 = vpop.f32.mrb[0].mxu0
        %1976 = vmatprep.mubr.bf16.mxu0 0
        %1977 = vmatmul.mubr.bf16.gmra.mrb[0].mxu0 %v1605
        %v1978 = vpop.f32.mrb[0].mxu0
        %v1979 = vadd.f32 %v1239, %v1978
        %v1980 = vpop.f32.mrb[0].mxu0
        %v1981 = vpop.f32.mrb[0].mxu0
        %v1982 = vadd.f32 %v1242, %v1981
        %v1983 = vpop.f32.mrb[0].mxu0
        %1984 = vmatprep.mubr.bf16.mxu0 0
        %1985 = vmatmul.mubr.bf16.gmra.mrb[0].mxu0 %v1608
        %v1986 = vpop.f32.mrb[0].mxu0
        %v1987 = vadd.f32 %v1247, %v1986
        %v1988 = vpop.f32.mrb[0].mxu0
        %v1989 = vpop.f32.mrb[0].mxu0
        %v1990 = vadd.f32 %v1250, %v1989
        %v1991 = vpop.f32.mrb[0].mxu0
        %1992 = vmatprep.mubr.bf16.mxu0 0
        %1993 = vmatmul.mubr.bf16.gmra.mrb[0].mxu0 %v1611
        %v1994 = vpop.f32.mrb[0].mxu0
        %v1995 = vadd.f32 %v1255, %v1994
        %v1996 = vpop.f32.mrb[0].mxu0
        %v1997 = vpop.f32.mrb[0].mxu0
        %v1998 = vadd.f32 %v1258, %v1997
        %v1999 = vpop.f32.mrb[0].mxu0
        %2000 = vmatprep.mubr.bf16.mxu0 0
        %2001 = vmatmul.mubr.bf16.gmra.mrb[0].mxu0 %v1614
        %v2002 = vpop.f32.mrb[0].mxu0
        %v2003 = vadd.f32 %v1263, %v2002
        %v2004 = vpop.f32.mrb[0].mxu0
        %v2005 = vpop.f32.mrb[0].mxu0
        %v2006 = vadd.f32 %v1266, %v2005
        %v2007 = vpop.f32.mrb[0].mxu0
        %2008 = vmatprep.mubr.bf16.mxu0 0
        %2009 = vmatmul.mubr.bf16.gmra.mrb[0].mxu0 %v1617
        %v2010 = vpop.f32.mrb[0].mxu0
        %v2011 = vadd.f32 %v1271, %v2010
        %v2012 = vpop.f32.mrb[0].mxu0
        %v2013 = vpop.f32.mrb[0].mxu0
        %v2014 = vadd.f32 %v1274, %v2013
        %v2015 = vpop.f32.mrb[0].mxu0
        %2016 = vmatprep.mubr.bf16.mxu0 0
        %2017 = vmatmul.mubr.bf16.gmra.mrb[0].mxu0 %v1620
        %v2018 = vpop.f32.mrb[0].mxu0
        %v2019 = vadd.f32 %v1279, %v2018
        %v2020 = vpop.f32.mrb[0].mxu0
        %v2021 = vpop.f32.mrb[0].mxu0
        %v2022 = vadd.f32 %v1282, %v2021
        %v2023 = vpop.f32.mrb[0].mxu0
        %2024 = vmatprep.mubr.bf16.mxu0 0
        %2025 = vmatmul.mubr.bf16.gmra.mrb[0].mxu0 %v1623
        %v2026 = vpop.f32.mrb[0].mxu0
        %v2027 = vadd.f32 %v1287, %v2026
        %v2028 = vpop.f32.mrb[0].mxu0
        %v2029 = vpop.f32.mrb[0].mxu0
        %v2030 = vadd.f32 %v1290, %v2029
        %v2031 = vpop.f32.mrb[0].mxu0
        %2032 = vmatprep.mubr.bf16.mxu0 0
        %2033 = vmatmul.mubr.bf16.gmra.mrb[0].mxu0 %v1626
        %v2034 = vpop.f32.mrb[0].mxu0
        %v2035 = vadd.f32 %v1295, %v2034
        %v2036 = vpop.f32.mrb[0].mxu0
        %v2037 = vpop.f32.mrb[0].mxu0
        %v2038 = vadd.f32 %v1298, %v2037
        %v2039 = vpop.f32.mrb[0].mxu0
        %2040 = vmatprep.mubr.bf16.mxu0 0
        %2041 = vmatmul.mubr.bf16.gmra.mrb[0].mxu0 %v1629
        %v2042 = vpop.f32.mrb[0].mxu0
        %v2043 = vadd.f32 %v1303, %v2042
        %v2044 = vpop.f32.mrb[0].mxu0
        %v2045 = vpop.f32.mrb[0].mxu0
        %v2046 = vadd.f32 %v1306, %v2045
        %v2047 = vpop.f32.mrb[0].mxu0
        %2048 = vmatprep.mubr.bf16.mxu0 0
        %2049 = vmatmul.mubr.bf16.gmra.mrb[0].mxu0 %v1632
        %v2050 = vpop.f32.mrb[0].mxu0
        %v2051 = vadd.f32 %v1311, %v2050
        %v2052 = vpop.f32.mrb[0].mxu0
        %v2053 = vpop.f32.mrb[0].mxu0
        %v2054 = vadd.f32 %v1314, %v2053
        %v2055 = vpop.f32.mrb[0].mxu0
        %2056 = vmatprep.mubr.bf16.mxu0 0
        %2057 = vmatmul.mubr.bf16.gmra.mrb[0].mxu0 %v1635
        %v2058 = vpop.f32.mrb[0].mxu0
        %v2059 = vadd.f32 %v1319, %v2058
        %v2060 = vpop.f32.mrb[0].mxu0
        %v2061 = vpop.f32.mrb[0].mxu0
        %v2062 = vadd.f32 %v1322, %v2061
        %v2063 = vpop.f32.mrb[0].mxu0
        %2064 = vmatprep.mubr.bf16.mxu0 0
        %2065 = vmatmul.mubr.bf16.gmra.mrb[0].mxu0 %v1638
        %v2066 = vpop.f32.mrb[0].mxu0
        %v2067 = vadd.f32 %v1327, %v2066
        %v2068 = vpop.f32.mrb[0].mxu0
        %v2069 = vpop.f32.mrb[0].mxu0
        %v2070 = vadd.f32 %v1330, %v2069
        %v2071 = vpop.f32.mrb[0].mxu0
        %2072 = vmatprep.mubr.bf16.mxu0 0
        %2073 = vmatmul.mubr.bf16.gmra.mrb[0].mxu0 %v1641
        %v2074 = vpop.f32.mrb[0].mxu0
        %v2075 = vadd.f32 %v1335, %v2074
        %v2076 = vpop.f32.mrb[0].mxu0
        %v2077 = vpop.f32.mrb[0].mxu0
        %v2078 = vadd.f32 %v1338, %v2077
        %v2079 = vpop.f32.mrb[0].mxu0
        %2080 = vmatprep.mubr.bf16.mxu0 0
        %2081 = vmatmul.mubr.bf16.gmra.mrb[0].mxu0 %v1644
        %v2082 = vpop.f32.mrb[0].mxu0
        %v2083 = vadd.f32 %v1343, %v2082
        %v2084 = vpop.f32.mrb[0].mxu0
        %v2085 = vpop.f32.mrb[0].mxu0
        %v2086 = vadd.f32 %v1346, %v2085
        %v2087 = vpop.f32.mrb[0].mxu0
        %2088 = vmatprep.mubr.bf16.mxu0 0
        %2089 = vmatmul.mubr.bf16.gmra.mrb[0].mxu0 %v1647
        %v2090 = vpop.f32.mrb[0].mxu0
        %v2091 = vadd.f32 %v1351, %v2090
        %v2092 = vpop.f32.mrb[0].mxu0
        %v2093 = vpop.f32.mrb[0].mxu0
        %v2094 = vadd.f32 %v1354, %v2093
        %v2095 = vpop.f32.mrb[0].mxu0
        %2096 = vmatprep.mubr.bf16.mxu0 0
        %2097 = vmatmul.mubr.bf16.gmra.mrb[0].mxu0 %v1650
        %v2098 = vpop.f32.mrb[0].mxu0
        %v2099 = vadd.f32 %v1359, %v2098
        %v2100 = vpop.f32.mrb[0].mxu0
        %v2101 = vpop.f32.mrb[0].mxu0
        %v2102 = vadd.f32 %v1362, %v2101
        %v2103 = vpop.f32.mrb[0].mxu0
        %2104 = vmatprep.mubr.bf16.mxu0 0
        %2105 = vmatmul.mubr.bf16.gmra.mrb[0].mxu0 %v1653
        %v2106 = vpop.f32.mrb[0].mxu0
        %v2107 = vadd.f32 %v1367, %v2106
        %v2108 = vpop.f32.mrb[0].mxu0
        %v2109 = vpop.f32.mrb[0].mxu0
        %v2110 = vadd.f32 %v1370, %v2109
        %v2111 = vpop.f32.mrb[0].mxu0
        %2112 = vmatprep.mubr.bf16.mxu0 0
        %2113 = vmatmul.mubr.bf16.gmra.mrb[0].mxu0 %v1656
        %v2114 = vpop.f32.mrb[0].mxu0
        %v2115 = vadd.f32 %v1375, %v2114
        %v2116 = vpop.f32.mrb[0].mxu0
        %v2117 = vpop.f32.mrb[0].mxu0
        %v2118 = vadd.f32 %v1378, %v2117
        %v2119 = vpop.f32.mrb[0].mxu0
        %2120 = vmatprep.mubr.bf16.mxu0 0
        %2121 = vmatmul.mubr.bf16.gmra.mrb[0].mxu0 %v1659
        %v2122 = vpop.f32.mrb[0].mxu0
        %v2123 = vadd.f32 %v1383, %v2122
        %v2124 = vpop.f32.mrb[0].mxu0
        %v2125 = vpop.f32.mrb[0].mxu0
        %v2126 = vadd.f32 %v1386, %v2125
        %v2127 = vpop.f32.mrb[0].mxu0
        %2128 = vmatprep.mubr.bf16.mxu0 0
        %2129 = vmatmul.mubr.bf16.gmra.mrb[0].mxu0 %v1662
        %v2130 = vpop.f32.mrb[0].mxu0
        %v2131 = vadd.f32 %v1391, %v2130
        %v2132 = vpop.f32.mrb[0].mxu0
        %v2133 = vpop.f32.mrb[0].mxu0
        %v2134 = vadd.f32 %v1394, %v2133
        %v2135 = vpop.f32.mrb[0].mxu0
        %2136 = vmatprep.mubr.bf16.mxu0 0
        %2137 = vmatmul.mubr.bf16.gmra.mrb[0].mxu0 %v1665
        %v2138 = vpop.f32.mrb[0].mxu0
        %v2139 = vadd.f32 %v1399, %v2138
        %v2140 = vpop.f32.mrb[0].mxu0
        %v2141 = vpop.f32.mrb[0].mxu0
        %v2142 = vadd.f32 %v1402, %v2141
        %v2143 = vpop.f32.mrb[0].mxu0
        %2144 = vmatprep.mubr.bf16.mxu0 0
        %2145 = vmatmul.mubr.bf16.gmra.mrb[0].mxu0 %v1668
        %v2146 = vpop.f32.mrb[0].mxu0
        %v2147 = vadd.f32 %v1407, %v2146
        %v2148 = vpop.f32.mrb[0].mxu0
        %v2149 = vpop.f32.mrb[0].mxu0
        %v2150 = vadd.f32 %v1410, %v2149
        %v2151 = vpop.f32.mrb[0].mxu0
        %2152 = vmatprep.mubr.bf16.mxu0 0
        %2153 = vmatmul.mubr.bf16.gmra.mrb[0].mxu0 %v1671
        %v2154 = vpop.f32.mrb[0].mxu0
        %v2155 = vadd.f32 %v1415, %v2154
        %v2156 = vpop.f32.mrb[0].mxu0
        %v2157 = vpop.f32.mrb[0].mxu0
        %v2158 = vadd.f32 %v1418, %v2157
        %v2159 = vpop.f32.mrb[0].mxu0
        %2160 = vmatprep.mubr.bf16.mxu0 0
        %2161 = vmatmul.mubr.bf16.gmra.mrb[0].mxu0 %v1674
        %v2162 = vpop.f32.mrb[0].mxu0
        %v2163 = vadd.f32 %v1423, %v2162
        %v2164 = vpop.f32.mrb[0].mxu0
        %v2165 = vpop.f32.mrb[0].mxu0
        %v2166 = vadd.f32 %v1426, %v2165
        %v2167 = vpop.f32.mrb[0].mxu0
        %2168 = vmatprep.mubr.bf16.mxu0 0
        %2169 = vmatmul.mubr.bf16.gmra.mrb[0].mxu0 %v1677
        %v2170 = vpop.f32.mrb[0].mxu0
        %v2171 = vadd.f32 %v1431, %v2170
        %v2172 = vpop.f32.mrb[0].mxu0
        %v2173 = vpop.f32.mrb[0].mxu0
        %v2174 = vadd.f32 %v1434, %v2173
        %v2175 = vpop.f32.mrb[0].mxu0
        %2176 = vmatprep.mubr.bf16.mxu0 0
        %2177 = vmatmul.mubr.bf16.gmra.mrb[0].mxu0 %v1680
        %v2178 = vpop.f32.mrb[0].mxu0
        %v2179 = vadd.f32 %v1439, %v2178
        %v2180 = vpop.f32.mrb[0].mxu0
        %v2181 = vpop.f32.mrb[0].mxu0
        %v2182 = vadd.f32 %v1442, %v2181
        %v2183 = vpop.f32.mrb[0].mxu0
        %2184 = vmatprep.mubr.bf16.mxu0 0
        %2185 = vmatmul.mubr.bf16.gmra.mrb[0].mxu0 %v1683
        %v2186 = vpop.f32.mrb[0].mxu0
        %v2187 = vadd.f32 %v1447, %v2186
        %v2188 = vpop.f32.mrb[0].mxu0
        %v2189 = vpop.f32.mrb[0].mxu0
        %v2190 = vadd.f32 %v1450, %v2189
        %v2191 = vpop.f32.mrb[0].mxu0
        %2192 = vmatprep.mubr.bf16.mxu0 0
        %2193 = vmatmul.mubr.bf16.gmra.mrb[0].mxu0 %v1686
        %v2194 = vpop.f32.mrb[0].mxu0
        %v2195 = vadd.f32 %v1455, %v2194
        %v2196 = vpop.f32.mrb[0].mxu0
        %v2197 = vpop.f32.mrb[0].mxu0
        %v2198 = vadd.f32 %v1458, %v2197
        %v2199 = vpop.f32.mrb[0].mxu0
        %2200 = vmatprep.mubr.bf16.mxu0 0
        %2201 = vmatmul.mubr.bf16.gmra.mrb[0].mxu0 %v1689
        %v2202 = vpop.f32.mrb[0].mxu0
        %v2203 = vadd.f32 %v1463, %v2202
        %v2204 = vpop.f32.mrb[0].mxu0
        %v2205 = vpop.f32.mrb[0].mxu0
        %v2206 = vadd.f32 %v1466, %v2205
        %v2207 = vpop.f32.mrb[0].mxu0
        %2208 = vmatprep.mubr.bf16.mxu0 0
        %2209 = vmatmul.mubr.bf16.gmra.mrb[0].mxu0 %v1692
        %v2210 = vpop.f32.mrb[0].mxu0
        %v2211 = vadd.f32 %v1471, %v2210
        %v2212 = vpop.f32.mrb[0].mxu0
        %v2213 = vpop.f32.mrb[0].mxu0
        %v2214 = vadd.f32 %v1474, %v2213
        %v2215 = vpop.f32.mrb[0].mxu0
        %2216 = vmatprep.mubr.bf16.mxu0 0
        %2217 = vmatmul.mubr.bf16.gmra.mrb[0].mxu0 %v1695
        %v2218 = vpop.f32.mrb[0].mxu0
        %v2219 = vadd.f32 %v1479, %v2218
        %v2220 = vpop.f32.mrb[0].mxu0
        %v2221 = vpop.f32.mrb[0].mxu0
        %v2222 = vadd.f32 %v1482, %v2221
        %v2223 = vpop.f32.mrb[0].mxu0
        %2224 = vmatprep.mubr.bf16.mxu0 0
        %2225 = vmatmul.mubr.bf16.gmra.mrb[0].mxu0 %v1698
        %v2226 = vpop.f32.mrb[0].mxu0
        %v2227 = vadd.f32 %v1487, %v2226
        %v2228 = vpop.f32.mrb[0].mxu0
        %v2229 = vpop.f32.mrb[0].mxu0
        %v2230 = vadd.f32 %v1490, %v2229
        %v2231 = vpop.f32.mrb[0].mxu0
        %2232 = vmatprep.mubr.bf16.mxu0 0
        %2233 = vmatmul.mubr.bf16.gmra.mrb[0].mxu0 %v1701
        %v2234 = vpop.f32.mrb[0].mxu0
        %v2235 = vadd.f32 %v1495, %v2234
        %v2236 = vpop.f32.mrb[0].mxu0
        %v2237 = vpop.f32.mrb[0].mxu0
        %v2238 = vadd.f32 %v1498, %v2237
        %v2239 = vpop.f32.mrb[0].mxu0
        %2240 = vmatprep.mubr.bf16.mxu0 0
        %2241 = vmatmul.mubr.bf16.gmra.mrb[0].mxu0 %v1704
        %v2242 = vpop.f32.mrb[0].mxu0
        %v2243 = vadd.f32 %v1503, %v2242
        %v2244 = vpop.f32.mrb[0].mxu0
        %v2245 = vpop.f32.mrb[0].mxu0
        %v2246 = vadd.f32 %v1506, %v2245
        %v2247 = vpop.f32.mrb[0].mxu0
        %2248 = vmatprep.mubr.bf16.mxu0 0
        %2249 = vmatmul.mubr.bf16.gmra.mrb[0].mxu0 %v1707
        %v2250 = vpop.f32.mrb[0].mxu0
        %v2251 = vadd.f32 %v1511, %v2250
        %v2252 = vpop.f32.mrb[0].mxu0
        %v2253 = vpop.f32.mrb[0].mxu0
        %v2254 = vadd.f32 %v1514, %v2253
        %v2255 = vpop.f32.mrb[0].mxu0
        %2256 = vdwg.mxu0
        %v2257 = vld [vmem:[%s383 + $0x2] sm:$0xff]
        %v2258 = vld [vmem:[%s383 + $0xa] sm:$0xff]
        %v2259 = vld [vmem:[%s383 + $0x12] sm:$0xff]
        %v2260 = vld [vmem:[%s383 + $0x1a] sm:$0xff]
        %v2261 = vld [vmem:[%s383 + $0x2a] sm:$0xff]
        %v2262 = vld [vmem:[%s383 + $0x32] sm:$0xff]
        %v2263 = vld [vmem:[%s383 + $0x3a] sm:$0xff]
        %v2264 = vld [vmem:[%s383 + $0x42] sm:$0xff]
        %v2265 = vld [vmem:[%s383 + $0x52] sm:$0xff]
        %v2266 = vld [vmem:[%s383 + $0x5a] sm:$0xff]
        %v2267 = vld [vmem:[%s383 + $0x62] sm:$0xff]
        %v2268 = vld [vmem:[%s383 + $0x6a] sm:$0xff]
        %v2269 = vld [vmem:[%s383 + $0x7a] sm:$0xff]
        %v2270 = vld [vmem:[%s383 + $0x82] sm:$0xff]
        %v2271 = vld [vmem:[%s383 + $0x8a] sm:$0xff]
        %v2272 = vld [vmem:[%s383 + $0x92] sm:$0xff]
        %v2273 = vld [vmem:[%s383 + $0xa2] sm:$0xff]
        %v2274 = vld [vmem:[%s383 + $0xaa] sm:$0xff]
        %v2275 = vld [vmem:[%s383 + $0xb2] sm:$0xff]
        %v2276 = vld [vmem:[%s383 + $0xba] sm:$0xff]
        %v2277 = vld [vmem:[%s383 + $0xca] sm:$0xff]
        %v2278 = vld [vmem:[%s383 + $0xd2] sm:$0xff]
        %v2279 = vld [vmem:[%s383 + $0xda] sm:$0xff]
        %v2280 = vld [vmem:[%s383 + $0xe2] sm:$0xff]
        %v2281 = vld [vmem:[%s383 + $0xf2] sm:$0xff]
        %v2282 = vld [vmem:[%s383 + $0xfa] sm:$0xff]
        %v2283 = vld [vmem:[%s383 + $0x102] sm:$0xff]
        %v2284 = vld [vmem:[%s383 + $0x10a] sm:$0xff]
        %v2285 = vld [vmem:[%s383 + $0x11a] sm:$0xff]
        %v2286 = vld [vmem:[%s383 + $0x122] sm:$0xff]
        %v2287 = vld [vmem:[%s383 + $0x12a] sm:$0xff]
        %v2288 = vld [vmem:[%s383 + $0x132] sm:$0xff]
        %v2289 = vld [vmem:[%s383 + $0x142] sm:$0xff]
        %v2290 = vld [vmem:[%s383 + $0x14a] sm:$0xff]
        %v2291 = vld [vmem:[%s383 + $0x152] sm:$0xff]
        %v2292 = vld [vmem:[%s383 + $0x15a] sm:$0xff]
        %v2293 = vld [vmem:[%s383 + $0x16a] sm:$0xff]
        %v2294 = vld [vmem:[%s383 + $0x172] sm:$0xff]
        %v2295 = vld [vmem:[%s383 + $0x17a] sm:$0xff]
        %v2296 = vld [vmem:[%s383 + $0x182] sm:$0xff]
        %v2297 = vld [vmem:[%s383 + $0x192] sm:$0xff]
        %v2298 = vld [vmem:[%s383 + $0x19a] sm:$0xff]
        %v2299 = vld [vmem:[%s383 + $0x1a2] sm:$0xff]
        %v2300 = vld [vmem:[%s383 + $0x1aa] sm:$0xff]
        %v2301 = vld [vmem:[%s383 + $0x1ba] sm:$0xff]
        %v2302 = vld [vmem:[%s383 + $0x1c2] sm:$0xff]
        %v2303 = vld [vmem:[%s383 + $0x1ca] sm:$0xff]
        %v2304 = vld [vmem:[%s383 + $0x1d2] sm:$0xff]
        %v2305 = vld [vmem:[%s383 + $0x1e2] sm:$0xff]
        %v2306 = vld [vmem:[%s383 + $0x1ea] sm:$0xff]
        %v2307 = vld [vmem:[%s383 + $0x1f2] sm:$0xff]
        %v2308 = vld [vmem:[%s383 + $0x1fa] sm:$0xff]
        %v2309 = vld [vmem:[%s383 + $0x20a] sm:$0xff]
        %v2310 = vld [vmem:[%s383 + $0x212] sm:$0xff]
        %v2311 = vld [vmem:[%s383 + $0x21a] sm:$0xff]
        %v2312 = vld [vmem:[%s383 + $0x222] sm:$0xff]
        %v2313 = vld [vmem:[%s383 + $0x232] sm:$0xff]
        %v2314 = vld [vmem:[%s383 + $0x23a] sm:$0xff]
        %v2315 = vld [vmem:[%s383 + $0x242] sm:$0xff]
        %v2316 = vld [vmem:[%s383 + $0x24a] sm:$0xff]
        %v2317 = vld [vmem:[%s383 + $0x25a] sm:$0xff]
        %v2318 = vld [vmem:[%s383 + $0x262] sm:$0xff]
        %v2319 = vld [vmem:[%s383 + $0x26a] sm:$0xff]
        %v2320 = vld [vmem:[%s383 + $0x272] sm:$0xff]
        %v2321 = vld [vmem:[%s383 + $0x282] sm:$0xff]
        %v2322 = vld [vmem:[%s383 + $0x28a] sm:$0xff]
        %v2323 = vld [vmem:[%s383 + $0x292] sm:$0xff]
        %v2324 = vld [vmem:[%s383 + $0x29a] sm:$0xff]
        %v2325 = vld [vmem:[%s383 + $0x2aa] sm:$0xff]
        %v2326 = vld [vmem:[%s383 + $0x2b2] sm:$0xff]
        %v2327 = vld [vmem:[%s383 + $0x2ba] sm:$0xff]
        %v2328 = vld [vmem:[%s383 + $0x2c2] sm:$0xff]
        %v2329 = vld [vmem:[%s383 + $0x2d2] sm:$0xff]
        %v2330 = vld [vmem:[%s383 + $0x2da] sm:$0xff]
        %v2331 = vld [vmem:[%s383 + $0x2e2] sm:$0xff]
        %v2332 = vld [vmem:[%s383 + $0x2ea] sm:$0xff]
        %v2333 = vld [vmem:[%s383 + $0x2fa] sm:$0xff]
        %v2334 = vld [vmem:[%s383 + $0x302] sm:$0xff]
        %v2335 = vld [vmem:[%s383 + $0x30a] sm:$0xff]
        %v2336 = vld [vmem:[%s383 + $0x312] sm:$0xff]
        %v2337 = vld [vmem:[%s383 + $0x322] sm:$0xff]
        %v2338 = vld [vmem:[%s383 + $0x32a] sm:$0xff]
        %v2339 = vld [vmem:[%s383 + $0x332] sm:$0xff]
        %v2340 = vld [vmem:[%s383 + $0x33a] sm:$0xff]
        %v2341 = vld [vmem:[%s383 + $0x34a] sm:$0xff]
        %v2342 = vld [vmem:[%s383 + $0x352] sm:$0xff]
        %v2343 = vld [vmem:[%s383 + $0x35a] sm:$0xff]
        %v2344 = vld [vmem:[%s383 + $0x362] sm:$0xff]
        %v2345 = vld [vmem:[%s383 + $0x372] sm:$0xff]
        %v2346 = vld [vmem:[%s383 + $0x37a] sm:$0xff]
        %v2347 = vld [vmem:[%s383 + $0x382] sm:$0xff]
        %v2348 = vld [vmem:[%s383 + $0x38a] sm:$0xff]
        %v2349 = vld [vmem:[%s383 + $0x39a] sm:$0xff]
        %v2350 = vld [vmem:[%s383 + $0x3a2] sm:$0xff]
        %v2351 = vld [vmem:[%s383 + $0x3aa] sm:$0xff]
        %v2352 = vld [vmem:[%s383 + $0x3b2] sm:$0xff]
        %v2353 = vld [vmem:[%s383 + $0x3c2] sm:$0xff]
        %v2354 = vld [vmem:[%s383 + $0x3ca] sm:$0xff]
        %v2355 = vld [vmem:[%s383 + $0x3d2] sm:$0xff]
        %v2356 = vld [vmem:[%s383 + $0x3da] sm:$0xff]
        %v2357 = vld [vmem:[%s383 + $0x3ea] sm:$0xff]
        %v2358 = vld [vmem:[%s383 + $0x3f2] sm:$0xff]
        %v2359 = vld [vmem:[%s383 + $0x3fa] sm:$0xff]
        %v2360 = vld [vmem:[%s383 + $0x402] sm:$0xff]
        %v2361 = vld [vmem:[%s383 + $0x412] sm:$0xff]
        %v2362 = vld [vmem:[%s383 + $0x41a] sm:$0xff]
        %v2363 = vld [vmem:[%s383 + $0x422] sm:$0xff]
        %v2364 = vld [vmem:[%s383 + $0x42a] sm:$0xff]
        %v2365 = vld [vmem:[%s383 + $0x43a] sm:$0xff]
        %v2366 = vld [vmem:[%s383 + $0x442] sm:$0xff]
        %v2367 = vld [vmem:[%s383 + $0x44a] sm:$0xff]
        %v2368 = vld [vmem:[%s383 + $0x452] sm:$0xff]
        %v2369 = vld [vmem:[%s383 + $0x462] sm:$0xff]
        %v2370 = vld [vmem:[%s383 + $0x46a] sm:$0xff]
        %v2371 = vld [vmem:[%s383 + $0x472] sm:$0xff]
        %v2372 = vld [vmem:[%s383 + $0x47a] sm:$0xff]
        %v2373 = vld [vmem:[%s383 + $0x48a] sm:$0xff]
        %v2374 = vld [vmem:[%s383 + $0x492] sm:$0xff]
        %v2375 = vld [vmem:[%s383 + $0x49a] sm:$0xff]
        %v2376 = vld [vmem:[%s383 + $0x4a2] sm:$0xff]
        %v2377 = vld [vmem:[%s383 + $0x4b2] sm:$0xff]
        %v2378 = vld [vmem:[%s383 + $0x4ba] sm:$0xff]
        %v2379 = vld [vmem:[%s383 + $0x4c2] sm:$0xff]
        %v2380 = vld [vmem:[%s383 + $0x4ca] sm:$0xff]
        %v2381 = vld [vmem:[%s383 + $0x4da] sm:$0xff]
        %v2382 = vld [vmem:[%s383 + $0x4e2] sm:$0xff]
        %v2383 = vld [vmem:[%s383 + $0x4ea] sm:$0xff]
        %v2384 = vld [vmem:[%s383 + $0x4f2] sm:$0xff]
        %v2385 = vpack.c.bf16 %v2258, %v2257
        %v2386 = vpack.c.bf16 %v2260, %v2259
        %v2387 = vpack.c.bf16 %v2262, %v2261
        %v2388 = vpack.c.bf16 %v2264, %v2263
        %v2389 = vpack.c.bf16 %v2266, %v2265
        %v2390 = vpack.c.bf16 %v2268, %v2267
        %v2391 = vpack.c.bf16 %v2270, %v2269
        %v2392 = vpack.c.bf16 %v2272, %v2271
        %v2393 = vpack.c.bf16 %v2274, %v2273
        %v2394 = vpack.c.bf16 %v2276, %v2275
        %v2395 = vpack.c.bf16 %v2278, %v2277
        %v2396 = vpack.c.bf16 %v2280, %v2279
        %v2397 = vpack.c.bf16 %v2282, %v2281
        %v2398 = vpack.c.bf16 %v2284, %v2283
        %v2399 = vpack.c.bf16 %v2286, %v2285
        %v2400 = vpack.c.bf16 %v2288, %v2287
        %v2401 = vpack.c.bf16 %v2290, %v2289
        %v2402 = vpack.c.bf16 %v2292, %v2291
        %v2403 = vpack.c.bf16 %v2294, %v2293
        %v2404 = vpack.c.bf16 %v2296, %v2295
        %v2405 = vpack.c.bf16 %v2298, %v2297
        %v2406 = vpack.c.bf16 %v2300, %v2299
        %v2407 = vpack.c.bf16 %v2302, %v2301
        %v2408 = vpack.c.bf16 %v2304, %v2303
        %v2409 = vpack.c.bf16 %v2306, %v2305
        %v2410 = vpack.c.bf16 %v2308, %v2307
        %v2411 = vpack.c.bf16 %v2310, %v2309
        %v2412 = vpack.c.bf16 %v2312, %v2311
        %v2413 = vpack.c.bf16 %v2314, %v2313
        %v2414 = vpack.c.bf16 %v2316, %v2315
        %v2415 = vpack.c.bf16 %v2318, %v2317
        %v2416 = vpack.c.bf16 %v2320, %v2319
        %v2417 = vpack.c.bf16 %v2322, %v2321
        %v2418 = vpack.c.bf16 %v2324, %v2323
        %v2419 = vpack.c.bf16 %v2326, %v2325
        %v2420 = vpack.c.bf16 %v2328, %v2327
        %v2421 = vpack.c.bf16 %v2330, %v2329
        %v2422 = vpack.c.bf16 %v2332, %v2331
        %v2423 = vpack.c.bf16 %v2334, %v2333
        %v2424 = vpack.c.bf16 %v2336, %v2335
        %v2425 = vpack.c.bf16 %v2338, %v2337
        %v2426 = vpack.c.bf16 %v2340, %v2339
        %v2427 = vpack.c.bf16 %v2342, %v2341
        %v2428 = vpack.c.bf16 %v2344, %v2343
        %v2429 = vpack.c.bf16 %v2346, %v2345
        %v2430 = vpack.c.bf16 %v2348, %v2347
        %v2431 = vpack.c.bf16 %v2350, %v2349
        %v2432 = vpack.c.bf16 %v2352, %v2351
        %v2433 = vpack.c.bf16 %v2354, %v2353
        %v2434 = vpack.c.bf16 %v2356, %v2355
        %v2435 = vpack.c.bf16 %v2358, %v2357
        %v2436 = vpack.c.bf16 %v2360, %v2359
        %v2437 = vpack.c.bf16 %v2362, %v2361
        %v2438 = vpack.c.bf16 %v2364, %v2363
        %v2439 = vpack.c.bf16 %v2366, %v2365
        %v2440 = vpack.c.bf16 %v2368, %v2367
        %v2441 = vpack.c.bf16 %v2370, %v2369
        %v2442 = vpack.c.bf16 %v2372, %v2371
        %v2443 = vpack.c.bf16 %v2374, %v2373
        %v2444 = vpack.c.bf16 %v2376, %v2375
        %v2445 = vpack.c.bf16 %v2378, %v2377
        %v2446 = vpack.c.bf16 %v2380, %v2379
        %v2447 = vpack.c.bf16 %v2382, %v2381
        %v2448 = vpack.c.bf16 %v2384, %v2383
        %s2449 = scalar_lea.vmem %s1, 4
        %v2450 = vld [vmem:[%s2449] sm:$0x3]
        %v2452 = vsel %vm772, %v2385, 0
        %v2455 = vsel %vm772, %v2386, 0
        %v2458 = vsel %vm772, %v2387, 0
        %v2461 = vsel %vm772, %v2388, 0
        %v2464 = vsel %vm772, %v2389, 0
        %v2467 = vsel %vm772, %v2390, 0
        %v2470 = vsel %vm772, %v2391, 0
        %v2473 = vsel %vm772, %v2392, 0
        %v2476 = vsel %vm772, %v2393, 0
        %v2479 = vsel %vm772, %v2394, 0
        %v2482 = vsel %vm772, %v2395, 0
        %v2485 = vsel %vm772, %v2396, 0
        %v2488 = vsel %vm772, %v2397, 0
        %v2491 = vsel %vm772, %v2398, 0
        %v2494 = vsel %vm772, %v2399, 0
        %v2497 = vsel %vm772, %v2400, 0
        %v2500 = vsel %vm772, %v2401, 0
        %v2503 = vsel %vm772, %v2402, 0
        %v2506 = vsel %vm772, %v2403, 0
        %v2509 = vsel %vm772, %v2404, 0
        %v2512 = vsel %vm772, %v2405, 0
        %v2515 = vsel %vm772, %v2406, 0
        %v2518 = vsel %vm772, %v2407, 0
        %v2521 = vsel %vm772, %v2408, 0
        %v2524 = vsel %vm772, %v2409, 0
        %v2527 = vsel %vm772, %v2410, 0
        %v2530 = vsel %vm772, %v2411, 0
        %v2533 = vsel %vm772, %v2412, 0
        %v2536 = vsel %vm772, %v2413, 0
        %v2539 = vsel %vm772, %v2414, 0
        %v2542 = vsel %vm772, %v2415, 0
        %v2545 = vsel %vm772, %v2416, 0
        %v2548 = vsel %vm772, %v2417, 0
        %v2551 = vsel %vm772, %v2418, 0
        %v2554 = vsel %vm772, %v2419, 0
        %v2557 = vsel %vm772, %v2420, 0
        %v2560 = vsel %vm772, %v2421, 0
        %v2563 = vsel %vm772, %v2422, 0
        %v2566 = vsel %vm772, %v2423, 0
        %v2569 = vsel %vm772, %v2424, 0
        %v2572 = vsel %vm772, %v2425, 0
        %v2575 = vsel %vm772, %v2426, 0
        %v2578 = vsel %vm772, %v2427, 0
        %v2581 = vsel %vm772, %v2428, 0
        %v2584 = vsel %vm772, %v2429, 0
        %v2587 = vsel %vm772, %v2430, 0
        %v2590 = vsel %vm772, %v2431, 0
        %v2593 = vsel %vm772, %v2432, 0
        %v2596 = vsel %vm772, %v2433, 0
        %v2599 = vsel %vm772, %v2434, 0
        %v2602 = vsel %vm772, %v2435, 0
        %v2605 = vsel %vm772, %v2436, 0
        %v2608 = vsel %vm772, %v2437, 0
        %v2611 = vsel %vm772, %v2438, 0
        %v2614 = vsel %vm772, %v2439, 0
        %v2617 = vsel %vm772, %v2440, 0
        %v2620 = vsel %vm772, %v2441, 0
        %v2623 = vsel %vm772, %v2442, 0
        %v2626 = vsel %vm772, %v2443, 0
        %v2629 = vsel %vm772, %v2444, 0
        %v2632 = vsel %vm772, %v2445, 0
        %v2635 = vsel %vm772, %v2446, 0
        %v2638 = vsel %vm772, %v2447, 0
        %v2641 = vsel %vm772, %v2448, 0
        %v2644 = vand.u32 %v2450, %v968
        %2646 = vmatprep.subr.bf16.mxu0 0
        %2647 = vmatpush1.bf16.msra.mxu0 %v2644
        %2648 = vmatprep.subr.bf16.mxu0 0
        %2649 = vmatpush1.bf16.msra.mxu0 0
        %2650 = vmatprep.subr.bf16.mxu0 0
        %2651 = vmatpush1.bf16.msra.mxu0 0
        %2652 = vmatprep.subr.bf16.mxu0 0
        %2653 = vmatpush1.bf16.msra.mxu0 0
        %2654 = vmatprep.subr.bf16.mxu0 0
        %2655 = vmatpush1.bf16.msra.mxu0 0
        %2656 = vmatprep.subr.bf16.mxu0 0
        %2657 = vmatpush1.bf16.msra.mxu0 0
        %2658 = vmatprep.subr.bf16.mxu0 0
        %2659 = vmatpush1.bf16.msra.mxu0 0
        %2660 = vmatprep.subr.bf16.mxu0 0
        %2661 = vmatpush1.bf16.msra.mxu0 0
        %2662 = vmatprep.subr.bf16.mxu0 0
        %2663 = vmatpush1.bf16.msra.mxu0 0
        %2664 = vmatprep.subr.bf16.mxu0 0
        %2665 = vmatpush1.bf16.msra.mxu0 0
        %2666 = vmatprep.subr.bf16.mxu0 0
        %2667 = vmatpush1.bf16.msra.mxu0 0
        %2668 = vmatprep.subr.bf16.mxu0 0
        %2669 = vmatpush1.bf16.msra.mxu0 0
        %2670 = vmatprep.subr.bf16.mxu0 0
        %2671 = vmatpush1.bf16.msra.mxu0 0
        %2672 = vmatprep.subr.bf16.mxu0 0
        %2673 = vmatpush1.bf16.msra.mxu0 0
        %2674 = vmatprep.subr.bf16.mxu0 0
        %2675 = vmatpush1.bf16.msra.mxu0 0
        %2676 = vmatprep.subr.bf16.mxu0 0
        %2677 = vmatpush1.bf16.msra.mxu0 0
        %2678 = vmatprep.mubr.bf16.mxu0 0
        %2679 = vmatmul.mubr.bf16.gmra.mrb[0].mxu0 %v2452
        %v2680 = vpop.f32.mrb[0].mxu0
        %v2681 = vadd.f32 0.0, %v2680
        %v2682 = vpop.f32.mrb[0].mxu0
        %v2683 = vpop.f32.mrb[0].mxu0
        %v2684 = vadd.f32 0.0, %v2683
        %v2685 = vpop.f32.mrb[0].mxu0
        %2686 = vmatprep.mubr.bf16.mxu0 0
        %2687 = vmatmul.mubr.bf16.gmra.mrb[0].mxu0 %v2455
        %v2688 = vpop.f32.mrb[0].mxu0
        %v2689 = vadd.f32 0.0, %v2688
        %v2690 = vpop.f32.mrb[0].mxu0
        %v2691 = vpop.f32.mrb[0].mxu0
        %v2692 = vadd.f32 0.0, %v2691
        %v2693 = vpop.f32.mrb[0].mxu0
        %2694 = vmatprep.mubr.bf16.mxu0 0
        %2695 = vmatmul.mubr.bf16.gmra.mrb[0].mxu0 %v2458
        %v2696 = vpop.f32.mrb[0].mxu0
        %v2697 = vadd.f32 0.0, %v2696
        %v2698 = vpop.f32.mrb[0].mxu0
        %v2699 = vpop.f32.mrb[0].mxu0
        %v2700 = vadd.f32 0.0, %v2699
        %v2701 = vpop.f32.mrb[0].mxu0
        %2702 = vmatprep.mubr.bf16.mxu0 0
        %2703 = vmatmul.mubr.bf16.gmra.mrb[0].mxu0 %v2461
        %v2704 = vpop.f32.mrb[0].mxu0
        %v2705 = vadd.f32 0.0, %v2704
        %v2706 = vpop.f32.mrb[0].mxu0
        %v2707 = vpop.f32.mrb[0].mxu0
        %v2708 = vadd.f32 0.0, %v2707
        %v2709 = vpop.f32.mrb[0].mxu0
        %2710 = vmatprep.mubr.bf16.mxu0 0
        %2711 = vmatmul.mubr.bf16.gmra.mrb[0].mxu0 %v2464
        %v2712 = vpop.f32.mrb[0].mxu0
        %v2713 = vadd.f32 0.0, %v2712
        %v2714 = vpop.f32.mrb[0].mxu0
        %v2715 = vpop.f32.mrb[0].mxu0
        %v2716 = vadd.f32 0.0, %v2715
        %v2717 = vpop.f32.mrb[0].mxu0
        %2718 = vmatprep.mubr.bf16.mxu0 0
        %2719 = vmatmul.mubr.bf16.gmra.mrb[0].mxu0 %v2467
        %v2720 = vpop.f32.mrb[0].mxu0
        %v2721 = vadd.f32 0.0, %v2720
        %v2722 = vpop.f32.mrb[0].mxu0
        %v2723 = vpop.f32.mrb[0].mxu0
        %v2724 = vadd.f32 0.0, %v2723
        %v2725 = vpop.f32.mrb[0].mxu0
        %2726 = vmatprep.mubr.bf16.mxu0 0
        %2727 = vmatmul.mubr.bf16.gmra.mrb[0].mxu0 %v2470
        %v2728 = vpop.f32.mrb[0].mxu0
        %v2729 = vadd.f32 0.0, %v2728
        %v2730 = vpop.f32.mrb[0].mxu0
        %v2731 = vpop.f32.mrb[0].mxu0
        %v2732 = vadd.f32 0.0, %v2731
        %v2733 = vpop.f32.mrb[0].mxu0
        %2734 = vmatprep.mubr.bf16.mxu0 0
        %2735 = vmatmul.mubr.bf16.gmra.mrb[0].mxu0 %v2473
        %v2736 = vpop.f32.mrb[0].mxu0
        %v2737 = vadd.f32 0.0, %v2736
        %v2738 = vpop.f32.mrb[0].mxu0
        %v2739 = vpop.f32.mrb[0].mxu0
        %v2740 = vadd.f32 0.0, %v2739
        %v2741 = vpop.f32.mrb[0].mxu0
        %2742 = vmatprep.mubr.bf16.mxu0 0
        %2743 = vmatmul.mubr.bf16.gmra.mrb[0].mxu0 %v2476
        %v2744 = vpop.f32.mrb[0].mxu0
        %v2745 = vadd.f32 0.0, %v2744
        %v2746 = vpop.f32.mrb[0].mxu0
        %v2747 = vpop.f32.mrb[0].mxu0
        %v2748 = vadd.f32 0.0, %v2747
        %v2749 = vpop.f32.mrb[0].mxu0
        %2750 = vmatprep.mubr.bf16.mxu0 0
        %2751 = vmatmul.mubr.bf16.gmra.mrb[0].mxu0 %v2479
        %v2752 = vpop.f32.mrb[0].mxu0
        %v2753 = vadd.f32 0.0, %v2752
        %v2754 = vpop.f32.mrb[0].mxu0
        %v2755 = vpop.f32.mrb[0].mxu0
        %v2756 = vadd.f32 0.0, %v2755
        %v2757 = vpop.f32.mrb[0].mxu0
        %2758 = vmatprep.mubr.bf16.mxu0 0
        %2759 = vmatmul.mubr.bf16.gmra.mrb[0].mxu0 %v2482
        %v2760 = vpop.f32.mrb[0].mxu0
        %v2761 = vadd.f32 0.0, %v2760
        %v2762 = vpop.f32.mrb[0].mxu0
        %v2763 = vpop.f32.mrb[0].mxu0
        %v2764 = vadd.f32 0.0, %v2763
        %v2765 = vpop.f32.mrb[0].mxu0
        %2766 = vmatprep.mubr.bf16.mxu0 0
        %2767 = vmatmul.mubr.bf16.gmra.mrb[0].mxu0 %v2485
        %v2768 = vpop.f32.mrb[0].mxu0
        %v2769 = vadd.f32 0.0, %v2768
        %v2770 = vpop.f32.mrb[0].mxu0
        %v2771 = vpop.f32.mrb[0].mxu0
        %v2772 = vadd.f32 0.0, %v2771
        %v2773 = vpop.f32.mrb[0].mxu0
        %2774 = vmatprep.mubr.bf16.mxu0 0
        %2775 = vmatmul.mubr.bf16.gmra.mrb[0].mxu0 %v2488
        %v2776 = vpop.f32.mrb[0].mxu0
        %v2777 = vadd.f32 0.0, %v2776
        %v2778 = vpop.f32.mrb[0].mxu0
        %v2779 = vpop.f32.mrb[0].mxu0
        %v2780 = vadd.f32 0.0, %v2779
        %v2781 = vpop.f32.mrb[0].mxu0
        %2782 = vmatprep.mubr.bf16.mxu0 0
        %2783 = vmatmul.mubr.bf16.gmra.mrb[0].mxu0 %v2491
        %v2784 = vpop.f32.mrb[0].mxu0
        %v2785 = vadd.f32 0.0, %v2784
        %v2786 = vpop.f32.mrb[0].mxu0
        %v2787 = vpop.f32.mrb[0].mxu0
        %v2788 = vadd.f32 0.0, %v2787
        %v2789 = vpop.f32.mrb[0].mxu0
        %2790 = vmatprep.mubr.bf16.mxu0 0
        %2791 = vmatmul.mubr.bf16.gmra.mrb[0].mxu0 %v2494
        %v2792 = vpop.f32.mrb[0].mxu0
        %v2793 = vadd.f32 0.0, %v2792
        %v2794 = vpop.f32.mrb[0].mxu0
        %v2795 = vpop.f32.mrb[0].mxu0
        %v2796 = vadd.f32 0.0, %v2795
        %v2797 = vpop.f32.mrb[0].mxu0
        %2798 = vmatprep.mubr.bf16.mxu0 0
        %2799 = vmatmul.mubr.bf16.gmra.mrb[0].mxu0 %v2497
        %v2800 = vpop.f32.mrb[0].mxu0
        %v2801 = vadd.f32 0.0, %v2800
        %v2802 = vpop.f32.mrb[0].mxu0
        %v2803 = vpop.f32.mrb[0].mxu0
        %v2804 = vadd.f32 0.0, %v2803
        %v2805 = vpop.f32.mrb[0].mxu0
        %2806 = vmatprep.mubr.bf16.mxu0 0
        %2807 = vmatmul.mubr.bf16.gmra.mrb[0].mxu0 %v2500
        %v2808 = vpop.f32.mrb[0].mxu0
        %v2809 = vadd.f32 0.0, %v2808
        %v2810 = vpop.f32.mrb[0].mxu0
        %v2811 = vpop.f32.mrb[0].mxu0
        %v2812 = vadd.f32 0.0, %v2811
        %v2813 = vpop.f32.mrb[0].mxu0
        %2814 = vmatprep.mubr.bf16.mxu0 0
        %2815 = vmatmul.mubr.bf16.gmra.mrb[0].mxu0 %v2503
        %v2816 = vpop.f32.mrb[0].mxu0
        %v2817 = vadd.f32 0.0, %v2816
        %v2818 = vpop.f32.mrb[0].mxu0
        %v2819 = vpop.f32.mrb[0].mxu0
        %v2820 = vadd.f32 0.0, %v2819
        %v2821 = vpop.f32.mrb[0].mxu0
        %2822 = vmatprep.mubr.bf16.mxu0 0
        %2823 = vmatmul.mubr.bf16.gmra.mrb[0].mxu0 %v2506
        %v2824 = vpop.f32.mrb[0].mxu0
        %v2825 = vadd.f32 0.0, %v2824
        %v2826 = vpop.f32.mrb[0].mxu0
        %v2827 = vpop.f32.mrb[0].mxu0
        %v2828 = vadd.f32 0.0, %v2827
        %v2829 = vpop.f32.mrb[0].mxu0
        %2830 = vmatprep.mubr.bf16.mxu0 0
        %2831 = vmatmul.mubr.bf16.gmra.mrb[0].mxu0 %v2509
        %v2832 = vpop.f32.mrb[0].mxu0
        %v2833 = vadd.f32 0.0, %v2832
        %v2834 = vpop.f32.mrb[0].mxu0
        %v2835 = vpop.f32.mrb[0].mxu0
        %v2836 = vadd.f32 0.0, %v2835
        %v2837 = vpop.f32.mrb[0].mxu0
        %2838 = vmatprep.mubr.bf16.mxu0 0
        %2839 = vmatmul.mubr.bf16.gmra.mrb[0].mxu0 %v2512
        %v2840 = vpop.f32.mrb[0].mxu0
        %v2841 = vadd.f32 0.0, %v2840
        %v2842 = vpop.f32.mrb[0].mxu0
        %v2843 = vpop.f32.mrb[0].mxu0
        %v2844 = vadd.f32 0.0, %v2843
        %v2845 = vpop.f32.mrb[0].mxu0
        %2846 = vmatprep.mubr.bf16.mxu0 0
        %2847 = vmatmul.mubr.bf16.gmra.mrb[0].mxu0 %v2515
        %v2848 = vpop.f32.mrb[0].mxu0
        %v2849 = vadd.f32 0.0, %v2848
        %v2850 = vpop.f32.mrb[0].mxu0
        %v2851 = vpop.f32.mrb[0].mxu0
        %v2852 = vadd.f32 0.0, %v2851
        %v2853 = vpop.f32.mrb[0].mxu0
        %2854 = vmatprep.mubr.bf16.mxu0 0
        %2855 = vmatmul.mubr.bf16.gmra.mrb[0].mxu0 %v2518
        %v2856 = vpop.f32.mrb[0].mxu0
        %v2857 = vadd.f32 0.0, %v2856
        %v2858 = vpop.f32.mrb[0].mxu0
        %v2859 = vpop.f32.mrb[0].mxu0
        %v2860 = vadd.f32 0.0, %v2859
        %v2861 = vpop.f32.mrb[0].mxu0
        %2862 = vmatprep.mubr.bf16.mxu0 0
        %2863 = vmatmul.mubr.bf16.gmra.mrb[0].mxu0 %v2521
        %v2864 = vpop.f32.mrb[0].mxu0
        %v2865 = vadd.f32 0.0, %v2864
        %v2866 = vpop.f32.mrb[0].mxu0
        %v2867 = vpop.f32.mrb[0].mxu0
        %v2868 = vadd.f32 0.0, %v2867
        %v2869 = vpop.f32.mrb[0].mxu0
        %2870 = vmatprep.mubr.bf16.mxu0 0
        %2871 = vmatmul.mubr.bf16.gmra.mrb[0].mxu0 %v2524
        %v2872 = vpop.f32.mrb[0].mxu0
        %v2873 = vadd.f32 0.0, %v2872
        %v2874 = vpop.f32.mrb[0].mxu0
        %v2875 = vpop.f32.mrb[0].mxu0
        %v2876 = vadd.f32 0.0, %v2875
        %v2877 = vpop.f32.mrb[0].mxu0
        %2878 = vmatprep.mubr.bf16.mxu0 0
        %2879 = vmatmul.mubr.bf16.gmra.mrb[0].mxu0 %v2527
        %v2880 = vpop.f32.mrb[0].mxu0
        %v2881 = vadd.f32 0.0, %v2880
        %v2882 = vpop.f32.mrb[0].mxu0
        %v2883 = vpop.f32.mrb[0].mxu0
        %v2884 = vadd.f32 0.0, %v2883
        %v2885 = vpop.f32.mrb[0].mxu0
        %2886 = vmatprep.mubr.bf16.mxu0 0
        %2887 = vmatmul.mubr.bf16.gmra.mrb[0].mxu0 %v2530
        %v2888 = vpop.f32.mrb[0].mxu0
        %v2889 = vadd.f32 0.0, %v2888
        %v2890 = vpop.f32.mrb[0].mxu0
        %v2891 = vpop.f32.mrb[0].mxu0
        %v2892 = vadd.f32 0.0, %v2891
        %v2893 = vpop.f32.mrb[0].mxu0
        %2894 = vmatprep.mubr.bf16.mxu0 0
        %2895 = vmatmul.mubr.bf16.gmra.mrb[0].mxu0 %v2533
        %v2896 = vpop.f32.mrb[0].mxu0
        %v2897 = vadd.f32 0.0, %v2896
        %v2898 = vpop.f32.mrb[0].mxu0
        %v2899 = vpop.f32.mrb[0].mxu0
        %v2900 = vadd.f32 0.0, %v2899
        %v2901 = vpop.f32.mrb[0].mxu0
        %2902 = vmatprep.mubr.bf16.mxu0 0
        %2903 = vmatmul.mubr.bf16.gmra.mrb[0].mxu0 %v2536
        %v2904 = vpop.f32.mrb[0].mxu0
        %v2905 = vadd.f32 0.0, %v2904
        %v2906 = vpop.f32.mrb[0].mxu0
        %v2907 = vpop.f32.mrb[0].mxu0
        %v2908 = vadd.f32 0.0, %v2907
        %v2909 = vpop.f32.mrb[0].mxu0
        %2910 = vmatprep.mubr.bf16.mxu0 0
        %2911 = vmatmul.mubr.bf16.gmra.mrb[0].mxu0 %v2539
        %v2912 = vpop.f32.mrb[0].mxu0
        %v2913 = vadd.f32 0.0, %v2912
        %v2914 = vpop.f32.mrb[0].mxu0
        %v2915 = vpop.f32.mrb[0].mxu0
        %v2916 = vadd.f32 0.0, %v2915
        %v2917 = vpop.f32.mrb[0].mxu0
        %2918 = vmatprep.mubr.bf16.mxu0 0
        %2919 = vmatmul.mubr.bf16.gmra.mrb[0].mxu0 %v2542
        %v2920 = vpop.f32.mrb[0].mxu0
        %v2921 = vadd.f32 0.0, %v2920
        %v2922 = vpop.f32.mrb[0].mxu0
        %v2923 = vpop.f32.mrb[0].mxu0
        %v2924 = vadd.f32 0.0, %v2923
        %v2925 = vpop.f32.mrb[0].mxu0
        %2926 = vmatprep.mubr.bf16.mxu0 0
        %2927 = vmatmul.mubr.bf16.gmra.mrb[0].mxu0 %v2545
        %v2928 = vpop.f32.mrb[0].mxu0
        %v2929 = vadd.f32 0.0, %v2928
        %v2930 = vpop.f32.mrb[0].mxu0
        %v2931 = vpop.f32.mrb[0].mxu0
        %v2932 = vadd.f32 0.0, %v2931
        %v2933 = vpop.f32.mrb[0].mxu0
        %2934 = vmatprep.mubr.bf16.mxu0 0
        %2935 = vmatmul.mubr.bf16.gmra.mrb[0].mxu0 %v2548
        %v2936 = vpop.f32.mrb[0].mxu0
        %v2937 = vadd.f32 0.0, %v2936
        %v2938 = vpop.f32.mrb[0].mxu0
        %v2939 = vpop.f32.mrb[0].mxu0
        %v2940 = vadd.f32 0.0, %v2939
        %v2941 = vpop.f32.mrb[0].mxu0
        %2942 = vmatprep.mubr.bf16.mxu0 0
        %2943 = vmatmul.mubr.bf16.gmra.mrb[0].mxu0 %v2551
        %v2944 = vpop.f32.mrb[0].mxu0
        %v2945 = vadd.f32 0.0, %v2944
        %v2946 = vpop.f32.mrb[0].mxu0
        %v2947 = vpop.f32.mrb[0].mxu0
        %v2948 = vadd.f32 0.0, %v2947
        %v2949 = vpop.f32.mrb[0].mxu0
        %2950 = vmatprep.mubr.bf16.mxu0 0
        %2951 = vmatmul.mubr.bf16.gmra.mrb[0].mxu0 %v2554
        %v2952 = vpop.f32.mrb[0].mxu0
        %v2953 = vadd.f32 0.0, %v2952
        %v2954 = vpop.f32.mrb[0].mxu0
        %v2955 = vpop.f32.mrb[0].mxu0
        %v2956 = vadd.f32 0.0, %v2955
        %v2957 = vpop.f32.mrb[0].mxu0
        %2958 = vmatprep.mubr.bf16.mxu0 0
        %2959 = vmatmul.mubr.bf16.gmra.mrb[0].mxu0 %v2557
        %v2960 = vpop.f32.mrb[0].mxu0
        %v2961 = vadd.f32 0.0, %v2960
        %v2962 = vpop.f32.mrb[0].mxu0
        %v2963 = vpop.f32.mrb[0].mxu0
        %v2964 = vadd.f32 0.0, %v2963
        %v2965 = vpop.f32.mrb[0].mxu0
        %2966 = vmatprep.mubr.bf16.mxu0 0
        %2967 = vmatmul.mubr.bf16.gmra.mrb[0].mxu0 %v2560
        %v2968 = vpop.f32.mrb[0].mxu0
        %v2969 = vadd.f32 0.0, %v2968
        %v2970 = vpop.f32.mrb[0].mxu0
        %v2971 = vpop.f32.mrb[0].mxu0
        %v2972 = vadd.f32 0.0, %v2971
        %v2973 = vpop.f32.mrb[0].mxu0
        %2974 = vmatprep.mubr.bf16.mxu0 0
        %2975 = vmatmul.mubr.bf16.gmra.mrb[0].mxu0 %v2563
        %v2976 = vpop.f32.mrb[0].mxu0
        %v2977 = vadd.f32 0.0, %v2976
        %v2978 = vpop.f32.mrb[0].mxu0
        %v2979 = vpop.f32.mrb[0].mxu0
        %v2980 = vadd.f32 0.0, %v2979
        %v2981 = vpop.f32.mrb[0].mxu0
        %2982 = vmatprep.mubr.bf16.mxu0 0
        %2983 = vmatmul.mubr.bf16.gmra.mrb[0].mxu0 %v2566
        %v2984 = vpop.f32.mrb[0].mxu0
        %v2985 = vadd.f32 0.0, %v2984
        %v2986 = vpop.f32.mrb[0].mxu0
        %v2987 = vpop.f32.mrb[0].mxu0
        %v2988 = vadd.f32 0.0, %v2987
        %v2989 = vpop.f32.mrb[0].mxu0
        %2990 = vmatprep.mubr.bf16.mxu0 0
        %2991 = vmatmul.mubr.bf16.gmra.mrb[0].mxu0 %v2569
        %v2992 = vpop.f32.mrb[0].mxu0
        %v2993 = vadd.f32 0.0, %v2992
        %v2994 = vpop.f32.mrb[0].mxu0
        %v2995 = vpop.f32.mrb[0].mxu0
        %v2996 = vadd.f32 0.0, %v2995
        %v2997 = vpop.f32.mrb[0].mxu0
        %2998 = vmatprep.mubr.bf16.mxu0 0
        %2999 = vmatmul.mubr.bf16.gmra.mrb[0].mxu0 %v2572
        %v3000 = vpop.f32.mrb[0].mxu0
        %v3001 = vadd.f32 0.0, %v3000
        %v3002 = vpop.f32.mrb[0].mxu0
        %v3003 = vpop.f32.mrb[0].mxu0
        %v3004 = vadd.f32 0.0, %v3003
        %v3005 = vpop.f32.mrb[0].mxu0
        %3006 = vmatprep.mubr.bf16.mxu0 0
        %3007 = vmatmul.mubr.bf16.gmra.mrb[0].mxu0 %v2575
        %v3008 = vpop.f32.mrb[0].mxu0
        %v3009 = vadd.f32 0.0, %v3008
        %v3010 = vpop.f32.mrb[0].mxu0
        %v3011 = vpop.f32.mrb[0].mxu0
        %v3012 = vadd.f32 0.0, %v3011
        %v3013 = vpop.f32.mrb[0].mxu0
        %3014 = vmatprep.mubr.bf16.mxu0 0
        %3015 = vmatmul.mubr.bf16.gmra.mrb[0].mxu0 %v2578
        %v3016 = vpop.f32.mrb[0].mxu0
        %v3017 = vadd.f32 0.0, %v3016
        %v3018 = vpop.f32.mrb[0].mxu0
        %v3019 = vpop.f32.mrb[0].mxu0
        %v3020 = vadd.f32 0.0, %v3019
        %v3021 = vpop.f32.mrb[0].mxu0
        %3022 = vmatprep.mubr.bf16.mxu0 0
        %3023 = vmatmul.mubr.bf16.gmra.mrb[0].mxu0 %v2581
        %v3024 = vpop.f32.mrb[0].mxu0
        %v3025 = vadd.f32 0.0, %v3024
        %v3026 = vpop.f32.mrb[0].mxu0
        %v3027 = vpop.f32.mrb[0].mxu0
        %v3028 = vadd.f32 0.0, %v3027
        %v3029 = vpop.f32.mrb[0].mxu0
        %3030 = vmatprep.mubr.bf16.mxu0 0
        %3031 = vmatmul.mubr.bf16.gmra.mrb[0].mxu0 %v2584
        %v3032 = vpop.f32.mrb[0].mxu0
        %v3033 = vadd.f32 0.0, %v3032
        %v3034 = vpop.f32.mrb[0].mxu0
        %v3035 = vpop.f32.mrb[0].mxu0
        %v3036 = vadd.f32 0.0, %v3035
        %v3037 = vpop.f32.mrb[0].mxu0
        %3038 = vmatprep.mubr.bf16.mxu0 0
        %3039 = vmatmul.mubr.bf16.gmra.mrb[0].mxu0 %v2587
        %v3040 = vpop.f32.mrb[0].mxu0
        %v3041 = vadd.f32 0.0, %v3040
        %v3042 = vpop.f32.mrb[0].mxu0
        %v3043 = vpop.f32.mrb[0].mxu0
        %v3044 = vadd.f32 0.0, %v3043
        %v3045 = vpop.f32.mrb[0].mxu0
        %3046 = vmatprep.mubr.bf16.mxu0 0
        %3047 = vmatmul.mubr.bf16.gmra.mrb[0].mxu0 %v2590
        %v3048 = vpop.f32.mrb[0].mxu0
        %v3049 = vadd.f32 0.0, %v3048
        %v3050 = vpop.f32.mrb[0].mxu0
        %v3051 = vpop.f32.mrb[0].mxu0
        %v3052 = vadd.f32 0.0, %v3051
        %v3053 = vpop.f32.mrb[0].mxu0
        %3054 = vmatprep.mubr.bf16.mxu0 0
        %3055 = vmatmul.mubr.bf16.gmra.mrb[0].mxu0 %v2593
        %v3056 = vpop.f32.mrb[0].mxu0
        %v3057 = vadd.f32 0.0, %v3056
        %v3058 = vpop.f32.mrb[0].mxu0
        %v3059 = vpop.f32.mrb[0].mxu0
        %v3060 = vadd.f32 0.0, %v3059
        %v3061 = vpop.f32.mrb[0].mxu0
        %3062 = vmatprep.mubr.bf16.mxu0 0
        %3063 = vmatmul.mubr.bf16.gmra.mrb[0].mxu0 %v2596
        %v3064 = vpop.f32.mrb[0].mxu0
        %v3065 = vadd.f32 0.0, %v3064
        %v3066 = vpop.f32.mrb[0].mxu0
        %v3067 = vpop.f32.mrb[0].mxu0
        %v3068 = vadd.f32 0.0, %v3067
        %v3069 = vpop.f32.mrb[0].mxu0
        %3070 = vmatprep.mubr.bf16.mxu0 0
        %3071 = vmatmul.mubr.bf16.gmra.mrb[0].mxu0 %v2599
        %v3072 = vpop.f32.mrb[0].mxu0
        %v3073 = vadd.f32 0.0, %v3072
        %v3074 = vpop.f32.mrb[0].mxu0
        %v3075 = vpop.f32.mrb[0].mxu0
        %v3076 = vadd.f32 0.0, %v3075
        %v3077 = vpop.f32.mrb[0].mxu0
        %3078 = vmatprep.mubr.bf16.mxu0 0
        %3079 = vmatmul.mubr.bf16.gmra.mrb[0].mxu0 %v2602
        %v3080 = vpop.f32.mrb[0].mxu0
        %v3081 = vadd.f32 0.0, %v3080
        %v3082 = vpop.f32.mrb[0].mxu0
        %v3083 = vpop.f32.mrb[0].mxu0
        %v3084 = vadd.f32 0.0, %v3083
        %v3085 = vpop.f32.mrb[0].mxu0
        %3086 = vmatprep.mubr.bf16.mxu0 0
        %3087 = vmatmul.mubr.bf16.gmra.mrb[0].mxu0 %v2605
        %v3088 = vpop.f32.mrb[0].mxu0
        %v3089 = vadd.f32 0.0, %v3088
        %v3090 = vpop.f32.mrb[0].mxu0
        %v3091 = vpop.f32.mrb[0].mxu0
        %v3092 = vadd.f32 0.0, %v3091
        %v3093 = vpop.f32.mrb[0].mxu0
        %3094 = vmatprep.mubr.bf16.mxu0 0
        %3095 = vmatmul.mubr.bf16.gmra.mrb[0].mxu0 %v2608
        %v3096 = vpop.f32.mrb[0].mxu0
        %v3097 = vadd.f32 0.0, %v3096
        %v3098 = vpop.f32.mrb[0].mxu0
        %v3099 = vpop.f32.mrb[0].mxu0
        %v3100 = vadd.f32 0.0, %v3099
        %v3101 = vpop.f32.mrb[0].mxu0
        %3102 = vmatprep.mubr.bf16.mxu0 0
        %3103 = vmatmul.mubr.bf16.gmra.mrb[0].mxu0 %v2611
        %v3104 = vpop.f32.mrb[0].mxu0
        %v3105 = vadd.f32 0.0, %v3104
        %v3106 = vpop.f32.mrb[0].mxu0
        %v3107 = vpop.f32.mrb[0].mxu0
        %v3108 = vadd.f32 0.0, %v3107
        %v3109 = vpop.f32.mrb[0].mxu0
        %3110 = vmatprep.mubr.bf16.mxu0 0
        %3111 = vmatmul.mubr.bf16.gmra.mrb[0].mxu0 %v2614
        %v3112 = vpop.f32.mrb[0].mxu0
        %v3113 = vadd.f32 0.0, %v3112
        %v3114 = vpop.f32.mrb[0].mxu0
        %v3115 = vpop.f32.mrb[0].mxu0
        %v3116 = vadd.f32 0.0, %v3115
        %v3117 = vpop.f32.mrb[0].mxu0
        %3118 = vmatprep.mubr.bf16.mxu0 0
        %3119 = vmatmul.mubr.bf16.gmra.mrb[0].mxu0 %v2617
        %v3120 = vpop.f32.mrb[0].mxu0
        %v3121 = vadd.f32 0.0, %v3120
        %v3122 = vpop.f32.mrb[0].mxu0
        %v3123 = vpop.f32.mrb[0].mxu0
        %v3124 = vadd.f32 0.0, %v3123
        %v3125 = vpop.f32.mrb[0].mxu0
        %3126 = vmatprep.mubr.bf16.mxu0 0
        %3127 = vmatmul.mubr.bf16.gmra.mrb[0].mxu0 %v2620
        %v3128 = vpop.f32.mrb[0].mxu0
        %v3129 = vadd.f32 0.0, %v3128
        %v3130 = vpop.f32.mrb[0].mxu0
        %v3131 = vpop.f32.mrb[0].mxu0
        %v3132 = vadd.f32 0.0, %v3131
        %v3133 = vpop.f32.mrb[0].mxu0
        %3134 = vmatprep.mubr.bf16.mxu0 0
        %3135 = vmatmul.mubr.bf16.gmra.mrb[0].mxu0 %v2623
        %v3136 = vpop.f32.mrb[0].mxu0
        %v3137 = vadd.f32 0.0, %v3136
        %v3138 = vpop.f32.mrb[0].mxu0
        %v3139 = vpop.f32.mrb[0].mxu0
        %v3140 = vadd.f32 0.0, %v3139
        %v3141 = vpop.f32.mrb[0].mxu0
        %3142 = vmatprep.mubr.bf16.mxu0 0
        %3143 = vmatmul.mubr.bf16.gmra.mrb[0].mxu0 %v2626
        %v3144 = vpop.f32.mrb[0].mxu0
        %v3145 = vadd.f32 0.0, %v3144
        %v3146 = vpop.f32.mrb[0].mxu0
        %v3147 = vpop.f32.mrb[0].mxu0
        %v3148 = vadd.f32 0.0, %v3147
        %v3149 = vpop.f32.mrb[0].mxu0
        %3150 = vmatprep.mubr.bf16.mxu0 0
        %3151 = vmatmul.mubr.bf16.gmra.mrb[0].mxu0 %v2629
        %v3152 = vpop.f32.mrb[0].mxu0
        %v3153 = vadd.f32 0.0, %v3152
        %v3154 = vpop.f32.mrb[0].mxu0
        %v3155 = vpop.f32.mrb[0].mxu0
        %v3156 = vadd.f32 0.0, %v3155
        %v3157 = vpop.f32.mrb[0].mxu0
        %3158 = vmatprep.mubr.bf16.mxu0 0
        %3159 = vmatmul.mubr.bf16.gmra.mrb[0].mxu0 %v2632
        %v3160 = vpop.f32.mrb[0].mxu0
        %v3161 = vadd.f32 0.0, %v3160
        %v3162 = vpop.f32.mrb[0].mxu0
        %v3163 = vpop.f32.mrb[0].mxu0
        %v3164 = vadd.f32 0.0, %v3163
        %v3165 = vpop.f32.mrb[0].mxu0
        %3166 = vmatprep.mubr.bf16.mxu0 0
        %3167 = vmatmul.mubr.bf16.gmra.mrb[0].mxu0 %v2635
        %v3168 = vpop.f32.mrb[0].mxu0
        %v3169 = vadd.f32 0.0, %v3168
        %v3170 = vpop.f32.mrb[0].mxu0
        %v3171 = vpop.f32.mrb[0].mxu0
        %v3172 = vadd.f32 0.0, %v3171
        %v3173 = vpop.f32.mrb[0].mxu0
        %3174 = vmatprep.mubr.bf16.mxu0 0
        %3175 = vmatmul.mubr.bf16.gmra.mrb[0].mxu0 %v2638
        %v3176 = vpop.f32.mrb[0].mxu0
        %v3177 = vadd.f32 0.0, %v3176
        %v3178 = vpop.f32.mrb[0].mxu0
        %v3179 = vpop.f32.mrb[0].mxu0
        %v3180 = vadd.f32 0.0, %v3179
        %v3181 = vpop.f32.mrb[0].mxu0
        %3182 = vmatprep.mubr.bf16.mxu0 0
        %3183 = vmatmul.mubr.bf16.gmra.mrb[0].mxu0 %v2641
        %v3184 = vpop.f32.mrb[0].mxu0
        %v3185 = vadd.f32 0.0, %v3184
        %v3186 = vpop.f32.mrb[0].mxu0
        %v3187 = vpop.f32.mrb[0].mxu0
        %v3188 = vadd.f32 0.0, %v3187
        %v3189 = vpop.f32.mrb[0].mxu0
        %3190 = vdwg.mxu0
        %v3191 = vadd.f32 %v1747, %v2681
        %v3192 = vadd.f32 %v1750, %v2684
        %v3193 = vadd.f32 %v1755, %v2689
        %v3194 = vadd.f32 %v1758, %v2692
        %v3195 = vadd.f32 %v1763, %v2697
        %v3196 = vadd.f32 %v1766, %v2700
        %v3197 = vadd.f32 %v1771, %v2705
        %v3198 = vadd.f32 %v1774, %v2708
        %v3199 = vadd.f32 %v1779, %v2713
        %v3200 = vadd.f32 %v1782, %v2716
        %v3201 = vadd.f32 %v1787, %v2721
        %v3202 = vadd.f32 %v1790, %v2724
        %v3203 = vadd.f32 %v1795, %v2729
        %v3204 = vadd.f32 %v1798, %v2732
        %v3205 = vadd.f32 %v1803, %v2737
        %v3206 = vadd.f32 %v1806, %v2740
        %v3207 = vadd.f32 %v1811, %v2745
        %v3208 = vadd.f32 %v1814, %v2748
        %v3209 = vadd.f32 %v1819, %v2753
        %v3210 = vadd.f32 %v1822, %v2756
        %v3211 = vadd.f32 %v1827, %v2761
        %v3212 = vadd.f32 %v1830, %v2764
        %v3213 = vadd.f32 %v1835, %v2769
        %v3214 = vadd.f32 %v1838, %v2772
        %v3215 = vadd.f32 %v1843, %v2777
        %v3216 = vadd.f32 %v1846, %v2780
        %v3217 = vadd.f32 %v1851, %v2785
        %v3218 = vadd.f32 %v1854, %v2788
        %v3219 = vadd.f32 %v1859, %v2793
        %v3220 = vadd.f32 %v1862, %v2796
        %v3221 = vadd.f32 %v1867, %v2801
        %v3222 = vadd.f32 %v1870, %v2804
        %v3223 = vadd.f32 %v1875, %v2809
        %v3224 = vadd.f32 %v1878, %v2812
        %v3225 = vadd.f32 %v1883, %v2817
        %v3226 = vadd.f32 %v1886, %v2820
        %v3227 = vadd.f32 %v1891, %v2825
        %v3228 = vadd.f32 %v1894, %v2828
        %v3229 = vadd.f32 %v1899, %v2833
        %v3230 = vadd.f32 %v1902, %v2836
        %v3231 = vadd.f32 %v1907, %v2841
        %v3232 = vadd.f32 %v1910, %v2844
        %v3233 = vadd.f32 %v1915, %v2849
        %v3234 = vadd.f32 %v1918, %v2852
        %v3235 = vadd.f32 %v1923, %v2857
        %v3236 = vadd.f32 %v1926, %v2860
        %v3237 = vadd.f32 %v1931, %v2865
        %v3238 = vadd.f32 %v1934, %v2868
        %v3239 = vadd.f32 %v1939, %v2873
        %v3240 = vadd.f32 %v1942, %v2876
        %v3241 = vadd.f32 %v1947, %v2881
        %v3242 = vadd.f32 %v1950, %v2884
        %v3243 = vadd.f32 %v1955, %v2889
        %v3244 = vadd.f32 %v1958, %v2892
        %v3245 = vadd.f32 %v1963, %v2897
        %v3246 = vadd.f32 %v1966, %v2900
        %v3247 = vadd.f32 %v1971, %v2905
        %v3248 = vadd.f32 %v1974, %v2908
        %v3249 = vadd.f32 %v1979, %v2913
        %v3250 = vadd.f32 %v1982, %v2916
        %v3251 = vadd.f32 %v1987, %v2921
        %v3252 = vadd.f32 %v1990, %v2924
        %v3253 = vadd.f32 %v1995, %v2929
        %v3254 = vadd.f32 %v1998, %v2932
        %v3255 = vadd.f32 %v2003, %v2937
        %v3256 = vadd.f32 %v2006, %v2940
        %v3257 = vadd.f32 %v2011, %v2945
        %v3258 = vadd.f32 %v2014, %v2948
        %v3259 = vadd.f32 %v2019, %v2953
        %v3260 = vadd.f32 %v2022, %v2956
        %v3261 = vadd.f32 %v2027, %v2961
        %v3262 = vadd.f32 %v2030, %v2964
        %v3263 = vadd.f32 %v2035, %v2969
        %v3264 = vadd.f32 %v2038, %v2972
        %v3265 = vadd.f32 %v2043, %v2977
        %v3266 = vadd.f32 %v2046, %v2980
        %v3267 = vadd.f32 %v2051, %v2985
        %v3268 = vadd.f32 %v2054, %v2988
        %v3269 = vadd.f32 %v2059, %v2993
        %v3270 = vadd.f32 %v2062, %v2996
        %v3271 = vadd.f32 %v2067, %v3001
        %v3272 = vadd.f32 %v2070, %v3004
        %v3273 = vadd.f32 %v2075, %v3009
        %v3274 = vadd.f32 %v2078, %v3012
        %v3275 = vadd.f32 %v2083, %v3017
        %v3276 = vadd.f32 %v2086, %v3020
        %v3277 = vadd.f32 %v2091, %v3025
        %v3278 = vadd.f32 %v2094, %v3028
        %v3279 = vadd.f32 %v2099, %v3033
        %v3280 = vadd.f32 %v2102, %v3036
        %v3281 = vadd.f32 %v2107, %v3041
        %v3282 = vadd.f32 %v2110, %v3044
        %v3283 = vadd.f32 %v2115, %v3049
        %v3284 = vadd.f32 %v2118, %v3052
        %v3285 = vadd.f32 %v2123, %v3057
        %v3286 = vadd.f32 %v2126, %v3060
        %v3287 = vadd.f32 %v2131, %v3065
        %v3288 = vadd.f32 %v2134, %v3068
        %v3289 = vadd.f32 %v2139, %v3073
        %v3290 = vadd.f32 %v2142, %v3076
        %v3291 = vadd.f32 %v2147, %v3081
        %v3292 = vadd.f32 %v2150, %v3084
        %v3293 = vadd.f32 %v2155, %v3089
        %v3294 = vadd.f32 %v2158, %v3092
        %v3295 = vadd.f32 %v2163, %v3097
        %v3296 = vadd.f32 %v2166, %v3100
        %v3297 = vadd.f32 %v2171, %v3105
        %v3298 = vadd.f32 %v2174, %v3108
        %v3299 = vadd.f32 %v2179, %v3113
        %v3300 = vadd.f32 %v2182, %v3116
        %v3301 = vadd.f32 %v2187, %v3121
        %v3302 = vadd.f32 %v2190, %v3124
        %v3303 = vadd.f32 %v2195, %v3129
        %v3304 = vadd.f32 %v2198, %v3132
        %v3305 = vadd.f32 %v2203, %v3137
        %v3306 = vadd.f32 %v2206, %v3140
        %v3307 = vadd.f32 %v2211, %v3145
        %v3308 = vadd.f32 %v2214, %v3148
        %v3309 = vadd.f32 %v2219, %v3153
        %v3310 = vadd.f32 %v2222, %v3156
        %v3311 = vadd.f32 %v2227, %v3161
        %v3312 = vadd.f32 %v2230, %v3164
        %v3313 = vadd.f32 %v2235, %v3169
        %v3314 = vadd.f32 %v2238, %v3172
        %v3315 = vadd.f32 %v2243, %v3177
        %v3316 = vadd.f32 %v2246, %v3180
        %v3317 = vadd.f32 %v2251, %v3185
        %v3318 = vadd.f32 %v2254, %v3188
        %s3319 = scalar_lea.vmem %s383, 40
        %v3320 = vld [vmem:[%s3319] sm:$0xff]
        %v3321 = vld [vmem:[%s3319 + $0x8] sm:$0xff]
        %v3322 = vld [vmem:[%s3319 + $0x10] sm:$0xff]
        %v3323 = vld [vmem:[%s3319 + $0x18] sm:$0xff]
        %v3324 = vld [vmem:[%s3319 + $0x28] sm:$0xff]
        %v3325 = vld [vmem:[%s3319 + $0x30] sm:$0xff]
        %v3326 = vld [vmem:[%s3319 + $0x38] sm:$0xff]
        %v3327 = vld [vmem:[%s3319 + $0x40] sm:$0xff]
        %v3328 = vld [vmem:[%s3319 + $0x50] sm:$0xff]
        %v3329 = vld [vmem:[%s3319 + $0x58] sm:$0xff]
        %v3330 = vld [vmem:[%s3319 + $0x60] sm:$0xff]
        %v3331 = vld [vmem:[%s3319 + $0x68] sm:$0xff]
        %v3332 = vld [vmem:[%s3319 + $0x78] sm:$0xff]
        %v3333 = vld [vmem:[%s3319 + $0x80] sm:$0xff]
        %v3334 = vld [vmem:[%s3319 + $0x88] sm:$0xff]
        %v3335 = vld [vmem:[%s3319 + $0x90] sm:$0xff]
        %v3336 = vld [vmem:[%s3319 + $0xa0] sm:$0xff]
        %v3337 = vld [vmem:[%s3319 + $0xa8] sm:$0xff]
        %v3338 = vld [vmem:[%s3319 + $0xb0] sm:$0xff]
        %v3339 = vld [vmem:[%s3319 + $0xb8] sm:$0xff]
        %v3340 = vld [vmem:[%s3319 + $0xc8] sm:$0xff]
        %v3341 = vld [vmem:[%s3319 + $0xd0] sm:$0xff]
        %v3342 = vld [vmem:[%s3319 + $0xd8] sm:$0xff]
        %v3343 = vld [vmem:[%s3319 + $0xe0] sm:$0xff]
        %v3344 = vld [vmem:[%s3319 + $0xf0] sm:$0xff]
        %v3345 = vld [vmem:[%s3319 + $0xf8] sm:$0xff]
        %v3346 = vld [vmem:[%s3319 + $0x100] sm:$0xff]
        %v3347 = vld [vmem:[%s3319 + $0x108] sm:$0xff]
        %v3348 = vld [vmem:[%s3319 + $0x118] sm:$0xff]
        %v3349 = vld [vmem:[%s3319 + $0x120] sm:$0xff]
        %v3350 = vld [vmem:[%s3319 + $0x128] sm:$0xff]
        %v3351 = vld [vmem:[%s3319 + $0x130] sm:$0xff]
        %v3352 = vld [vmem:[%s3319 + $0x140] sm:$0xff]
        %v3353 = vld [vmem:[%s3319 + $0x148] sm:$0xff]
        %v3354 = vld [vmem:[%s3319 + $0x150] sm:$0xff]
        %v3355 = vld [vmem:[%s3319 + $0x158] sm:$0xff]
        %v3356 = vld [vmem:[%s3319 + $0x168] sm:$0xff]
        %v3357 = vld [vmem:[%s3319 + $0x170] sm:$0xff]
        %v3358 = vld [vmem:[%s3319 + $0x178] sm:$0xff]
        %v3359 = vld [vmem:[%s3319 + $0x180] sm:$0xff]
        %v3360 = vld [vmem:[%s3319 + $0x190] sm:$0xff]
        %v3361 = vld [vmem:[%s3319 + $0x198] sm:$0xff]
        %v3362 = vld [vmem:[%s3319 + $0x1a0] sm:$0xff]
        %v3363 = vld [vmem:[%s3319 + $0x1a8] sm:$0xff]
        %v3364 = vld [vmem:[%s3319 + $0x1b8] sm:$0xff]
        %v3365 = vld [vmem:[%s3319 + $0x1c0] sm:$0xff]
        %v3366 = vld [vmem:[%s3319 + $0x1c8] sm:$0xff]
        %v3367 = vld [vmem:[%s3319 + $0x1d0] sm:$0xff]
        %v3368 = vld [vmem:[%s3319 + $0x1e0] sm:$0xff]
        %v3369 = vld [vmem:[%s3319 + $0x1e8] sm:$0xff]
        %v3370 = vld [vmem:[%s3319 + $0x1f0] sm:$0xff]
        %v3371 = vld [vmem:[%s3319 + $0x1f8] sm:$0xff]
        %v3372 = vld [vmem:[%s3319 + $0x208] sm:$0xff]
        %v3373 = vld [vmem:[%s3319 + $0x210] sm:$0xff]
        %v3374 = vld [vmem:[%s3319 + $0x218] sm:$0xff]
        %v3375 = vld [vmem:[%s3319 + $0x220] sm:$0xff]
        %v3376 = vld [vmem:[%s3319 + $0x230] sm:$0xff]
        %v3377 = vld [vmem:[%s3319 + $0x238] sm:$0xff]
        %v3378 = vld [vmem:[%s3319 + $0x240] sm:$0xff]
        %v3379 = vld [vmem:[%s3319 + $0x248] sm:$0xff]
        %v3380 = vld [vmem:[%s3319 + $0x258] sm:$0xff]
        %v3381 = vld [vmem:[%s3319 + $0x260] sm:$0xff]
        %v3382 = vld [vmem:[%s3319 + $0x268] sm:$0xff]
        %v3383 = vld [vmem:[%s3319 + $0x270] sm:$0xff]
        %v3384 = vld [vmem:[%s3319 + $0x280] sm:$0xff]
        %v3385 = vld [vmem:[%s3319 + $0x288] sm:$0xff]
        %v3386 = vld [vmem:[%s3319 + $0x290] sm:$0xff]
        %v3387 = vld [vmem:[%s3319 + $0x298] sm:$0xff]
        %v3388 = vld [vmem:[%s3319 + $0x2a8] sm:$0xff]
        %v3389 = vld [vmem:[%s3319 + $0x2b0] sm:$0xff]
        %v3390 = vld [vmem:[%s3319 + $0x2b8] sm:$0xff]
        %v3391 = vld [vmem:[%s3319 + $0x2c0] sm:$0xff]
        %v3392 = vld [vmem:[%s3319 + $0x2d0] sm:$0xff]
        %v3393 = vld [vmem:[%s3319 + $0x2d8] sm:$0xff]
        %v3394 = vld [vmem:[%s3319 + $0x2e0] sm:$0xff]
        %v3395 = vld [vmem:[%s3319 + $0x2e8] sm:$0xff]
        %v3396 = vld [vmem:[%s3319 + $0x2f8] sm:$0xff]
        %v3397 = vld [vmem:[%s3319 + $0x300] sm:$0xff]
        %v3398 = vld [vmem:[%s3319 + $0x308] sm:$0xff]
        %v3399 = vld [vmem:[%s3319 + $0x310] sm:$0xff]
        %v3400 = vld [vmem:[%s3319 + $0x320] sm:$0xff]
        %v3401 = vld [vmem:[%s3319 + $0x328] sm:$0xff]
        %v3402 = vld [vmem:[%s3319 + $0x330] sm:$0xff]
        %v3403 = vld [vmem:[%s3319 + $0x338] sm:$0xff]
        %v3404 = vld [vmem:[%s3319 + $0x348] sm:$0xff]
        %v3405 = vld [vmem:[%s3319 + $0x350] sm:$0xff]
        %v3406 = vld [vmem:[%s3319 + $0x358] sm:$0xff]
        %v3407 = vld [vmem:[%s3319 + $0x360] sm:$0xff]
        %v3408 = vld [vmem:[%s3319 + $0x370] sm:$0xff]
        %v3409 = vld [vmem:[%s3319 + $0x378] sm:$0xff]
        %v3410 = vld [vmem:[%s3319 + $0x380] sm:$0xff]
        %v3411 = vld [vmem:[%s3319 + $0x388] sm:$0xff]
        %v3412 = vld [vmem:[%s3319 + $0x398] sm:$0xff]
        %v3413 = vld [vmem:[%s3319 + $0x3a0] sm:$0xff]
        %v3414 = vld [vmem:[%s3319 + $0x3a8] sm:$0xff]
        %v3415 = vld [vmem:[%s3319 + $0x3b0] sm:$0xff]
        %v3416 = vld [vmem:[%s3319 + $0x3c0] sm:$0xff]
        %v3417 = vld [vmem:[%s3319 + $0x3c8] sm:$0xff]
        %v3418 = vld [vmem:[%s3319 + $0x3d0] sm:$0xff]
        %v3419 = vld [vmem:[%s3319 + $0x3d8] sm:$0xff]
        %v3420 = vld [vmem:[%s3319 + $0x3e8] sm:$0xff]
        %v3421 = vld [vmem:[%s3319 + $0x3f0] sm:$0xff]
        %v3422 = vld [vmem:[%s3319 + $0x3f8] sm:$0xff]
        %v3423 = vld [vmem:[%s3319 + $0x400] sm:$0xff]
        %v3424 = vld [vmem:[%s3319 + $0x410] sm:$0xff]
        %v3425 = vld [vmem:[%s3319 + $0x418] sm:$0xff]
        %v3426 = vld [vmem:[%s3319 + $0x420] sm:$0xff]
        %v3427 = vld [vmem:[%s3319 + $0x428] sm:$0xff]
        %v3428 = vld [vmem:[%s3319 + $0x438] sm:$0xff]
        %v3429 = vld [vmem:[%s3319 + $0x440] sm:$0xff]
        %v3430 = vld [vmem:[%s3319 + $0x448] sm:$0xff]
        %v3431 = vld [vmem:[%s3319 + $0x450] sm:$0xff]
        %v3432 = vld [vmem:[%s3319 + $0x460] sm:$0xff]
        %v3433 = vld [vmem:[%s3319 + $0x468] sm:$0xff]
        %v3434 = vld [vmem:[%s3319 + $0x470] sm:$0xff]
        %v3435 = vld [vmem:[%s3319 + $0x478] sm:$0xff]
        %v3436 = vld [vmem:[%s3319 + $0x488] sm:$0xff]
        %v3437 = vld [vmem:[%s3319 + $0x490] sm:$0xff]
        %v3438 = vld [vmem:[%s3319 + $0x498] sm:$0xff]
        %v3439 = vld [vmem:[%s3319 + $0x4a0] sm:$0xff]
        %v3440 = vld [vmem:[%s3319 + $0x4b0] sm:$0xff]
        %v3441 = vld [vmem:[%s3319 + $0x4b8] sm:$0xff]
        %v3442 = vld [vmem:[%s3319 + $0x4c0] sm:$0xff]
        %v3443 = vld [vmem:[%s3319 + $0x4c8] sm:$0xff]
        %v3444 = vld [vmem:[%s3319 + $0x4d8] sm:$0xff]
        %v3445 = vld [vmem:[%s3319 + $0x4e0] sm:$0xff]
        %v3446 = vld [vmem:[%s3319 + $0x4e8] sm:$0xff]
        %v3447 = vld [vmem:[%s3319 + $0x4f0] sm:$0xff]
        %v3448 = vpack.c.bf16 %v3321, %v3320
        %v3449 = vpack.c.bf16 %v3323, %v3322
        %v3450 = vpack.c.bf16 %v3325, %v3324
        %v3451 = vpack.c.bf16 %v3327, %v3326
        %v3452 = vpack.c.bf16 %v3329, %v3328
        %v3453 = vpack.c.bf16 %v3331, %v3330
        %v3454 = vpack.c.bf16 %v3333, %v3332
        %v3455 = vpack.c.bf16 %v3335, %v3334
        %v3456 = vpack.c.bf16 %v3337, %v3336
        %v3457 = vpack.c.bf16 %v3339, %v3338
        %v3458 = vpack.c.bf16 %v3341, %v3340
        %v3459 = vpack.c.bf16 %v3343, %v3342
        %v3460 = vpack.c.bf16 %v3345, %v3344
        %v3461 = vpack.c.bf16 %v3347, %v3346
        %v3462 = vpack.c.bf16 %v3349, %v3348
        %v3463 = vpack.c.bf16 %v3351, %v3350
        %v3464 = vpack.c.bf16 %v3353, %v3352
        %v3465 = vpack.c.bf16 %v3355, %v3354
        %v3466 = vpack.c.bf16 %v3357, %v3356
        %v3467 = vpack.c.bf16 %v3359, %v3358
        %v3468 = vpack.c.bf16 %v3361, %v3360
        %v3469 = vpack.c.bf16 %v3363, %v3362
        %v3470 = vpack.c.bf16 %v3365, %v3364
        %v3471 = vpack.c.bf16 %v3367, %v3366
        %v3472 = vpack.c.bf16 %v3369, %v3368
        %v3473 = vpack.c.bf16 %v3371, %v3370
        %v3474 = vpack.c.bf16 %v3373, %v3372
        %v3475 = vpack.c.bf16 %v3375, %v3374
        %v3476 = vpack.c.bf16 %v3377, %v3376
        %v3477 = vpack.c.bf16 %v3379, %v3378
        %v3478 = vpack.c.bf16 %v3381, %v3380
        %v3479 = vpack.c.bf16 %v3383, %v3382
        %v3480 = vpack.c.bf16 %v3385, %v3384
        %v3481 = vpack.c.bf16 %v3387, %v3386
        %v3482 = vpack.c.bf16 %v3389, %v3388
        %v3483 = vpack.c.bf16 %v3391, %v3390
        %v3484 = vpack.c.bf16 %v3393, %v3392
        %v3485 = vpack.c.bf16 %v3395, %v3394
        %v3486 = vpack.c.bf16 %v3397, %v3396
        %v3487 = vpack.c.bf16 %v3399, %v3398
        %v3488 = vpack.c.bf16 %v3401, %v3400
        %v3489 = vpack.c.bf16 %v3403, %v3402
        %v3490 = vpack.c.bf16 %v3405, %v3404
        %v3491 = vpack.c.bf16 %v3407, %v3406
        %v3492 = vpack.c.bf16 %v3409, %v3408
        %v3493 = vpack.c.bf16 %v3411, %v3410
        %v3494 = vpack.c.bf16 %v3413, %v3412
        %v3495 = vpack.c.bf16 %v3415, %v3414
        %v3496 = vpack.c.bf16 %v3417, %v3416
        %v3497 = vpack.c.bf16 %v3419, %v3418
        %v3498 = vpack.c.bf16 %v3421, %v3420
        %v3499 = vpack.c.bf16 %v3423, %v3422
        %v3500 = vpack.c.bf16 %v3425, %v3424
        %v3501 = vpack.c.bf16 %v3427, %v3426
        %v3502 = vpack.c.bf16 %v3429, %v3428
        %v3503 = vpack.c.bf16 %v3431, %v3430
        %v3504 = vpack.c.bf16 %v3433, %v3432
        %v3505 = vpack.c.bf16 %v3435, %v3434
        %v3506 = vpack.c.bf16 %v3437, %v3436
        %v3507 = vpack.c.bf16 %v3439, %v3438
        %v3508 = vpack.c.bf16 %v3441, %v3440
        %v3509 = vpack.c.bf16 %v3443, %v3442
        %v3510 = vpack.c.bf16 %v3445, %v3444
        %v3511 = vpack.c.bf16 %v3447, %v3446
        %s3512 = scalar_lea.vmem %s1, 6
        %v3513 = vld [vmem:[%s3512] sm:$0x3]
        %v3515 = vsel %vm772, %v3448, 0
        %v3518 = vsel %vm772, %v3449, 0
        %v3521 = vsel %vm772, %v3450, 0
        %v3524 = vsel %vm772, %v3451, 0
        %v3527 = vsel %vm772, %v3452, 0
        %v3530 = vsel %vm772, %v3453, 0
        %v3533 = vsel %vm772, %v3454, 0
        %v3536 = vsel %vm772, %v3455, 0
        %v3539 = vsel %vm772, %v3456, 0
        %v3542 = vsel %vm772, %v3457, 0
        %v3545 = vsel %vm772, %v3458, 0
        %v3548 = vsel %vm772, %v3459, 0
        %v3551 = vsel %vm772, %v3460, 0
        %v3554 = vsel %vm772, %v3461, 0
        %v3557 = vsel %vm772, %v3462, 0
        %v3560 = vsel %vm772, %v3463, 0
        %v3563 = vsel %vm772, %v3464, 0
        %v3566 = vsel %vm772, %v3465, 0
        %v3569 = vsel %vm772, %v3466, 0
        %v3572 = vsel %vm772, %v3467, 0
        %v3575 = vsel %vm772, %v3468, 0
        %v3578 = vsel %vm772, %v3469, 0
        %v3581 = vsel %vm772, %v3470, 0
        %v3584 = vsel %vm772, %v3471, 0
        %v3587 = vsel %vm772, %v3472, 0
        %v3590 = vsel %vm772, %v3473, 0
        %v3593 = vsel %vm772, %v3474, 0
        %v3596 = vsel %vm772, %v3475, 0
        %v3599 = vsel %vm772, %v3476, 0
        %v3602 = vsel %vm772, %v3477, 0
        %v3605 = vsel %vm772, %v3478, 0
        %v3608 = vsel %vm772, %v3479, 0
        %v3611 = vsel %vm772, %v3480, 0
        %v3614 = vsel %vm772, %v3481, 0
        %v3617 = vsel %vm772, %v3482, 0
        %v3620 = vsel %vm772, %v3483, 0
        %v3623 = vsel %vm772, %v3484, 0
        %v3626 = vsel %vm772, %v3485, 0
        %v3629 = vsel %vm772, %v3486, 0
        %v3632 = vsel %vm772, %v3487, 0
        %v3635 = vsel %vm772, %v3488, 0
        %v3638 = vsel %vm772, %v3489, 0
        %v3641 = vsel %vm772, %v3490, 0
        %v3644 = vsel %vm772, %v3491, 0
        %v3647 = vsel %vm772, %v3492, 0
        %v3650 = vsel %vm772, %v3493, 0
        %v3653 = vsel %vm772, %v3494, 0
        %v3656 = vsel %vm772, %v3495, 0
        %v3659 = vsel %vm772, %v3496, 0
        %v3662 = vsel %vm772, %v3497, 0
        %v3665 = vsel %vm772, %v3498, 0
        %v3668 = vsel %vm772, %v3499, 0
        %v3671 = vsel %vm772, %v3500, 0
        %v3674 = vsel %vm772, %v3501, 0
        %v3677 = vsel %vm772, %v3502, 0
        %v3680 = vsel %vm772, %v3503, 0
        %v3683 = vsel %vm772, %v3504, 0
        %v3686 = vsel %vm772, %v3505, 0
        %v3689 = vsel %vm772, %v3506, 0
        %v3692 = vsel %vm772, %v3507, 0
        %v3695 = vsel %vm772, %v3508, 0
        %v3698 = vsel %vm772, %v3509, 0
        %v3701 = vsel %vm772, %v3510, 0
        %v3704 = vsel %vm772, %v3511, 0
        %v3707 = vand.u32 %v3513, %v968
        %3709 = vmatprep.subr.bf16.mxu0 0
        %3710 = vmatpush1.bf16.msra.mxu0 %v3707
        %3711 = vmatprep.subr.bf16.mxu0 0
        %3712 = vmatpush1.bf16.msra.mxu0 0
        %3713 = vmatprep.subr.bf16.mxu0 0
        %3714 = vmatpush1.bf16.msra.mxu0 0
        %3715 = vmatprep.subr.bf16.mxu0 0
        %3716 = vmatpush1.bf16.msra.mxu0 0
        %3717 = vmatprep.subr.bf16.mxu0 0
        %3718 = vmatpush1.bf16.msra.mxu0 0
        %3719 = vmatprep.subr.bf16.mxu0 0
        %3720 = vmatpush1.bf16.msra.mxu0 0
        %3721 = vmatprep.subr.bf16.mxu0 0
        %3722 = vmatpush1.bf16.msra.mxu0 0
        %3723 = vmatprep.subr.bf16.mxu0 0
        %3724 = vmatpush1.bf16.msra.mxu0 0
        %3725 = vmatprep.subr.bf16.mxu0 0
        %3726 = vmatpush1.bf16.msra.mxu0 0
        %3727 = vmatprep.subr.bf16.mxu0 0
        %3728 = vmatpush1.bf16.msra.mxu0 0
        %3729 = vmatprep.subr.bf16.mxu0 0
        %3730 = vmatpush1.bf16.msra.mxu0 0
        %3731 = vmatprep.subr.bf16.mxu0 0
        %3732 = vmatpush1.bf16.msra.mxu0 0
        %3733 = vmatprep.subr.bf16.mxu0 0
        %3734 = vmatpush1.bf16.msra.mxu0 0
        %3735 = vmatprep.subr.bf16.mxu0 0
        %3736 = vmatpush1.bf16.msra.mxu0 0
        %3737 = vmatprep.subr.bf16.mxu0 0
        %3738 = vmatpush1.bf16.msra.mxu0 0
        %3739 = vmatprep.subr.bf16.mxu0 0
        %3740 = vmatpush1.bf16.msra.mxu0 0
        %3741 = vmatprep.mubr.bf16.mxu0 0
        %3742 = vmatmul.mubr.bf16.gmra.mrb[0].mxu0 %v3515
        %v3743 = vpop.f32.mrb[0].mxu0
        %v3744 = vadd.f32 0.0, %v3743
        %v3745 = vpop.f32.mrb[0].mxu0
        %v3746 = vpop.f32.mrb[0].mxu0
        %v3747 = vadd.f32 0.0, %v3746
        %v3748 = vpop.f32.mrb[0].mxu0
        %3749 = vmatprep.mubr.bf16.mxu0 0
        %3750 = vmatmul.mubr.bf16.gmra.mrb[0].mxu0 %v3518
        %v3751 = vpop.f32.mrb[0].mxu0
        %v3752 = vadd.f32 0.0, %v3751
        %v3753 = vpop.f32.mrb[0].mxu0
        %v3754 = vpop.f32.mrb[0].mxu0
        %v3755 = vadd.f32 0.0, %v3754
        %v3756 = vpop.f32.mrb[0].mxu0
        %3757 = vmatprep.mubr.bf16.mxu0 0
        %3758 = vmatmul.mubr.bf16.gmra.mrb[0].mxu0 %v3521
        %v3759 = vpop.f32.mrb[0].mxu0
        %v3760 = vadd.f32 0.0, %v3759
        %v3761 = vpop.f32.mrb[0].mxu0
        %v3762 = vpop.f32.mrb[0].mxu0
        %v3763 = vadd.f32 0.0, %v3762
        %v3764 = vpop.f32.mrb[0].mxu0
        %3765 = vmatprep.mubr.bf16.mxu0 0
        %3766 = vmatmul.mubr.bf16.gmra.mrb[0].mxu0 %v3524
        %v3767 = vpop.f32.mrb[0].mxu0
        %v3768 = vadd.f32 0.0, %v3767
        %v3769 = vpop.f32.mrb[0].mxu0
        %v3770 = vpop.f32.mrb[0].mxu0
        %v3771 = vadd.f32 0.0, %v3770
        %v3772 = vpop.f32.mrb[0].mxu0
        %3773 = vmatprep.mubr.bf16.mxu0 0
        %3774 = vmatmul.mubr.bf16.gmra.mrb[0].mxu0 %v3527
        %v3775 = vpop.f32.mrb[0].mxu0
        %v3776 = vadd.f32 0.0, %v3775
        %v3777 = vpop.f32.mrb[0].mxu0
        %v3778 = vpop.f32.mrb[0].mxu0
        %v3779 = vadd.f32 0.0, %v3778
        %v3780 = vpop.f32.mrb[0].mxu0
        %3781 = vmatprep.mubr.bf16.mxu0 0
        %3782 = vmatmul.mubr.bf16.gmra.mrb[0].mxu0 %v3530
        %v3783 = vpop.f32.mrb[0].mxu0
        %v3784 = vadd.f32 0.0, %v3783
        %v3785 = vpop.f32.mrb[0].mxu0
        %v3786 = vpop.f32.mrb[0].mxu0
        %v3787 = vadd.f32 0.0, %v3786
        %v3788 = vpop.f32.mrb[0].mxu0
        %3789 = vmatprep.mubr.bf16.mxu0 0
        %3790 = vmatmul.mubr.bf16.gmra.mrb[0].mxu0 %v3533
        %v3791 = vpop.f32.mrb[0].mxu0
        %v3792 = vadd.f32 0.0, %v3791
        %v3793 = vpop.f32.mrb[0].mxu0
        %v3794 = vpop.f32.mrb[0].mxu0
        %v3795 = vadd.f32 0.0, %v3794
        %v3796 = vpop.f32.mrb[0].mxu0
        %3797 = vmatprep.mubr.bf16.mxu0 0
        %3798 = vmatmul.mubr.bf16.gmra.mrb[0].mxu0 %v3536
        %v3799 = vpop.f32.mrb[0].mxu0
        %v3800 = vadd.f32 0.0, %v3799
        %v3801 = vpop.f32.mrb[0].mxu0
        %v3802 = vpop.f32.mrb[0].mxu0
        %v3803 = vadd.f32 0.0, %v3802
        %v3804 = vpop.f32.mrb[0].mxu0
        %3805 = vmatprep.mubr.bf16.mxu0 0
        %3806 = vmatmul.mubr.bf16.gmra.mrb[0].mxu0 %v3539
        %v3807 = vpop.f32.mrb[0].mxu0
        %v3808 = vadd.f32 0.0, %v3807
        %v3809 = vpop.f32.mrb[0].mxu0
        %v3810 = vpop.f32.mrb[0].mxu0
        %v3811 = vadd.f32 0.0, %v3810
        %v3812 = vpop.f32.mrb[0].mxu0
        %3813 = vmatprep.mubr.bf16.mxu0 0
        %3814 = vmatmul.mubr.bf16.gmra.mrb[0].mxu0 %v3542
        %v3815 = vpop.f32.mrb[0].mxu0
        %v3816 = vadd.f32 0.0, %v3815
        %v3817 = vpop.f32.mrb[0].mxu0
        %v3818 = vpop.f32.mrb[0].mxu0
        %v3819 = vadd.f32 0.0, %v3818
        %v3820 = vpop.f32.mrb[0].mxu0
        %3821 = vmatprep.mubr.bf16.mxu0 0
        %3822 = vmatmul.mubr.bf16.gmra.mrb[0].mxu0 %v3545
        %v3823 = vpop.f32.mrb[0].mxu0
        %v3824 = vadd.f32 0.0, %v3823
        %v3825 = vpop.f32.mrb[0].mxu0
        %v3826 = vpop.f32.mrb[0].mxu0
        %v3827 = vadd.f32 0.0, %v3826
        %v3828 = vpop.f32.mrb[0].mxu0
        %3829 = vmatprep.mubr.bf16.mxu0 0
        %3830 = vmatmul.mubr.bf16.gmra.mrb[0].mxu0 %v3548
        %v3831 = vpop.f32.mrb[0].mxu0
        %v3832 = vadd.f32 0.0, %v3831
        %v3833 = vpop.f32.mrb[0].mxu0
        %v3834 = vpop.f32.mrb[0].mxu0
        %v3835 = vadd.f32 0.0, %v3834
        %v3836 = vpop.f32.mrb[0].mxu0
        %3837 = vmatprep.mubr.bf16.mxu0 0
        %3838 = vmatmul.mubr.bf16.gmra.mrb[0].mxu0 %v3551
        %v3839 = vpop.f32.mrb[0].mxu0
        %v3840 = vadd.f32 0.0, %v3839
        %v3841 = vpop.f32.mrb[0].mxu0
        %v3842 = vpop.f32.mrb[0].mxu0
        %v3843 = vadd.f32 0.0, %v3842
        %v3844 = vpop.f32.mrb[0].mxu0
        %3845 = vmatprep.mubr.bf16.mxu0 0
        %3846 = vmatmul.mubr.bf16.gmra.mrb[0].mxu0 %v3554
        %v3847 = vpop.f32.mrb[0].mxu0
        %v3848 = vadd.f32 0.0, %v3847
        %v3849 = vpop.f32.mrb[0].mxu0
        %v3850 = vpop.f32.mrb[0].mxu0
        %v3851 = vadd.f32 0.0, %v3850
        %v3852 = vpop.f32.mrb[0].mxu0
        %3853 = vmatprep.mubr.bf16.mxu0 0
        %3854 = vmatmul.mubr.bf16.gmra.mrb[0].mxu0 %v3557
        %v3855 = vpop.f32.mrb[0].mxu0
        %v3856 = vadd.f32 0.0, %v3855
        %v3857 = vpop.f32.mrb[0].mxu0
        %v3858 = vpop.f32.mrb[0].mxu0
        %v3859 = vadd.f32 0.0, %v3858
        %v3860 = vpop.f32.mrb[0].mxu0
        %3861 = vmatprep.mubr.bf16.mxu0 0
        %3862 = vmatmul.mubr.bf16.gmra.mrb[0].mxu0 %v3560
        %v3863 = vpop.f32.mrb[0].mxu0
        %v3864 = vadd.f32 0.0, %v3863
        %v3865 = vpop.f32.mrb[0].mxu0
        %v3866 = vpop.f32.mrb[0].mxu0
        %v3867 = vadd.f32 0.0, %v3866
        %v3868 = vpop.f32.mrb[0].mxu0
        %3869 = vmatprep.mubr.bf16.mxu0 0
        %3870 = vmatmul.mubr.bf16.gmra.mrb[0].mxu0 %v3563
        %v3871 = vpop.f32.mrb[0].mxu0
        %v3872 = vadd.f32 0.0, %v3871
        %v3873 = vpop.f32.mrb[0].mxu0
        %v3874 = vpop.f32.mrb[0].mxu0
        %v3875 = vadd.f32 0.0, %v3874
        %v3876 = vpop.f32.mrb[0].mxu0
        %3877 = vmatprep.mubr.bf16.mxu0 0
        %3878 = vmatmul.mubr.bf16.gmra.mrb[0].mxu0 %v3566
        %v3879 = vpop.f32.mrb[0].mxu0
        %v3880 = vadd.f32 0.0, %v3879
        %v3881 = vpop.f32.mrb[0].mxu0
        %v3882 = vpop.f32.mrb[0].mxu0
        %v3883 = vadd.f32 0.0, %v3882
        %v3884 = vpop.f32.mrb[0].mxu0
        %3885 = vmatprep.mubr.bf16.mxu0 0
        %3886 = vmatmul.mubr.bf16.gmra.mrb[0].mxu0 %v3569
        %v3887 = vpop.f32.mrb[0].mxu0
        %v3888 = vadd.f32 0.0, %v3887
        %v3889 = vpop.f32.mrb[0].mxu0
        %v3890 = vpop.f32.mrb[0].mxu0
        %v3891 = vadd.f32 0.0, %v3890
        %v3892 = vpop.f32.mrb[0].mxu0
        %3893 = vmatprep.mubr.bf16.mxu0 0
        %3894 = vmatmul.mubr.bf16.gmra.mrb[0].mxu0 %v3572
        %v3895 = vpop.f32.mrb[0].mxu0
        %v3896 = vadd.f32 0.0, %v3895
        %v3897 = vpop.f32.mrb[0].mxu0
        %v3898 = vpop.f32.mrb[0].mxu0
        %v3899 = vadd.f32 0.0, %v3898
        %v3900 = vpop.f32.mrb[0].mxu0
        %3901 = vmatprep.mubr.bf16.mxu0 0
        %3902 = vmatmul.mubr.bf16.gmra.mrb[0].mxu0 %v3575
        %v3903 = vpop.f32.mrb[0].mxu0
        %v3904 = vadd.f32 0.0, %v3903
        %v3905 = vpop.f32.mrb[0].mxu0
        %v3906 = vpop.f32.mrb[0].mxu0
        %v3907 = vadd.f32 0.0, %v3906
        %v3908 = vpop.f32.mrb[0].mxu0
        %3909 = vmatprep.mubr.bf16.mxu0 0
        %3910 = vmatmul.mubr.bf16.gmra.mrb[0].mxu0 %v3578
        %v3911 = vpop.f32.mrb[0].mxu0
        %v3912 = vadd.f32 0.0, %v3911
        %v3913 = vpop.f32.mrb[0].mxu0
        %v3914 = vpop.f32.mrb[0].mxu0
        %v3915 = vadd.f32 0.0, %v3914
        %v3916 = vpop.f32.mrb[0].mxu0
        %3917 = vmatprep.mubr.bf16.mxu0 0
        %3918 = vmatmul.mubr.bf16.gmra.mrb[0].mxu0 %v3581
        %v3919 = vpop.f32.mrb[0].mxu0
        %v3920 = vadd.f32 0.0, %v3919
        %v3921 = vpop.f32.mrb[0].mxu0
        %v3922 = vpop.f32.mrb[0].mxu0
        %v3923 = vadd.f32 0.0, %v3922
        %v3924 = vpop.f32.mrb[0].mxu0
        %3925 = vmatprep.mubr.bf16.mxu0 0
        %3926 = vmatmul.mubr.bf16.gmra.mrb[0].mxu0 %v3584
        %v3927 = vpop.f32.mrb[0].mxu0
        %v3928 = vadd.f32 0.0, %v3927
        %v3929 = vpop.f32.mrb[0].mxu0
        %v3930 = vpop.f32.mrb[0].mxu0
        %v3931 = vadd.f32 0.0, %v3930
        %v3932 = vpop.f32.mrb[0].mxu0
        %3933 = vmatprep.mubr.bf16.mxu0 0
        %3934 = vmatmul.mubr.bf16.gmra.mrb[0].mxu0 %v3587
        %v3935 = vpop.f32.mrb[0].mxu0
        %v3936 = vadd.f32 0.0, %v3935
        %v3937 = vpop.f32.mrb[0].mxu0
        %v3938 = vpop.f32.mrb[0].mxu0
        %v3939 = vadd.f32 0.0, %v3938
        %v3940 = vpop.f32.mrb[0].mxu0
        %3941 = vmatprep.mubr.bf16.mxu0 0
        %3942 = vmatmul.mubr.bf16.gmra.mrb[0].mxu0 %v3590
        %v3943 = vpop.f32.mrb[0].mxu0
        %v3944 = vadd.f32 0.0, %v3943
        %v3945 = vpop.f32.mrb[0].mxu0
        %v3946 = vpop.f32.mrb[0].mxu0
        %v3947 = vadd.f32 0.0, %v3946
        %v3948 = vpop.f32.mrb[0].mxu0
        %3949 = vmatprep.mubr.bf16.mxu0 0
        %3950 = vmatmul.mubr.bf16.gmra.mrb[0].mxu0 %v3593
        %v3951 = vpop.f32.mrb[0].mxu0
        %v3952 = vadd.f32 0.0, %v3951
        %v3953 = vpop.f32.mrb[0].mxu0
        %v3954 = vpop.f32.mrb[0].mxu0
        %v3955 = vadd.f32 0.0, %v3954
        %v3956 = vpop.f32.mrb[0].mxu0
        %3957 = vmatprep.mubr.bf16.mxu0 0
        %3958 = vmatmul.mubr.bf16.gmra.mrb[0].mxu0 %v3596
        %v3959 = vpop.f32.mrb[0].mxu0
        %v3960 = vadd.f32 0.0, %v3959
        %v3961 = vpop.f32.mrb[0].mxu0
        %v3962 = vpop.f32.mrb[0].mxu0
        %v3963 = vadd.f32 0.0, %v3962
        %v3964 = vpop.f32.mrb[0].mxu0
        %3965 = vmatprep.mubr.bf16.mxu0 0
        %3966 = vmatmul.mubr.bf16.gmra.mrb[0].mxu0 %v3599
        %v3967 = vpop.f32.mrb[0].mxu0
        %v3968 = vadd.f32 0.0, %v3967
        %v3969 = vpop.f32.mrb[0].mxu0
        %v3970 = vpop.f32.mrb[0].mxu0
        %v3971 = vadd.f32 0.0, %v3970
        %v3972 = vpop.f32.mrb[0].mxu0
        %3973 = vmatprep.mubr.bf16.mxu0 0
        %3974 = vmatmul.mubr.bf16.gmra.mrb[0].mxu0 %v3602
        %v3975 = vpop.f32.mrb[0].mxu0
        %v3976 = vadd.f32 0.0, %v3975
        %v3977 = vpop.f32.mrb[0].mxu0
        %v3978 = vpop.f32.mrb[0].mxu0
        %v3979 = vadd.f32 0.0, %v3978
        %v3980 = vpop.f32.mrb[0].mxu0
        %3981 = vmatprep.mubr.bf16.mxu0 0
        %3982 = vmatmul.mubr.bf16.gmra.mrb[0].mxu0 %v3605
        %v3983 = vpop.f32.mrb[0].mxu0
        %v3984 = vadd.f32 0.0, %v3983
        %v3985 = vpop.f32.mrb[0].mxu0
        %v3986 = vpop.f32.mrb[0].mxu0
        %v3987 = vadd.f32 0.0, %v3986
        %v3988 = vpop.f32.mrb[0].mxu0
        %3989 = vmatprep.mubr.bf16.mxu0 0
        %3990 = vmatmul.mubr.bf16.gmra.mrb[0].mxu0 %v3608
        %v3991 = vpop.f32.mrb[0].mxu0
        %v3992 = vadd.f32 0.0, %v3991
        %v3993 = vpop.f32.mrb[0].mxu0
        %v3994 = vpop.f32.mrb[0].mxu0
        %v3995 = vadd.f32 0.0, %v3994
        %v3996 = vpop.f32.mrb[0].mxu0
        %3997 = vmatprep.mubr.bf16.mxu0 0
        %3998 = vmatmul.mubr.bf16.gmra.mrb[0].mxu0 %v3611
        %v3999 = vpop.f32.mrb[0].mxu0
        %v4000 = vadd.f32 0.0, %v3999
        %v4001 = vpop.f32.mrb[0].mxu0
        %v4002 = vpop.f32.mrb[0].mxu0
        %v4003 = vadd.f32 0.0, %v4002
        %v4004 = vpop.f32.mrb[0].mxu0
        %4005 = vmatprep.mubr.bf16.mxu0 0
        %4006 = vmatmul.mubr.bf16.gmra.mrb[0].mxu0 %v3614
        %v4007 = vpop.f32.mrb[0].mxu0
        %v4008 = vadd.f32 0.0, %v4007
        %v4009 = vpop.f32.mrb[0].mxu0
        %v4010 = vpop.f32.mrb[0].mxu0
        %v4011 = vadd.f32 0.0, %v4010
        %v4012 = vpop.f32.mrb[0].mxu0
        %4013 = vmatprep.mubr.bf16.mxu0 0
        %4014 = vmatmul.mubr.bf16.gmra.mrb[0].mxu0 %v3617
        %v4015 = vpop.f32.mrb[0].mxu0
        %v4016 = vadd.f32 0.0, %v4015
        %v4017 = vpop.f32.mrb[0].mxu0
        %v4018 = vpop.f32.mrb[0].mxu0
        %v4019 = vadd.f32 0.0, %v4018
        %v4020 = vpop.f32.mrb[0].mxu0
        %4021 = vmatprep.mubr.bf16.mxu0 0
        %4022 = vmatmul.mubr.bf16.gmra.mrb[0].mxu0 %v3620
        %v4023 = vpop.f32.mrb[0].mxu0
        %v4024 = vadd.f32 0.0, %v4023
        %v4025 = vpop.f32.mrb[0].mxu0
        %v4026 = vpop.f32.mrb[0].mxu0
        %v4027 = vadd.f32 0.0, %v4026
        %v4028 = vpop.f32.mrb[0].mxu0
        %4029 = vmatprep.mubr.bf16.mxu0 0
        %4030 = vmatmul.mubr.bf16.gmra.mrb[0].mxu0 %v3623
        %v4031 = vpop.f32.mrb[0].mxu0
        %v4032 = vadd.f32 0.0, %v4031
        %v4033 = vpop.f32.mrb[0].mxu0
        %v4034 = vpop.f32.mrb[0].mxu0
        %v4035 = vadd.f32 0.0, %v4034
        %v4036 = vpop.f32.mrb[0].mxu0
        %4037 = vmatprep.mubr.bf16.mxu0 0
        %4038 = vmatmul.mubr.bf16.gmra.mrb[0].mxu0 %v3626
        %v4039 = vpop.f32.mrb[0].mxu0
        %v4040 = vadd.f32 0.0, %v4039
        %v4041 = vpop.f32.mrb[0].mxu0
        %v4042 = vpop.f32.mrb[0].mxu0
        %v4043 = vadd.f32 0.0, %v4042
        %v4044 = vpop.f32.mrb[0].mxu0
        %4045 = vmatprep.mubr.bf16.mxu0 0
        %4046 = vmatmul.mubr.bf16.gmra.mrb[0].mxu0 %v3629
        %v4047 = vpop.f32.mrb[0].mxu0
        %v4048 = vadd.f32 0.0, %v4047
        %v4049 = vpop.f32.mrb[0].mxu0
        %v4050 = vpop.f32.mrb[0].mxu0
        %v4051 = vadd.f32 0.0, %v4050
        %v4052 = vpop.f32.mrb[0].mxu0
        %4053 = vmatprep.mubr.bf16.mxu0 0
        %4054 = vmatmul.mubr.bf16.gmra.mrb[0].mxu0 %v3632
        %v4055 = vpop.f32.mrb[0].mxu0
        %v4056 = vadd.f32 0.0, %v4055
        %v4057 = vpop.f32.mrb[0].mxu0
        %v4058 = vpop.f32.mrb[0].mxu0
        %v4059 = vadd.f32 0.0, %v4058
        %v4060 = vpop.f32.mrb[0].mxu0
        %4061 = vmatprep.mubr.bf16.mxu0 0
        %4062 = vmatmul.mubr.bf16.gmra.mrb[0].mxu0 %v3635
        %v4063 = vpop.f32.mrb[0].mxu0
        %v4064 = vadd.f32 0.0, %v4063
        %v4065 = vpop.f32.mrb[0].mxu0
        %v4066 = vpop.f32.mrb[0].mxu0
        %v4067 = vadd.f32 0.0, %v4066
        %v4068 = vpop.f32.mrb[0].mxu0
        %4069 = vmatprep.mubr.bf16.mxu0 0
        %4070 = vmatmul.mubr.bf16.gmra.mrb[0].mxu0 %v3638
        %v4071 = vpop.f32.mrb[0].mxu0
        %v4072 = vadd.f32 0.0, %v4071
        %v4073 = vpop.f32.mrb[0].mxu0
        %v4074 = vpop.f32.mrb[0].mxu0
        %v4075 = vadd.f32 0.0, %v4074
        %v4076 = vpop.f32.mrb[0].mxu0
        %4077 = vmatprep.mubr.bf16.mxu0 0
        %4078 = vmatmul.mubr.bf16.gmra.mrb[0].mxu0 %v3641
        %v4079 = vpop.f32.mrb[0].mxu0
        %v4080 = vadd.f32 0.0, %v4079
        %v4081 = vpop.f32.mrb[0].mxu0
        %v4082 = vpop.f32.mrb[0].mxu0
        %v4083 = vadd.f32 0.0, %v4082
        %v4084 = vpop.f32.mrb[0].mxu0
        %4085 = vmatprep.mubr.bf16.mxu0 0
        %4086 = vmatmul.mubr.bf16.gmra.mrb[0].mxu0 %v3644
        %v4087 = vpop.f32.mrb[0].mxu0
        %v4088 = vadd.f32 0.0, %v4087
        %v4089 = vpop.f32.mrb[0].mxu0
        %v4090 = vpop.f32.mrb[0].mxu0
        %v4091 = vadd.f32 0.0, %v4090
        %v4092 = vpop.f32.mrb[0].mxu0
        %4093 = vmatprep.mubr.bf16.mxu0 0
        %4094 = vmatmul.mubr.bf16.gmra.mrb[0].mxu0 %v3647
        %v4095 = vpop.f32.mrb[0].mxu0
        %v4096 = vadd.f32 0.0, %v4095
        %v4097 = vpop.f32.mrb[0].mxu0
        %v4098 = vpop.f32.mrb[0].mxu0
        %v4099 = vadd.f32 0.0, %v4098
        %v4100 = vpop.f32.mrb[0].mxu0
        %4101 = vmatprep.mubr.bf16.mxu0 0
        %4102 = vmatmul.mubr.bf16.gmra.mrb[0].mxu0 %v3650
        %v4103 = vpop.f32.mrb[0].mxu0
        %v4104 = vadd.f32 0.0, %v4103
        %v4105 = vpop.f32.mrb[0].mxu0
        %v4106 = vpop.f32.mrb[0].mxu0
        %v4107 = vadd.f32 0.0, %v4106
        %v4108 = vpop.f32.mrb[0].mxu0
        %4109 = vmatprep.mubr.bf16.mxu0 0
        %4110 = vmatmul.mubr.bf16.gmra.mrb[0].mxu0 %v3653
        %v4111 = vpop.f32.mrb[0].mxu0
        %v4112 = vadd.f32 0.0, %v4111
        %v4113 = vpop.f32.mrb[0].mxu0
        %v4114 = vpop.f32.mrb[0].mxu0
        %v4115 = vadd.f32 0.0, %v4114
        %v4116 = vpop.f32.mrb[0].mxu0
        %4117 = vmatprep.mubr.bf16.mxu0 0
        %4118 = vmatmul.mubr.bf16.gmra.mrb[0].mxu0 %v3656
        %v4119 = vpop.f32.mrb[0].mxu0
        %v4120 = vadd.f32 0.0, %v4119
        %v4121 = vpop.f32.mrb[0].mxu0
        %v4122 = vpop.f32.mrb[0].mxu0
        %v4123 = vadd.f32 0.0, %v4122
        %v4124 = vpop.f32.mrb[0].mxu0
        %4125 = vmatprep.mubr.bf16.mxu0 0
        %4126 = vmatmul.mubr.bf16.gmra.mrb[0].mxu0 %v3659
        %v4127 = vpop.f32.mrb[0].mxu0
        %v4128 = vadd.f32 0.0, %v4127
        %v4129 = vpop.f32.mrb[0].mxu0
        %v4130 = vpop.f32.mrb[0].mxu0
        %v4131 = vadd.f32 0.0, %v4130
        %v4132 = vpop.f32.mrb[0].mxu0
        %4133 = vmatprep.mubr.bf16.mxu0 0
        %4134 = vmatmul.mubr.bf16.gmra.mrb[0].mxu0 %v3662
        %v4135 = vpop.f32.mrb[0].mxu0
        %v4136 = vadd.f32 0.0, %v4135
        %v4137 = vpop.f32.mrb[0].mxu0
        %v4138 = vpop.f32.mrb[0].mxu0
        %v4139 = vadd.f32 0.0, %v4138
        %v4140 = vpop.f32.mrb[0].mxu0
        %4141 = vmatprep.mubr.bf16.mxu0 0
        %4142 = vmatmul.mubr.bf16.gmra.mrb[0].mxu0 %v3665
        %v4143 = vpop.f32.mrb[0].mxu0
        %v4144 = vadd.f32 0.0, %v4143
        %v4145 = vpop.f32.mrb[0].mxu0
        %v4146 = vpop.f32.mrb[0].mxu0
        %v4147 = vadd.f32 0.0, %v4146
        %v4148 = vpop.f32.mrb[0].mxu0
        %4149 = vmatprep.mubr.bf16.mxu0 0
        %4150 = vmatmul.mubr.bf16.gmra.mrb[0].mxu0 %v3668
        %v4151 = vpop.f32.mrb[0].mxu0
        %v4152 = vadd.f32 0.0, %v4151
        %v4153 = vpop.f32.mrb[0].mxu0
        %v4154 = vpop.f32.mrb[0].mxu0
        %v4155 = vadd.f32 0.0, %v4154
        %v4156 = vpop.f32.mrb[0].mxu0
        %4157 = vmatprep.mubr.bf16.mxu0 0
        %4158 = vmatmul.mubr.bf16.gmra.mrb[0].mxu0 %v3671
        %v4159 = vpop.f32.mrb[0].mxu0
        %v4160 = vadd.f32 0.0, %v4159
        %v4161 = vpop.f32.mrb[0].mxu0
        %v4162 = vpop.f32.mrb[0].mxu0
        %v4163 = vadd.f32 0.0, %v4162
        %v4164 = vpop.f32.mrb[0].mxu0
        %4165 = vmatprep.mubr.bf16.mxu0 0
        %4166 = vmatmul.mubr.bf16.gmra.mrb[0].mxu0 %v3674
        %v4167 = vpop.f32.mrb[0].mxu0
        %v4168 = vadd.f32 0.0, %v4167
        %v4169 = vpop.f32.mrb[0].mxu0
        %v4170 = vpop.f32.mrb[0].mxu0
        %v4171 = vadd.f32 0.0, %v4170
        %v4172 = vpop.f32.mrb[0].mxu0
        %4173 = vmatprep.mubr.bf16.mxu0 0
        %4174 = vmatmul.mubr.bf16.gmra.mrb[0].mxu0 %v3677
        %v4175 = vpop.f32.mrb[0].mxu0
        %v4176 = vadd.f32 0.0, %v4175
        %v4177 = vpop.f32.mrb[0].mxu0
        %v4178 = vpop.f32.mrb[0].mxu0
        %v4179 = vadd.f32 0.0, %v4178
        %v4180 = vpop.f32.mrb[0].mxu0
        %4181 = vmatprep.mubr.bf16.mxu0 0
        %4182 = vmatmul.mubr.bf16.gmra.mrb[0].mxu0 %v3680
        %v4183 = vpop.f32.mrb[0].mxu0
        %v4184 = vadd.f32 0.0, %v4183
        %v4185 = vpop.f32.mrb[0].mxu0
        %v4186 = vpop.f32.mrb[0].mxu0
        %v4187 = vadd.f32 0.0, %v4186
        %v4188 = vpop.f32.mrb[0].mxu0
        %4189 = vmatprep.mubr.bf16.mxu0 0
        %4190 = vmatmul.mubr.bf16.gmra.mrb[0].mxu0 %v3683
        %v4191 = vpop.f32.mrb[0].mxu0
        %v4192 = vadd.f32 0.0, %v4191
        %v4193 = vpop.f32.mrb[0].mxu0
        %v4194 = vpop.f32.mrb[0].mxu0
        %v4195 = vadd.f32 0.0, %v4194
        %v4196 = vpop.f32.mrb[0].mxu0
        %4197 = vmatprep.mubr.bf16.mxu0 0
        %4198 = vmatmul.mubr.bf16.gmra.mrb[0].mxu0 %v3686
        %v4199 = vpop.f32.mrb[0].mxu0
        %v4200 = vadd.f32 0.0, %v4199
        %v4201 = vpop.f32.mrb[0].mxu0
        %v4202 = vpop.f32.mrb[0].mxu0
        %v4203 = vadd.f32 0.0, %v4202
        %v4204 = vpop.f32.mrb[0].mxu0
        %4205 = vmatprep.mubr.bf16.mxu0 0
        %4206 = vmatmul.mubr.bf16.gmra.mrb[0].mxu0 %v3689
        %v4207 = vpop.f32.mrb[0].mxu0
        %v4208 = vadd.f32 0.0, %v4207
        %v4209 = vpop.f32.mrb[0].mxu0
        %v4210 = vpop.f32.mrb[0].mxu0
        %v4211 = vadd.f32 0.0, %v4210
        %v4212 = vpop.f32.mrb[0].mxu0
        %4213 = vmatprep.mubr.bf16.mxu0 0
        %4214 = vmatmul.mubr.bf16.gmra.mrb[0].mxu0 %v3692
        %v4215 = vpop.f32.mrb[0].mxu0
        %v4216 = vadd.f32 0.0, %v4215
        %v4217 = vpop.f32.mrb[0].mxu0
        %v4218 = vpop.f32.mrb[0].mxu0
        %v4219 = vadd.f32 0.0, %v4218
        %v4220 = vpop.f32.mrb[0].mxu0
        %4221 = vmatprep.mubr.bf16.mxu0 0
        %4222 = vmatmul.mubr.bf16.gmra.mrb[0].mxu0 %v3695
        %v4223 = vpop.f32.mrb[0].mxu0
        %v4224 = vadd.f32 0.0, %v4223
        %v4225 = vpop.f32.mrb[0].mxu0
        %v4226 = vpop.f32.mrb[0].mxu0
        %v4227 = vadd.f32 0.0, %v4226
        %v4228 = vpop.f32.mrb[0].mxu0
        %4229 = vmatprep.mubr.bf16.mxu0 0
        %4230 = vmatmul.mubr.bf16.gmra.mrb[0].mxu0 %v3698
        %v4231 = vpop.f32.mrb[0].mxu0
        %v4232 = vadd.f32 0.0, %v4231
        %v4233 = vpop.f32.mrb[0].mxu0
        %v4234 = vpop.f32.mrb[0].mxu0
        %v4235 = vadd.f32 0.0, %v4234
        %v4236 = vpop.f32.mrb[0].mxu0
        %4237 = vmatprep.mubr.bf16.mxu0 0
        %4238 = vmatmul.mubr.bf16.gmra.mrb[0].mxu0 %v3701
        %v4239 = vpop.f32.mrb[0].mxu0
        %v4240 = vadd.f32 0.0, %v4239
        %v4241 = vpop.f32.mrb[0].mxu0
        %v4242 = vpop.f32.mrb[0].mxu0
        %v4243 = vadd.f32 0.0, %v4242
        %v4244 = vpop.f32.mrb[0].mxu0
        %4245 = vmatprep.mubr.bf16.mxu0 0
        %4246 = vmatmul.mubr.bf16.gmra.mrb[0].mxu0 %v3704
        %v4247 = vpop.f32.mrb[0].mxu0
        %v4248 = vadd.f32 0.0, %v4247
        %v4249 = vpop.f32.mrb[0].mxu0
        %v4250 = vpop.f32.mrb[0].mxu0
        %v4251 = vadd.f32 0.0, %v4250
        %v4252 = vpop.f32.mrb[0].mxu0
        %4253 = vdwg.mxu0
        %v4254 = vadd.f32 %v3191, %v3744
        %v4255 = vadd.f32 %v3192, %v3747
        %v4256 = vadd.f32 %v3193, %v3752
        %v4257 = vadd.f32 %v3194, %v3755
        %v4258 = vadd.f32 %v3195, %v3760
        %v4259 = vadd.f32 %v3196, %v3763
        %v4260 = vadd.f32 %v3197, %v3768
        %v4261 = vadd.f32 %v3198, %v3771
        %v4262 = vadd.f32 %v3199, %v3776
        %v4263 = vadd.f32 %v3200, %v3779
        %v4264 = vadd.f32 %v3201, %v3784
        %v4265 = vadd.f32 %v3202, %v3787
        %v4266 = vadd.f32 %v3203, %v3792
        %v4267 = vadd.f32 %v3204, %v3795
        %v4268 = vadd.f32 %v3205, %v3800
        %v4269 = vadd.f32 %v3206, %v3803
        %v4270 = vadd.f32 %v3207, %v3808
        %v4271 = vadd.f32 %v3208, %v3811
        %v4272 = vadd.f32 %v3209, %v3816
        %v4273 = vadd.f32 %v3210, %v3819
        %v4274 = vadd.f32 %v3211, %v3824
        %v4275 = vadd.f32 %v3212, %v3827
        %v4276 = vadd.f32 %v3213, %v3832
        %v4277 = vadd.f32 %v3214, %v3835
        %v4278 = vadd.f32 %v3215, %v3840
        %v4279 = vadd.f32 %v3216, %v3843
        %v4280 = vadd.f32 %v3217, %v3848
        %v4281 = vadd.f32 %v3218, %v3851
        %v4282 = vadd.f32 %v3219, %v3856
        %v4283 = vadd.f32 %v3220, %v3859
        %v4284 = vadd.f32 %v3221, %v3864
        %v4285 = vadd.f32 %v3222, %v3867
        %v4286 = vadd.f32 %v3223, %v3872
        %v4287 = vadd.f32 %v3224, %v3875
        %v4288 = vadd.f32 %v3225, %v3880
        %v4289 = vadd.f32 %v3226, %v3883
        %v4290 = vadd.f32 %v3227, %v3888
        %v4291 = vadd.f32 %v3228, %v3891
        %v4292 = vadd.f32 %v3229, %v3896
        %v4293 = vadd.f32 %v3230, %v3899
        %v4294 = vadd.f32 %v3231, %v3904
        %v4295 = vadd.f32 %v3232, %v3907
        %v4296 = vadd.f32 %v3233, %v3912
        %v4297 = vadd.f32 %v3234, %v3915
        %v4298 = vadd.f32 %v3235, %v3920
        %v4299 = vadd.f32 %v3236, %v3923
        %v4300 = vadd.f32 %v3237, %v3928
        %v4301 = vadd.f32 %v3238, %v3931
        %v4302 = vadd.f32 %v3239, %v3936
        %v4303 = vadd.f32 %v3240, %v3939
        %v4304 = vadd.f32 %v3241, %v3944
        %v4305 = vadd.f32 %v3242, %v3947
        %v4306 = vadd.f32 %v3243, %v3952
        %v4307 = vadd.f32 %v3244, %v3955
        %v4308 = vadd.f32 %v3245, %v3960
        %v4309 = vadd.f32 %v3246, %v3963
        %v4310 = vadd.f32 %v3247, %v3968
        %v4311 = vadd.f32 %v3248, %v3971
        %v4312 = vadd.f32 %v3249, %v3976
        %v4313 = vadd.f32 %v3250, %v3979
        %v4314 = vadd.f32 %v3251, %v3984
        %v4315 = vadd.f32 %v3252, %v3987
        %v4316 = vadd.f32 %v3253, %v3992
        %v4317 = vadd.f32 %v3254, %v3995
        %v4318 = vadd.f32 %v3255, %v4000
        %v4319 = vadd.f32 %v3256, %v4003
        %v4320 = vadd.f32 %v3257, %v4008
        %v4321 = vadd.f32 %v3258, %v4011
        %v4322 = vadd.f32 %v3259, %v4016
        %v4323 = vadd.f32 %v3260, %v4019
        %v4324 = vadd.f32 %v3261, %v4024
        %v4325 = vadd.f32 %v3262, %v4027
        %v4326 = vadd.f32 %v3263, %v4032
        %v4327 = vadd.f32 %v3264, %v4035
        %v4328 = vadd.f32 %v3265, %v4040
        %v4329 = vadd.f32 %v3266, %v4043
        %v4330 = vadd.f32 %v3267, %v4048
        %v4331 = vadd.f32 %v3268, %v4051
        %v4332 = vadd.f32 %v3269, %v4056
        %v4333 = vadd.f32 %v3270, %v4059
        %v4334 = vadd.f32 %v3271, %v4064
        %v4335 = vadd.f32 %v3272, %v4067
        %v4336 = vadd.f32 %v3273, %v4072
        %v4337 = vadd.f32 %v3274, %v4075
        %v4338 = vadd.f32 %v3275, %v4080
        %v4339 = vadd.f32 %v3276, %v4083
        %v4340 = vadd.f32 %v3277, %v4088
        %v4341 = vadd.f32 %v3278, %v4091
        %v4342 = vadd.f32 %v3279, %v4096
        %v4343 = vadd.f32 %v3280, %v4099
        %v4344 = vadd.f32 %v3281, %v4104
        %v4345 = vadd.f32 %v3282, %v4107
        %v4346 = vadd.f32 %v3283, %v4112
        %v4347 = vadd.f32 %v3284, %v4115
        %v4348 = vadd.f32 %v3285, %v4120
        %v4349 = vadd.f32 %v3286, %v4123
        %v4350 = vadd.f32 %v3287, %v4128
        %v4351 = vadd.f32 %v3288, %v4131
        %v4352 = vadd.f32 %v3289, %v4136
        %v4353 = vadd.f32 %v3290, %v4139
        %v4354 = vadd.f32 %v3291, %v4144
        %v4355 = vadd.f32 %v3292, %v4147
        %v4356 = vadd.f32 %v3293, %v4152
        %v4357 = vadd.f32 %v3294, %v4155
        %v4358 = vadd.f32 %v3295, %v4160
        %v4359 = vadd.f32 %v3296, %v4163
        %v4360 = vadd.f32 %v3297, %v4168
        %v4361 = vadd.f32 %v3298, %v4171
        %v4362 = vadd.f32 %v3299, %v4176
        %v4363 = vadd.f32 %v3300, %v4179
        %v4364 = vadd.f32 %v3301, %v4184
        %v4365 = vadd.f32 %v3302, %v4187
        %v4366 = vadd.f32 %v3303, %v4192
        %v4367 = vadd.f32 %v3304, %v4195
        %v4368 = vadd.f32 %v3305, %v4200
        %v4369 = vadd.f32 %v3306, %v4203
        %v4370 = vadd.f32 %v3307, %v4208
        %v4371 = vadd.f32 %v3308, %v4211
        %v4372 = vadd.f32 %v3309, %v4216
        %v4373 = vadd.f32 %v3310, %v4219
        %v4374 = vadd.f32 %v3311, %v4224
        %v4375 = vadd.f32 %v3312, %v4227
        %v4376 = vadd.f32 %v3313, %v4232
        %v4377 = vadd.f32 %v3314, %v4235
        %v4378 = vadd.f32 %v3315, %v4240
        %v4379 = vadd.f32 %v3316, %v4243
        %v4380 = vadd.f32 %v3317, %v4248
        %v4381 = vadd.f32 %v3318, %v4251
        %v4382 = vld [vmem:[%s3319 + $0x1] sm:$0xff]
        %v4383 = vld [vmem:[%s3319 + $0x9] sm:$0xff]
        %v4384 = vld [vmem:[%s3319 + $0x11] sm:$0xff]
        %v4385 = vld [vmem:[%s3319 + $0x19] sm:$0xff]
        %v4386 = vld [vmem:[%s3319 + $0x29] sm:$0xff]
        %v4387 = vld [vmem:[%s3319 + $0x31] sm:$0xff]
        %v4388 = vld [vmem:[%s3319 + $0x39] sm:$0xff]
        %v4389 = vld [vmem:[%s3319 + $0x41] sm:$0xff]
        %v4390 = vld [vmem:[%s3319 + $0x51] sm:$0xff]
        %v4391 = vld [vmem:[%s3319 + $0x59] sm:$0xff]
        %v4392 = vld [vmem:[%s3319 + $0x61] sm:$0xff]
        %v4393 = vld [vmem:[%s3319 + $0x69] sm:$0xff]
        %v4394 = vld [vmem:[%s3319 + $0x79] sm:$0xff]
        %v4395 = vld [vmem:[%s3319 + $0x81] sm:$0xff]
        %v4396 = vld [vmem:[%s3319 + $0x89] sm:$0xff]
        %v4397 = vld [vmem:[%s3319 + $0x91] sm:$0xff]
        %v4398 = vld [vmem:[%s3319 + $0xa1] sm:$0xff]
        %v4399 = vld [vmem:[%s3319 + $0xa9] sm:$0xff]
        %v4400 = vld [vmem:[%s3319 + $0xb1] sm:$0xff]
        %v4401 = vld [vmem:[%s3319 + $0xb9] sm:$0xff]
        %v4402 = vld [vmem:[%s3319 + $0xc9] sm:$0xff]
        %v4403 = vld [vmem:[%s3319 + $0xd1] sm:$0xff]
        %v4404 = vld [vmem:[%s3319 + $0xd9] sm:$0xff]
        %v4405 = vld [vmem:[%s3319 + $0xe1] sm:$0xff]
        %v4406 = vld [vmem:[%s3319 + $0xf1] sm:$0xff]
        %v4407 = vld [vmem:[%s3319 + $0xf9] sm:$0xff]
        %v4408 = vld [vmem:[%s3319 + $0x101] sm:$0xff]
        %v4409 = vld [vmem:[%s3319 + $0x109] sm:$0xff]
        %v4410 = vld [vmem:[%s3319 + $0x119] sm:$0xff]
        %v4411 = vld [vmem:[%s3319 + $0x121] sm:$0xff]
        %v4412 = vld [vmem:[%s3319 + $0x129] sm:$0xff]
        %v4413 = vld [vmem:[%s3319 + $0x131] sm:$0xff]
        %v4414 = vld [vmem:[%s3319 + $0x141] sm:$0xff]
        %v4415 = vld [vmem:[%s3319 + $0x149] sm:$0xff]
        %v4416 = vld [vmem:[%s3319 + $0x151] sm:$0xff]
        %v4417 = vld [vmem:[%s3319 + $0x159] sm:$0xff]
        %v4418 = vld [vmem:[%s3319 + $0x169] sm:$0xff]
        %v4419 = vld [vmem:[%s3319 + $0x171] sm:$0xff]
        %v4420 = vld [vmem:[%s3319 + $0x179] sm:$0xff]
        %v4421 = vld [vmem:[%s3319 + $0x181] sm:$0xff]
        %v4422 = vld [vmem:[%s3319 + $0x191] sm:$0xff]
        %v4423 = vld [vmem:[%s3319 + $0x199] sm:$0xff]
        %v4424 = vld [vmem:[%s3319 + $0x1a1] sm:$0xff]
        %v4425 = vld [vmem:[%s3319 + $0x1a9] sm:$0xff]
        %v4426 = vld [vmem:[%s3319 + $0x1b9] sm:$0xff]
        %v4427 = vld [vmem:[%s3319 + $0x1c1] sm:$0xff]
        %v4428 = vld [vmem:[%s3319 + $0x1c9] sm:$0xff]
        %v4429 = vld [vmem:[%s3319 + $0x1d1] sm:$0xff]
        %v4430 = vld [vmem:[%s3319 + $0x1e1] sm:$0xff]
        %v4431 = vld [vmem:[%s3319 + $0x1e9] sm:$0xff]
        %v4432 = vld [vmem:[%s3319 + $0x1f1] sm:$0xff]
        %v4433 = vld [vmem:[%s3319 + $0x1f9] sm:$0xff]
        %v4434 = vld [vmem:[%s3319 + $0x209] sm:$0xff]
        %v4435 = vld [vmem:[%s3319 + $0x211] sm:$0xff]
        %v4436 = vld [vmem:[%s3319 + $0x219] sm:$0xff]
        %v4437 = vld [vmem:[%s3319 + $0x221] sm:$0xff]
        %v4438 = vld [vmem:[%s3319 + $0x231] sm:$0xff]
        %v4439 = vld [vmem:[%s3319 + $0x239] sm:$0xff]
        %v4440 = vld [vmem:[%s3319 + $0x241] sm:$0xff]
        %v4441 = vld [vmem:[%s3319 + $0x249] sm:$0xff]
        %v4442 = vld [vmem:[%s3319 + $0x259] sm:$0xff]
        %v4443 = vld [vmem:[%s3319 + $0x261] sm:$0xff]
        %v4444 = vld [vmem:[%s3319 + $0x269] sm:$0xff]
        %v4445 = vld [vmem:[%s3319 + $0x271] sm:$0xff]
        %v4446 = vld [vmem:[%s3319 + $0x281] sm:$0xff]
        %v4447 = vld [vmem:[%s3319 + $0x289] sm:$0xff]
        %v4448 = vld [vmem:[%s3319 + $0x291] sm:$0xff]
        %v4449 = vld [vmem:[%s3319 + $0x299] sm:$0xff]
        %v4450 = vld [vmem:[%s3319 + $0x2a9] sm:$0xff]
        %v4451 = vld [vmem:[%s3319 + $0x2b1] sm:$0xff]
        %v4452 = vld [vmem:[%s3319 + $0x2b9] sm:$0xff]
        %v4453 = vld [vmem:[%s3319 + $0x2c1] sm:$0xff]
        %v4454 = vld [vmem:[%s3319 + $0x2d1] sm:$0xff]
        %v4455 = vld [vmem:[%s3319 + $0x2d9] sm:$0xff]
        %v4456 = vld [vmem:[%s3319 + $0x2e1] sm:$0xff]
        %v4457 = vld [vmem:[%s3319 + $0x2e9] sm:$0xff]
        %v4458 = vld [vmem:[%s3319 + $0x2f9] sm:$0xff]
        %v4459 = vld [vmem:[%s3319 + $0x301] sm:$0xff]
        %v4460 = vld [vmem:[%s3319 + $0x309] sm:$0xff]
        %v4461 = vld [vmem:[%s3319 + $0x311] sm:$0xff]
        %v4462 = vld [vmem:[%s3319 + $0x321] sm:$0xff]
        %v4463 = vld [vmem:[%s3319 + $0x329] sm:$0xff]
        %v4464 = vld [vmem:[%s3319 + $0x331] sm:$0xff]
        %v4465 = vld [vmem:[%s3319 + $0x339] sm:$0xff]
        %v4466 = vld [vmem:[%s3319 + $0x349] sm:$0xff]
        %v4467 = vld [vmem:[%s3319 + $0x351] sm:$0xff]
        %v4468 = vld [vmem:[%s3319 + $0x359] sm:$0xff]
        %v4469 = vld [vmem:[%s3319 + $0x361] sm:$0xff]
        %v4470 = vld [vmem:[%s3319 + $0x371] sm:$0xff]
        %v4471 = vld [vmem:[%s3319 + $0x379] sm:$0xff]
        %v4472 = vld [vmem:[%s3319 + $0x381] sm:$0xff]
        %v4473 = vld [vmem:[%s3319 + $0x389] sm:$0xff]
        %v4474 = vld [vmem:[%s3319 + $0x399] sm:$0xff]
        %v4475 = vld [vmem:[%s3319 + $0x3a1] sm:$0xff]
        %v4476 = vld [vmem:[%s3319 + $0x3a9] sm:$0xff]
        %v4477 = vld [vmem:[%s3319 + $0x3b1] sm:$0xff]
        %v4478 = vld [vmem:[%s3319 + $0x3c1] sm:$0xff]
        %v4479 = vld [vmem:[%s3319 + $0x3c9] sm:$0xff]
        %v4480 = vld [vmem:[%s3319 + $0x3d1] sm:$0xff]
        %v4481 = vld [vmem:[%s3319 + $0x3d9] sm:$0xff]
        %v4482 = vld [vmem:[%s3319 + $0x3e9] sm:$0xff]
        %v4483 = vld [vmem:[%s3319 + $0x3f1] sm:$0xff]
        %v4484 = vld [vmem:[%s3319 + $0x3f9] sm:$0xff]
        %v4485 = vld [vmem:[%s3319 + $0x401] sm:$0xff]
        %v4486 = vld [vmem:[%s3319 + $0x411] sm:$0xff]
        %v4487 = vld [vmem:[%s3319 + $0x419] sm:$0xff]
        %v4488 = vld [vmem:[%s3319 + $0x421] sm:$0xff]
        %v4489 = vld [vmem:[%s3319 + $0x429] sm:$0xff]
        %v4490 = vld [vmem:[%s3319 + $0x439] sm:$0xff]
        %v4491 = vld [vmem:[%s3319 + $0x441] sm:$0xff]
        %v4492 = vld [vmem:[%s3319 + $0x449] sm:$0xff]
        %v4493 = vld [vmem:[%s3319 + $0x451] sm:$0xff]
        %v4494 = vld [vmem:[%s3319 + $0x461] sm:$0xff]
        %v4495 = vld [vmem:[%s3319 + $0x469] sm:$0xff]
        %v4496 = vld [vmem:[%s3319 + $0x471] sm:$0xff]
        %v4497 = vld [vmem:[%s3319 + $0x479] sm:$0xff]
        %v4498 = vld [vmem:[%s3319 + $0x489] sm:$0xff]
        %v4499 = vld [vmem:[%s3319 + $0x491] sm:$0xff]
        %v4500 = vld [vmem:[%s3319 + $0x499] sm:$0xff]
        %v4501 = vld [vmem:[%s3319 + $0x4a1] sm:$0xff]
        %v4502 = vld [vmem:[%s3319 + $0x4b1] sm:$0xff]
        %v4503 = vld [vmem:[%s3319 + $0x4b9] sm:$0xff]
        %v4504 = vld [vmem:[%s3319 + $0x4c1] sm:$0xff]
        %v4505 = vld [vmem:[%s3319 + $0x4c9] sm:$0xff]
        %v4506 = vld [vmem:[%s3319 + $0x4d9] sm:$0xff]
        %v4507 = vld [vmem:[%s3319 + $0x4e1] sm:$0xff]
        %v4508 = vld [vmem:[%s3319 + $0x4e9] sm:$0xff]
        %v4509 = vld [vmem:[%s3319 + $0x4f1] sm:$0xff]
        %v4510 = vpack.c.bf16 %v4383, %v4382
        %v4511 = vpack.c.bf16 %v4385, %v4384
        %v4512 = vpack.c.bf16 %v4387, %v4386
        %v4513 = vpack.c.bf16 %v4389, %v4388
        %v4514 = vpack.c.bf16 %v4391, %v4390
        %v4515 = vpack.c.bf16 %v4393, %v4392
        %v4516 = vpack.c.bf16 %v4395, %v4394
        %v4517 = vpack.c.bf16 %v4397, %v4396
        %v4518 = vpack.c.bf16 %v4399, %v4398
        %v4519 = vpack.c.bf16 %v4401, %v4400
        %v4520 = vpack.c.bf16 %v4403, %v4402
        %v4521 = vpack.c.bf16 %v4405, %v4404
        %v4522 = vpack.c.bf16 %v4407, %v4406
        %v4523 = vpack.c.bf16 %v4409, %v4408
        %v4524 = vpack.c.bf16 %v4411, %v4410
        %v4525 = vpack.c.bf16 %v4413, %v4412
        %v4526 = vpack.c.bf16 %v4415, %v4414
        %v4527 = vpack.c.bf16 %v4417, %v4416
        %v4528 = vpack.c.bf16 %v4419, %v4418
        %v4529 = vpack.c.bf16 %v4421, %v4420
        %v4530 = vpack.c.bf16 %v4423, %v4422
        %v4531 = vpack.c.bf16 %v4425, %v4424
        %v4532 = vpack.c.bf16 %v4427, %v4426
        %v4533 = vpack.c.bf16 %v4429, %v4428
        %v4534 = vpack.c.bf16 %v4431, %v4430
        %v4535 = vpack.c.bf16 %v4433, %v4432
        %v4536 = vpack.c.bf16 %v4435, %v4434
        %v4537 = vpack.c.bf16 %v4437, %v4436
        %v4538 = vpack.c.bf16 %v4439, %v4438
        %v4539 = vpack.c.bf16 %v4441, %v4440
        %v4540 = vpack.c.bf16 %v4443, %v4442
        %v4541 = vpack.c.bf16 %v4445, %v4444
        %v4542 = vpack.c.bf16 %v4447, %v4446
        %v4543 = vpack.c.bf16 %v4449, %v4448
        %v4544 = vpack.c.bf16 %v4451, %v4450
        %v4545 = vpack.c.bf16 %v4453, %v4452
        %v4546 = vpack.c.bf16 %v4455, %v4454
        %v4547 = vpack.c.bf16 %v4457, %v4456
        %v4548 = vpack.c.bf16 %v4459, %v4458
        %v4549 = vpack.c.bf16 %v4461, %v4460
        %v4550 = vpack.c.bf16 %v4463, %v4462
        %v4551 = vpack.c.bf16 %v4465, %v4464
        %v4552 = vpack.c.bf16 %v4467, %v4466
        %v4553 = vpack.c.bf16 %v4469, %v4468
        %v4554 = vpack.c.bf16 %v4471, %v4470
        %v4555 = vpack.c.bf16 %v4473, %v4472
        %v4556 = vpack.c.bf16 %v4475, %v4474
        %v4557 = vpack.c.bf16 %v4477, %v4476
        %v4558 = vpack.c.bf16 %v4479, %v4478
        %v4559 = vpack.c.bf16 %v4481, %v4480
        %v4560 = vpack.c.bf16 %v4483, %v4482
        %v4561 = vpack.c.bf16 %v4485, %v4484
        %v4562 = vpack.c.bf16 %v4487, %v4486
        %v4563 = vpack.c.bf16 %v4489, %v4488
        %v4564 = vpack.c.bf16 %v4491, %v4490
        %v4565 = vpack.c.bf16 %v4493, %v4492
        %v4566 = vpack.c.bf16 %v4495, %v4494
        %v4567 = vpack.c.bf16 %v4497, %v4496
        %v4568 = vpack.c.bf16 %v4499, %v4498
        %v4569 = vpack.c.bf16 %v4501, %v4500
        %v4570 = vpack.c.bf16 %v4503, %v4502
        %v4571 = vpack.c.bf16 %v4505, %v4504
        %v4572 = vpack.c.bf16 %v4507, %v4506
        %v4573 = vpack.c.bf16 %v4509, %v4508
        %s4574 = scalar_lea.vmem %s1, 8
        %v4575 = vld [vmem:[%s4574] sm:$0x3]
        %v4577 = vsel %vm772, %v4510, 0
        %v4580 = vsel %vm772, %v4511, 0
        %v4583 = vsel %vm772, %v4512, 0
        %v4586 = vsel %vm772, %v4513, 0
        %v4589 = vsel %vm772, %v4514, 0
        %v4592 = vsel %vm772, %v4515, 0
        %v4595 = vsel %vm772, %v4516, 0
        %v4598 = vsel %vm772, %v4517, 0
        %v4601 = vsel %vm772, %v4518, 0
        %v4604 = vsel %vm772, %v4519, 0
        %v4607 = vsel %vm772, %v4520, 0
        %v4610 = vsel %vm772, %v4521, 0
        %v4613 = vsel %vm772, %v4522, 0
        %v4616 = vsel %vm772, %v4523, 0
        %v4619 = vsel %vm772, %v4524, 0
        %v4622 = vsel %vm772, %v4525, 0
        %v4625 = vsel %vm772, %v4526, 0
        %v4628 = vsel %vm772, %v4527, 0
        %v4631 = vsel %vm772, %v4528, 0
        %v4634 = vsel %vm772, %v4529, 0
        %v4637 = vsel %vm772, %v4530, 0
        %v4640 = vsel %vm772, %v4531, 0
        %v4643 = vsel %vm772, %v4532, 0
        %v4646 = vsel %vm772, %v4533, 0
        %v4649 = vsel %vm772, %v4534, 0
        %v4652 = vsel %vm772, %v4535, 0
        %v4655 = vsel %vm772, %v4536, 0
        %v4658 = vsel %vm772, %v4537, 0
        %v4661 = vsel %vm772, %v4538, 0
        %v4664 = vsel %vm772, %v4539, 0
        %v4667 = vsel %vm772, %v4540, 0
        %v4670 = vsel %vm772, %v4541, 0
        %v4673 = vsel %vm772, %v4542, 0
        %v4676 = vsel %vm772, %v4543, 0
        %v4679 = vsel %vm772, %v4544, 0
        %v4682 = vsel %vm772, %v4545, 0
        %v4685 = vsel %vm772, %v4546, 0
        %v4688 = vsel %vm772, %v4547, 0
        %v4691 = vsel %vm772, %v4548, 0
        %v4694 = vsel %vm772, %v4549, 0
        %v4697 = vsel %vm772, %v4550, 0
        %v4700 = vsel %vm772, %v4551, 0
        %v4703 = vsel %vm772, %v4552, 0
        %v4706 = vsel %vm772, %v4553, 0
        %v4709 = vsel %vm772, %v4554, 0
        %v4712 = vsel %vm772, %v4555, 0
        %v4715 = vsel %vm772, %v4556, 0
        %v4718 = vsel %vm772, %v4557, 0
        %v4721 = vsel %vm772, %v4558, 0
        %v4724 = vsel %vm772, %v4559, 0
        %v4727 = vsel %vm772, %v4560, 0
        %v4730 = vsel %vm772, %v4561, 0
        %v4733 = vsel %vm772, %v4562, 0
        %v4736 = vsel %vm772, %v4563, 0
        %v4739 = vsel %vm772, %v4564, 0
        %v4742 = vsel %vm772, %v4565, 0
        %v4745 = vsel %vm772, %v4566, 0
        %v4748 = vsel %vm772, %v4567, 0
        %v4751 = vsel %vm772, %v4568, 0
        %v4754 = vsel %vm772, %v4569, 0
        %v4757 = vsel %vm772, %v4570, 0
        %v4760 = vsel %vm772, %v4571, 0
        %v4763 = vsel %vm772, %v4572, 0
        %v4766 = vsel %vm772, %v4573, 0
        %v4769 = vand.u32 %v4575, %v968
        %4771 = vmatprep.subr.bf16.mxu0 0
        %4772 = vmatpush1.bf16.msra.mxu0 %v4769
        %4773 = vmatprep.subr.bf16.mxu0 0
        %4774 = vmatpush1.bf16.msra.mxu0 0
        %4775 = vmatprep.subr.bf16.mxu0 0
        %4776 = vmatpush1.bf16.msra.mxu0 0
        %4777 = vmatprep.subr.bf16.mxu0 0
        %4778 = vmatpush1.bf16.msra.mxu0 0
        %4779 = vmatprep.subr.bf16.mxu0 0
        %4780 = vmatpush1.bf16.msra.mxu0 0
        %4781 = vmatprep.subr.bf16.mxu0 0
        %4782 = vmatpush1.bf16.msra.mxu0 0
        %4783 = vmatprep.subr.bf16.mxu0 0
        %4784 = vmatpush1.bf16.msra.mxu0 0
        %4785 = vmatprep.subr.bf16.mxu0 0
        %4786 = vmatpush1.bf16.msra.mxu0 0
        %4787 = vmatprep.subr.bf16.mxu0 0
        %4788 = vmatpush1.bf16.msra.mxu0 0
        %4789 = vmatprep.subr.bf16.mxu0 0
        %4790 = vmatpush1.bf16.msra.mxu0 0
        %4791 = vmatprep.subr.bf16.mxu0 0
        %4792 = vmatpush1.bf16.msra.mxu0 0
        %4793 = vmatprep.subr.bf16.mxu0 0
        %4794 = vmatpush1.bf16.msra.mxu0 0
        %4795 = vmatprep.subr.bf16.mxu0 0
        %4796 = vmatpush1.bf16.msra.mxu0 0
        %4797 = vmatprep.subr.bf16.mxu0 0
        %4798 = vmatpush1.bf16.msra.mxu0 0
        %4799 = vmatprep.subr.bf16.mxu0 0
        %4800 = vmatpush1.bf16.msra.mxu0 0
        %4801 = vmatprep.subr.bf16.mxu0 0
        %4802 = vmatpush1.bf16.msra.mxu0 0
        %4803 = vmatprep.mubr.bf16.mxu0 0
        %4804 = vmatmul.mubr.bf16.gmra.mrb[0].mxu0 %v4577
        %v4805 = vpop.f32.mrb[0].mxu0
        %v4806 = vadd.f32 0.0, %v4805
        %v4807 = vpop.f32.mrb[0].mxu0
        %v4808 = vpop.f32.mrb[0].mxu0
        %v4809 = vadd.f32 0.0, %v4808
        %v4810 = vpop.f32.mrb[0].mxu0
        %4811 = vmatprep.mubr.bf16.mxu0 0
        %4812 = vmatmul.mubr.bf16.gmra.mrb[0].mxu0 %v4580
        %v4813 = vpop.f32.mrb[0].mxu0
        %v4814 = vadd.f32 0.0, %v4813
        %v4815 = vpop.f32.mrb[0].mxu0
        %v4816 = vpop.f32.mrb[0].mxu0
        %v4817 = vadd.f32 0.0, %v4816
        %v4818 = vpop.f32.mrb[0].mxu0
        %4819 = vmatprep.mubr.bf16.mxu0 0
        %4820 = vmatmul.mubr.bf16.gmra.mrb[0].mxu0 %v4583
        %v4821 = vpop.f32.mrb[0].mxu0
        %v4822 = vadd.f32 0.0, %v4821
        %v4823 = vpop.f32.mrb[0].mxu0
        %v4824 = vpop.f32.mrb[0].mxu0
        %v4825 = vadd.f32 0.0, %v4824
        %v4826 = vpop.f32.mrb[0].mxu0
        %4827 = vmatprep.mubr.bf16.mxu0 0
        %4828 = vmatmul.mubr.bf16.gmra.mrb[0].mxu0 %v4586
        %v4829 = vpop.f32.mrb[0].mxu0
        %v4830 = vadd.f32 0.0, %v4829
        %v4831 = vpop.f32.mrb[0].mxu0
        %v4832 = vpop.f32.mrb[0].mxu0
        %v4833 = vadd.f32 0.0, %v4832
        %v4834 = vpop.f32.mrb[0].mxu0
        %4835 = vmatprep.mubr.bf16.mxu0 0
        %4836 = vmatmul.mubr.bf16.gmra.mrb[0].mxu0 %v4589
        %v4837 = vpop.f32.mrb[0].mxu0
        %v4838 = vadd.f32 0.0, %v4837
        %v4839 = vpop.f32.mrb[0].mxu0
        %v4840 = vpop.f32.mrb[0].mxu0
        %v4841 = vadd.f32 0.0, %v4840
        %v4842 = vpop.f32.mrb[0].mxu0
        %4843 = vmatprep.mubr.bf16.mxu0 0
        %4844 = vmatmul.mubr.bf16.gmra.mrb[0].mxu0 %v4592
        %v4845 = vpop.f32.mrb[0].mxu0
        %v4846 = vadd.f32 0.0, %v4845
        %v4847 = vpop.f32.mrb[0].mxu0
        %v4848 = vpop.f32.mrb[0].mxu0
        %v4849 = vadd.f32 0.0, %v4848
        %v4850 = vpop.f32.mrb[0].mxu0
        %4851 = vmatprep.mubr.bf16.mxu0 0
        %4852 = vmatmul.mubr.bf16.gmra.mrb[0].mxu0 %v4595
        %v4853 = vpop.f32.mrb[0].mxu0
        %v4854 = vadd.f32 0.0, %v4853
        %v4855 = vpop.f32.mrb[0].mxu0
        %v4856 = vpop.f32.mrb[0].mxu0
        %v4857 = vadd.f32 0.0, %v4856
        %v4858 = vpop.f32.mrb[0].mxu0
        %4859 = vmatprep.mubr.bf16.mxu0 0
        %4860 = vmatmul.mubr.bf16.gmra.mrb[0].mxu0 %v4598
        %v4861 = vpop.f32.mrb[0].mxu0
        %v4862 = vadd.f32 0.0, %v4861
        %v4863 = vpop.f32.mrb[0].mxu0
        %v4864 = vpop.f32.mrb[0].mxu0
        %v4865 = vadd.f32 0.0, %v4864
        %v4866 = vpop.f32.mrb[0].mxu0
        %4867 = vmatprep.mubr.bf16.mxu0 0
        %4868 = vmatmul.mubr.bf16.gmra.mrb[0].mxu0 %v4601
        %v4869 = vpop.f32.mrb[0].mxu0
        %v4870 = vadd.f32 0.0, %v4869
        %v4871 = vpop.f32.mrb[0].mxu0
        %v4872 = vpop.f32.mrb[0].mxu0
        %v4873 = vadd.f32 0.0, %v4872
        %v4874 = vpop.f32.mrb[0].mxu0
        %4875 = vmatprep.mubr.bf16.mxu0 0
        %4876 = vmatmul.mubr.bf16.gmra.mrb[0].mxu0 %v4604
        %v4877 = vpop.f32.mrb[0].mxu0
        %v4878 = vadd.f32 0.0, %v4877
        %v4879 = vpop.f32.mrb[0].mxu0
        %v4880 = vpop.f32.mrb[0].mxu0
        %v4881 = vadd.f32 0.0, %v4880
        %v4882 = vpop.f32.mrb[0].mxu0
        %4883 = vmatprep.mubr.bf16.mxu0 0
        %4884 = vmatmul.mubr.bf16.gmra.mrb[0].mxu0 %v4607
        %v4885 = vpop.f32.mrb[0].mxu0
        %v4886 = vadd.f32 0.0, %v4885
        %v4887 = vpop.f32.mrb[0].mxu0
        %v4888 = vpop.f32.mrb[0].mxu0
        %v4889 = vadd.f32 0.0, %v4888
        %v4890 = vpop.f32.mrb[0].mxu0
        %4891 = vmatprep.mubr.bf16.mxu0 0
        %4892 = vmatmul.mubr.bf16.gmra.mrb[0].mxu0 %v4610
        %v4893 = vpop.f32.mrb[0].mxu0
        %v4894 = vadd.f32 0.0, %v4893
        %v4895 = vpop.f32.mrb[0].mxu0
        %v4896 = vpop.f32.mrb[0].mxu0
        %v4897 = vadd.f32 0.0, %v4896
        %v4898 = vpop.f32.mrb[0].mxu0
        %4899 = vmatprep.mubr.bf16.mxu0 0
        %4900 = vmatmul.mubr.bf16.gmra.mrb[0].mxu0 %v4613
        %v4901 = vpop.f32.mrb[0].mxu0
        %v4902 = vadd.f32 0.0, %v4901
        %v4903 = vpop.f32.mrb[0].mxu0
        %v4904 = vpop.f32.mrb[0].mxu0
        %v4905 = vadd.f32 0.0, %v4904
        %v4906 = vpop.f32.mrb[0].mxu0
        %4907 = vmatprep.mubr.bf16.mxu0 0
        %4908 = vmatmul.mubr.bf16.gmra.mrb[0].mxu0 %v4616
        %v4909 = vpop.f32.mrb[0].mxu0
        %v4910 = vadd.f32 0.0, %v4909
        %v4911 = vpop.f32.mrb[0].mxu0
        %v4912 = vpop.f32.mrb[0].mxu0
        %v4913 = vadd.f32 0.0, %v4912
        %v4914 = vpop.f32.mrb[0].mxu0
        %4915 = vmatprep.mubr.bf16.mxu0 0
        %4916 = vmatmul.mubr.bf16.gmra.mrb[0].mxu0 %v4619
        %v4917 = vpop.f32.mrb[0].mxu0
        %v4918 = vadd.f32 0.0, %v4917
        %v4919 = vpop.f32.mrb[0].mxu0
        %v4920 = vpop.f32.mrb[0].mxu0
        %v4921 = vadd.f32 0.0, %v4920
        %v4922 = vpop.f32.mrb[0].mxu0
        %4923 = vmatprep.mubr.bf16.mxu0 0
        %4924 = vmatmul.mubr.bf16.gmra.mrb[0].mxu0 %v4622
        %v4925 = vpop.f32.mrb[0].mxu0
        %v4926 = vadd.f32 0.0, %v4925
        %v4927 = vpop.f32.mrb[0].mxu0
        %v4928 = vpop.f32.mrb[0].mxu0
        %v4929 = vadd.f32 0.0, %v4928
        %v4930 = vpop.f32.mrb[0].mxu0
        %4931 = vmatprep.mubr.bf16.mxu0 0
        %4932 = vmatmul.mubr.bf16.gmra.mrb[0].mxu0 %v4625
        %v4933 = vpop.f32.mrb[0].mxu0
        %v4934 = vadd.f32 0.0, %v4933
        %v4935 = vpop.f32.mrb[0].mxu0
        %v4936 = vpop.f32.mrb[0].mxu0
        %v4937 = vadd.f32 0.0, %v4936
        %v4938 = vpop.f32.mrb[0].mxu0
        %4939 = vmatprep.mubr.bf16.mxu0 0
        %4940 = vmatmul.mubr.bf16.gmra.mrb[0].mxu0 %v4628
        %v4941 = vpop.f32.mrb[0].mxu0
        %v4942 = vadd.f32 0.0, %v4941
        %v4943 = vpop.f32.mrb[0].mxu0
        %v4944 = vpop.f32.mrb[0].mxu0
        %v4945 = vadd.f32 0.0, %v4944
        %v4946 = vpop.f32.mrb[0].mxu0
        %4947 = vmatprep.mubr.bf16.mxu0 0
        %4948 = vmatmul.mubr.bf16.gmra.mrb[0].mxu0 %v4631
        %v4949 = vpop.f32.mrb[0].mxu0
        %v4950 = vadd.f32 0.0, %v4949
        %v4951 = vpop.f32.mrb[0].mxu0
        %v4952 = vpop.f32.mrb[0].mxu0
        %v4953 = vadd.f32 0.0, %v4952
        %v4954 = vpop.f32.mrb[0].mxu0
        %4955 = vmatprep.mubr.bf16.mxu0 0
        %4956 = vmatmul.mubr.bf16.gmra.mrb[0].mxu0 %v4634
        %v4957 = vpop.f32.mrb[0].mxu0
        %v4958 = vadd.f32 0.0, %v4957
        %v4959 = vpop.f32.mrb[0].mxu0
        %v4960 = vpop.f32.mrb[0].mxu0
        %v4961 = vadd.f32 0.0, %v4960
        %v4962 = vpop.f32.mrb[0].mxu0
        %4963 = vmatprep.mubr.bf16.mxu0 0
        %4964 = vmatmul.mubr.bf16.gmra.mrb[0].mxu0 %v4637
        %v4965 = vpop.f32.mrb[0].mxu0
        %v4966 = vadd.f32 0.0, %v4965
        %v4967 = vpop.f32.mrb[0].mxu0
        %v4968 = vpop.f32.mrb[0].mxu0
        %v4969 = vadd.f32 0.0, %v4968
        %v4970 = vpop.f32.mrb[0].mxu0
        %4971 = vmatprep.mubr.bf16.mxu0 0
        %4972 = vmatmul.mubr.bf16.gmra.mrb[0].mxu0 %v4640
        %v4973 = vpop.f32.mrb[0].mxu0
        %v4974 = vadd.f32 0.0, %v4973
        %v4975 = vpop.f32.mrb[0].mxu0
        %v4976 = vpop.f32.mrb[0].mxu0
        %v4977 = vadd.f32 0.0, %v4976
        %v4978 = vpop.f32.mrb[0].mxu0
        %4979 = vmatprep.mubr.bf16.mxu0 0
        %4980 = vmatmul.mubr.bf16.gmra.mrb[0].mxu0 %v4643
        %v4981 = vpop.f32.mrb[0].mxu0
        %v4982 = vadd.f32 0.0, %v4981
        %v4983 = vpop.f32.mrb[0].mxu0
        %v4984 = vpop.f32.mrb[0].mxu0
        %v4985 = vadd.f32 0.0, %v4984
        %v4986 = vpop.f32.mrb[0].mxu0
        %4987 = vmatprep.mubr.bf16.mxu0 0
        %4988 = vmatmul.mubr.bf16.gmra.mrb[0].mxu0 %v4646
        %v4989 = vpop.f32.mrb[0].mxu0
        %v4990 = vadd.f32 0.0, %v4989
        %v4991 = vpop.f32.mrb[0].mxu0
        %v4992 = vpop.f32.mrb[0].mxu0
        %v4993 = vadd.f32 0.0, %v4992
        %v4994 = vpop.f32.mrb[0].mxu0
        %4995 = vmatprep.mubr.bf16.mxu0 0
        %4996 = vmatmul.mubr.bf16.gmra.mrb[0].mxu0 %v4649
        %v4997 = vpop.f32.mrb[0].mxu0
        %v4998 = vadd.f32 0.0, %v4997
        %v4999 = vpop.f32.mrb[0].mxu0
        %v5000 = vpop.f32.mrb[0].mxu0
        %v5001 = vadd.f32 0.0, %v5000
        %v5002 = vpop.f32.mrb[0].mxu0
        %5003 = vmatprep.mubr.bf16.mxu0 0
        %5004 = vmatmul.mubr.bf16.gmra.mrb[0].mxu0 %v4652
        %v5005 = vpop.f32.mrb[0].mxu0
        %v5006 = vadd.f32 0.0, %v5005
        %v5007 = vpop.f32.mrb[0].mxu0
        %v5008 = vpop.f32.mrb[0].mxu0
        %v5009 = vadd.f32 0.0, %v5008
        %v5010 = vpop.f32.mrb[0].mxu0
        %5011 = vmatprep.mubr.bf16.mxu0 0
        %5012 = vmatmul.mubr.bf16.gmra.mrb[0].mxu0 %v4655
        %v5013 = vpop.f32.mrb[0].mxu0
        %v5014 = vadd.f32 0.0, %v5013
        %v5015 = vpop.f32.mrb[0].mxu0
        %v5016 = vpop.f32.mrb[0].mxu0
        %v5017 = vadd.f32 0.0, %v5016
        %v5018 = vpop.f32.mrb[0].mxu0
        %5019 = vmatprep.mubr.bf16.mxu0 0
        %5020 = vmatmul.mubr.bf16.gmra.mrb[0].mxu0 %v4658
        %v5021 = vpop.f32.mrb[0].mxu0
        %v5022 = vadd.f32 0.0, %v5021
        %v5023 = vpop.f32.mrb[0].mxu0
        %v5024 = vpop.f32.mrb[0].mxu0
        %v5025 = vadd.f32 0.0, %v5024
        %v5026 = vpop.f32.mrb[0].mxu0
        %5027 = vmatprep.mubr.bf16.mxu0 0
        %5028 = vmatmul.mubr.bf16.gmra.mrb[0].mxu0 %v4661
        %v5029 = vpop.f32.mrb[0].mxu0
        %v5030 = vadd.f32 0.0, %v5029
        %v5031 = vpop.f32.mrb[0].mxu0
        %v5032 = vpop.f32.mrb[0].mxu0
        %v5033 = vadd.f32 0.0, %v5032
        %v5034 = vpop.f32.mrb[0].mxu0
        %5035 = vmatprep.mubr.bf16.mxu0 0
        %5036 = vmatmul.mubr.bf16.gmra.mrb[0].mxu0 %v4664
        %v5037 = vpop.f32.mrb[0].mxu0
        %v5038 = vadd.f32 0.0, %v5037
        %v5039 = vpop.f32.mrb[0].mxu0
        %v5040 = vpop.f32.mrb[0].mxu0
        %v5041 = vadd.f32 0.0, %v5040
        %v5042 = vpop.f32.mrb[0].mxu0
        %5043 = vmatprep.mubr.bf16.mxu0 0
        %5044 = vmatmul.mubr.bf16.gmra.mrb[0].mxu0 %v4667
        %v5045 = vpop.f32.mrb[0].mxu0
        %v5046 = vadd.f32 0.0, %v5045
        %v5047 = vpop.f32.mrb[0].mxu0
        %v5048 = vpop.f32.mrb[0].mxu0
        %v5049 = vadd.f32 0.0, %v5048
        %v5050 = vpop.f32.mrb[0].mxu0
        %5051 = vmatprep.mubr.bf16.mxu0 0
        %5052 = vmatmul.mubr.bf16.gmra.mrb[0].mxu0 %v4670
        %v5053 = vpop.f32.mrb[0].mxu0
        %v5054 = vadd.f32 0.0, %v5053
        %v5055 = vpop.f32.mrb[0].mxu0
        %v5056 = vpop.f32.mrb[0].mxu0
        %v5057 = vadd.f32 0.0, %v5056
        %v5058 = vpop.f32.mrb[0].mxu0
        %5059 = vmatprep.mubr.bf16.mxu0 0
        %5060 = vmatmul.mubr.bf16.gmra.mrb[0].mxu0 %v4673
        %v5061 = vpop.f32.mrb[0].mxu0
        %v5062 = vadd.f32 0.0, %v5061
        %v5063 = vpop.f32.mrb[0].mxu0
        %v5064 = vpop.f32.mrb[0].mxu0
        %v5065 = vadd.f32 0.0, %v5064
        %v5066 = vpop.f32.mrb[0].mxu0
        %5067 = vmatprep.mubr.bf16.mxu0 0
        %5068 = vmatmul.mubr.bf16.gmra.mrb[0].mxu0 %v4676
        %v5069 = vpop.f32.mrb[0].mxu0
        %v5070 = vadd.f32 0.0, %v5069
        %v5071 = vpop.f32.mrb[0].mxu0
        %v5072 = vpop.f32.mrb[0].mxu0
        %v5073 = vadd.f32 0.0, %v5072
        %v5074 = vpop.f32.mrb[0].mxu0
        %5075 = vmatprep.mubr.bf16.mxu0 0
        %5076 = vmatmul.mubr.bf16.gmra.mrb[0].mxu0 %v4679
        %v5077 = vpop.f32.mrb[0].mxu0
        %v5078 = vadd.f32 0.0, %v5077
        %v5079 = vpop.f32.mrb[0].mxu0
        %v5080 = vpop.f32.mrb[0].mxu0
        %v5081 = vadd.f32 0.0, %v5080
        %v5082 = vpop.f32.mrb[0].mxu0
        %5083 = vmatprep.mubr.bf16.mxu0 0
        %5084 = vmatmul.mubr.bf16.gmra.mrb[0].mxu0 %v4682
        %v5085 = vpop.f32.mrb[0].mxu0
        %v5086 = vadd.f32 0.0, %v5085
        %v5087 = vpop.f32.mrb[0].mxu0
        %v5088 = vpop.f32.mrb[0].mxu0
        %v5089 = vadd.f32 0.0, %v5088
        %v5090 = vpop.f32.mrb[0].mxu0
        %5091 = vmatprep.mubr.bf16.mxu0 0
        %5092 = vmatmul.mubr.bf16.gmra.mrb[0].mxu0 %v4685
        %v5093 = vpop.f32.mrb[0].mxu0
        %v5094 = vadd.f32 0.0, %v5093
        %v5095 = vpop.f32.mrb[0].mxu0
        %v5096 = vpop.f32.mrb[0].mxu0
        %v5097 = vadd.f32 0.0, %v5096
        %v5098 = vpop.f32.mrb[0].mxu0
        %5099 = vmatprep.mubr.bf16.mxu0 0
        %5100 = vmatmul.mubr.bf16.gmra.mrb[0].mxu0 %v4688
        %v5101 = vpop.f32.mrb[0].mxu0
        %v5102 = vadd.f32 0.0, %v5101
        %v5103 = vpop.f32.mrb[0].mxu0
        %v5104 = vpop.f32.mrb[0].mxu0
        %v5105 = vadd.f32 0.0, %v5104
        %v5106 = vpop.f32.mrb[0].mxu0
        %5107 = vmatprep.mubr.bf16.mxu0 0
        %5108 = vmatmul.mubr.bf16.gmra.mrb[0].mxu0 %v4691
        %v5109 = vpop.f32.mrb[0].mxu0
        %v5110 = vadd.f32 0.0, %v5109
        %v5111 = vpop.f32.mrb[0].mxu0
        %v5112 = vpop.f32.mrb[0].mxu0
        %v5113 = vadd.f32 0.0, %v5112
        %v5114 = vpop.f32.mrb[0].mxu0
        %5115 = vmatprep.mubr.bf16.mxu0 0
        %5116 = vmatmul.mubr.bf16.gmra.mrb[0].mxu0 %v4694
        %v5117 = vpop.f32.mrb[0].mxu0
        %v5118 = vadd.f32 0.0, %v5117
        %v5119 = vpop.f32.mrb[0].mxu0
        %v5120 = vpop.f32.mrb[0].mxu0
        %v5121 = vadd.f32 0.0, %v5120
        %v5122 = vpop.f32.mrb[0].mxu0
        %5123 = vmatprep.mubr.bf16.mxu0 0
        %5124 = vmatmul.mubr.bf16.gmra.mrb[0].mxu0 %v4697
        %v5125 = vpop.f32.mrb[0].mxu0
        %v5126 = vadd.f32 0.0, %v5125
        %v5127 = vpop.f32.mrb[0].mxu0
        %v5128 = vpop.f32.mrb[0].mxu0
        %v5129 = vadd.f32 0.0, %v5128
        %v5130 = vpop.f32.mrb[0].mxu0
        %5131 = vmatprep.mubr.bf16.mxu0 0
        %5132 = vmatmul.mubr.bf16.gmra.mrb[0].mxu0 %v4700
        %v5133 = vpop.f32.mrb[0].mxu0
        %v5134 = vadd.f32 0.0, %v5133
        %v5135 = vpop.f32.mrb[0].mxu0
        %v5136 = vpop.f32.mrb[0].mxu0
        %v5137 = vadd.f32 0.0, %v5136
        %v5138 = vpop.f32.mrb[0].mxu0
        %5139 = vmatprep.mubr.bf16.mxu0 0
        %5140 = vmatmul.mubr.bf16.gmra.mrb[0].mxu0 %v4703
        %v5141 = vpop.f32.mrb[0].mxu0
        %v5142 = vadd.f32 0.0, %v5141
        %v5143 = vpop.f32.mrb[0].mxu0
        %v5144 = vpop.f32.mrb[0].mxu0
        %v5145 = vadd.f32 0.0, %v5144
        %v5146 = vpop.f32.mrb[0].mxu0
        %5147 = vmatprep.mubr.bf16.mxu0 0
        %5148 = vmatmul.mubr.bf16.gmra.mrb[0].mxu0 %v4706
        %v5149 = vpop.f32.mrb[0].mxu0
        %v5150 = vadd.f32 0.0, %v5149
        %v5151 = vpop.f32.mrb[0].mxu0
        %v5152 = vpop.f32.mrb[0].mxu0
        %v5153 = vadd.f32 0.0, %v5152
        %v5154 = vpop.f32.mrb[0].mxu0
        %5155 = vmatprep.mubr.bf16.mxu0 0
        %5156 = vmatmul.mubr.bf16.gmra.mrb[0].mxu0 %v4709
        %v5157 = vpop.f32.mrb[0].mxu0
        %v5158 = vadd.f32 0.0, %v5157
        %v5159 = vpop.f32.mrb[0].mxu0
        %v5160 = vpop.f32.mrb[0].mxu0
        %v5161 = vadd.f32 0.0, %v5160
        %v5162 = vpop.f32.mrb[0].mxu0
        %5163 = vmatprep.mubr.bf16.mxu0 0
        %5164 = vmatmul.mubr.bf16.gmra.mrb[0].mxu0 %v4712
        %v5165 = vpop.f32.mrb[0].mxu0
        %v5166 = vadd.f32 0.0, %v5165
        %v5167 = vpop.f32.mrb[0].mxu0
        %v5168 = vpop.f32.mrb[0].mxu0
        %v5169 = vadd.f32 0.0, %v5168
        %v5170 = vpop.f32.mrb[0].mxu0
        %5171 = vmatprep.mubr.bf16.mxu0 0
        %5172 = vmatmul.mubr.bf16.gmra.mrb[0].mxu0 %v4715
        %v5173 = vpop.f32.mrb[0].mxu0
        %v5174 = vadd.f32 0.0, %v5173
        %v5175 = vpop.f32.mrb[0].mxu0
        %v5176 = vpop.f32.mrb[0].mxu0
        %v5177 = vadd.f32 0.0, %v5176
        %v5178 = vpop.f32.mrb[0].mxu0
        %5179 = vmatprep.mubr.bf16.mxu0 0
        %5180 = vmatmul.mubr.bf16.gmra.mrb[0].mxu0 %v4718
        %v5181 = vpop.f32.mrb[0].mxu0
        %v5182 = vadd.f32 0.0, %v5181
        %v5183 = vpop.f32.mrb[0].mxu0
        %v5184 = vpop.f32.mrb[0].mxu0
        %v5185 = vadd.f32 0.0, %v5184
        %v5186 = vpop.f32.mrb[0].mxu0
        %5187 = vmatprep.mubr.bf16.mxu0 0
        %5188 = vmatmul.mubr.bf16.gmra.mrb[0].mxu0 %v4721
        %v5189 = vpop.f32.mrb[0].mxu0
        %v5190 = vadd.f32 0.0, %v5189
        %v5191 = vpop.f32.mrb[0].mxu0
        %v5192 = vpop.f32.mrb[0].mxu0
        %v5193 = vadd.f32 0.0, %v5192
        %v5194 = vpop.f32.mrb[0].mxu0
        %5195 = vmatprep.mubr.bf16.mxu0 0
        %5196 = vmatmul.mubr.bf16.gmra.mrb[0].mxu0 %v4724
        %v5197 = vpop.f32.mrb[0].mxu0
        %v5198 = vadd.f32 0.0, %v5197
        %v5199 = vpop.f32.mrb[0].mxu0
        %v5200 = vpop.f32.mrb[0].mxu0
        %v5201 = vadd.f32 0.0, %v5200
        %v5202 = vpop.f32.mrb[0].mxu0
        %5203 = vmatprep.mubr.bf16.mxu0 0
        %5204 = vmatmul.mubr.bf16.gmra.mrb[0].mxu0 %v4727
        %v5205 = vpop.f32.mrb[0].mxu0
        %v5206 = vadd.f32 0.0, %v5205
        %v5207 = vpop.f32.mrb[0].mxu0
        %v5208 = vpop.f32.mrb[0].mxu0
        %v5209 = vadd.f32 0.0, %v5208
        %v5210 = vpop.f32.mrb[0].mxu0
        %5211 = vmatprep.mubr.bf16.mxu0 0
        %5212 = vmatmul.mubr.bf16.gmra.mrb[0].mxu0 %v4730
        %v5213 = vpop.f32.mrb[0].mxu0
        %v5214 = vadd.f32 0.0, %v5213
        %v5215 = vpop.f32.mrb[0].mxu0
        %v5216 = vpop.f32.mrb[0].mxu0
        %v5217 = vadd.f32 0.0, %v5216
        %v5218 = vpop.f32.mrb[0].mxu0
        %5219 = vmatprep.mubr.bf16.mxu0 0
        %5220 = vmatmul.mubr.bf16.gmra.mrb[0].mxu0 %v4733
        %v5221 = vpop.f32.mrb[0].mxu0
        %v5222 = vadd.f32 0.0, %v5221
        %v5223 = vpop.f32.mrb[0].mxu0
        %v5224 = vpop.f32.mrb[0].mxu0
        %v5225 = vadd.f32 0.0, %v5224
        %v5226 = vpop.f32.mrb[0].mxu0
        %5227 = vmatprep.mubr.bf16.mxu0 0
        %5228 = vmatmul.mubr.bf16.gmra.mrb[0].mxu0 %v4736
        %v5229 = vpop.f32.mrb[0].mxu0
        %v5230 = vadd.f32 0.0, %v5229
        %v5231 = vpop.f32.mrb[0].mxu0
        %v5232 = vpop.f32.mrb[0].mxu0
        %v5233 = vadd.f32 0.0, %v5232
        %v5234 = vpop.f32.mrb[0].mxu0
        %5235 = vmatprep.mubr.bf16.mxu0 0
        %5236 = vmatmul.mubr.bf16.gmra.mrb[0].mxu0 %v4739
        %v5237 = vpop.f32.mrb[0].mxu0
        %v5238 = vadd.f32 0.0, %v5237
        %v5239 = vpop.f32.mrb[0].mxu0
        %v5240 = vpop.f32.mrb[0].mxu0
        %v5241 = vadd.f32 0.0, %v5240
        %v5242 = vpop.f32.mrb[0].mxu0
        %5243 = vmatprep.mubr.bf16.mxu0 0
        %5244 = vmatmul.mubr.bf16.gmra.mrb[0].mxu0 %v4742
        %v5245 = vpop.f32.mrb[0].mxu0
        %v5246 = vadd.f32 0.0, %v5245
        %v5247 = vpop.f32.mrb[0].mxu0
        %v5248 = vpop.f32.mrb[0].mxu0
        %v5249 = vadd.f32 0.0, %v5248
        %v5250 = vpop.f32.mrb[0].mxu0
        %5251 = vmatprep.mubr.bf16.mxu0 0
        %5252 = vmatmul.mubr.bf16.gmra.mrb[0].mxu0 %v4745
        %v5253 = vpop.f32.mrb[0].mxu0
        %v5254 = vadd.f32 0.0, %v5253
        %v5255 = vpop.f32.mrb[0].mxu0
        %v5256 = vpop.f32.mrb[0].mxu0
        %v5257 = vadd.f32 0.0, %v5256
        %v5258 = vpop.f32.mrb[0].mxu0
        %5259 = vmatprep.mubr.bf16.mxu0 0
        %5260 = vmatmul.mubr.bf16.gmra.mrb[0].mxu0 %v4748
        %v5261 = vpop.f32.mrb[0].mxu0
        %v5262 = vadd.f32 0.0, %v5261
        %v5263 = vpop.f32.mrb[0].mxu0
        %v5264 = vpop.f32.mrb[0].mxu0
        %v5265 = vadd.f32 0.0, %v5264
        %v5266 = vpop.f32.mrb[0].mxu0
        %5267 = vmatprep.mubr.bf16.mxu0 0
        %5268 = vmatmul.mubr.bf16.gmra.mrb[0].mxu0 %v4751
        %v5269 = vpop.f32.mrb[0].mxu0
        %v5270 = vadd.f32 0.0, %v5269
        %v5271 = vpop.f32.mrb[0].mxu0
        %v5272 = vpop.f32.mrb[0].mxu0
        %v5273 = vadd.f32 0.0, %v5272
        %v5274 = vpop.f32.mrb[0].mxu0
        %5275 = vmatprep.mubr.bf16.mxu0 0
        %5276 = vmatmul.mubr.bf16.gmra.mrb[0].mxu0 %v4754
        %v5277 = vpop.f32.mrb[0].mxu0
        %v5278 = vadd.f32 0.0, %v5277
        %v5279 = vpop.f32.mrb[0].mxu0
        %v5280 = vpop.f32.mrb[0].mxu0
        %v5281 = vadd.f32 0.0, %v5280
        %v5282 = vpop.f32.mrb[0].mxu0
        %5283 = vmatprep.mubr.bf16.mxu0 0
        %5284 = vmatmul.mubr.bf16.gmra.mrb[0].mxu0 %v4757
        %v5285 = vpop.f32.mrb[0].mxu0
        %v5286 = vadd.f32 0.0, %v5285
        %v5287 = vpop.f32.mrb[0].mxu0
        %v5288 = vpop.f32.mrb[0].mxu0
        %v5289 = vadd.f32 0.0, %v5288
        %v5290 = vpop.f32.mrb[0].mxu0
        %5291 = vmatprep.mubr.bf16.mxu0 0
        %5292 = vmatmul.mubr.bf16.gmra.mrb[0].mxu0 %v4760
        %v5293 = vpop.f32.mrb[0].mxu0
        %v5294 = vadd.f32 0.0, %v5293
        %v5295 = vpop.f32.mrb[0].mxu0
        %v5296 = vpop.f32.mrb[0].mxu0
        %v5297 = vadd.f32 0.0, %v5296
        %v5298 = vpop.f32.mrb[0].mxu0
        %5299 = vmatprep.mubr.bf16.mxu0 0
        %5300 = vmatmul.mubr.bf16.gmra.mrb[0].mxu0 %v4763
        %v5301 = vpop.f32.mrb[0].mxu0
        %v5302 = vadd.f32 0.0, %v5301
        %v5303 = vpop.f32.mrb[0].mxu0
        %v5304 = vpop.f32.mrb[0].mxu0
        %v5305 = vadd.f32 0.0, %v5304
        %v5306 = vpop.f32.mrb[0].mxu0
        %5307 = vmatprep.mubr.bf16.mxu0 0
        %5308 = vmatmul.mubr.bf16.gmra.mrb[0].mxu0 %v4766
        %v5309 = vpop.f32.mrb[0].mxu0
        %v5310 = vadd.f32 0.0, %v5309
        %v5311 = vpop.f32.mrb[0].mxu0
        %v5312 = vpop.f32.mrb[0].mxu0
        %v5313 = vadd.f32 0.0, %v5312
        %v5314 = vpop.f32.mrb[0].mxu0
        %5315 = vdwg.mxu0
        %v5316 = vadd.f32 %v4254, %v4806
        %v5317 = vadd.f32 %v4255, %v4809
        %v5318 = vadd.f32 %v4256, %v4814
        %v5319 = vadd.f32 %v4257, %v4817
        %v5320 = vadd.f32 %v4258, %v4822
        %v5321 = vadd.f32 %v4259, %v4825
        %v5322 = vadd.f32 %v4260, %v4830
        %v5323 = vadd.f32 %v4261, %v4833
        %v5324 = vadd.f32 %v4262, %v4838
        %v5325 = vadd.f32 %v4263, %v4841
        %v5326 = vadd.f32 %v4264, %v4846
        %v5327 = vadd.f32 %v4265, %v4849
        %v5328 = vadd.f32 %v4266, %v4854
        %v5329 = vadd.f32 %v4267, %v4857
        %v5330 = vadd.f32 %v4268, %v4862
        %v5331 = vadd.f32 %v4269, %v4865
        %v5332 = vadd.f32 %v4270, %v4870
        %v5333 = vadd.f32 %v4271, %v4873
        %v5334 = vadd.f32 %v4272, %v4878
        %v5335 = vadd.f32 %v4273, %v4881
        %v5336 = vadd.f32 %v4274, %v4886
        %v5337 = vadd.f32 %v4275, %v4889
        %v5338 = vadd.f32 %v4276, %v4894
        %v5339 = vadd.f32 %v4277, %v4897
        %v5340 = vadd.f32 %v4278, %v4902
        %v5341 = vadd.f32 %v4279, %v4905
        %v5342 = vadd.f32 %v4280, %v4910
        %v5343 = vadd.f32 %v4281, %v4913
        %v5344 = vadd.f32 %v4282, %v4918
        %v5345 = vadd.f32 %v4283, %v4921
        %v5346 = vadd.f32 %v4284, %v4926
        %v5347 = vadd.f32 %v4285, %v4929
        %v5348 = vadd.f32 %v4286, %v4934
        %v5349 = vadd.f32 %v4287, %v4937
        %v5350 = vadd.f32 %v4288, %v4942
        %v5351 = vadd.f32 %v4289, %v4945
        %v5352 = vadd.f32 %v4290, %v4950
        %v5353 = vadd.f32 %v4291, %v4953
        %v5354 = vadd.f32 %v4292, %v4958
        %v5355 = vadd.f32 %v4293, %v4961
        %v5356 = vadd.f32 %v4294, %v4966
        %v5357 = vadd.f32 %v4295, %v4969
        %v5358 = vadd.f32 %v4296, %v4974
        %v5359 = vadd.f32 %v4297, %v4977
        %v5360 = vadd.f32 %v4298, %v4982
        %v5361 = vadd.f32 %v4299, %v4985
        %v5362 = vadd.f32 %v4300, %v4990
        %v5363 = vadd.f32 %v4301, %v4993
        %v5364 = vadd.f32 %v4302, %v4998
        %v5365 = vadd.f32 %v4303, %v5001
        %v5366 = vadd.f32 %v4304, %v5006
        %v5367 = vadd.f32 %v4305, %v5009
        %v5368 = vadd.f32 %v4306, %v5014
        %v5369 = vadd.f32 %v4307, %v5017
        %v5370 = vadd.f32 %v4308, %v5022
        %v5371 = vadd.f32 %v4309, %v5025
        %v5372 = vadd.f32 %v4310, %v5030
        %v5373 = vadd.f32 %v4311, %v5033
        %v5374 = vadd.f32 %v4312, %v5038
        %v5375 = vadd.f32 %v4313, %v5041
        %v5376 = vadd.f32 %v4314, %v5046
        %v5377 = vadd.f32 %v4315, %v5049
        %v5378 = vadd.f32 %v4316, %v5054
        %v5379 = vadd.f32 %v4317, %v5057
        %v5380 = vadd.f32 %v4318, %v5062
        %v5381 = vadd.f32 %v4319, %v5065
        %v5382 = vadd.f32 %v4320, %v5070
        %v5383 = vadd.f32 %v4321, %v5073
        %v5384 = vadd.f32 %v4322, %v5078
        %v5385 = vadd.f32 %v4323, %v5081
        %v5386 = vadd.f32 %v4324, %v5086
        %v5387 = vadd.f32 %v4325, %v5089
        %v5388 = vadd.f32 %v4326, %v5094
        %v5389 = vadd.f32 %v4327, %v5097
        %v5390 = vadd.f32 %v4328, %v5102
        %v5391 = vadd.f32 %v4329, %v5105
        %v5392 = vadd.f32 %v4330, %v5110
        %v5393 = vadd.f32 %v4331, %v5113
        %v5394 = vadd.f32 %v4332, %v5118
        %v5395 = vadd.f32 %v4333, %v5121
        %v5396 = vadd.f32 %v4334, %v5126
        %v5397 = vadd.f32 %v4335, %v5129
        %v5398 = vadd.f32 %v4336, %v5134
        %v5399 = vadd.f32 %v4337, %v5137
        %v5400 = vadd.f32 %v4338, %v5142
        %v5401 = vadd.f32 %v4339, %v5145
        %v5402 = vadd.f32 %v4340, %v5150
        %v5403 = vadd.f32 %v4341, %v5153
        %v5404 = vadd.f32 %v4342, %v5158
        %v5405 = vadd.f32 %v4343, %v5161
        %v5406 = vadd.f32 %v4344, %v5166
        %v5407 = vadd.f32 %v4345, %v5169
        %v5408 = vadd.f32 %v4346, %v5174
        %v5409 = vadd.f32 %v4347, %v5177
        %v5410 = vadd.f32 %v4348, %v5182
        %v5411 = vadd.f32 %v4349, %v5185
        %v5412 = vadd.f32 %v4350, %v5190
        %v5413 = vadd.f32 %v4351, %v5193
        %v5414 = vadd.f32 %v4352, %v5198
        %v5415 = vadd.f32 %v4353, %v5201
        %v5416 = vadd.f32 %v4354, %v5206
        %v5417 = vadd.f32 %v4355, %v5209
        %v5418 = vadd.f32 %v4356, %v5214
        %v5419 = vadd.f32 %v4357, %v5217
        %v5420 = vadd.f32 %v4358, %v5222
        %v5421 = vadd.f32 %v4359, %v5225
        %v5422 = vadd.f32 %v4360, %v5230
        %v5423 = vadd.f32 %v4361, %v5233
        %v5424 = vadd.f32 %v4362, %v5238
        %v5425 = vadd.f32 %v4363, %v5241
        %v5426 = vadd.f32 %v4364, %v5246
        %v5427 = vadd.f32 %v4365, %v5249
        %v5428 = vadd.f32 %v4366, %v5254
        %v5429 = vadd.f32 %v4367, %v5257
        %v5430 = vadd.f32 %v4368, %v5262
        %v5431 = vadd.f32 %v4369, %v5265
        %v5432 = vadd.f32 %v4370, %v5270
        %v5433 = vadd.f32 %v4371, %v5273
        %v5434 = vadd.f32 %v4372, %v5278
        %v5435 = vadd.f32 %v4373, %v5281
        %v5436 = vadd.f32 %v4374, %v5286
        %v5437 = vadd.f32 %v4375, %v5289
        %v5438 = vadd.f32 %v4376, %v5294
        %v5439 = vadd.f32 %v4377, %v5297
        %v5440 = vadd.f32 %v4378, %v5302
        %v5441 = vadd.f32 %v4379, %v5305
        %v5442 = vadd.f32 %v4380, %v5310
        %v5443 = vadd.f32 %v4381, %v5313
        %v5444 = vld [vmem:[%s3319 + $0x2] sm:$0xff]
        %v5445 = vld [vmem:[%s3319 + $0xa] sm:$0xff]
        %v5446 = vld [vmem:[%s3319 + $0x12] sm:$0xff]
        %v5447 = vld [vmem:[%s3319 + $0x1a] sm:$0xff]
        %v5448 = vld [vmem:[%s3319 + $0x2a] sm:$0xff]
        %v5449 = vld [vmem:[%s3319 + $0x32] sm:$0xff]
        %v5450 = vld [vmem:[%s3319 + $0x3a] sm:$0xff]
        %v5451 = vld [vmem:[%s3319 + $0x42] sm:$0xff]
        %v5452 = vld [vmem:[%s3319 + $0x52] sm:$0xff]
        %v5453 = vld [vmem:[%s3319 + $0x5a] sm:$0xff]
        %v5454 = vld [vmem:[%s3319 + $0x62] sm:$0xff]
        %v5455 = vld [vmem:[%s3319 + $0x6a] sm:$0xff]
        %v5456 = vld [vmem:[%s3319 + $0x7a] sm:$0xff]
        %v5457 = vld [vmem:[%s3319 + $0x82] sm:$0xff]
        %v5458 = vld [vmem:[%s3319 + $0x8a] sm:$0xff]
        %v5459 = vld [vmem:[%s3319 + $0x92] sm:$0xff]
        %v5460 = vld [vmem:[%s3319 + $0xa2] sm:$0xff]
        %v5461 = vld [vmem:[%s3319 + $0xaa] sm:$0xff]
        %v5462 = vld [vmem:[%s3319 + $0xb2] sm:$0xff]
        %v5463 = vld [vmem:[%s3319 + $0xba] sm:$0xff]
        %v5464 = vld [vmem:[%s3319 + $0xca] sm:$0xff]
        %v5465 = vld [vmem:[%s3319 + $0xd2] sm:$0xff]
        %v5466 = vld [vmem:[%s3319 + $0xda] sm:$0xff]
        %v5467 = vld [vmem:[%s3319 + $0xe2] sm:$0xff]
        %v5468 = vld [vmem:[%s3319 + $0xf2] sm:$0xff]
        %v5469 = vld [vmem:[%s3319 + $0xfa] sm:$0xff]
        %v5470 = vld [vmem:[%s3319 + $0x102] sm:$0xff]
        %v5471 = vld [vmem:[%s3319 + $0x10a] sm:$0xff]
        %v5472 = vld [vmem:[%s3319 + $0x11a] sm:$0xff]
        %v5473 = vld [vmem:[%s3319 + $0x122] sm:$0xff]
        %v5474 = vld [vmem:[%s3319 + $0x12a] sm:$0xff]
        %v5475 = vld [vmem:[%s3319 + $0x132] sm:$0xff]
        %v5476 = vld [vmem:[%s3319 + $0x142] sm:$0xff]
        %v5477 = vld [vmem:[%s3319 + $0x14a] sm:$0xff]
        %v5478 = vld [vmem:[%s3319 + $0x152] sm:$0xff]
        %v5479 = vld [vmem:[%s3319 + $0x15a] sm:$0xff]
        %v5480 = vld [vmem:[%s3319 + $0x16a] sm:$0xff]
        %v5481 = vld [vmem:[%s3319 + $0x172] sm:$0xff]
        %v5482 = vld [vmem:[%s3319 + $0x17a] sm:$0xff]
        %v5483 = vld [vmem:[%s3319 + $0x182] sm:$0xff]
        %v5484 = vld [vmem:[%s3319 + $0x192] sm:$0xff]
        %v5485 = vld [vmem:[%s3319 + $0x19a] sm:$0xff]
        %v5486 = vld [vmem:[%s3319 + $0x1a2] sm:$0xff]
        %v5487 = vld [vmem:[%s3319 + $0x1aa] sm:$0xff]
        %v5488 = vld [vmem:[%s3319 + $0x1ba] sm:$0xff]
        %v5489 = vld [vmem:[%s3319 + $0x1c2] sm:$0xff]
        %v5490 = vld [vmem:[%s3319 + $0x1ca] sm:$0xff]
        %v5491 = vld [vmem:[%s3319 + $0x1d2] sm:$0xff]
        %v5492 = vld [vmem:[%s3319 + $0x1e2] sm:$0xff]
        %v5493 = vld [vmem:[%s3319 + $0x1ea] sm:$0xff]
        %v5494 = vld [vmem:[%s3319 + $0x1f2] sm:$0xff]
        %v5495 = vld [vmem:[%s3319 + $0x1fa] sm:$0xff]
        %v5496 = vld [vmem:[%s3319 + $0x20a] sm:$0xff]
        %v5497 = vld [vmem:[%s3319 + $0x212] sm:$0xff]
        %v5498 = vld [vmem:[%s3319 + $0x21a] sm:$0xff]
        %v5499 = vld [vmem:[%s3319 + $0x222] sm:$0xff]
        %v5500 = vld [vmem:[%s3319 + $0x232] sm:$0xff]
        %v5501 = vld [vmem:[%s3319 + $0x23a] sm:$0xff]
        %v5502 = vld [vmem:[%s3319 + $0x242] sm:$0xff]
        %v5503 = vld [vmem:[%s3319 + $0x24a] sm:$0xff]
        %v5504 = vld [vmem:[%s3319 + $0x25a] sm:$0xff]
        %v5505 = vld [vmem:[%s3319 + $0x262] sm:$0xff]
        %v5506 = vld [vmem:[%s3319 + $0x26a] sm:$0xff]
        %v5507 = vld [vmem:[%s3319 + $0x272] sm:$0xff]
        %v5508 = vld [vmem:[%s3319 + $0x282] sm:$0xff]
        %v5509 = vld [vmem:[%s3319 + $0x28a] sm:$0xff]
        %v5510 = vld [vmem:[%s3319 + $0x292] sm:$0xff]
        %v5511 = vld [vmem:[%s3319 + $0x29a] sm:$0xff]
        %v5512 = vld [vmem:[%s3319 + $0x2aa] sm:$0xff]
        %v5513 = vld [vmem:[%s3319 + $0x2b2] sm:$0xff]
        %v5514 = vld [vmem:[%s3319 + $0x2ba] sm:$0xff]
        %v5515 = vld [vmem:[%s3319 + $0x2c2] sm:$0xff]
        %v5516 = vld [vmem:[%s3319 + $0x2d2] sm:$0xff]
        %v5517 = vld [vmem:[%s3319 + $0x2da] sm:$0xff]
        %v5518 = vld [vmem:[%s3319 + $0x2e2] sm:$0xff]
        %v5519 = vld [vmem:[%s3319 + $0x2ea] sm:$0xff]
        %v5520 = vld [vmem:[%s3319 + $0x2fa] sm:$0xff]
        %v5521 = vld [vmem:[%s3319 + $0x302] sm:$0xff]
        %v5522 = vld [vmem:[%s3319 + $0x30a] sm:$0xff]
        %v5523 = vld [vmem:[%s3319 + $0x312] sm:$0xff]
        %v5524 = vld [vmem:[%s3319 + $0x322] sm:$0xff]
        %v5525 = vld [vmem:[%s3319 + $0x32a] sm:$0xff]
        %v5526 = vld [vmem:[%s3319 + $0x332] sm:$0xff]
        %v5527 = vld [vmem:[%s3319 + $0x33a] sm:$0xff]
        %v5528 = vld [vmem:[%s3319 + $0x34a] sm:$0xff]
        %v5529 = vld [vmem:[%s3319 + $0x352] sm:$0xff]
        %v5530 = vld [vmem:[%s3319 + $0x35a] sm:$0xff]
        %v5531 = vld [vmem:[%s3319 + $0x362] sm:$0xff]
        %v5532 = vld [vmem:[%s3319 + $0x372] sm:$0xff]
        %v5533 = vld [vmem:[%s3319 + $0x37a] sm:$0xff]
        %v5534 = vld [vmem:[%s3319 + $0x382] sm:$0xff]
        %v5535 = vld [vmem:[%s3319 + $0x38a] sm:$0xff]
        %v5536 = vld [vmem:[%s3319 + $0x39a] sm:$0xff]
        %v5537 = vld [vmem:[%s3319 + $0x3a2] sm:$0xff]
        %v5538 = vld [vmem:[%s3319 + $0x3aa] sm:$0xff]
        %v5539 = vld [vmem:[%s3319 + $0x3b2] sm:$0xff]
        %v5540 = vld [vmem:[%s3319 + $0x3c2] sm:$0xff]
        %v5541 = vld [vmem:[%s3319 + $0x3ca] sm:$0xff]
        %v5542 = vld [vmem:[%s3319 + $0x3d2] sm:$0xff]
        %v5543 = vld [vmem:[%s3319 + $0x3da] sm:$0xff]
        %v5544 = vld [vmem:[%s3319 + $0x3ea] sm:$0xff]
        %v5545 = vld [vmem:[%s3319 + $0x3f2] sm:$0xff]
        %v5546 = vld [vmem:[%s3319 + $0x3fa] sm:$0xff]
        %v5547 = vld [vmem:[%s3319 + $0x402] sm:$0xff]
        %v5548 = vld [vmem:[%s3319 + $0x412] sm:$0xff]
        %v5549 = vld [vmem:[%s3319 + $0x41a] sm:$0xff]
        %v5550 = vld [vmem:[%s3319 + $0x422] sm:$0xff]
        %v5551 = vld [vmem:[%s3319 + $0x42a] sm:$0xff]
        %v5552 = vld [vmem:[%s3319 + $0x43a] sm:$0xff]
        %v5553 = vld [vmem:[%s3319 + $0x442] sm:$0xff]
        %v5554 = vld [vmem:[%s3319 + $0x44a] sm:$0xff]
        %v5555 = vld [vmem:[%s3319 + $0x452] sm:$0xff]
        %v5556 = vld [vmem:[%s3319 + $0x462] sm:$0xff]
        %v5557 = vld [vmem:[%s3319 + $0x46a] sm:$0xff]
        %v5558 = vld [vmem:[%s3319 + $0x472] sm:$0xff]
        %v5559 = vld [vmem:[%s3319 + $0x47a] sm:$0xff]
        %v5560 = vld [vmem:[%s3319 + $0x48a] sm:$0xff]
        %v5561 = vld [vmem:[%s3319 + $0x492] sm:$0xff]
        %v5562 = vld [vmem:[%s3319 + $0x49a] sm:$0xff]
        %v5563 = vld [vmem:[%s3319 + $0x4a2] sm:$0xff]
        %v5564 = vld [vmem:[%s3319 + $0x4b2] sm:$0xff]
        %v5565 = vld [vmem:[%s3319 + $0x4ba] sm:$0xff]
        %v5566 = vld [vmem:[%s3319 + $0x4c2] sm:$0xff]
        %v5567 = vld [vmem:[%s3319 + $0x4ca] sm:$0xff]
        %v5568 = vld [vmem:[%s3319 + $0x4da] sm:$0xff]
        %v5569 = vld [vmem:[%s3319 + $0x4e2] sm:$0xff]
        %v5570 = vld [vmem:[%s3319 + $0x4ea] sm:$0xff]
        %v5571 = vld [vmem:[%s3319 + $0x4f2] sm:$0xff]
        %v5572 = vpack.c.bf16 %v5445, %v5444
        %v5573 = vpack.c.bf16 %v5447, %v5446
        %v5574 = vpack.c.bf16 %v5449, %v5448
        %v5575 = vpack.c.bf16 %v5451, %v5450
        %v5576 = vpack.c.bf16 %v5453, %v5452
        %v5577 = vpack.c.bf16 %v5455, %v5454
        %v5578 = vpack.c.bf16 %v5457, %v5456
        %v5579 = vpack.c.bf16 %v5459, %v5458
        %v5580 = vpack.c.bf16 %v5461, %v5460
        %v5581 = vpack.c.bf16 %v5463, %v5462
        %v5582 = vpack.c.bf16 %v5465, %v5464
        %v5583 = vpack.c.bf16 %v5467, %v5466
        %v5584 = vpack.c.bf16 %v5469, %v5468
        %v5585 = vpack.c.bf16 %v5471, %v5470
        %v5586 = vpack.c.bf16 %v5473, %v5472
        %v5587 = vpack.c.bf16 %v5475, %v5474
        %v5588 = vpack.c.bf16 %v5477, %v5476
        %v5589 = vpack.c.bf16 %v5479, %v5478
        %v5590 = vpack.c.bf16 %v5481, %v5480
        %v5591 = vpack.c.bf16 %v5483, %v5482
        %v5592 = vpack.c.bf16 %v5485, %v5484
        %v5593 = vpack.c.bf16 %v5487, %v5486
        %v5594 = vpack.c.bf16 %v5489, %v5488
        %v5595 = vpack.c.bf16 %v5491, %v5490
        %v5596 = vpack.c.bf16 %v5493, %v5492
        %v5597 = vpack.c.bf16 %v5495, %v5494
        %v5598 = vpack.c.bf16 %v5497, %v5496
        %v5599 = vpack.c.bf16 %v5499, %v5498
        %v5600 = vpack.c.bf16 %v5501, %v5500
        %v5601 = vpack.c.bf16 %v5503, %v5502
        %v5602 = vpack.c.bf16 %v5505, %v5504
        %v5603 = vpack.c.bf16 %v5507, %v5506
        %v5604 = vpack.c.bf16 %v5509, %v5508
        %v5605 = vpack.c.bf16 %v5511, %v5510
        %v5606 = vpack.c.bf16 %v5513, %v5512
        %v5607 = vpack.c.bf16 %v5515, %v5514
        %v5608 = vpack.c.bf16 %v5517, %v5516
        %v5609 = vpack.c.bf16 %v5519, %v5518
        %v5610 = vpack.c.bf16 %v5521, %v5520
        %v5611 = vpack.c.bf16 %v5523, %v5522
        %v5612 = vpack.c.bf16 %v5525, %v5524
        %v5613 = vpack.c.bf16 %v5527, %v5526
        %v5614 = vpack.c.bf16 %v5529, %v5528
        %v5615 = vpack.c.bf16 %v5531, %v5530
        %v5616 = vpack.c.bf16 %v5533, %v5532
        %v5617 = vpack.c.bf16 %v5535, %v5534
        %v5618 = vpack.c.bf16 %v5537, %v5536
        %v5619 = vpack.c.bf16 %v5539, %v5538
        %v5620 = vpack.c.bf16 %v5541, %v5540
        %v5621 = vpack.c.bf16 %v5543, %v5542
        %v5622 = vpack.c.bf16 %v5545, %v5544
        %v5623 = vpack.c.bf16 %v5547, %v5546
        %v5624 = vpack.c.bf16 %v5549, %v5548
        %v5625 = vpack.c.bf16 %v5551, %v5550
        %v5626 = vpack.c.bf16 %v5553, %v5552
        %v5627 = vpack.c.bf16 %v5555, %v5554
        %v5628 = vpack.c.bf16 %v5557, %v5556
        %v5629 = vpack.c.bf16 %v5559, %v5558
        %v5630 = vpack.c.bf16 %v5561, %v5560
        %v5631 = vpack.c.bf16 %v5563, %v5562
        %v5632 = vpack.c.bf16 %v5565, %v5564
        %v5633 = vpack.c.bf16 %v5567, %v5566
        %v5634 = vpack.c.bf16 %v5569, %v5568
        %v5635 = vpack.c.bf16 %v5571, %v5570
        %s5636 = scalar_lea.vmem %s1, 10
        %v5637 = vld [vmem:[%s5636] sm:$0x3]
        %v5639 = vsel %vm772, %v5572, 0
        %v5642 = vsel %vm772, %v5573, 0
        %v5645 = vsel %vm772, %v5574, 0
        %v5648 = vsel %vm772, %v5575, 0
        %v5651 = vsel %vm772, %v5576, 0
        %v5654 = vsel %vm772, %v5577, 0
        %v5657 = vsel %vm772, %v5578, 0
        %v5660 = vsel %vm772, %v5579, 0
        %v5663 = vsel %vm772, %v5580, 0
        %v5666 = vsel %vm772, %v5581, 0
        %v5669 = vsel %vm772, %v5582, 0
        %v5672 = vsel %vm772, %v5583, 0
        %v5675 = vsel %vm772, %v5584, 0
        %v5678 = vsel %vm772, %v5585, 0
        %v5681 = vsel %vm772, %v5586, 0
        %v5684 = vsel %vm772, %v5587, 0
        %v5687 = vsel %vm772, %v5588, 0
        %v5690 = vsel %vm772, %v5589, 0
        %v5693 = vsel %vm772, %v5590, 0
        %v5696 = vsel %vm772, %v5591, 0
        %v5699 = vsel %vm772, %v5592, 0
        %v5702 = vsel %vm772, %v5593, 0
        %v5705 = vsel %vm772, %v5594, 0
        %v5708 = vsel %vm772, %v5595, 0
        %v5711 = vsel %vm772, %v5596, 0
        %v5714 = vsel %vm772, %v5597, 0
        %v5717 = vsel %vm772, %v5598, 0
        %v5720 = vsel %vm772, %v5599, 0
        %v5723 = vsel %vm772, %v5600, 0
        %v5726 = vsel %vm772, %v5601, 0
        %v5729 = vsel %vm772, %v5602, 0
        %v5732 = vsel %vm772, %v5603, 0
        %v5735 = vsel %vm772, %v5604, 0
        %v5738 = vsel %vm772, %v5605, 0
        %v5741 = vsel %vm772, %v5606, 0
        %v5744 = vsel %vm772, %v5607, 0
        %v5747 = vsel %vm772, %v5608, 0
        %v5750 = vsel %vm772, %v5609, 0
        %v5753 = vsel %vm772, %v5610, 0
        %v5756 = vsel %vm772, %v5611, 0
        %v5759 = vsel %vm772, %v5612, 0
        %v5762 = vsel %vm772, %v5613, 0
        %v5765 = vsel %vm772, %v5614, 0
        %v5768 = vsel %vm772, %v5615, 0
        %v5771 = vsel %vm772, %v5616, 0
        %v5774 = vsel %vm772, %v5617, 0
        %v5777 = vsel %vm772, %v5618, 0
        %v5780 = vsel %vm772, %v5619, 0
        %v5783 = vsel %vm772, %v5620, 0
        %v5786 = vsel %vm772, %v5621, 0
        %v5789 = vsel %vm772, %v5622, 0
        %v5792 = vsel %vm772, %v5623, 0
        %v5795 = vsel %vm772, %v5624, 0
        %v5798 = vsel %vm772, %v5625, 0
        %v5801 = vsel %vm772, %v5626, 0
        %v5804 = vsel %vm772, %v5627, 0
        %v5807 = vsel %vm772, %v5628, 0
        %v5810 = vsel %vm772, %v5629, 0
        %v5813 = vsel %vm772, %v5630, 0
        %v5816 = vsel %vm772, %v5631, 0
        %v5819 = vsel %vm772, %v5632, 0
        %v5822 = vsel %vm772, %v5633, 0
        %v5825 = vsel %vm772, %v5634, 0
        %v5828 = vsel %vm772, %v5635, 0
        %v5831 = vand.u32 %v5637, %v968
        %5833 = vmatprep.subr.bf16.mxu0 0
        %5834 = vmatpush1.bf16.msra.mxu0 %v5831
        %5835 = vmatprep.subr.bf16.mxu0 0
        %5836 = vmatpush1.bf16.msra.mxu0 0
        %5837 = vmatprep.subr.bf16.mxu0 0
        %5838 = vmatpush1.bf16.msra.mxu0 0
        %5839 = vmatprep.subr.bf16.mxu0 0
        %5840 = vmatpush1.bf16.msra.mxu0 0
        %5841 = vmatprep.subr.bf16.mxu0 0
        %5842 = vmatpush1.bf16.msra.mxu0 0
        %5843 = vmatprep.subr.bf16.mxu0 0
        %5844 = vmatpush1.bf16.msra.mxu0 0
        %5845 = vmatprep.subr.bf16.mxu0 0
        %5846 = vmatpush1.bf16.msra.mxu0 0
        %5847 = vmatprep.subr.bf16.mxu0 0
        %5848 = vmatpush1.bf16.msra.mxu0 0
        %5849 = vmatprep.subr.bf16.mxu0 0
        %5850 = vmatpush1.bf16.msra.mxu0 0
        %5851 = vmatprep.subr.bf16.mxu0 0
        %5852 = vmatpush1.bf16.msra.mxu0 0
        %5853 = vmatprep.subr.bf16.mxu0 0
        %5854 = vmatpush1.bf16.msra.mxu0 0
        %5855 = vmatprep.subr.bf16.mxu0 0
        %5856 = vmatpush1.bf16.msra.mxu0 0
        %5857 = vmatprep.subr.bf16.mxu0 0
        %5858 = vmatpush1.bf16.msra.mxu0 0
        %5859 = vmatprep.subr.bf16.mxu0 0
        %5860 = vmatpush1.bf16.msra.mxu0 0
        %5861 = vmatprep.subr.bf16.mxu0 0
        %5862 = vmatpush1.bf16.msra.mxu0 0
        %5863 = vmatprep.subr.bf16.mxu0 0
        %5864 = vmatpush1.bf16.msra.mxu0 0
        %5865 = vmatprep.mubr.bf16.mxu0 0
        %5866 = vmatmul.mubr.bf16.gmra.mrb[0].mxu0 %v5639
        %v5867 = vpop.f32.mrb[0].mxu0
        %v5868 = vadd.f32 0.0, %v5867
        %v5869 = vpop.f32.mrb[0].mxu0
        %v5870 = vpop.f32.mrb[0].mxu0
        %v5871 = vadd.f32 0.0, %v5870
        %v5872 = vpop.f32.mrb[0].mxu0
        %5873 = vmatprep.mubr.bf16.mxu0 0
        %5874 = vmatmul.mubr.bf16.gmra.mrb[0].mxu0 %v5642
        %v5875 = vpop.f32.mrb[0].mxu0
        %v5876 = vadd.f32 0.0, %v5875
        %v5877 = vpop.f32.mrb[0].mxu0
        %v5878 = vpop.f32.mrb[0].mxu0
        %v5879 = vadd.f32 0.0, %v5878
        %v5880 = vpop.f32.mrb[0].mxu0
        %5881 = vmatprep.mubr.bf16.mxu0 0
        %5882 = vmatmul.mubr.bf16.gmra.mrb[0].mxu0 %v5645
        %v5883 = vpop.f32.mrb[0].mxu0
        %v5884 = vadd.f32 0.0, %v5883
        %v5885 = vpop.f32.mrb[0].mxu0
        %v5886 = vpop.f32.mrb[0].mxu0
        %v5887 = vadd.f32 0.0, %v5886
        %v5888 = vpop.f32.mrb[0].mxu0
        %5889 = vmatprep.mubr.bf16.mxu0 0
        %5890 = vmatmul.mubr.bf16.gmra.mrb[0].mxu0 %v5648
        %v5891 = vpop.f32.mrb[0].mxu0
        %v5892 = vadd.f32 0.0, %v5891
        %v5893 = vpop.f32.mrb[0].mxu0
        %v5894 = vpop.f32.mrb[0].mxu0
        %v5895 = vadd.f32 0.0, %v5894
        %v5896 = vpop.f32.mrb[0].mxu0
        %5897 = vmatprep.mubr.bf16.mxu0 0
        %5898 = vmatmul.mubr.bf16.gmra.mrb[0].mxu0 %v5651
        %v5899 = vpop.f32.mrb[0].mxu0
        %v5900 = vadd.f32 0.0, %v5899
        %v5901 = vpop.f32.mrb[0].mxu0
        %v5902 = vpop.f32.mrb[0].mxu0
        %v5903 = vadd.f32 0.0, %v5902
        %v5904 = vpop.f32.mrb[0].mxu0
        %5905 = vmatprep.mubr.bf16.mxu0 0
        %5906 = vmatmul.mubr.bf16.gmra.mrb[0].mxu0 %v5654
        %v5907 = vpop.f32.mrb[0].mxu0
        %v5908 = vadd.f32 0.0, %v5907
        %v5909 = vpop.f32.mrb[0].mxu0
        %v5910 = vpop.f32.mrb[0].mxu0
        %v5911 = vadd.f32 0.0, %v5910
        %v5912 = vpop.f32.mrb[0].mxu0
        %5913 = vmatprep.mubr.bf16.mxu0 0
        %5914 = vmatmul.mubr.bf16.gmra.mrb[0].mxu0 %v5657
        %v5915 = vpop.f32.mrb[0].mxu0
        %v5916 = vadd.f32 0.0, %v5915
        %v5917 = vpop.f32.mrb[0].mxu0
        %v5918 = vpop.f32.mrb[0].mxu0
        %v5919 = vadd.f32 0.0, %v5918
        %v5920 = vpop.f32.mrb[0].mxu0
        %5921 = vmatprep.mubr.bf16.mxu0 0
        %5922 = vmatmul.mubr.bf16.gmra.mrb[0].mxu0 %v5660
        %v5923 = vpop.f32.mrb[0].mxu0
        %v5924 = vadd.f32 0.0, %v5923
        %v5925 = vpop.f32.mrb[0].mxu0
        %v5926 = vpop.f32.mrb[0].mxu0
        %v5927 = vadd.f32 0.0, %v5926
        %v5928 = vpop.f32.mrb[0].mxu0
        %5929 = vmatprep.mubr.bf16.mxu0 0
        %5930 = vmatmul.mubr.bf16.gmra.mrb[0].mxu0 %v5663
        %v5931 = vpop.f32.mrb[0].mxu0
        %v5932 = vadd.f32 0.0, %v5931
        %v5933 = vpop.f32.mrb[0].mxu0
        %v5934 = vpop.f32.mrb[0].mxu0
        %v5935 = vadd.f32 0.0, %v5934
        %v5936 = vpop.f32.mrb[0].mxu0
        %5937 = vmatprep.mubr.bf16.mxu0 0
        %5938 = vmatmul.mubr.bf16.gmra.mrb[0].mxu0 %v5666
        %v5939 = vpop.f32.mrb[0].mxu0
        %v5940 = vadd.f32 0.0, %v5939
        %v5941 = vpop.f32.mrb[0].mxu0
        %v5942 = vpop.f32.mrb[0].mxu0
        %v5943 = vadd.f32 0.0, %v5942
        %v5944 = vpop.f32.mrb[0].mxu0
        %5945 = vmatprep.mubr.bf16.mxu0 0
        %5946 = vmatmul.mubr.bf16.gmra.mrb[0].mxu0 %v5669
        %v5947 = vpop.f32.mrb[0].mxu0
        %v5948 = vadd.f32 0.0, %v5947
        %v5949 = vpop.f32.mrb[0].mxu0
        %v5950 = vpop.f32.mrb[0].mxu0
        %v5951 = vadd.f32 0.0, %v5950
        %v5952 = vpop.f32.mrb[0].mxu0
        %5953 = vmatprep.mubr.bf16.mxu0 0
        %5954 = vmatmul.mubr.bf16.gmra.mrb[0].mxu0 %v5672
        %v5955 = vpop.f32.mrb[0].mxu0
        %v5956 = vadd.f32 0.0, %v5955
        %v5957 = vpop.f32.mrb[0].mxu0
        %v5958 = vpop.f32.mrb[0].mxu0
        %v5959 = vadd.f32 0.0, %v5958
        %v5960 = vpop.f32.mrb[0].mxu0
        %5961 = vmatprep.mubr.bf16.mxu0 0
        %5962 = vmatmul.mubr.bf16.gmra.mrb[0].mxu0 %v5675
        %v5963 = vpop.f32.mrb[0].mxu0
        %v5964 = vadd.f32 0.0, %v5963
        %v5965 = vpop.f32.mrb[0].mxu0
        %v5966 = vpop.f32.mrb[0].mxu0
        %v5967 = vadd.f32 0.0, %v5966
        %v5968 = vpop.f32.mrb[0].mxu0
        %5969 = vmatprep.mubr.bf16.mxu0 0
        %5970 = vmatmul.mubr.bf16.gmra.mrb[0].mxu0 %v5678
        %v5971 = vpop.f32.mrb[0].mxu0
        %v5972 = vadd.f32 0.0, %v5971
        %v5973 = vpop.f32.mrb[0].mxu0
        %v5974 = vpop.f32.mrb[0].mxu0
        %v5975 = vadd.f32 0.0, %v5974
        %v5976 = vpop.f32.mrb[0].mxu0
        %5977 = vmatprep.mubr.bf16.mxu0 0
        %5978 = vmatmul.mubr.bf16.gmra.mrb[0].mxu0 %v5681
        %v5979 = vpop.f32.mrb[0].mxu0
        %v5980 = vadd.f32 0.0, %v5979
        %v5981 = vpop.f32.mrb[0].mxu0
        %v5982 = vpop.f32.mrb[0].mxu0
        %v5983 = vadd.f32 0.0, %v5982
        %v5984 = vpop.f32.mrb[0].mxu0
        %5985 = vmatprep.mubr.bf16.mxu0 0
        %5986 = vmatmul.mubr.bf16.gmra.mrb[0].mxu0 %v5684
        %v5987 = vpop.f32.mrb[0].mxu0
        %v5988 = vadd.f32 0.0, %v5987
        %v5989 = vpop.f32.mrb[0].mxu0
        %v5990 = vpop.f32.mrb[0].mxu0
        %v5991 = vadd.f32 0.0, %v5990
        %v5992 = vpop.f32.mrb[0].mxu0
        %5993 = vmatprep.mubr.bf16.mxu0 0
        %5994 = vmatmul.mubr.bf16.gmra.mrb[0].mxu0 %v5687
        %v5995 = vpop.f32.mrb[0].mxu0
        %v5996 = vadd.f32 0.0, %v5995
        %v5997 = vpop.f32.mrb[0].mxu0
        %v5998 = vpop.f32.mrb[0].mxu0
        %v5999 = vadd.f32 0.0, %v5998
        %v6000 = vpop.f32.mrb[0].mxu0
        %6001 = vmatprep.mubr.bf16.mxu0 0
        %6002 = vmatmul.mubr.bf16.gmra.mrb[0].mxu0 %v5690
        %v6003 = vpop.f32.mrb[0].mxu0
        %v6004 = vadd.f32 0.0, %v6003
        %v6005 = vpop.f32.mrb[0].mxu0
        %v6006 = vpop.f32.mrb[0].mxu0
        %v6007 = vadd.f32 0.0, %v6006
        %v6008 = vpop.f32.mrb[0].mxu0
        %6009 = vmatprep.mubr.bf16.mxu0 0
        %6010 = vmatmul.mubr.bf16.gmra.mrb[0].mxu0 %v5693
        %v6011 = vpop.f32.mrb[0].mxu0
        %v6012 = vadd.f32 0.0, %v6011
        %v6013 = vpop.f32.mrb[0].mxu0
        %v6014 = vpop.f32.mrb[0].mxu0
        %v6015 = vadd.f32 0.0, %v6014
        %v6016 = vpop.f32.mrb[0].mxu0
        %6017 = vmatprep.mubr.bf16.mxu0 0
        %6018 = vmatmul.mubr.bf16.gmra.mrb[0].mxu0 %v5696
        %v6019 = vpop.f32.mrb[0].mxu0
        %v6020 = vadd.f32 0.0, %v6019
        %v6021 = vpop.f32.mrb[0].mxu0
        %v6022 = vpop.f32.mrb[0].mxu0
        %v6023 = vadd.f32 0.0, %v6022
        %v6024 = vpop.f32.mrb[0].mxu0
        %6025 = vmatprep.mubr.bf16.mxu0 0
        %6026 = vmatmul.mubr.bf16.gmra.mrb[0].mxu0 %v5699
        %v6027 = vpop.f32.mrb[0].mxu0
        %v6028 = vadd.f32 0.0, %v6027
        %v6029 = vpop.f32.mrb[0].mxu0
        %v6030 = vpop.f32.mrb[0].mxu0
        %v6031 = vadd.f32 0.0, %v6030
        %v6032 = vpop.f32.mrb[0].mxu0
        %6033 = vmatprep.mubr.bf16.mxu0 0
        %6034 = vmatmul.mubr.bf16.gmra.mrb[0].mxu0 %v5702
        %v6035 = vpop.f32.mrb[0].mxu0
        %v6036 = vadd.f32 0.0, %v6035
        %v6037 = vpop.f32.mrb[0].mxu0
        %v6038 = vpop.f32.mrb[0].mxu0
        %v6039 = vadd.f32 0.0, %v6038
        %v6040 = vpop.f32.mrb[0].mxu0
        %6041 = vmatprep.mubr.bf16.mxu0 0
        %6042 = vmatmul.mubr.bf16.gmra.mrb[0].mxu0 %v5705
        %v6043 = vpop.f32.mrb[0].mxu0
        %v6044 = vadd.f32 0.0, %v6043
        %v6045 = vpop.f32.mrb[0].mxu0
        %v6046 = vpop.f32.mrb[0].mxu0
        %v6047 = vadd.f32 0.0, %v6046
        %v6048 = vpop.f32.mrb[0].mxu0
        %6049 = vmatprep.mubr.bf16.mxu0 0
        %6050 = vmatmul.mubr.bf16.gmra.mrb[0].mxu0 %v5708
        %v6051 = vpop.f32.mrb[0].mxu0
        %v6052 = vadd.f32 0.0, %v6051
        %v6053 = vpop.f32.mrb[0].mxu0
        %v6054 = vpop.f32.mrb[0].mxu0
        %v6055 = vadd.f32 0.0, %v6054
        %v6056 = vpop.f32.mrb[0].mxu0
        %6057 = vmatprep.mubr.bf16.mxu0 0
        %6058 = vmatmul.mubr.bf16.gmra.mrb[0].mxu0 %v5711
        %v6059 = vpop.f32.mrb[0].mxu0
        %v6060 = vadd.f32 0.0, %v6059
        %v6061 = vpop.f32.mrb[0].mxu0
        %v6062 = vpop.f32.mrb[0].mxu0
        %v6063 = vadd.f32 0.0, %v6062
        %v6064 = vpop.f32.mrb[0].mxu0
        %6065 = vmatprep.mubr.bf16.mxu0 0
        %6066 = vmatmul.mubr.bf16.gmra.mrb[0].mxu0 %v5714
        %v6067 = vpop.f32.mrb[0].mxu0
        %v6068 = vadd.f32 0.0, %v6067
        %v6069 = vpop.f32.mrb[0].mxu0
        %v6070 = vpop.f32.mrb[0].mxu0
        %v6071 = vadd.f32 0.0, %v6070
        %v6072 = vpop.f32.mrb[0].mxu0
        %6073 = vmatprep.mubr.bf16.mxu0 0
        %6074 = vmatmul.mubr.bf16.gmra.mrb[0].mxu0 %v5717
        %v6075 = vpop.f32.mrb[0].mxu0
        %v6076 = vadd.f32 0.0, %v6075
        %v6077 = vpop.f32.mrb[0].mxu0
        %v6078 = vpop.f32.mrb[0].mxu0
        %v6079 = vadd.f32 0.0, %v6078
        %v6080 = vpop.f32.mrb[0].mxu0
        %6081 = vmatprep.mubr.bf16.mxu0 0
        %6082 = vmatmul.mubr.bf16.gmra.mrb[0].mxu0 %v5720
        %v6083 = vpop.f32.mrb[0].mxu0
        %v6084 = vadd.f32 0.0, %v6083
        %v6085 = vpop.f32.mrb[0].mxu0
        %v6086 = vpop.f32.mrb[0].mxu0
        %v6087 = vadd.f32 0.0, %v6086
        %v6088 = vpop.f32.mrb[0].mxu0
        %6089 = vmatprep.mubr.bf16.mxu0 0
        %6090 = vmatmul.mubr.bf16.gmra.mrb[0].mxu0 %v5723
        %v6091 = vpop.f32.mrb[0].mxu0
        %v6092 = vadd.f32 0.0, %v6091
        %v6093 = vpop.f32.mrb[0].mxu0
        %v6094 = vpop.f32.mrb[0].mxu0
        %v6095 = vadd.f32 0.0, %v6094
        %v6096 = vpop.f32.mrb[0].mxu0
        %6097 = vmatprep.mubr.bf16.mxu0 0
        %6098 = vmatmul.mubr.bf16.gmra.mrb[0].mxu0 %v5726
        %v6099 = vpop.f32.mrb[0].mxu0
        %v6100 = vadd.f32 0.0, %v6099
        %v6101 = vpop.f32.mrb[0].mxu0
        %v6102 = vpop.f32.mrb[0].mxu0
        %v6103 = vadd.f32 0.0, %v6102
        %v6104 = vpop.f32.mrb[0].mxu0
        %6105 = vmatprep.mubr.bf16.mxu0 0
        %6106 = vmatmul.mubr.bf16.gmra.mrb[0].mxu0 %v5729
        %v6107 = vpop.f32.mrb[0].mxu0
        %v6108 = vadd.f32 0.0, %v6107
        %v6109 = vpop.f32.mrb[0].mxu0
        %v6110 = vpop.f32.mrb[0].mxu0
        %v6111 = vadd.f32 0.0, %v6110
        %v6112 = vpop.f32.mrb[0].mxu0
        %6113 = vmatprep.mubr.bf16.mxu0 0
        %6114 = vmatmul.mubr.bf16.gmra.mrb[0].mxu0 %v5732
        %v6115 = vpop.f32.mrb[0].mxu0
        %v6116 = vadd.f32 0.0, %v6115
        %v6117 = vpop.f32.mrb[0].mxu0
        %v6118 = vpop.f32.mrb[0].mxu0
        %v6119 = vadd.f32 0.0, %v6118
        %v6120 = vpop.f32.mrb[0].mxu0
        %6121 = vmatprep.mubr.bf16.mxu0 0
        %6122 = vmatmul.mubr.bf16.gmra.mrb[0].mxu0 %v5735
        %v6123 = vpop.f32.mrb[0].mxu0
        %v6124 = vadd.f32 0.0, %v6123
        %v6125 = vpop.f32.mrb[0].mxu0
        %v6126 = vpop.f32.mrb[0].mxu0
        %v6127 = vadd.f32 0.0, %v6126
        %v6128 = vpop.f32.mrb[0].mxu0
        %6129 = vmatprep.mubr.bf16.mxu0 0
        %6130 = vmatmul.mubr.bf16.gmra.mrb[0].mxu0 %v5738
        %v6131 = vpop.f32.mrb[0].mxu0
        %v6132 = vadd.f32 0.0, %v6131
        %v6133 = vpop.f32.mrb[0].mxu0
        %v6134 = vpop.f32.mrb[0].mxu0
        %v6135 = vadd.f32 0.0, %v6134
        %v6136 = vpop.f32.mrb[0].mxu0
        %6137 = vmatprep.mubr.bf16.mxu0 0
        %6138 = vmatmul.mubr.bf16.gmra.mrb[0].mxu0 %v5741
        %v6139 = vpop.f32.mrb[0].mxu0
        %v6140 = vadd.f32 0.0, %v6139
        %v6141 = vpop.f32.mrb[0].mxu0
        %v6142 = vpop.f32.mrb[0].mxu0
        %v6143 = vadd.f32 0.0, %v6142
        %v6144 = vpop.f32.mrb[0].mxu0
        %6145 = vmatprep.mubr.bf16.mxu0 0
        %6146 = vmatmul.mubr.bf16.gmra.mrb[0].mxu0 %v5744
        %v6147 = vpop.f32.mrb[0].mxu0
        %v6148 = vadd.f32 0.0, %v6147
        %v6149 = vpop.f32.mrb[0].mxu0
        %v6150 = vpop.f32.mrb[0].mxu0
        %v6151 = vadd.f32 0.0, %v6150
        %v6152 = vpop.f32.mrb[0].mxu0
        %6153 = vmatprep.mubr.bf16.mxu0 0
        %6154 = vmatmul.mubr.bf16.gmra.mrb[0].mxu0 %v5747
        %v6155 = vpop.f32.mrb[0].mxu0
        %v6156 = vadd.f32 0.0, %v6155
        %v6157 = vpop.f32.mrb[0].mxu0
        %v6158 = vpop.f32.mrb[0].mxu0
        %v6159 = vadd.f32 0.0, %v6158
        %v6160 = vpop.f32.mrb[0].mxu0
        %6161 = vmatprep.mubr.bf16.mxu0 0
        %6162 = vmatmul.mubr.bf16.gmra.mrb[0].mxu0 %v5750
        %v6163 = vpop.f32.mrb[0].mxu0
        %v6164 = vadd.f32 0.0, %v6163
        %v6165 = vpop.f32.mrb[0].mxu0
        %v6166 = vpop.f32.mrb[0].mxu0
        %v6167 = vadd.f32 0.0, %v6166
        %v6168 = vpop.f32.mrb[0].mxu0
        %6169 = vmatprep.mubr.bf16.mxu0 0
        %6170 = vmatmul.mubr.bf16.gmra.mrb[0].mxu0 %v5753
        %v6171 = vpop.f32.mrb[0].mxu0
        %v6172 = vadd.f32 0.0, %v6171
        %v6173 = vpop.f32.mrb[0].mxu0
        %v6174 = vpop.f32.mrb[0].mxu0
        %v6175 = vadd.f32 0.0, %v6174
        %v6176 = vpop.f32.mrb[0].mxu0
        %6177 = vmatprep.mubr.bf16.mxu0 0
        %6178 = vmatmul.mubr.bf16.gmra.mrb[0].mxu0 %v5756
        %v6179 = vpop.f32.mrb[0].mxu0
        %v6180 = vadd.f32 0.0, %v6179
        %v6181 = vpop.f32.mrb[0].mxu0
        %v6182 = vpop.f32.mrb[0].mxu0
        %v6183 = vadd.f32 0.0, %v6182
        %v6184 = vpop.f32.mrb[0].mxu0
        %6185 = vmatprep.mubr.bf16.mxu0 0
        %6186 = vmatmul.mubr.bf16.gmra.mrb[0].mxu0 %v5759
        %v6187 = vpop.f32.mrb[0].mxu0
        %v6188 = vadd.f32 0.0, %v6187
        %v6189 = vpop.f32.mrb[0].mxu0
        %v6190 = vpop.f32.mrb[0].mxu0
        %v6191 = vadd.f32 0.0, %v6190
        %v6192 = vpop.f32.mrb[0].mxu0
        %6193 = vmatprep.mubr.bf16.mxu0 0
        %6194 = vmatmul.mubr.bf16.gmra.mrb[0].mxu0 %v5762
        %v6195 = vpop.f32.mrb[0].mxu0
        %v6196 = vadd.f32 0.0, %v6195
        %v6197 = vpop.f32.mrb[0].mxu0
        %v6198 = vpop.f32.mrb[0].mxu0
        %v6199 = vadd.f32 0.0, %v6198
        %v6200 = vpop.f32.mrb[0].mxu0
        %6201 = vmatprep.mubr.bf16.mxu0 0
        %6202 = vmatmul.mubr.bf16.gmra.mrb[0].mxu0 %v5765
        %v6203 = vpop.f32.mrb[0].mxu0
        %v6204 = vadd.f32 0.0, %v6203
        %v6205 = vpop.f32.mrb[0].mxu0
        %v6206 = vpop.f32.mrb[0].mxu0
        %v6207 = vadd.f32 0.0, %v6206
        %v6208 = vpop.f32.mrb[0].mxu0
        %6209 = vmatprep.mubr.bf16.mxu0 0
        %6210 = vmatmul.mubr.bf16.gmra.mrb[0].mxu0 %v5768
        %v6211 = vpop.f32.mrb[0].mxu0
        %v6212 = vadd.f32 0.0, %v6211
        %v6213 = vpop.f32.mrb[0].mxu0
        %v6214 = vpop.f32.mrb[0].mxu0
        %v6215 = vadd.f32 0.0, %v6214
        %v6216 = vpop.f32.mrb[0].mxu0
        %6217 = vmatprep.mubr.bf16.mxu0 0
        %6218 = vmatmul.mubr.bf16.gmra.mrb[0].mxu0 %v5771
        %v6219 = vpop.f32.mrb[0].mxu0
        %v6220 = vadd.f32 0.0, %v6219
        %v6221 = vpop.f32.mrb[0].mxu0
        %v6222 = vpop.f32.mrb[0].mxu0
        %v6223 = vadd.f32 0.0, %v6222
        %v6224 = vpop.f32.mrb[0].mxu0
        %6225 = vmatprep.mubr.bf16.mxu0 0
        %6226 = vmatmul.mubr.bf16.gmra.mrb[0].mxu0 %v5774
        %v6227 = vpop.f32.mrb[0].mxu0
        %v6228 = vadd.f32 0.0, %v6227
        %v6229 = vpop.f32.mrb[0].mxu0
        %v6230 = vpop.f32.mrb[0].mxu0
        %v6231 = vadd.f32 0.0, %v6230
        %v6232 = vpop.f32.mrb[0].mxu0
        %6233 = vmatprep.mubr.bf16.mxu0 0
        %6234 = vmatmul.mubr.bf16.gmra.mrb[0].mxu0 %v5777
        %v6235 = vpop.f32.mrb[0].mxu0
        %v6236 = vadd.f32 0.0, %v6235
        %v6237 = vpop.f32.mrb[0].mxu0
        %v6238 = vpop.f32.mrb[0].mxu0
        %v6239 = vadd.f32 0.0, %v6238
        %v6240 = vpop.f32.mrb[0].mxu0
        %6241 = vmatprep.mubr.bf16.mxu0 0
        %6242 = vmatmul.mubr.bf16.gmra.mrb[0].mxu0 %v5780
        %v6243 = vpop.f32.mrb[0].mxu0
        %v6244 = vadd.f32 0.0, %v6243
        %v6245 = vpop.f32.mrb[0].mxu0
        %v6246 = vpop.f32.mrb[0].mxu0
        %v6247 = vadd.f32 0.0, %v6246
        %v6248 = vpop.f32.mrb[0].mxu0
        %6249 = vmatprep.mubr.bf16.mxu0 0
        %6250 = vmatmul.mubr.bf16.gmra.mrb[0].mxu0 %v5783
        %v6251 = vpop.f32.mrb[0].mxu0
        %v6252 = vadd.f32 0.0, %v6251
        %v6253 = vpop.f32.mrb[0].mxu0
        %v6254 = vpop.f32.mrb[0].mxu0
        %v6255 = vadd.f32 0.0, %v6254
        %v6256 = vpop.f32.mrb[0].mxu0
        %6257 = vmatprep.mubr.bf16.mxu0 0
        %6258 = vmatmul.mubr.bf16.gmra.mrb[0].mxu0 %v5786
        %v6259 = vpop.f32.mrb[0].mxu0
        %v6260 = vadd.f32 0.0, %v6259
        %v6261 = vpop.f32.mrb[0].mxu0
        %v6262 = vpop.f32.mrb[0].mxu0
        %v6263 = vadd.f32 0.0, %v6262
        %v6264 = vpop.f32.mrb[0].mxu0
        %6265 = vmatprep.mubr.bf16.mxu0 0
        %6266 = vmatmul.mubr.bf16.gmra.mrb[0].mxu0 %v5789
        %v6267 = vpop.f32.mrb[0].mxu0
        %v6268 = vadd.f32 0.0, %v6267
        %v6269 = vpop.f32.mrb[0].mxu0
        %v6270 = vpop.f32.mrb[0].mxu0
        %v6271 = vadd.f32 0.0, %v6270
        %v6272 = vpop.f32.mrb[0].mxu0
        %6273 = vmatprep.mubr.bf16.mxu0 0
        %6274 = vmatmul.mubr.bf16.gmra.mrb[0].mxu0 %v5792
        %v6275 = vpop.f32.mrb[0].mxu0
        %v6276 = vadd.f32 0.0, %v6275
        %v6277 = vpop.f32.mrb[0].mxu0
        %v6278 = vpop.f32.mrb[0].mxu0
        %v6279 = vadd.f32 0.0, %v6278
        %v6280 = vpop.f32.mrb[0].mxu0
        %6281 = vmatprep.mubr.bf16.mxu0 0
        %6282 = vmatmul.mubr.bf16.gmra.mrb[0].mxu0 %v5795
        %v6283 = vpop.f32.mrb[0].mxu0
        %v6284 = vadd.f32 0.0, %v6283
        %v6285 = vpop.f32.mrb[0].mxu0
        %v6286 = vpop.f32.mrb[0].mxu0
        %v6287 = vadd.f32 0.0, %v6286
        %v6288 = vpop.f32.mrb[0].mxu0
        %6289 = vmatprep.mubr.bf16.mxu0 0
        %6290 = vmatmul.mubr.bf16.gmra.mrb[0].mxu0 %v5798
        %v6291 = vpop.f32.mrb[0].mxu0
        %v6292 = vadd.f32 0.0, %v6291
        %v6293 = vpop.f32.mrb[0].mxu0
        %v6294 = vpop.f32.mrb[0].mxu0
        %v6295 = vadd.f32 0.0, %v6294
        %v6296 = vpop.f32.mrb[0].mxu0
        %6297 = vmatprep.mubr.bf16.mxu0 0
        %6298 = vmatmul.mubr.bf16.gmra.mrb[0].mxu0 %v5801
        %v6299 = vpop.f32.mrb[0].mxu0
        %v6300 = vadd.f32 0.0, %v6299
        %v6301 = vpop.f32.mrb[0].mxu0
        %v6302 = vpop.f32.mrb[0].mxu0
        %v6303 = vadd.f32 0.0, %v6302
        %v6304 = vpop.f32.mrb[0].mxu0
        %6305 = vmatprep.mubr.bf16.mxu0 0
        %6306 = vmatmul.mubr.bf16.gmra.mrb[0].mxu0 %v5804
        %v6307 = vpop.f32.mrb[0].mxu0
        %v6308 = vadd.f32 0.0, %v6307
        %v6309 = vpop.f32.mrb[0].mxu0
        %v6310 = vpop.f32.mrb[0].mxu0
        %v6311 = vadd.f32 0.0, %v6310
        %v6312 = vpop.f32.mrb[0].mxu0
        %6313 = vmatprep.mubr.bf16.mxu0 0
        %6314 = vmatmul.mubr.bf16.gmra.mrb[0].mxu0 %v5807
        %v6315 = vpop.f32.mrb[0].mxu0
        %v6316 = vadd.f32 0.0, %v6315
        %v6317 = vpop.f32.mrb[0].mxu0
        %v6318 = vpop.f32.mrb[0].mxu0
        %v6319 = vadd.f32 0.0, %v6318
        %v6320 = vpop.f32.mrb[0].mxu0
        %6321 = vmatprep.mubr.bf16.mxu0 0
        %6322 = vmatmul.mubr.bf16.gmra.mrb[0].mxu0 %v5810
        %v6323 = vpop.f32.mrb[0].mxu0
        %v6324 = vadd.f32 0.0, %v6323
        %v6325 = vpop.f32.mrb[0].mxu0
        %v6326 = vpop.f32.mrb[0].mxu0
        %v6327 = vadd.f32 0.0, %v6326
        %v6328 = vpop.f32.mrb[0].mxu0
        %6329 = vmatprep.mubr.bf16.mxu0 0
        %6330 = vmatmul.mubr.bf16.gmra.mrb[0].mxu0 %v5813
        %v6331 = vpop.f32.mrb[0].mxu0
        %v6332 = vadd.f32 0.0, %v6331
        %v6333 = vpop.f32.mrb[0].mxu0
        %v6334 = vpop.f32.mrb[0].mxu0
        %v6335 = vadd.f32 0.0, %v6334
        %v6336 = vpop.f32.mrb[0].mxu0
        %6337 = vmatprep.mubr.bf16.mxu0 0
        %6338 = vmatmul.mubr.bf16.gmra.mrb[0].mxu0 %v5816
        %v6339 = vpop.f32.mrb[0].mxu0
        %v6340 = vadd.f32 0.0, %v6339
        %v6341 = vpop.f32.mrb[0].mxu0
        %v6342 = vpop.f32.mrb[0].mxu0
        %v6343 = vadd.f32 0.0, %v6342
        %v6344 = vpop.f32.mrb[0].mxu0
        %6345 = vmatprep.mubr.bf16.mxu0 0
        %6346 = vmatmul.mubr.bf16.gmra.mrb[0].mxu0 %v5819
        %v6347 = vpop.f32.mrb[0].mxu0
        %v6348 = vadd.f32 0.0, %v6347
        %v6349 = vpop.f32.mrb[0].mxu0
        %v6350 = vpop.f32.mrb[0].mxu0
        %v6351 = vadd.f32 0.0, %v6350
        %v6352 = vpop.f32.mrb[0].mxu0
        %6353 = vmatprep.mubr.bf16.mxu0 0
        %6354 = vmatmul.mubr.bf16.gmra.mrb[0].mxu0 %v5822
        %v6355 = vpop.f32.mrb[0].mxu0
        %v6356 = vadd.f32 0.0, %v6355
        %v6357 = vpop.f32.mrb[0].mxu0
        %v6358 = vpop.f32.mrb[0].mxu0
        %v6359 = vadd.f32 0.0, %v6358
        %v6360 = vpop.f32.mrb[0].mxu0
        %6361 = vmatprep.mubr.bf16.mxu0 0
        %6362 = vmatmul.mubr.bf16.gmra.mrb[0].mxu0 %v5825
        %v6363 = vpop.f32.mrb[0].mxu0
        %v6364 = vadd.f32 0.0, %v6363
        %v6365 = vpop.f32.mrb[0].mxu0
        %v6366 = vpop.f32.mrb[0].mxu0
        %v6367 = vadd.f32 0.0, %v6366
        %v6368 = vpop.f32.mrb[0].mxu0
        %6369 = vmatprep.mubr.bf16.mxu0 0
        %6370 = vmatmul.mubr.bf16.gmra.mrb[0].mxu0 %v5828
        %v6371 = vpop.f32.mrb[0].mxu0
        %v6372 = vadd.f32 0.0, %v6371
        %v6373 = vpop.f32.mrb[0].mxu0
        %v6374 = vpop.f32.mrb[0].mxu0
        %v6375 = vadd.f32 0.0, %v6374
        %v6376 = vpop.f32.mrb[0].mxu0
        %6377 = vdwg.mxu0
        %v6378 = vadd.f32 %v5316, %v5868
        %v6379 = vadd.f32 %v5317, %v5871
        %v6380 = vadd.f32 %v5318, %v5876
        %v6381 = vadd.f32 %v5319, %v5879
        %v6382 = vadd.f32 %v5320, %v5884
        %v6383 = vadd.f32 %v5321, %v5887
        %v6384 = vadd.f32 %v5322, %v5892
        %v6385 = vadd.f32 %v5323, %v5895
        %v6386 = vadd.f32 %v5324, %v5900
        %v6387 = vadd.f32 %v5325, %v5903
        %v6388 = vadd.f32 %v5326, %v5908
        %v6389 = vadd.f32 %v5327, %v5911
        %v6390 = vadd.f32 %v5328, %v5916
        %v6391 = vadd.f32 %v5329, %v5919
        %v6392 = vadd.f32 %v5330, %v5924
        %v6393 = vadd.f32 %v5331, %v5927
        %v6394 = vadd.f32 %v5332, %v5932
        %v6395 = vadd.f32 %v5333, %v5935
        %v6396 = vadd.f32 %v5334, %v5940
        %v6397 = vadd.f32 %v5335, %v5943
        %v6398 = vadd.f32 %v5336, %v5948
        %v6399 = vadd.f32 %v5337, %v5951
        %v6400 = vadd.f32 %v5338, %v5956
        %v6401 = vadd.f32 %v5339, %v5959
        %v6402 = vadd.f32 %v5340, %v5964
        %v6403 = vadd.f32 %v5341, %v5967
        %v6404 = vadd.f32 %v5342, %v5972
        %v6405 = vadd.f32 %v5343, %v5975
        %v6406 = vadd.f32 %v5344, %v5980
        %v6407 = vadd.f32 %v5345, %v5983
        %v6408 = vadd.f32 %v5346, %v5988
        %v6409 = vadd.f32 %v5347, %v5991
        %v6410 = vadd.f32 %v5348, %v5996
        %v6411 = vadd.f32 %v5349, %v5999
        %v6412 = vadd.f32 %v5350, %v6004
        %v6413 = vadd.f32 %v5351, %v6007
        %v6414 = vadd.f32 %v5352, %v6012
        %v6415 = vadd.f32 %v5353, %v6015
        %v6416 = vadd.f32 %v5354, %v6020
        %v6417 = vadd.f32 %v5355, %v6023
        %v6418 = vadd.f32 %v5356, %v6028
        %v6419 = vadd.f32 %v5357, %v6031
        %v6420 = vadd.f32 %v5358, %v6036
        %v6421 = vadd.f32 %v5359, %v6039
        %v6422 = vadd.f32 %v5360, %v6044
        %v6423 = vadd.f32 %v5361, %v6047
        %v6424 = vadd.f32 %v5362, %v6052
        %v6425 = vadd.f32 %v5363, %v6055
        %v6426 = vadd.f32 %v5364, %v6060
        %v6427 = vadd.f32 %v5365, %v6063
        %v6428 = vadd.f32 %v5366, %v6068
        %v6429 = vadd.f32 %v5367, %v6071
        %v6430 = vadd.f32 %v5368, %v6076
        %v6431 = vadd.f32 %v5369, %v6079
        %v6432 = vadd.f32 %v5370, %v6084
        %v6433 = vadd.f32 %v5371, %v6087
        %v6434 = vadd.f32 %v5372, %v6092
        %v6435 = vadd.f32 %v5373, %v6095
        %v6436 = vadd.f32 %v5374, %v6100
        %v6437 = vadd.f32 %v5375, %v6103
        %v6438 = vadd.f32 %v5376, %v6108
        %v6439 = vadd.f32 %v5377, %v6111
        %v6440 = vadd.f32 %v5378, %v6116
        %v6441 = vadd.f32 %v5379, %v6119
        %v6442 = vadd.f32 %v5380, %v6124
        %v6443 = vadd.f32 %v5381, %v6127
        %v6444 = vadd.f32 %v5382, %v6132
        %v6445 = vadd.f32 %v5383, %v6135
        %v6446 = vadd.f32 %v5384, %v6140
        %v6447 = vadd.f32 %v5385, %v6143
        %v6448 = vadd.f32 %v5386, %v6148
        %v6449 = vadd.f32 %v5387, %v6151
        %v6450 = vadd.f32 %v5388, %v6156
        %v6451 = vadd.f32 %v5389, %v6159
        %v6452 = vadd.f32 %v5390, %v6164
        %v6453 = vadd.f32 %v5391, %v6167
        %v6454 = vadd.f32 %v5392, %v6172
        %v6455 = vadd.f32 %v5393, %v6175
        %v6456 = vadd.f32 %v5394, %v6180
        %v6457 = vadd.f32 %v5395, %v6183
        %v6458 = vadd.f32 %v5396, %v6188
        %v6459 = vadd.f32 %v5397, %v6191
        %v6460 = vadd.f32 %v5398, %v6196
        %v6461 = vadd.f32 %v5399, %v6199
        %v6462 = vadd.f32 %v5400, %v6204
        %v6463 = vadd.f32 %v5401, %v6207
        %v6464 = vadd.f32 %v5402, %v6212
        %v6465 = vadd.f32 %v5403, %v6215
        %v6466 = vadd.f32 %v5404, %v6220
        %v6467 = vadd.f32 %v5405, %v6223
        %v6468 = vadd.f32 %v5406, %v6228
        %v6469 = vadd.f32 %v5407, %v6231
        %v6470 = vadd.f32 %v5408, %v6236
        %v6471 = vadd.f32 %v5409, %v6239
        %v6472 = vadd.f32 %v5410, %v6244
        %v6473 = vadd.f32 %v5411, %v6247
        %v6474 = vadd.f32 %v5412, %v6252
        %v6475 = vadd.f32 %v5413, %v6255
        %v6476 = vadd.f32 %v5414, %v6260
        %v6477 = vadd.f32 %v5415, %v6263
        %v6478 = vadd.f32 %v5416, %v6268
        %v6479 = vadd.f32 %v5417, %v6271
        %v6480 = vadd.f32 %v5418, %v6276
        %v6481 = vadd.f32 %v5419, %v6279
        %v6482 = vadd.f32 %v5420, %v6284
        %v6483 = vadd.f32 %v5421, %v6287
        %v6484 = vadd.f32 %v5422, %v6292
        %v6485 = vadd.f32 %v5423, %v6295
        %v6486 = vadd.f32 %v5424, %v6300
        %v6487 = vadd.f32 %v5425, %v6303
        %v6488 = vadd.f32 %v5426, %v6308
        %v6489 = vadd.f32 %v5427, %v6311
        %v6490 = vadd.f32 %v5428, %v6316
        %v6491 = vadd.f32 %v5429, %v6319
        %v6492 = vadd.f32 %v5430, %v6324
        %v6493 = vadd.f32 %v5431, %v6327
        %v6494 = vadd.f32 %v5432, %v6332
        %v6495 = vadd.f32 %v5433, %v6335
        %v6496 = vadd.f32 %v5434, %v6340
        %v6497 = vadd.f32 %v5435, %v6343
        %v6498 = vadd.f32 %v5436, %v6348
        %v6499 = vadd.f32 %v5437, %v6351
        %v6500 = vadd.f32 %v5438, %v6356
        %v6501 = vadd.f32 %v5439, %v6359
        %v6502 = vadd.f32 %v5440, %v6364
        %v6503 = vadd.f32 %v5441, %v6367
        %v6504 = vadd.f32 %v5442, %v6372
        %v6505 = vadd.f32 %v5443, %v6375
        %s6506 = scalar_lea.vmem %s383, 80
        %v6507 = vld [vmem:[%s6506] sm:$0xff]
        %v6508 = vld [vmem:[%s6506 + $0x8] sm:$0xff]
        %v6509 = vld [vmem:[%s6506 + $0x10] sm:$0xff]
        %v6510 = vld [vmem:[%s6506 + $0x18] sm:$0xff]
        %v6511 = vld [vmem:[%s6506 + $0x28] sm:$0xff]
        %v6512 = vld [vmem:[%s6506 + $0x30] sm:$0xff]
        %v6513 = vld [vmem:[%s6506 + $0x38] sm:$0xff]
        %v6514 = vld [vmem:[%s6506 + $0x40] sm:$0xff]
        %v6515 = vld [vmem:[%s6506 + $0x50] sm:$0xff]
        %v6516 = vld [vmem:[%s6506 + $0x58] sm:$0xff]
        %v6517 = vld [vmem:[%s6506 + $0x60] sm:$0xff]
        %v6518 = vld [vmem:[%s6506 + $0x68] sm:$0xff]
        %v6519 = vld [vmem:[%s6506 + $0x78] sm:$0xff]
        %v6520 = vld [vmem:[%s6506 + $0x80] sm:$0xff]
        %v6521 = vld [vmem:[%s6506 + $0x88] sm:$0xff]
        %v6522 = vld [vmem:[%s6506 + $0x90] sm:$0xff]
        %v6523 = vld [vmem:[%s6506 + $0xa0] sm:$0xff]
        %v6524 = vld [vmem:[%s6506 + $0xa8] sm:$0xff]
        %v6525 = vld [vmem:[%s6506 + $0xb0] sm:$0xff]
        %v6526 = vld [vmem:[%s6506 + $0xb8] sm:$0xff]
        %v6527 = vld [vmem:[%s6506 + $0xc8] sm:$0xff]
        %v6528 = vld [vmem:[%s6506 + $0xd0] sm:$0xff]
        %v6529 = vld [vmem:[%s6506 + $0xd8] sm:$0xff]
        %v6530 = vld [vmem:[%s6506 + $0xe0] sm:$0xff]
        %v6531 = vld [vmem:[%s6506 + $0xf0] sm:$0xff]
        %v6532 = vld [vmem:[%s6506 + $0xf8] sm:$0xff]
        %v6533 = vld [vmem:[%s6506 + $0x100] sm:$0xff]
        %v6534 = vld [vmem:[%s6506 + $0x108] sm:$0xff]
        %v6535 = vld [vmem:[%s6506 + $0x118] sm:$0xff]
        %v6536 = vld [vmem:[%s6506 + $0x120] sm:$0xff]
        %v6537 = vld [vmem:[%s6506 + $0x128] sm:$0xff]
        %v6538 = vld [vmem:[%s6506 + $0x130] sm:$0xff]
        %v6539 = vld [vmem:[%s6506 + $0x140] sm:$0xff]
        %v6540 = vld [vmem:[%s6506 + $0x148] sm:$0xff]
        %v6541 = vld [vmem:[%s6506 + $0x150] sm:$0xff]
        %v6542 = vld [vmem:[%s6506 + $0x158] sm:$0xff]
        %v6543 = vld [vmem:[%s6506 + $0x168] sm:$0xff]
        %v6544 = vld [vmem:[%s6506 + $0x170] sm:$0xff]
        %v6545 = vld [vmem:[%s6506 + $0x178] sm:$0xff]
        %v6546 = vld [vmem:[%s6506 + $0x180] sm:$0xff]
        %v6547 = vld [vmem:[%s6506 + $0x190] sm:$0xff]
        %v6548 = vld [vmem:[%s6506 + $0x198] sm:$0xff]
        %v6549 = vld [vmem:[%s6506 + $0x1a0] sm:$0xff]
        %v6550 = vld [vmem:[%s6506 + $0x1a8] sm:$0xff]
        %v6551 = vld [vmem:[%s6506 + $0x1b8] sm:$0xff]
        %v6552 = vld [vmem:[%s6506 + $0x1c0] sm:$0xff]
        %v6553 = vld [vmem:[%s6506 + $0x1c8] sm:$0xff]
        %v6554 = vld [vmem:[%s6506 + $0x1d0] sm:$0xff]
        %v6555 = vld [vmem:[%s6506 + $0x1e0] sm:$0xff]
        %v6556 = vld [vmem:[%s6506 + $0x1e8] sm:$0xff]
        %v6557 = vld [vmem:[%s6506 + $0x1f0] sm:$0xff]
        %v6558 = vld [vmem:[%s6506 + $0x1f8] sm:$0xff]
        %v6559 = vld [vmem:[%s6506 + $0x208] sm:$0xff]
        %v6560 = vld [vmem:[%s6506 + $0x210] sm:$0xff]
        %v6561 = vld [vmem:[%s6506 + $0x218] sm:$0xff]
        %v6562 = vld [vmem:[%s6506 + $0x220] sm:$0xff]
        %v6563 = vld [vmem:[%s6506 + $0x230] sm:$0xff]
        %v6564 = vld [vmem:[%s6506 + $0x238] sm:$0xff]
        %v6565 = vld [vmem:[%s6506 + $0x240] sm:$0xff]
        %v6566 = vld [vmem:[%s6506 + $0x248] sm:$0xff]
        %v6567 = vld [vmem:[%s6506 + $0x258] sm:$0xff]
        %v6568 = vld [vmem:[%s6506 + $0x260] sm:$0xff]
        %v6569 = vld [vmem:[%s6506 + $0x268] sm:$0xff]
        %v6570 = vld [vmem:[%s6506 + $0x270] sm:$0xff]
        %v6571 = vld [vmem:[%s6506 + $0x280] sm:$0xff]
        %v6572 = vld [vmem:[%s6506 + $0x288] sm:$0xff]
        %v6573 = vld [vmem:[%s6506 + $0x290] sm:$0xff]
        %v6574 = vld [vmem:[%s6506 + $0x298] sm:$0xff]
        %v6575 = vld [vmem:[%s6506 + $0x2a8] sm:$0xff]
        %v6576 = vld [vmem:[%s6506 + $0x2b0] sm:$0xff]
        %v6577 = vld [vmem:[%s6506 + $0x2b8] sm:$0xff]
        %v6578 = vld [vmem:[%s6506 + $0x2c0] sm:$0xff]
        %v6579 = vld [vmem:[%s6506 + $0x2d0] sm:$0xff]
        %v6580 = vld [vmem:[%s6506 + $0x2d8] sm:$0xff]
        %v6581 = vld [vmem:[%s6506 + $0x2e0] sm:$0xff]
        %v6582 = vld [vmem:[%s6506 + $0x2e8] sm:$0xff]
        %v6583 = vld [vmem:[%s6506 + $0x2f8] sm:$0xff]
        %v6584 = vld [vmem:[%s6506 + $0x300] sm:$0xff]
        %v6585 = vld [vmem:[%s6506 + $0x308] sm:$0xff]
        %v6586 = vld [vmem:[%s6506 + $0x310] sm:$0xff]
        %v6587 = vld [vmem:[%s6506 + $0x320] sm:$0xff]
        %v6588 = vld [vmem:[%s6506 + $0x328] sm:$0xff]
        %v6589 = vld [vmem:[%s6506 + $0x330] sm:$0xff]
        %v6590 = vld [vmem:[%s6506 + $0x338] sm:$0xff]
        %v6591 = vld [vmem:[%s6506 + $0x348] sm:$0xff]
        %v6592 = vld [vmem:[%s6506 + $0x350] sm:$0xff]
        %v6593 = vld [vmem:[%s6506 + $0x358] sm:$0xff]
        %v6594 = vld [vmem:[%s6506 + $0x360] sm:$0xff]
        %v6595 = vld [vmem:[%s6506 + $0x370] sm:$0xff]
        %v6596 = vld [vmem:[%s6506 + $0x378] sm:$0xff]
        %v6597 = vld [vmem:[%s6506 + $0x380] sm:$0xff]
        %v6598 = vld [vmem:[%s6506 + $0x388] sm:$0xff]
        %v6599 = vld [vmem:[%s6506 + $0x398] sm:$0xff]
        %v6600 = vld [vmem:[%s6506 + $0x3a0] sm:$0xff]
        %v6601 = vld [vmem:[%s6506 + $0x3a8] sm:$0xff]
        %v6602 = vld [vmem:[%s6506 + $0x3b0] sm:$0xff]
        %v6603 = vld [vmem:[%s6506 + $0x3c0] sm:$0xff]
        %v6604 = vld [vmem:[%s6506 + $0x3c8] sm:$0xff]
        %v6605 = vld [vmem:[%s6506 + $0x3d0] sm:$0xff]
        %v6606 = vld [vmem:[%s6506 + $0x3d8] sm:$0xff]
        %v6607 = vld [vmem:[%s6506 + $0x3e8] sm:$0xff]
        %v6608 = vld [vmem:[%s6506 + $0x3f0] sm:$0xff]
        %v6609 = vld [vmem:[%s6506 + $0x3f8] sm:$0xff]
        %v6610 = vld [vmem:[%s6506 + $0x400] sm:$0xff]
        %v6611 = vld [vmem:[%s6506 + $0x410] sm:$0xff]
        %v6612 = vld [vmem:[%s6506 + $0x418] sm:$0xff]
        %v6613 = vld [vmem:[%s6506 + $0x420] sm:$0xff]
        %v6614 = vld [vmem:[%s6506 + $0x428] sm:$0xff]
        %v6615 = vld [vmem:[%s6506 + $0x438] sm:$0xff]
        %v6616 = vld [vmem:[%s6506 + $0x440] sm:$0xff]
        %v6617 = vld [vmem:[%s6506 + $0x448] sm:$0xff]
        %v6618 = vld [vmem:[%s6506 + $0x450] sm:$0xff]
        %v6619 = vld [vmem:[%s6506 + $0x460] sm:$0xff]
        %v6620 = vld [vmem:[%s6506 + $0x468] sm:$0xff]
        %v6621 = vld [vmem:[%s6506 + $0x470] sm:$0xff]
        %v6622 = vld [vmem:[%s6506 + $0x478] sm:$0xff]
        %v6623 = vld [vmem:[%s6506 + $0x488] sm:$0xff]
        %v6624 = vld [vmem:[%s6506 + $0x490] sm:$0xff]
        %v6625 = vld [vmem:[%s6506 + $0x498] sm:$0xff]
        %v6626 = vld [vmem:[%s6506 + $0x4a0] sm:$0xff]
        %v6627 = vld [vmem:[%s6506 + $0x4b0] sm:$0xff]
        %v6628 = vld [vmem:[%s6506 + $0x4b8] sm:$0xff]
        %v6629 = vld [vmem:[%s6506 + $0x4c0] sm:$0xff]
        %v6630 = vld [vmem:[%s6506 + $0x4c8] sm:$0xff]
        %v6631 = vld [vmem:[%s6506 + $0x4d8] sm:$0xff]
        %v6632 = vld [vmem:[%s6506 + $0x4e0] sm:$0xff]
        %v6633 = vld [vmem:[%s6506 + $0x4e8] sm:$0xff]
        %v6634 = vld [vmem:[%s6506 + $0x4f0] sm:$0xff]
        %v6635 = vpack.c.bf16 %v6508, %v6507
        %v6636 = vpack.c.bf16 %v6510, %v6509
        %v6637 = vpack.c.bf16 %v6512, %v6511
        %v6638 = vpack.c.bf16 %v6514, %v6513
        %v6639 = vpack.c.bf16 %v6516, %v6515
        %v6640 = vpack.c.bf16 %v6518, %v6517
        %v6641 = vpack.c.bf16 %v6520, %v6519
        %v6642 = vpack.c.bf16 %v6522, %v6521
        %v6643 = vpack.c.bf16 %v6524, %v6523
        %v6644 = vpack.c.bf16 %v6526, %v6525
        %v6645 = vpack.c.bf16 %v6528, %v6527
        %v6646 = vpack.c.bf16 %v6530, %v6529
        %v6647 = vpack.c.bf16 %v6532, %v6531
        %v6648 = vpack.c.bf16 %v6534, %v6533
        %v6649 = vpack.c.bf16 %v6536, %v6535
        %v6650 = vpack.c.bf16 %v6538, %v6537
        %v6651 = vpack.c.bf16 %v6540, %v6539
        %v6652 = vpack.c.bf16 %v6542, %v6541
        %v6653 = vpack.c.bf16 %v6544, %v6543
        %v6654 = vpack.c.bf16 %v6546, %v6545
        %v6655 = vpack.c.bf16 %v6548, %v6547
        %v6656 = vpack.c.bf16 %v6550, %v6549
        %v6657 = vpack.c.bf16 %v6552, %v6551
        %v6658 = vpack.c.bf16 %v6554, %v6553
        %v6659 = vpack.c.bf16 %v6556, %v6555
        %v6660 = vpack.c.bf16 %v6558, %v6557
        %v6661 = vpack.c.bf16 %v6560, %v6559
        %v6662 = vpack.c.bf16 %v6562, %v6561
        %v6663 = vpack.c.bf16 %v6564, %v6563
        %v6664 = vpack.c.bf16 %v6566, %v6565
        %v6665 = vpack.c.bf16 %v6568, %v6567
        %v6666 = vpack.c.bf16 %v6570, %v6569
        %v6667 = vpack.c.bf16 %v6572, %v6571
        %v6668 = vpack.c.bf16 %v6574, %v6573
        %v6669 = vpack.c.bf16 %v6576, %v6575
        %v6670 = vpack.c.bf16 %v6578, %v6577
        %v6671 = vpack.c.bf16 %v6580, %v6579
        %v6672 = vpack.c.bf16 %v6582, %v6581
        %v6673 = vpack.c.bf16 %v6584, %v6583
        %v6674 = vpack.c.bf16 %v6586, %v6585
        %v6675 = vpack.c.bf16 %v6588, %v6587
        %v6676 = vpack.c.bf16 %v6590, %v6589
        %v6677 = vpack.c.bf16 %v6592, %v6591
        %v6678 = vpack.c.bf16 %v6594, %v6593
        %v6679 = vpack.c.bf16 %v6596, %v6595
        %v6680 = vpack.c.bf16 %v6598, %v6597
        %v6681 = vpack.c.bf16 %v6600, %v6599
        %v6682 = vpack.c.bf16 %v6602, %v6601
        %v6683 = vpack.c.bf16 %v6604, %v6603
        %v6684 = vpack.c.bf16 %v6606, %v6605
        %v6685 = vpack.c.bf16 %v6608, %v6607
        %v6686 = vpack.c.bf16 %v6610, %v6609
        %v6687 = vpack.c.bf16 %v6612, %v6611
        %v6688 = vpack.c.bf16 %v6614, %v6613
        %v6689 = vpack.c.bf16 %v6616, %v6615
        %v6690 = vpack.c.bf16 %v6618, %v6617
        %v6691 = vpack.c.bf16 %v6620, %v6619
        %v6692 = vpack.c.bf16 %v6622, %v6621
        %v6693 = vpack.c.bf16 %v6624, %v6623
        %v6694 = vpack.c.bf16 %v6626, %v6625
        %v6695 = vpack.c.bf16 %v6628, %v6627
        %v6696 = vpack.c.bf16 %v6630, %v6629
        %v6697 = vpack.c.bf16 %v6632, %v6631
        %v6698 = vpack.c.bf16 %v6634, %v6633
        %s6699 = scalar_lea.vmem %s1, 12
        %v6700 = vld [vmem:[%s6699] sm:$0x3]
        %v6702 = vsel %vm772, %v6635, 0
        %v6705 = vsel %vm772, %v6636, 0
        %v6708 = vsel %vm772, %v6637, 0
        %v6711 = vsel %vm772, %v6638, 0
        %v6714 = vsel %vm772, %v6639, 0
        %v6717 = vsel %vm772, %v6640, 0
        %v6720 = vsel %vm772, %v6641, 0
        %v6723 = vsel %vm772, %v6642, 0
        %v6726 = vsel %vm772, %v6643, 0
        %v6729 = vsel %vm772, %v6644, 0
        %v6732 = vsel %vm772, %v6645, 0
        %v6735 = vsel %vm772, %v6646, 0
        %v6738 = vsel %vm772, %v6647, 0
        %v6741 = vsel %vm772, %v6648, 0
        %v6744 = vsel %vm772, %v6649, 0
        %v6747 = vsel %vm772, %v6650, 0
        %v6750 = vsel %vm772, %v6651, 0
        %v6753 = vsel %vm772, %v6652, 0
        %v6756 = vsel %vm772, %v6653, 0
        %v6759 = vsel %vm772, %v6654, 0
        %v6762 = vsel %vm772, %v6655, 0
        %v6765 = vsel %vm772, %v6656, 0
        %v6768 = vsel %vm772, %v6657, 0
        %v6771 = vsel %vm772, %v6658, 0
        %v6774 = vsel %vm772, %v6659, 0
        %v6777 = vsel %vm772, %v6660, 0
        %v6780 = vsel %vm772, %v6661, 0
        %v6783 = vsel %vm772, %v6662, 0
        %v6786 = vsel %vm772, %v6663, 0
        %v6789 = vsel %vm772, %v6664, 0
        %v6792 = vsel %vm772, %v6665, 0
        %v6795 = vsel %vm772, %v6666, 0
        %v6798 = vsel %vm772, %v6667, 0
        %v6801 = vsel %vm772, %v6668, 0
        %v6804 = vsel %vm772, %v6669, 0
        %v6807 = vsel %vm772, %v6670, 0
        %v6810 = vsel %vm772, %v6671, 0
        %v6813 = vsel %vm772, %v6672, 0
        %v6816 = vsel %vm772, %v6673, 0
        %v6819 = vsel %vm772, %v6674, 0
        %v6822 = vsel %vm772, %v6675, 0
        %v6825 = vsel %vm772, %v6676, 0
        %v6828 = vsel %vm772, %v6677, 0
        %v6831 = vsel %vm772, %v6678, 0
        %v6834 = vsel %vm772, %v6679, 0
        %v6837 = vsel %vm772, %v6680, 0
        %v6840 = vsel %vm772, %v6681, 0
        %v6843 = vsel %vm772, %v6682, 0
        %v6846 = vsel %vm772, %v6683, 0
        %v6849 = vsel %vm772, %v6684, 0
        %v6852 = vsel %vm772, %v6685, 0
        %v6855 = vsel %vm772, %v6686, 0
        %v6858 = vsel %vm772, %v6687, 0
        %v6861 = vsel %vm772, %v6688, 0
        %v6864 = vsel %vm772, %v6689, 0
        %v6867 = vsel %vm772, %v6690, 0
        %v6870 = vsel %vm772, %v6691, 0
        %v6873 = vsel %vm772, %v6692, 0
        %v6876 = vsel %vm772, %v6693, 0
        %v6879 = vsel %vm772, %v6694, 0
        %v6882 = vsel %vm772, %v6695, 0
        %v6885 = vsel %vm772, %v6696, 0
        %v6888 = vsel %vm772, %v6697, 0
        %v6891 = vsel %vm772, %v6698, 0
        %v6894 = vand.u32 %v6700, %v968
        %6896 = vmatprep.subr.bf16.mxu0 0
        %6897 = vmatpush1.bf16.msra.mxu0 %v6894
        %6898 = vmatprep.subr.bf16.mxu0 0
        %6899 = vmatpush1.bf16.msra.mxu0 0
        %6900 = vmatprep.subr.bf16.mxu0 0
        %6901 = vmatpush1.bf16.msra.mxu0 0
        %6902 = vmatprep.subr.bf16.mxu0 0
        %6903 = vmatpush1.bf16.msra.mxu0 0
        %6904 = vmatprep.subr.bf16.mxu0 0
        %6905 = vmatpush1.bf16.msra.mxu0 0
        %6906 = vmatprep.subr.bf16.mxu0 0
        %6907 = vmatpush1.bf16.msra.mxu0 0
        %6908 = vmatprep.subr.bf16.mxu0 0
        %6909 = vmatpush1.bf16.msra.mxu0 0
        %6910 = vmatprep.subr.bf16.mxu0 0
        %6911 = vmatpush1.bf16.msra.mxu0 0
        %6912 = vmatprep.subr.bf16.mxu0 0
        %6913 = vmatpush1.bf16.msra.mxu0 0
        %6914 = vmatprep.subr.bf16.mxu0 0
        %6915 = vmatpush1.bf16.msra.mxu0 0
        %6916 = vmatprep.subr.bf16.mxu0 0
        %6917 = vmatpush1.bf16.msra.mxu0 0
        %6918 = vmatprep.subr.bf16.mxu0 0
        %6919 = vmatpush1.bf16.msra.mxu0 0
        %6920 = vmatprep.subr.bf16.mxu0 0
        %6921 = vmatpush1.bf16.msra.mxu0 0
        %6922 = vmatprep.subr.bf16.mxu0 0
        %6923 = vmatpush1.bf16.msra.mxu0 0
        %6924 = vmatprep.subr.bf16.mxu0 0
        %6925 = vmatpush1.bf16.msra.mxu0 0
        %6926 = vmatprep.subr.bf16.mxu0 0
        %6927 = vmatpush1.bf16.msra.mxu0 0
        %6928 = vmatprep.mubr.bf16.mxu0 0
        %6929 = vmatmul.mubr.bf16.gmra.mrb[0].mxu0 %v6702
        %v6930 = vpop.f32.mrb[0].mxu0
        %v6931 = vadd.f32 0.0, %v6930
        %v6932 = vpop.f32.mrb[0].mxu0
        %v6933 = vpop.f32.mrb[0].mxu0
        %v6934 = vadd.f32 0.0, %v6933
        %v6935 = vpop.f32.mrb[0].mxu0
        %6936 = vmatprep.mubr.bf16.mxu0 0
        %6937 = vmatmul.mubr.bf16.gmra.mrb[0].mxu0 %v6705
        %v6938 = vpop.f32.mrb[0].mxu0
        %v6939 = vadd.f32 0.0, %v6938
        %v6940 = vpop.f32.mrb[0].mxu0
        %v6941 = vpop.f32.mrb[0].mxu0
        %v6942 = vadd.f32 0.0, %v6941
        %v6943 = vpop.f32.mrb[0].mxu0
        %6944 = vmatprep.mubr.bf16.mxu0 0
        %6945 = vmatmul.mubr.bf16.gmra.mrb[0].mxu0 %v6708
        %v6946 = vpop.f32.mrb[0].mxu0
        %v6947 = vadd.f32 0.0, %v6946
        %v6948 = vpop.f32.mrb[0].mxu0
        %v6949 = vpop.f32.mrb[0].mxu0
        %v6950 = vadd.f32 0.0, %v6949
        %v6951 = vpop.f32.mrb[0].mxu0
        %6952 = vmatprep.mubr.bf16.mxu0 0
        %6953 = vmatmul.mubr.bf16.gmra.mrb[0].mxu0 %v6711
        %v6954 = vpop.f32.mrb[0].mxu0
        %v6955 = vadd.f32 0.0, %v6954
        %v6956 = vpop.f32.mrb[0].mxu0
        %v6957 = vpop.f32.mrb[0].mxu0
        %v6958 = vadd.f32 0.0, %v6957
        %v6959 = vpop.f32.mrb[0].mxu0
        %6960 = vmatprep.mubr.bf16.mxu0 0
        %6961 = vmatmul.mubr.bf16.gmra.mrb[0].mxu0 %v6714
        %v6962 = vpop.f32.mrb[0].mxu0
        %v6963 = vadd.f32 0.0, %v6962
        %v6964 = vpop.f32.mrb[0].mxu0
        %v6965 = vpop.f32.mrb[0].mxu0
        %v6966 = vadd.f32 0.0, %v6965
        %v6967 = vpop.f32.mrb[0].mxu0
        %6968 = vmatprep.mubr.bf16.mxu0 0
        %6969 = vmatmul.mubr.bf16.gmra.mrb[0].mxu0 %v6717
        %v6970 = vpop.f32.mrb[0].mxu0
        %v6971 = vadd.f32 0.0, %v6970
        %v6972 = vpop.f32.mrb[0].mxu0
        %v6973 = vpop.f32.mrb[0].mxu0
        %v6974 = vadd.f32 0.0, %v6973
        %v6975 = vpop.f32.mrb[0].mxu0
        %6976 = vmatprep.mubr.bf16.mxu0 0
        %6977 = vmatmul.mubr.bf16.gmra.mrb[0].mxu0 %v6720
        %v6978 = vpop.f32.mrb[0].mxu0
        %v6979 = vadd.f32 0.0, %v6978
        %v6980 = vpop.f32.mrb[0].mxu0
        %v6981 = vpop.f32.mrb[0].mxu0
        %v6982 = vadd.f32 0.0, %v6981
        %v6983 = vpop.f32.mrb[0].mxu0
        %6984 = vmatprep.mubr.bf16.mxu0 0
        %6985 = vmatmul.mubr.bf16.gmra.mrb[0].mxu0 %v6723
        %v6986 = vpop.f32.mrb[0].mxu0
        %v6987 = vadd.f32 0.0, %v6986
        %v6988 = vpop.f32.mrb[0].mxu0
        %v6989 = vpop.f32.mrb[0].mxu0
        %v6990 = vadd.f32 0.0, %v6989
        %v6991 = vpop.f32.mrb[0].mxu0
        %6992 = vmatprep.mubr.bf16.mxu0 0
        %6993 = vmatmul.mubr.bf16.gmra.mrb[0].mxu0 %v6726
        %v6994 = vpop.f32.mrb[0].mxu0
        %v6995 = vadd.f32 0.0, %v6994
        %v6996 = vpop.f32.mrb[0].mxu0
        %v6997 = vpop.f32.mrb[0].mxu0
        %v6998 = vadd.f32 0.0, %v6997
        %v6999 = vpop.f32.mrb[0].mxu0
        %7000 = vmatprep.mubr.bf16.mxu0 0
        %7001 = vmatmul.mubr.bf16.gmra.mrb[0].mxu0 %v6729
        %v7002 = vpop.f32.mrb[0].mxu0
        %v7003 = vadd.f32 0.0, %v7002
        %v7004 = vpop.f32.mrb[0].mxu0
        %v7005 = vpop.f32.mrb[0].mxu0
        %v7006 = vadd.f32 0.0, %v7005
        %v7007 = vpop.f32.mrb[0].mxu0
        %7008 = vmatprep.mubr.bf16.mxu0 0
        %7009 = vmatmul.mubr.bf16.gmra.mrb[0].mxu0 %v6732
        %v7010 = vpop.f32.mrb[0].mxu0
        %v7011 = vadd.f32 0.0, %v7010
        %v7012 = vpop.f32.mrb[0].mxu0
        %v7013 = vpop.f32.mrb[0].mxu0
        %v7014 = vadd.f32 0.0, %v7013
        %v7015 = vpop.f32.mrb[0].mxu0
        %7016 = vmatprep.mubr.bf16.mxu0 0
        %7017 = vmatmul.mubr.bf16.gmra.mrb[0].mxu0 %v6735
        %v7018 = vpop.f32.mrb[0].mxu0
        %v7019 = vadd.f32 0.0, %v7018
        %v7020 = vpop.f32.mrb[0].mxu0
        %v7021 = vpop.f32.mrb[0].mxu0
        %v7022 = vadd.f32 0.0, %v7021
        %v7023 = vpop.f32.mrb[0].mxu0
        %7024 = vmatprep.mubr.bf16.mxu0 0
        %7025 = vmatmul.mubr.bf16.gmra.mrb[0].mxu0 %v6738
        %v7026 = vpop.f32.mrb[0].mxu0
        %v7027 = vadd.f32 0.0, %v7026
        %v7028 = vpop.f32.mrb[0].mxu0
        %v7029 = vpop.f32.mrb[0].mxu0
        %v7030 = vadd.f32 0.0, %v7029
        %v7031 = vpop.f32.mrb[0].mxu0
        %7032 = vmatprep.mubr.bf16.mxu0 0
        %7033 = vmatmul.mubr.bf16.gmra.mrb[0].mxu0 %v6741
        %v7034 = vpop.f32.mrb[0].mxu0
        %v7035 = vadd.f32 0.0, %v7034
        %v7036 = vpop.f32.mrb[0].mxu0
        %v7037 = vpop.f32.mrb[0].mxu0
        %v7038 = vadd.f32 0.0, %v7037
        %v7039 = vpop.f32.mrb[0].mxu0
        %7040 = vmatprep.mubr.bf16.mxu0 0
        %7041 = vmatmul.mubr.bf16.gmra.mrb[0].mxu0 %v6744
        %v7042 = vpop.f32.mrb[0].mxu0
        %v7043 = vadd.f32 0.0, %v7042
        %v7044 = vpop.f32.mrb[0].mxu0
        %v7045 = vpop.f32.mrb[0].mxu0
        %v7046 = vadd.f32 0.0, %v7045
        %v7047 = vpop.f32.mrb[0].mxu0
        %7048 = vmatprep.mubr.bf16.mxu0 0
        %7049 = vmatmul.mubr.bf16.gmra.mrb[0].mxu0 %v6747
        %v7050 = vpop.f32.mrb[0].mxu0
        %v7051 = vadd.f32 0.0, %v7050
        %v7052 = vpop.f32.mrb[0].mxu0
        %v7053 = vpop.f32.mrb[0].mxu0
        %v7054 = vadd.f32 0.0, %v7053
        %v7055 = vpop.f32.mrb[0].mxu0
        %7056 = vmatprep.mubr.bf16.mxu0 0
        %7057 = vmatmul.mubr.bf16.gmra.mrb[0].mxu0 %v6750
        %v7058 = vpop.f32.mrb[0].mxu0
        %v7059 = vadd.f32 0.0, %v7058
        %v7060 = vpop.f32.mrb[0].mxu0
        %v7061 = vpop.f32.mrb[0].mxu0
        %v7062 = vadd.f32 0.0, %v7061
        %v7063 = vpop.f32.mrb[0].mxu0
        %7064 = vmatprep.mubr.bf16.mxu0 0
        %7065 = vmatmul.mubr.bf16.gmra.mrb[0].mxu0 %v6753
        %v7066 = vpop.f32.mrb[0].mxu0
        %v7067 = vadd.f32 0.0, %v7066
        %v7068 = vpop.f32.mrb[0].mxu0
        %v7069 = vpop.f32.mrb[0].mxu0
        %v7070 = vadd.f32 0.0, %v7069
        %v7071 = vpop.f32.mrb[0].mxu0
        %7072 = vmatprep.mubr.bf16.mxu0 0
        %7073 = vmatmul.mubr.bf16.gmra.mrb[0].mxu0 %v6756
        %v7074 = vpop.f32.mrb[0].mxu0
        %v7075 = vadd.f32 0.0, %v7074
        %v7076 = vpop.f32.mrb[0].mxu0
        %v7077 = vpop.f32.mrb[0].mxu0
        %v7078 = vadd.f32 0.0, %v7077
        %v7079 = vpop.f32.mrb[0].mxu0
        %7080 = vmatprep.mubr.bf16.mxu0 0
        %7081 = vmatmul.mubr.bf16.gmra.mrb[0].mxu0 %v6759
        %v7082 = vpop.f32.mrb[0].mxu0
        %v7083 = vadd.f32 0.0, %v7082
        %v7084 = vpop.f32.mrb[0].mxu0
        %v7085 = vpop.f32.mrb[0].mxu0
        %v7086 = vadd.f32 0.0, %v7085
        %v7087 = vpop.f32.mrb[0].mxu0
        %7088 = vmatprep.mubr.bf16.mxu0 0
        %7089 = vmatmul.mubr.bf16.gmra.mrb[0].mxu0 %v6762
        %v7090 = vpop.f32.mrb[0].mxu0
        %v7091 = vadd.f32 0.0, %v7090
        %v7092 = vpop.f32.mrb[0].mxu0
        %v7093 = vpop.f32.mrb[0].mxu0
        %v7094 = vadd.f32 0.0, %v7093
        %v7095 = vpop.f32.mrb[0].mxu0
        %7096 = vmatprep.mubr.bf16.mxu0 0
        %7097 = vmatmul.mubr.bf16.gmra.mrb[0].mxu0 %v6765
        %v7098 = vpop.f32.mrb[0].mxu0
        %v7099 = vadd.f32 0.0, %v7098
        %v7100 = vpop.f32.mrb[0].mxu0
        %v7101 = vpop.f32.mrb[0].mxu0
        %v7102 = vadd.f32 0.0, %v7101
        %v7103 = vpop.f32.mrb[0].mxu0
        %7104 = vmatprep.mubr.bf16.mxu0 0
        %7105 = vmatmul.mubr.bf16.gmra.mrb[0].mxu0 %v6768
        %v7106 = vpop.f32.mrb[0].mxu0
        %v7107 = vadd.f32 0.0, %v7106
        %v7108 = vpop.f32.mrb[0].mxu0
        %v7109 = vpop.f32.mrb[0].mxu0
        %v7110 = vadd.f32 0.0, %v7109
        %v7111 = vpop.f32.mrb[0].mxu0
        %7112 = vmatprep.mubr.bf16.mxu0 0
        %7113 = vmatmul.mubr.bf16.gmra.mrb[0].mxu0 %v6771
        %v7114 = vpop.f32.mrb[0].mxu0
        %v7115 = vadd.f32 0.0, %v7114
        %v7116 = vpop.f32.mrb[0].mxu0
        %v7117 = vpop.f32.mrb[0].mxu0
        %v7118 = vadd.f32 0.0, %v7117
        %v7119 = vpop.f32.mrb[0].mxu0
        %7120 = vmatprep.mubr.bf16.mxu0 0
        %7121 = vmatmul.mubr.bf16.gmra.mrb[0].mxu0 %v6774
        %v7122 = vpop.f32.mrb[0].mxu0
        %v7123 = vadd.f32 0.0, %v7122
        %v7124 = vpop.f32.mrb[0].mxu0
        %v7125 = vpop.f32.mrb[0].mxu0
        %v7126 = vadd.f32 0.0, %v7125
        %v7127 = vpop.f32.mrb[0].mxu0
        %7128 = vmatprep.mubr.bf16.mxu0 0
        %7129 = vmatmul.mubr.bf16.gmra.mrb[0].mxu0 %v6777
        %v7130 = vpop.f32.mrb[0].mxu0
        %v7131 = vadd.f32 0.0, %v7130
        %v7132 = vpop.f32.mrb[0].mxu0
        %v7133 = vpop.f32.mrb[0].mxu0
        %v7134 = vadd.f32 0.0, %v7133
        %v7135 = vpop.f32.mrb[0].mxu0
        %7136 = vmatprep.mubr.bf16.mxu0 0
        %7137 = vmatmul.mubr.bf16.gmra.mrb[0].mxu0 %v6780
        %v7138 = vpop.f32.mrb[0].mxu0
        %v7139 = vadd.f32 0.0, %v7138
        %v7140 = vpop.f32.mrb[0].mxu0
        %v7141 = vpop.f32.mrb[0].mxu0
        %v7142 = vadd.f32 0.0, %v7141
        %v7143 = vpop.f32.mrb[0].mxu0
        %7144 = vmatprep.mubr.bf16.mxu0 0
        %7145 = vmatmul.mubr.bf16.gmra.mrb[0].mxu0 %v6783
        %v7146 = vpop.f32.mrb[0].mxu0
        %v7147 = vadd.f32 0.0, %v7146
        %v7148 = vpop.f32.mrb[0].mxu0
        %v7149 = vpop.f32.mrb[0].mxu0
        %v7150 = vadd.f32 0.0, %v7149
        %v7151 = vpop.f32.mrb[0].mxu0
        %7152 = vmatprep.mubr.bf16.mxu0 0
        %7153 = vmatmul.mubr.bf16.gmra.mrb[0].mxu0 %v6786
        %v7154 = vpop.f32.mrb[0].mxu0
        %v7155 = vadd.f32 0.0, %v7154
        %v7156 = vpop.f32.mrb[0].mxu0
        %v7157 = vpop.f32.mrb[0].mxu0
        %v7158 = vadd.f32 0.0, %v7157
        %v7159 = vpop.f32.mrb[0].mxu0
        %7160 = vmatprep.mubr.bf16.mxu0 0
        %7161 = vmatmul.mubr.bf16.gmra.mrb[0].mxu0 %v6789
        %v7162 = vpop.f32.mrb[0].mxu0
        %v7163 = vadd.f32 0.0, %v7162
        %v7164 = vpop.f32.mrb[0].mxu0
        %v7165 = vpop.f32.mrb[0].mxu0
        %v7166 = vadd.f32 0.0, %v7165
        %v7167 = vpop.f32.mrb[0].mxu0
        %7168 = vmatprep.mubr.bf16.mxu0 0
        %7169 = vmatmul.mubr.bf16.gmra.mrb[0].mxu0 %v6792
        %v7170 = vpop.f32.mrb[0].mxu0
        %v7171 = vadd.f32 0.0, %v7170
        %v7172 = vpop.f32.mrb[0].mxu0
        %v7173 = vpop.f32.mrb[0].mxu0
        %v7174 = vadd.f32 0.0, %v7173
        %v7175 = vpop.f32.mrb[0].mxu0
        %7176 = vmatprep.mubr.bf16.mxu0 0
        %7177 = vmatmul.mubr.bf16.gmra.mrb[0].mxu0 %v6795
        %v7178 = vpop.f32.mrb[0].mxu0
        %v7179 = vadd.f32 0.0, %v7178
        %v7180 = vpop.f32.mrb[0].mxu0
        %v7181 = vpop.f32.mrb[0].mxu0
        %v7182 = vadd.f32 0.0, %v7181
        %v7183 = vpop.f32.mrb[0].mxu0
        %7184 = vmatprep.mubr.bf16.mxu0 0
        %7185 = vmatmul.mubr.bf16.gmra.mrb[0].mxu0 %v6798
        %v7186 = vpop.f32.mrb[0].mxu0
        %v7187 = vadd.f32 0.0, %v7186
        %v7188 = vpop.f32.mrb[0].mxu0
        %v7189 = vpop.f32.mrb[0].mxu0
        %v7190 = vadd.f32 0.0, %v7189
        %v7191 = vpop.f32.mrb[0].mxu0
        %7192 = vmatprep.mubr.bf16.mxu0 0
        %7193 = vmatmul.mubr.bf16.gmra.mrb[0].mxu0 %v6801
        %v7194 = vpop.f32.mrb[0].mxu0
        %v7195 = vadd.f32 0.0, %v7194
        %v7196 = vpop.f32.mrb[0].mxu0
        %v7197 = vpop.f32.mrb[0].mxu0
        %v7198 = vadd.f32 0.0, %v7197
        %v7199 = vpop.f32.mrb[0].mxu0
        %7200 = vmatprep.mubr.bf16.mxu0 0
        %7201 = vmatmul.mubr.bf16.gmra.mrb[0].mxu0 %v6804
        %v7202 = vpop.f32.mrb[0].mxu0
        %v7203 = vadd.f32 0.0, %v7202
        %v7204 = vpop.f32.mrb[0].mxu0
        %v7205 = vpop.f32.mrb[0].mxu0
        %v7206 = vadd.f32 0.0, %v7205
        %v7207 = vpop.f32.mrb[0].mxu0
        %7208 = vmatprep.mubr.bf16.mxu0 0
        %7209 = vmatmul.mubr.bf16.gmra.mrb[0].mxu0 %v6807
        %v7210 = vpop.f32.mrb[0].mxu0
        %v7211 = vadd.f32 0.0, %v7210
        %v7212 = vpop.f32.mrb[0].mxu0
        %v7213 = vpop.f32.mrb[0].mxu0
        %v7214 = vadd.f32 0.0, %v7213
        %v7215 = vpop.f32.mrb[0].mxu0
        %7216 = vmatprep.mubr.bf16.mxu0 0
        %7217 = vmatmul.mubr.bf16.gmra.mrb[0].mxu0 %v6810
        %v7218 = vpop.f32.mrb[0].mxu0
        %v7219 = vadd.f32 0.0, %v7218
        %v7220 = vpop.f32.mrb[0].mxu0
        %v7221 = vpop.f32.mrb[0].mxu0
        %v7222 = vadd.f32 0.0, %v7221
        %v7223 = vpop.f32.mrb[0].mxu0
        %7224 = vmatprep.mubr.bf16.mxu0 0
        %7225 = vmatmul.mubr.bf16.gmra.mrb[0].mxu0 %v6813
        %v7226 = vpop.f32.mrb[0].mxu0
        %v7227 = vadd.f32 0.0, %v7226
        %v7228 = vpop.f32.mrb[0].mxu0
        %v7229 = vpop.f32.mrb[0].mxu0
        %v7230 = vadd.f32 0.0, %v7229
        %v7231 = vpop.f32.mrb[0].mxu0
        %7232 = vmatprep.mubr.bf16.mxu0 0
        %7233 = vmatmul.mubr.bf16.gmra.mrb[0].mxu0 %v6816
        %v7234 = vpop.f32.mrb[0].mxu0
        %v7235 = vadd.f32 0.0, %v7234
        %v7236 = vpop.f32.mrb[0].mxu0
        %v7237 = vpop.f32.mrb[0].mxu0
        %v7238 = vadd.f32 0.0, %v7237
        %v7239 = vpop.f32.mrb[0].mxu0
        %7240 = vmatprep.mubr.bf16.mxu0 0
        %7241 = vmatmul.mubr.bf16.gmra.mrb[0].mxu0 %v6819
        %v7242 = vpop.f32.mrb[0].mxu0
        %v7243 = vadd.f32 0.0, %v7242
        %v7244 = vpop.f32.mrb[0].mxu0
        %v7245 = vpop.f32.mrb[0].mxu0
        %v7246 = vadd.f32 0.0, %v7245
        %v7247 = vpop.f32.mrb[0].mxu0
        %7248 = vmatprep.mubr.bf16.mxu0 0
        %7249 = vmatmul.mubr.bf16.gmra.mrb[0].mxu0 %v6822
        %v7250 = vpop.f32.mrb[0].mxu0
        %v7251 = vadd.f32 0.0, %v7250
        %v7252 = vpop.f32.mrb[0].mxu0
        %v7253 = vpop.f32.mrb[0].mxu0
        %v7254 = vadd.f32 0.0, %v7253
        %v7255 = vpop.f32.mrb[0].mxu0
        %7256 = vmatprep.mubr.bf16.mxu0 0
        %7257 = vmatmul.mubr.bf16.gmra.mrb[0].mxu0 %v6825
        %v7258 = vpop.f32.mrb[0].mxu0
        %v7259 = vadd.f32 0.0, %v7258
        %v7260 = vpop.f32.mrb[0].mxu0
        %v7261 = vpop.f32.mrb[0].mxu0
        %v7262 = vadd.f32 0.0, %v7261
        %v7263 = vpop.f32.mrb[0].mxu0
        %7264 = vmatprep.mubr.bf16.mxu0 0
        %7265 = vmatmul.mubr.bf16.gmra.mrb[0].mxu0 %v6828
        %v7266 = vpop.f32.mrb[0].mxu0
        %v7267 = vadd.f32 0.0, %v7266
        %v7268 = vpop.f32.mrb[0].mxu0
        %v7269 = vpop.f32.mrb[0].mxu0
        %v7270 = vadd.f32 0.0, %v7269
        %v7271 = vpop.f32.mrb[0].mxu0
        %7272 = vmatprep.mubr.bf16.mxu0 0
        %7273 = vmatmul.mubr.bf16.gmra.mrb[0].mxu0 %v6831
        %v7274 = vpop.f32.mrb[0].mxu0
        %v7275 = vadd.f32 0.0, %v7274
        %v7276 = vpop.f32.mrb[0].mxu0
        %v7277 = vpop.f32.mrb[0].mxu0
        %v7278 = vadd.f32 0.0, %v7277
        %v7279 = vpop.f32.mrb[0].mxu0
        %7280 = vmatprep.mubr.bf16.mxu0 0
        %7281 = vmatmul.mubr.bf16.gmra.mrb[0].mxu0 %v6834
        %v7282 = vpop.f32.mrb[0].mxu0
        %v7283 = vadd.f32 0.0, %v7282
        %v7284 = vpop.f32.mrb[0].mxu0
        %v7285 = vpop.f32.mrb[0].mxu0
        %v7286 = vadd.f32 0.0, %v7285
        %v7287 = vpop.f32.mrb[0].mxu0
        %7288 = vmatprep.mubr.bf16.mxu0 0
        %7289 = vmatmul.mubr.bf16.gmra.mrb[0].mxu0 %v6837
        %v7290 = vpop.f32.mrb[0].mxu0
        %v7291 = vadd.f32 0.0, %v7290
        %v7292 = vpop.f32.mrb[0].mxu0
        %v7293 = vpop.f32.mrb[0].mxu0
        %v7294 = vadd.f32 0.0, %v7293
        %v7295 = vpop.f32.mrb[0].mxu0
        %7296 = vmatprep.mubr.bf16.mxu0 0
        %7297 = vmatmul.mubr.bf16.gmra.mrb[0].mxu0 %v6840
        %v7298 = vpop.f32.mrb[0].mxu0
        %v7299 = vadd.f32 0.0, %v7298
        %v7300 = vpop.f32.mrb[0].mxu0
        %v7301 = vpop.f32.mrb[0].mxu0
        %v7302 = vadd.f32 0.0, %v7301
        %v7303 = vpop.f32.mrb[0].mxu0
        %7304 = vmatprep.mubr.bf16.mxu0 0
        %7305 = vmatmul.mubr.bf16.gmra.mrb[0].mxu0 %v6843
        %v7306 = vpop.f32.mrb[0].mxu0
        %v7307 = vadd.f32 0.0, %v7306
        %v7308 = vpop.f32.mrb[0].mxu0
        %v7309 = vpop.f32.mrb[0].mxu0
        %v7310 = vadd.f32 0.0, %v7309
        %v7311 = vpop.f32.mrb[0].mxu0
        %7312 = vmatprep.mubr.bf16.mxu0 0
        %7313 = vmatmul.mubr.bf16.gmra.mrb[0].mxu0 %v6846
        %v7314 = vpop.f32.mrb[0].mxu0
        %v7315 = vadd.f32 0.0, %v7314
        %v7316 = vpop.f32.mrb[0].mxu0
        %v7317 = vpop.f32.mrb[0].mxu0
        %v7318 = vadd.f32 0.0, %v7317
        %v7319 = vpop.f32.mrb[0].mxu0
        %7320 = vmatprep.mubr.bf16.mxu0 0
        %7321 = vmatmul.mubr.bf16.gmra.mrb[0].mxu0 %v6849
        %v7322 = vpop.f32.mrb[0].mxu0
        %v7323 = vadd.f32 0.0, %v7322
        %v7324 = vpop.f32.mrb[0].mxu0
        %v7325 = vpop.f32.mrb[0].mxu0
        %v7326 = vadd.f32 0.0, %v7325
        %v7327 = vpop.f32.mrb[0].mxu0
        %7328 = vmatprep.mubr.bf16.mxu0 0
        %7329 = vmatmul.mubr.bf16.gmra.mrb[0].mxu0 %v6852
        %v7330 = vpop.f32.mrb[0].mxu0
        %v7331 = vadd.f32 0.0, %v7330
        %v7332 = vpop.f32.mrb[0].mxu0
        %v7333 = vpop.f32.mrb[0].mxu0
        %v7334 = vadd.f32 0.0, %v7333
        %v7335 = vpop.f32.mrb[0].mxu0
        %7336 = vmatprep.mubr.bf16.mxu0 0
        %7337 = vmatmul.mubr.bf16.gmra.mrb[0].mxu0 %v6855
        %v7338 = vpop.f32.mrb[0].mxu0
        %v7339 = vadd.f32 0.0, %v7338
        %v7340 = vpop.f32.mrb[0].mxu0
        %v7341 = vpop.f32.mrb[0].mxu0
        %v7342 = vadd.f32 0.0, %v7341
        %v7343 = vpop.f32.mrb[0].mxu0
        %7344 = vmatprep.mubr.bf16.mxu0 0
        %7345 = vmatmul.mubr.bf16.gmra.mrb[0].mxu0 %v6858
        %v7346 = vpop.f32.mrb[0].mxu0
        %v7347 = vadd.f32 0.0, %v7346
        %v7348 = vpop.f32.mrb[0].mxu0
        %v7349 = vpop.f32.mrb[0].mxu0
        %v7350 = vadd.f32 0.0, %v7349
        %v7351 = vpop.f32.mrb[0].mxu0
        %7352 = vmatprep.mubr.bf16.mxu0 0
        %7353 = vmatmul.mubr.bf16.gmra.mrb[0].mxu0 %v6861
        %v7354 = vpop.f32.mrb[0].mxu0
        %v7355 = vadd.f32 0.0, %v7354
        %v7356 = vpop.f32.mrb[0].mxu0
        %v7357 = vpop.f32.mrb[0].mxu0
        %v7358 = vadd.f32 0.0, %v7357
        %v7359 = vpop.f32.mrb[0].mxu0
        %7360 = vmatprep.mubr.bf16.mxu0 0
        %7361 = vmatmul.mubr.bf16.gmra.mrb[0].mxu0 %v6864
        %v7362 = vpop.f32.mrb[0].mxu0
        %v7363 = vadd.f32 0.0, %v7362
        %v7364 = vpop.f32.mrb[0].mxu0
        %v7365 = vpop.f32.mrb[0].mxu0
        %v7366 = vadd.f32 0.0, %v7365
        %v7367 = vpop.f32.mrb[0].mxu0
        %7368 = vmatprep.mubr.bf16.mxu0 0
        %7369 = vmatmul.mubr.bf16.gmra.mrb[0].mxu0 %v6867
        %v7370 = vpop.f32.mrb[0].mxu0
        %v7371 = vadd.f32 0.0, %v7370
        %v7372 = vpop.f32.mrb[0].mxu0
        %v7373 = vpop.f32.mrb[0].mxu0
        %v7374 = vadd.f32 0.0, %v7373
        %v7375 = vpop.f32.mrb[0].mxu0
        %7376 = vmatprep.mubr.bf16.mxu0 0
        %7377 = vmatmul.mubr.bf16.gmra.mrb[0].mxu0 %v6870
        %v7378 = vpop.f32.mrb[0].mxu0
        %v7379 = vadd.f32 0.0, %v7378
        %v7380 = vpop.f32.mrb[0].mxu0
        %v7381 = vpop.f32.mrb[0].mxu0
        %v7382 = vadd.f32 0.0, %v7381
        %v7383 = vpop.f32.mrb[0].mxu0
        %7384 = vmatprep.mubr.bf16.mxu0 0
        %7385 = vmatmul.mubr.bf16.gmra.mrb[0].mxu0 %v6873
        %v7386 = vpop.f32.mrb[0].mxu0
        %v7387 = vadd.f32 0.0, %v7386
        %v7388 = vpop.f32.mrb[0].mxu0
        %v7389 = vpop.f32.mrb[0].mxu0
        %v7390 = vadd.f32 0.0, %v7389
        %v7391 = vpop.f32.mrb[0].mxu0
        %7392 = vmatprep.mubr.bf16.mxu0 0
        %7393 = vmatmul.mubr.bf16.gmra.mrb[0].mxu0 %v6876
        %v7394 = vpop.f32.mrb[0].mxu0
        %v7395 = vadd.f32 0.0, %v7394
        %v7396 = vpop.f32.mrb[0].mxu0
        %v7397 = vpop.f32.mrb[0].mxu0
        %v7398 = vadd.f32 0.0, %v7397
        %v7399 = vpop.f32.mrb[0].mxu0
        %7400 = vmatprep.mubr.bf16.mxu0 0
        %7401 = vmatmul.mubr.bf16.gmra.mrb[0].mxu0 %v6879
        %v7402 = vpop.f32.mrb[0].mxu0
        %v7403 = vadd.f32 0.0, %v7402
        %v7404 = vpop.f32.mrb[0].mxu0
        %v7405 = vpop.f32.mrb[0].mxu0
        %v7406 = vadd.f32 0.0, %v7405
        %v7407 = vpop.f32.mrb[0].mxu0
        %7408 = vmatprep.mubr.bf16.mxu0 0
        %7409 = vmatmul.mubr.bf16.gmra.mrb[0].mxu0 %v6882
        %v7410 = vpop.f32.mrb[0].mxu0
        %v7411 = vadd.f32 0.0, %v7410
        %v7412 = vpop.f32.mrb[0].mxu0
        %v7413 = vpop.f32.mrb[0].mxu0
        %v7414 = vadd.f32 0.0, %v7413
        %v7415 = vpop.f32.mrb[0].mxu0
        %7416 = vmatprep.mubr.bf16.mxu0 0
        %7417 = vmatmul.mubr.bf16.gmra.mrb[0].mxu0 %v6885
        %v7418 = vpop.f32.mrb[0].mxu0
        %v7419 = vadd.f32 0.0, %v7418
        %v7420 = vpop.f32.mrb[0].mxu0
        %v7421 = vpop.f32.mrb[0].mxu0
        %v7422 = vadd.f32 0.0, %v7421
        %v7423 = vpop.f32.mrb[0].mxu0
        %7424 = vmatprep.mubr.bf16.mxu0 0
        %7425 = vmatmul.mubr.bf16.gmra.mrb[0].mxu0 %v6888
        %v7426 = vpop.f32.mrb[0].mxu0
        %v7427 = vadd.f32 0.0, %v7426
        %v7428 = vpop.f32.mrb[0].mxu0
        %v7429 = vpop.f32.mrb[0].mxu0
        %v7430 = vadd.f32 0.0, %v7429
        %v7431 = vpop.f32.mrb[0].mxu0
        %7432 = vmatprep.mubr.bf16.mxu0 0
        %7433 = vmatmul.mubr.bf16.gmra.mrb[0].mxu0 %v6891
        %v7434 = vpop.f32.mrb[0].mxu0
        %v7435 = vadd.f32 0.0, %v7434
        %v7436 = vpop.f32.mrb[0].mxu0
        %v7437 = vpop.f32.mrb[0].mxu0
        %v7438 = vadd.f32 0.0, %v7437
        %v7439 = vpop.f32.mrb[0].mxu0
        %7440 = vdwg.mxu0
        %v7441 = vadd.f32 %v6378, %v6931
        %v7442 = vadd.f32 %v6379, %v6934
        %v7443 = vadd.f32 %v6380, %v6939
        %v7444 = vadd.f32 %v6381, %v6942
        %v7445 = vadd.f32 %v6382, %v6947
        %v7446 = vadd.f32 %v6383, %v6950
        %v7447 = vadd.f32 %v6384, %v6955
        %v7448 = vadd.f32 %v6385, %v6958
        %v7449 = vadd.f32 %v6386, %v6963
        %v7450 = vadd.f32 %v6387, %v6966
        %v7451 = vadd.f32 %v6388, %v6971
        %v7452 = vadd.f32 %v6389, %v6974
        %v7453 = vadd.f32 %v6390, %v6979
        %v7454 = vadd.f32 %v6391, %v6982
        %v7455 = vadd.f32 %v6392, %v6987
        %v7456 = vadd.f32 %v6393, %v6990
        %v7457 = vadd.f32 %v6394, %v6995
        %v7458 = vadd.f32 %v6395, %v6998
        %v7459 = vadd.f32 %v6396, %v7003
        %v7460 = vadd.f32 %v6397, %v7006
        %v7461 = vadd.f32 %v6398, %v7011
        %v7462 = vadd.f32 %v6399, %v7014
        %v7463 = vadd.f32 %v6400, %v7019
        %v7464 = vadd.f32 %v6401, %v7022
        %v7465 = vadd.f32 %v6402, %v7027
        %v7466 = vadd.f32 %v6403, %v7030
        %v7467 = vadd.f32 %v6404, %v7035
        %v7468 = vadd.f32 %v6405, %v7038
        %v7469 = vadd.f32 %v6406, %v7043
        %v7470 = vadd.f32 %v6407, %v7046
        %v7471 = vadd.f32 %v6408, %v7051
        %v7472 = vadd.f32 %v6409, %v7054
        %v7473 = vadd.f32 %v6410, %v7059
        %v7474 = vadd.f32 %v6411, %v7062
        %v7475 = vadd.f32 %v6412, %v7067
        %v7476 = vadd.f32 %v6413, %v7070
        %v7477 = vadd.f32 %v6414, %v7075
        %v7478 = vadd.f32 %v6415, %v7078
        %v7479 = vadd.f32 %v6416, %v7083
        %v7480 = vadd.f32 %v6417, %v7086
        %v7481 = vadd.f32 %v6418, %v7091
        %v7482 = vadd.f32 %v6419, %v7094
        %v7483 = vadd.f32 %v6420, %v7099
        %v7484 = vadd.f32 %v6421, %v7102
        %v7485 = vadd.f32 %v6422, %v7107
        %v7486 = vadd.f32 %v6423, %v7110
        %v7487 = vadd.f32 %v6424, %v7115
        %v7488 = vadd.f32 %v6425, %v7118
        %v7489 = vadd.f32 %v6426, %v7123
        %v7490 = vadd.f32 %v6427, %v7126
        %v7491 = vadd.f32 %v6428, %v7131
        %v7492 = vadd.f32 %v6429, %v7134
        %v7493 = vadd.f32 %v6430, %v7139
        %v7494 = vadd.f32 %v6431, %v7142
        %v7495 = vadd.f32 %v6432, %v7147
        %v7496 = vadd.f32 %v6433, %v7150
        %v7497 = vadd.f32 %v6434, %v7155
        %v7498 = vadd.f32 %v6435, %v7158
        %v7499 = vadd.f32 %v6436, %v7163
        %v7500 = vadd.f32 %v6437, %v7166
        %v7501 = vadd.f32 %v6438, %v7171
        %v7502 = vadd.f32 %v6439, %v7174
        %v7503 = vadd.f32 %v6440, %v7179
        %v7504 = vadd.f32 %v6441, %v7182
        %v7505 = vadd.f32 %v6442, %v7187
        %v7506 = vadd.f32 %v6443, %v7190
        %v7507 = vadd.f32 %v6444, %v7195
        %v7508 = vadd.f32 %v6445, %v7198
        %v7509 = vadd.f32 %v6446, %v7203
        %v7510 = vadd.f32 %v6447, %v7206
        %v7511 = vadd.f32 %v6448, %v7211
        %v7512 = vadd.f32 %v6449, %v7214
        %v7513 = vadd.f32 %v6450, %v7219
        %v7514 = vadd.f32 %v6451, %v7222
        %v7515 = vadd.f32 %v6452, %v7227
        %v7516 = vadd.f32 %v6453, %v7230
        %v7517 = vadd.f32 %v6454, %v7235
        %v7518 = vadd.f32 %v6455, %v7238
        %v7519 = vadd.f32 %v6456, %v7243
        %v7520 = vadd.f32 %v6457, %v7246
        %v7521 = vadd.f32 %v6458, %v7251
        %v7522 = vadd.f32 %v6459, %v7254
        %v7523 = vadd.f32 %v6460, %v7259
        %v7524 = vadd.f32 %v6461, %v7262
        %v7525 = vadd.f32 %v6462, %v7267
        %v7526 = vadd.f32 %v6463, %v7270
        %v7527 = vadd.f32 %v6464, %v7275
        %v7528 = vadd.f32 %v6465, %v7278
        %v7529 = vadd.f32 %v6466, %v7283
        %v7530 = vadd.f32 %v6467, %v7286
        %v7531 = vadd.f32 %v6468, %v7291
        %v7532 = vadd.f32 %v6469, %v7294
        %v7533 = vadd.f32 %v6470, %v7299
        %v7534 = vadd.f32 %v6471, %v7302
        %v7535 = vadd.f32 %v6472, %v7307
        %v7536 = vadd.f32 %v6473, %v7310
        %v7537 = vadd.f32 %v6474, %v7315
        %v7538 = vadd.f32 %v6475, %v7318
        %v7539 = vadd.f32 %v6476, %v7323
        %v7540 = vadd.f32 %v6477, %v7326
        %v7541 = vadd.f32 %v6478, %v7331
        %v7542 = vadd.f32 %v6479, %v7334
        %v7543 = vadd.f32 %v6480, %v7339
        %v7544 = vadd.f32 %v6481, %v7342
        %v7545 = vadd.f32 %v6482, %v7347
        %v7546 = vadd.f32 %v6483, %v7350
        %v7547 = vadd.f32 %v6484, %v7355
        %v7548 = vadd.f32 %v6485, %v7358
        %v7549 = vadd.f32 %v6486, %v7363
        %v7550 = vadd.f32 %v6487, %v7366
        %v7551 = vadd.f32 %v6488, %v7371
        %v7552 = vadd.f32 %v6489, %v7374
        %v7553 = vadd.f32 %v6490, %v7379
        %v7554 = vadd.f32 %v6491, %v7382
        %v7555 = vadd.f32 %v6492, %v7387
        %v7556 = vadd.f32 %v6493, %v7390
        %v7557 = vadd.f32 %v6494, %v7395
        %v7558 = vadd.f32 %v6495, %v7398
        %v7559 = vadd.f32 %v6496, %v7403
        %v7560 = vadd.f32 %v6497, %v7406
        %v7561 = vadd.f32 %v6498, %v7411
        %v7562 = vadd.f32 %v6499, %v7414
        %v7563 = vadd.f32 %v6500, %v7419
        %v7564 = vadd.f32 %v6501, %v7422
        %v7565 = vadd.f32 %v6502, %v7427
        %v7566 = vadd.f32 %v6503, %v7430
        %v7567 = vadd.f32 %v6504, %v7435
        %v7568 = vadd.f32 %v6505, %v7438
        %v7569 = vld [vmem:[%s6506 + $0x1] sm:$0xff]
        %v7570 = vld [vmem:[%s6506 + $0x9] sm:$0xff]
        %v7571 = vld [vmem:[%s6506 + $0x11] sm:$0xff]
        %v7572 = vld [vmem:[%s6506 + $0x19] sm:$0xff]
        %v7573 = vld [vmem:[%s6506 + $0x29] sm:$0xff]
        %v7574 = vld [vmem:[%s6506 + $0x31] sm:$0xff]
        %v7575 = vld [vmem:[%s6506 + $0x39] sm:$0xff]
        %v7576 = vld [vmem:[%s6506 + $0x41] sm:$0xff]
        %v7577 = vld [vmem:[%s6506 + $0x51] sm:$0xff]
        %v7578 = vld [vmem:[%s6506 + $0x59] sm:$0xff]
        %v7579 = vld [vmem:[%s6506 + $0x61] sm:$0xff]
        %v7580 = vld [vmem:[%s6506 + $0x69] sm:$0xff]
        %v7581 = vld [vmem:[%s6506 + $0x79] sm:$0xff]
        %v7582 = vld [vmem:[%s6506 + $0x81] sm:$0xff]
        %v7583 = vld [vmem:[%s6506 + $0x89] sm:$0xff]
        %v7584 = vld [vmem:[%s6506 + $0x91] sm:$0xff]
        %v7585 = vld [vmem:[%s6506 + $0xa1] sm:$0xff]
        %v7586 = vld [vmem:[%s6506 + $0xa9] sm:$0xff]
        %v7587 = vld [vmem:[%s6506 + $0xb1] sm:$0xff]
        %v7588 = vld [vmem:[%s6506 + $0xb9] sm:$0xff]
        %v7589 = vld [vmem:[%s6506 + $0xc9] sm:$0xff]
        %v7590 = vld [vmem:[%s6506 + $0xd1] sm:$0xff]
        %v7591 = vld [vmem:[%s6506 + $0xd9] sm:$0xff]
        %v7592 = vld [vmem:[%s6506 + $0xe1] sm:$0xff]
        %v7593 = vld [vmem:[%s6506 + $0xf1] sm:$0xff]
        %v7594 = vld [vmem:[%s6506 + $0xf9] sm:$0xff]
        %v7595 = vld [vmem:[%s6506 + $0x101] sm:$0xff]
        %v7596 = vld [vmem:[%s6506 + $0x109] sm:$0xff]
        %v7597 = vld [vmem:[%s6506 + $0x119] sm:$0xff]
        %v7598 = vld [vmem:[%s6506 + $0x121] sm:$0xff]
        %v7599 = vld [vmem:[%s6506 + $0x129] sm:$0xff]
        %v7600 = vld [vmem:[%s6506 + $0x131] sm:$0xff]
        %v7601 = vld [vmem:[%s6506 + $0x141] sm:$0xff]
        %v7602 = vld [vmem:[%s6506 + $0x149] sm:$0xff]
        %v7603 = vld [vmem:[%s6506 + $0x151] sm:$0xff]
        %v7604 = vld [vmem:[%s6506 + $0x159] sm:$0xff]
        %v7605 = vld [vmem:[%s6506 + $0x169] sm:$0xff]
        %v7606 = vld [vmem:[%s6506 + $0x171] sm:$0xff]
        %v7607 = vld [vmem:[%s6506 + $0x179] sm:$0xff]
        %v7608 = vld [vmem:[%s6506 + $0x181] sm:$0xff]
        %v7609 = vld [vmem:[%s6506 + $0x191] sm:$0xff]
        %v7610 = vld [vmem:[%s6506 + $0x199] sm:$0xff]
        %v7611 = vld [vmem:[%s6506 + $0x1a1] sm:$0xff]
        %v7612 = vld [vmem:[%s6506 + $0x1a9] sm:$0xff]
        %v7613 = vld [vmem:[%s6506 + $0x1b9] sm:$0xff]
        %v7614 = vld [vmem:[%s6506 + $0x1c1] sm:$0xff]
        %v7615 = vld [vmem:[%s6506 + $0x1c9] sm:$0xff]
        %v7616 = vld [vmem:[%s6506 + $0x1d1] sm:$0xff]
        %v7617 = vld [vmem:[%s6506 + $0x1e1] sm:$0xff]
        %v7618 = vld [vmem:[%s6506 + $0x1e9] sm:$0xff]
        %v7619 = vld [vmem:[%s6506 + $0x1f1] sm:$0xff]
        %v7620 = vld [vmem:[%s6506 + $0x1f9] sm:$0xff]
        %v7621 = vld [vmem:[%s6506 + $0x209] sm:$0xff]
        %v7622 = vld [vmem:[%s6506 + $0x211] sm:$0xff]
        %v7623 = vld [vmem:[%s6506 + $0x219] sm:$0xff]
        %v7624 = vld [vmem:[%s6506 + $0x221] sm:$0xff]
        %v7625 = vld [vmem:[%s6506 + $0x231] sm:$0xff]
        %v7626 = vld [vmem:[%s6506 + $0x239] sm:$0xff]
        %v7627 = vld [vmem:[%s6506 + $0x241] sm:$0xff]
        %v7628 = vld [vmem:[%s6506 + $0x249] sm:$0xff]
        %v7629 = vld [vmem:[%s6506 + $0x259] sm:$0xff]
        %v7630 = vld [vmem:[%s6506 + $0x261] sm:$0xff]
        %v7631 = vld [vmem:[%s6506 + $0x269] sm:$0xff]
        %v7632 = vld [vmem:[%s6506 + $0x271] sm:$0xff]
        %v7633 = vld [vmem:[%s6506 + $0x281] sm:$0xff]
        %v7634 = vld [vmem:[%s6506 + $0x289] sm:$0xff]
        %v7635 = vld [vmem:[%s6506 + $0x291] sm:$0xff]
        %v7636 = vld [vmem:[%s6506 + $0x299] sm:$0xff]
        %v7637 = vld [vmem:[%s6506 + $0x2a9] sm:$0xff]
        %v7638 = vld [vmem:[%s6506 + $0x2b1] sm:$0xff]
        %v7639 = vld [vmem:[%s6506 + $0x2b9] sm:$0xff]
        %v7640 = vld [vmem:[%s6506 + $0x2c1] sm:$0xff]
        %v7641 = vld [vmem:[%s6506 + $0x2d1] sm:$0xff]
        %v7642 = vld [vmem:[%s6506 + $0x2d9] sm:$0xff]
        %v7643 = vld [vmem:[%s6506 + $0x2e1] sm:$0xff]
        %v7644 = vld [vmem:[%s6506 + $0x2e9] sm:$0xff]
        %v7645 = vld [vmem:[%s6506 + $0x2f9] sm:$0xff]
        %v7646 = vld [vmem:[%s6506 + $0x301] sm:$0xff]
        %v7647 = vld [vmem:[%s6506 + $0x309] sm:$0xff]
        %v7648 = vld [vmem:[%s6506 + $0x311] sm:$0xff]
        %v7649 = vld [vmem:[%s6506 + $0x321] sm:$0xff]
        %v7650 = vld [vmem:[%s6506 + $0x329] sm:$0xff]
        %v7651 = vld [vmem:[%s6506 + $0x331] sm:$0xff]
        %v7652 = vld [vmem:[%s6506 + $0x339] sm:$0xff]
        %v7653 = vld [vmem:[%s6506 + $0x349] sm:$0xff]
        %v7654 = vld [vmem:[%s6506 + $0x351] sm:$0xff]
        %v7655 = vld [vmem:[%s6506 + $0x359] sm:$0xff]
        %v7656 = vld [vmem:[%s6506 + $0x361] sm:$0xff]
        %v7657 = vld [vmem:[%s6506 + $0x371] sm:$0xff]
        %v7658 = vld [vmem:[%s6506 + $0x379] sm:$0xff]
        %v7659 = vld [vmem:[%s6506 + $0x381] sm:$0xff]
        %v7660 = vld [vmem:[%s6506 + $0x389] sm:$0xff]
        %v7661 = vld [vmem:[%s6506 + $0x399] sm:$0xff]
        %v7662 = vld [vmem:[%s6506 + $0x3a1] sm:$0xff]
        %v7663 = vld [vmem:[%s6506 + $0x3a9] sm:$0xff]
        %v7664 = vld [vmem:[%s6506 + $0x3b1] sm:$0xff]
        %v7665 = vld [vmem:[%s6506 + $0x3c1] sm:$0xff]
        %v7666 = vld [vmem:[%s6506 + $0x3c9] sm:$0xff]
        %v7667 = vld [vmem:[%s6506 + $0x3d1] sm:$0xff]
        %v7668 = vld [vmem:[%s6506 + $0x3d9] sm:$0xff]
        %v7669 = vld [vmem:[%s6506 + $0x3e9] sm:$0xff]
        %v7670 = vld [vmem:[%s6506 + $0x3f1] sm:$0xff]
        %v7671 = vld [vmem:[%s6506 + $0x3f9] sm:$0xff]
        %v7672 = vld [vmem:[%s6506 + $0x401] sm:$0xff]
        %v7673 = vld [vmem:[%s6506 + $0x411] sm:$0xff]
        %v7674 = vld [vmem:[%s6506 + $0x419] sm:$0xff]
        %v7675 = vld [vmem:[%s6506 + $0x421] sm:$0xff]
        %v7676 = vld [vmem:[%s6506 + $0x429] sm:$0xff]
        %v7677 = vld [vmem:[%s6506 + $0x439] sm:$0xff]
        %v7678 = vld [vmem:[%s6506 + $0x441] sm:$0xff]
        %v7679 = vld [vmem:[%s6506 + $0x449] sm:$0xff]
        %v7680 = vld [vmem:[%s6506 + $0x451] sm:$0xff]
        %v7681 = vld [vmem:[%s6506 + $0x461] sm:$0xff]
        %v7682 = vld [vmem:[%s6506 + $0x469] sm:$0xff]
        %v7683 = vld [vmem:[%s6506 + $0x471] sm:$0xff]
        %v7684 = vld [vmem:[%s6506 + $0x479] sm:$0xff]
        %v7685 = vld [vmem:[%s6506 + $0x489] sm:$0xff]
        %v7686 = vld [vmem:[%s6506 + $0x491] sm:$0xff]
        %v7687 = vld [vmem:[%s6506 + $0x499] sm:$0xff]
        %v7688 = vld [vmem:[%s6506 + $0x4a1] sm:$0xff]
        %v7689 = vld [vmem:[%s6506 + $0x4b1] sm:$0xff]
        %v7690 = vld [vmem:[%s6506 + $0x4b9] sm:$0xff]
        %v7691 = vld [vmem:[%s6506 + $0x4c1] sm:$0xff]
        %v7692 = vld [vmem:[%s6506 + $0x4c9] sm:$0xff]
        %v7693 = vld [vmem:[%s6506 + $0x4d9] sm:$0xff]
        %v7694 = vld [vmem:[%s6506 + $0x4e1] sm:$0xff]
        %v7695 = vld [vmem:[%s6506 + $0x4e9] sm:$0xff]
        %v7696 = vld [vmem:[%s6506 + $0x4f1] sm:$0xff]
        %v7697 = vpack.c.bf16 %v7570, %v7569
        %v7698 = vpack.c.bf16 %v7572, %v7571
        %v7699 = vpack.c.bf16 %v7574, %v7573
        %v7700 = vpack.c.bf16 %v7576, %v7575
        %v7701 = vpack.c.bf16 %v7578, %v7577
        %v7702 = vpack.c.bf16 %v7580, %v7579
        %v7703 = vpack.c.bf16 %v7582, %v7581
        %v7704 = vpack.c.bf16 %v7584, %v7583
        %v7705 = vpack.c.bf16 %v7586, %v7585
        %v7706 = vpack.c.bf16 %v7588, %v7587
        %v7707 = vpack.c.bf16 %v7590, %v7589
        %v7708 = vpack.c.bf16 %v7592, %v7591
        %v7709 = vpack.c.bf16 %v7594, %v7593
        %v7710 = vpack.c.bf16 %v7596, %v7595
        %v7711 = vpack.c.bf16 %v7598, %v7597
        %v7712 = vpack.c.bf16 %v7600, %v7599
        %v7713 = vpack.c.bf16 %v7602, %v7601
        %v7714 = vpack.c.bf16 %v7604, %v7603
        %v7715 = vpack.c.bf16 %v7606, %v7605
        %v7716 = vpack.c.bf16 %v7608, %v7607
        %v7717 = vpack.c.bf16 %v7610, %v7609
        %v7718 = vpack.c.bf16 %v7612, %v7611
        %v7719 = vpack.c.bf16 %v7614, %v7613
        %v7720 = vpack.c.bf16 %v7616, %v7615
        %v7721 = vpack.c.bf16 %v7618, %v7617
        %v7722 = vpack.c.bf16 %v7620, %v7619
        %v7723 = vpack.c.bf16 %v7622, %v7621
        %v7724 = vpack.c.bf16 %v7624, %v7623
        %v7725 = vpack.c.bf16 %v7626, %v7625
        %v7726 = vpack.c.bf16 %v7628, %v7627
        %v7727 = vpack.c.bf16 %v7630, %v7629
        %v7728 = vpack.c.bf16 %v7632, %v7631
        %v7729 = vpack.c.bf16 %v7634, %v7633
        %v7730 = vpack.c.bf16 %v7636, %v7635
        %v7731 = vpack.c.bf16 %v7638, %v7637
        %v7732 = vpack.c.bf16 %v7640, %v7639
        %v7733 = vpack.c.bf16 %v7642, %v7641
        %v7734 = vpack.c.bf16 %v7644, %v7643
        %v7735 = vpack.c.bf16 %v7646, %v7645
        %v7736 = vpack.c.bf16 %v7648, %v7647
        %v7737 = vpack.c.bf16 %v7650, %v7649
        %v7738 = vpack.c.bf16 %v7652, %v7651
        %v7739 = vpack.c.bf16 %v7654, %v7653
        %v7740 = vpack.c.bf16 %v7656, %v7655
        %v7741 = vpack.c.bf16 %v7658, %v7657
        %v7742 = vpack.c.bf16 %v7660, %v7659
        %v7743 = vpack.c.bf16 %v7662, %v7661
        %v7744 = vpack.c.bf16 %v7664, %v7663
        %v7745 = vpack.c.bf16 %v7666, %v7665
        %v7746 = vpack.c.bf16 %v7668, %v7667
        %v7747 = vpack.c.bf16 %v7670, %v7669
        %v7748 = vpack.c.bf16 %v7672, %v7671
        %v7749 = vpack.c.bf16 %v7674, %v7673
        %v7750 = vpack.c.bf16 %v7676, %v7675
        %v7751 = vpack.c.bf16 %v7678, %v7677
        %v7752 = vpack.c.bf16 %v7680, %v7679
        %v7753 = vpack.c.bf16 %v7682, %v7681
        %v7754 = vpack.c.bf16 %v7684, %v7683
        %v7755 = vpack.c.bf16 %v7686, %v7685
        %v7756 = vpack.c.bf16 %v7688, %v7687
        %v7757 = vpack.c.bf16 %v7690, %v7689
        %v7758 = vpack.c.bf16 %v7692, %v7691
        %v7759 = vpack.c.bf16 %v7694, %v7693
        %v7760 = vpack.c.bf16 %v7696, %v7695
        %s7761 = scalar_lea.vmem %s1, 14
        %v7762 = vld [vmem:[%s7761] sm:$0x3]
        %v7764 = vsel %vm772, %v7697, 0
        %v7767 = vsel %vm772, %v7698, 0
        %v7770 = vsel %vm772, %v7699, 0
        %v7773 = vsel %vm772, %v7700, 0
        %v7776 = vsel %vm772, %v7701, 0
        %v7779 = vsel %vm772, %v7702, 0
        %v7782 = vsel %vm772, %v7703, 0
        %v7785 = vsel %vm772, %v7704, 0
        %v7788 = vsel %vm772, %v7705, 0
        %v7791 = vsel %vm772, %v7706, 0
        %v7794 = vsel %vm772, %v7707, 0
        %v7797 = vsel %vm772, %v7708, 0
        %v7800 = vsel %vm772, %v7709, 0
        %v7803 = vsel %vm772, %v7710, 0
        %v7806 = vsel %vm772, %v7711, 0
        %v7809 = vsel %vm772, %v7712, 0
        %v7812 = vsel %vm772, %v7713, 0
        %v7815 = vsel %vm772, %v7714, 0
        %v7818 = vsel %vm772, %v7715, 0
        %v7821 = vsel %vm772, %v7716, 0
        %v7824 = vsel %vm772, %v7717, 0
        %v7827 = vsel %vm772, %v7718, 0
        %v7830 = vsel %vm772, %v7719, 0
        %v7833 = vsel %vm772, %v7720, 0
        %v7836 = vsel %vm772, %v7721, 0
        %v7839 = vsel %vm772, %v7722, 0
        %v7842 = vsel %vm772, %v7723, 0
        %v7845 = vsel %vm772, %v7724, 0
        %v7848 = vsel %vm772, %v7725, 0
        %v7851 = vsel %vm772, %v7726, 0
        %v7854 = vsel %vm772, %v7727, 0
        %v7857 = vsel %vm772, %v7728, 0
        %v7860 = vsel %vm772, %v7729, 0
        %v7863 = vsel %vm772, %v7730, 0
        %v7866 = vsel %vm772, %v7731, 0
        %v7869 = vsel %vm772, %v7732, 0
        %v7872 = vsel %vm772, %v7733, 0
        %v7875 = vsel %vm772, %v7734, 0
        %v7878 = vsel %vm772, %v7735, 0
        %v7881 = vsel %vm772, %v7736, 0
        %v7884 = vsel %vm772, %v7737, 0
        %v7887 = vsel %vm772, %v7738, 0
        %v7890 = vsel %vm772, %v7739, 0
        %v7893 = vsel %vm772, %v7740, 0
        %v7896 = vsel %vm772, %v7741, 0
        %v7899 = vsel %vm772, %v7742, 0
        %v7902 = vsel %vm772, %v7743, 0
        %v7905 = vsel %vm772, %v7744, 0
        %v7908 = vsel %vm772, %v7745, 0
        %v7911 = vsel %vm772, %v7746, 0
        %v7914 = vsel %vm772, %v7747, 0
        %v7917 = vsel %vm772, %v7748, 0
        %v7920 = vsel %vm772, %v7749, 0
        %v7923 = vsel %vm772, %v7750, 0
        %v7926 = vsel %vm772, %v7751, 0
        %v7929 = vsel %vm772, %v7752, 0
        %v7932 = vsel %vm772, %v7753, 0
        %v7935 = vsel %vm772, %v7754, 0
        %v7938 = vsel %vm772, %v7755, 0
        %v7941 = vsel %vm772, %v7756, 0
        %v7944 = vsel %vm772, %v7757, 0
        %v7947 = vsel %vm772, %v7758, 0
        %v7950 = vsel %vm772, %v7759, 0
        %v7953 = vsel %vm772, %v7760, 0
        %v7956 = vand.u32 %v7762, %v968
        %7958 = vmatprep.subr.bf16.mxu0 0
        %7959 = vmatpush1.bf16.msra.mxu0 %v7956
        %7960 = vmatprep.subr.bf16.mxu0 0
        %7961 = vmatpush1.bf16.msra.mxu0 0
        %7962 = vmatprep.subr.bf16.mxu0 0
        %7963 = vmatpush1.bf16.msra.mxu0 0
        %7964 = vmatprep.subr.bf16.mxu0 0
        %7965 = vmatpush1.bf16.msra.mxu0 0
        %7966 = vmatprep.subr.bf16.mxu0 0
        %7967 = vmatpush1.bf16.msra.mxu0 0
        %7968 = vmatprep.subr.bf16.mxu0 0
        %7969 = vmatpush1.bf16.msra.mxu0 0
        %7970 = vmatprep.subr.bf16.mxu0 0
        %7971 = vmatpush1.bf16.msra.mxu0 0
        %7972 = vmatprep.subr.bf16.mxu0 0
        %7973 = vmatpush1.bf16.msra.mxu0 0
        %7974 = vmatprep.subr.bf16.mxu0 0
        %7975 = vmatpush1.bf16.msra.mxu0 0
        %7976 = vmatprep.subr.bf16.mxu0 0
        %7977 = vmatpush1.bf16.msra.mxu0 0
        %7978 = vmatprep.subr.bf16.mxu0 0
        %7979 = vmatpush1.bf16.msra.mxu0 0
        %7980 = vmatprep.subr.bf16.mxu0 0
        %7981 = vmatpush1.bf16.msra.mxu0 0
        %7982 = vmatprep.subr.bf16.mxu0 0
        %7983 = vmatpush1.bf16.msra.mxu0 0
        %7984 = vmatprep.subr.bf16.mxu0 0
        %7985 = vmatpush1.bf16.msra.mxu0 0
        %7986 = vmatprep.subr.bf16.mxu0 0
        %7987 = vmatpush1.bf16.msra.mxu0 0
        %7988 = vmatprep.subr.bf16.mxu0 0
        %7989 = vmatpush1.bf16.msra.mxu0 0
        %7990 = vmatprep.mubr.bf16.mxu0 0
        %7991 = vmatmul.mubr.bf16.gmra.mrb[0].mxu0 %v7764
        %v7992 = vpop.f32.mrb[0].mxu0
        %v7993 = vadd.f32 0.0, %v7992
        %v7994 = vpop.f32.mrb[0].mxu0
        %v7995 = vpop.f32.mrb[0].mxu0
        %v7996 = vadd.f32 0.0, %v7995
        %v7997 = vpop.f32.mrb[0].mxu0
        %7998 = vmatprep.mubr.bf16.mxu0 0
        %7999 = vmatmul.mubr.bf16.gmra.mrb[0].mxu0 %v7767
        %v8000 = vpop.f32.mrb[0].mxu0
        %v8001 = vadd.f32 0.0, %v8000
        %v8002 = vpop.f32.mrb[0].mxu0
        %v8003 = vpop.f32.mrb[0].mxu0
        %v8004 = vadd.f32 0.0, %v8003
        %v8005 = vpop.f32.mrb[0].mxu0
        %8006 = vmatprep.mubr.bf16.mxu0 0
        %8007 = vmatmul.mubr.bf16.gmra.mrb[0].mxu0 %v7770
        %v8008 = vpop.f32.mrb[0].mxu0
        %v8009 = vadd.f32 0.0, %v8008
        %v8010 = vpop.f32.mrb[0].mxu0
        %v8011 = vpop.f32.mrb[0].mxu0
        %v8012 = vadd.f32 0.0, %v8011
        %v8013 = vpop.f32.mrb[0].mxu0
        %8014 = vmatprep.mubr.bf16.mxu0 0
        %8015 = vmatmul.mubr.bf16.gmra.mrb[0].mxu0 %v7773
        %v8016 = vpop.f32.mrb[0].mxu0
        %v8017 = vadd.f32 0.0, %v8016
        %v8018 = vpop.f32.mrb[0].mxu0
        %v8019 = vpop.f32.mrb[0].mxu0
        %v8020 = vadd.f32 0.0, %v8019
        %v8021 = vpop.f32.mrb[0].mxu0
        %8022 = vmatprep.mubr.bf16.mxu0 0
        %8023 = vmatmul.mubr.bf16.gmra.mrb[0].mxu0 %v7776
        %v8024 = vpop.f32.mrb[0].mxu0
        %v8025 = vadd.f32 0.0, %v8024
        %v8026 = vpop.f32.mrb[0].mxu0
        %v8027 = vpop.f32.mrb[0].mxu0
        %v8028 = vadd.f32 0.0, %v8027
        %v8029 = vpop.f32.mrb[0].mxu0
        %8030 = vmatprep.mubr.bf16.mxu0 0
        %8031 = vmatmul.mubr.bf16.gmra.mrb[0].mxu0 %v7779
        %v8032 = vpop.f32.mrb[0].mxu0
        %v8033 = vadd.f32 0.0, %v8032
        %v8034 = vpop.f32.mrb[0].mxu0
        %v8035 = vpop.f32.mrb[0].mxu0
        %v8036 = vadd.f32 0.0, %v8035
        %v8037 = vpop.f32.mrb[0].mxu0
        %8038 = vmatprep.mubr.bf16.mxu0 0
        %8039 = vmatmul.mubr.bf16.gmra.mrb[0].mxu0 %v7782
        %v8040 = vpop.f32.mrb[0].mxu0
        %v8041 = vadd.f32 0.0, %v8040
        %v8042 = vpop.f32.mrb[0].mxu0
        %v8043 = vpop.f32.mrb[0].mxu0
        %v8044 = vadd.f32 0.0, %v8043
        %v8045 = vpop.f32.mrb[0].mxu0
        %8046 = vmatprep.mubr.bf16.mxu0 0
        %8047 = vmatmul.mubr.bf16.gmra.mrb[0].mxu0 %v7785
        %v8048 = vpop.f32.mrb[0].mxu0
        %v8049 = vadd.f32 0.0, %v8048
        %v8050 = vpop.f32.mrb[0].mxu0
        %v8051 = vpop.f32.mrb[0].mxu0
        %v8052 = vadd.f32 0.0, %v8051
        %v8053 = vpop.f32.mrb[0].mxu0
        %8054 = vmatprep.mubr.bf16.mxu0 0
        %8055 = vmatmul.mubr.bf16.gmra.mrb[0].mxu0 %v7788
        %v8056 = vpop.f32.mrb[0].mxu0
        %v8057 = vadd.f32 0.0, %v8056
        %v8058 = vpop.f32.mrb[0].mxu0
        %v8059 = vpop.f32.mrb[0].mxu0
        %v8060 = vadd.f32 0.0, %v8059
        %v8061 = vpop.f32.mrb[0].mxu0
        %8062 = vmatprep.mubr.bf16.mxu0 0
        %8063 = vmatmul.mubr.bf16.gmra.mrb[0].mxu0 %v7791
        %v8064 = vpop.f32.mrb[0].mxu0
        %v8065 = vadd.f32 0.0, %v8064
        %v8066 = vpop.f32.mrb[0].mxu0
        %v8067 = vpop.f32.mrb[0].mxu0
        %v8068 = vadd.f32 0.0, %v8067
        %v8069 = vpop.f32.mrb[0].mxu0
        %8070 = vmatprep.mubr.bf16.mxu0 0
        %8071 = vmatmul.mubr.bf16.gmra.mrb[0].mxu0 %v7794
        %v8072 = vpop.f32.mrb[0].mxu0
        %v8073 = vadd.f32 0.0, %v8072
        %v8074 = vpop.f32.mrb[0].mxu0
        %v8075 = vpop.f32.mrb[0].mxu0
        %v8076 = vadd.f32 0.0, %v8075
        %v8077 = vpop.f32.mrb[0].mxu0
        %8078 = vmatprep.mubr.bf16.mxu0 0
        %8079 = vmatmul.mubr.bf16.gmra.mrb[0].mxu0 %v7797
        %v8080 = vpop.f32.mrb[0].mxu0
        %v8081 = vadd.f32 0.0, %v8080
        %v8082 = vpop.f32.mrb[0].mxu0
        %v8083 = vpop.f32.mrb[0].mxu0
        %v8084 = vadd.f32 0.0, %v8083
        %v8085 = vpop.f32.mrb[0].mxu0
        %8086 = vmatprep.mubr.bf16.mxu0 0
        %8087 = vmatmul.mubr.bf16.gmra.mrb[0].mxu0 %v7800
        %v8088 = vpop.f32.mrb[0].mxu0
        %v8089 = vadd.f32 0.0, %v8088
        %v8090 = vpop.f32.mrb[0].mxu0
        %v8091 = vpop.f32.mrb[0].mxu0
        %v8092 = vadd.f32 0.0, %v8091
        %v8093 = vpop.f32.mrb[0].mxu0
        %8094 = vmatprep.mubr.bf16.mxu0 0
        %8095 = vmatmul.mubr.bf16.gmra.mrb[0].mxu0 %v7803
        %v8096 = vpop.f32.mrb[0].mxu0
        %v8097 = vadd.f32 0.0, %v8096
        %v8098 = vpop.f32.mrb[0].mxu0
        %v8099 = vpop.f32.mrb[0].mxu0
        %v8100 = vadd.f32 0.0, %v8099
        %v8101 = vpop.f32.mrb[0].mxu0
        %8102 = vmatprep.mubr.bf16.mxu0 0
        %8103 = vmatmul.mubr.bf16.gmra.mrb[0].mxu0 %v7806
        %v8104 = vpop.f32.mrb[0].mxu0
        %v8105 = vadd.f32 0.0, %v8104
        %v8106 = vpop.f32.mrb[0].mxu0
        %v8107 = vpop.f32.mrb[0].mxu0
        %v8108 = vadd.f32 0.0, %v8107
        %v8109 = vpop.f32.mrb[0].mxu0
        %8110 = vmatprep.mubr.bf16.mxu0 0
        %8111 = vmatmul.mubr.bf16.gmra.mrb[0].mxu0 %v7809
        %v8112 = vpop.f32.mrb[0].mxu0
        %v8113 = vadd.f32 0.0, %v8112
        %v8114 = vpop.f32.mrb[0].mxu0
        %v8115 = vpop.f32.mrb[0].mxu0
        %v8116 = vadd.f32 0.0, %v8115
        %v8117 = vpop.f32.mrb[0].mxu0
        %8118 = vmatprep.mubr.bf16.mxu0 0
        %8119 = vmatmul.mubr.bf16.gmra.mrb[0].mxu0 %v7812
        %v8120 = vpop.f32.mrb[0].mxu0
        %v8121 = vadd.f32 0.0, %v8120
        %v8122 = vpop.f32.mrb[0].mxu0
        %v8123 = vpop.f32.mrb[0].mxu0
        %v8124 = vadd.f32 0.0, %v8123
        %v8125 = vpop.f32.mrb[0].mxu0
        %8126 = vmatprep.mubr.bf16.mxu0 0
        %8127 = vmatmul.mubr.bf16.gmra.mrb[0].mxu0 %v7815
        %v8128 = vpop.f32.mrb[0].mxu0
        %v8129 = vadd.f32 0.0, %v8128
        %v8130 = vpop.f32.mrb[0].mxu0
        %v8131 = vpop.f32.mrb[0].mxu0
        %v8132 = vadd.f32 0.0, %v8131
        %v8133 = vpop.f32.mrb[0].mxu0
        %8134 = vmatprep.mubr.bf16.mxu0 0
        %8135 = vmatmul.mubr.bf16.gmra.mrb[0].mxu0 %v7818
        %v8136 = vpop.f32.mrb[0].mxu0
        %v8137 = vadd.f32 0.0, %v8136
        %v8138 = vpop.f32.mrb[0].mxu0
        %v8139 = vpop.f32.mrb[0].mxu0
        %v8140 = vadd.f32 0.0, %v8139
        %v8141 = vpop.f32.mrb[0].mxu0
        %8142 = vmatprep.mubr.bf16.mxu0 0
        %8143 = vmatmul.mubr.bf16.gmra.mrb[0].mxu0 %v7821
        %v8144 = vpop.f32.mrb[0].mxu0
        %v8145 = vadd.f32 0.0, %v8144
        %v8146 = vpop.f32.mrb[0].mxu0
        %v8147 = vpop.f32.mrb[0].mxu0
        %v8148 = vadd.f32 0.0, %v8147
        %v8149 = vpop.f32.mrb[0].mxu0
        %8150 = vmatprep.mubr.bf16.mxu0 0
        %8151 = vmatmul.mubr.bf16.gmra.mrb[0].mxu0 %v7824
        %v8152 = vpop.f32.mrb[0].mxu0
        %v8153 = vadd.f32 0.0, %v8152
        %v8154 = vpop.f32.mrb[0].mxu0
        %v8155 = vpop.f32.mrb[0].mxu0
        %v8156 = vadd.f32 0.0, %v8155
        %v8157 = vpop.f32.mrb[0].mxu0
        %8158 = vmatprep.mubr.bf16.mxu0 0
        %8159 = vmatmul.mubr.bf16.gmra.mrb[0].mxu0 %v7827
        %v8160 = vpop.f32.mrb[0].mxu0
        %v8161 = vadd.f32 0.0, %v8160
        %v8162 = vpop.f32.mrb[0].mxu0
        %v8163 = vpop.f32.mrb[0].mxu0
        %v8164 = vadd.f32 0.0, %v8163
        %v8165 = vpop.f32.mrb[0].mxu0
        %8166 = vmatprep.mubr.bf16.mxu0 0
        %8167 = vmatmul.mubr.bf16.gmra.mrb[0].mxu0 %v7830
        %v8168 = vpop.f32.mrb[0].mxu0
        %v8169 = vadd.f32 0.0, %v8168
        %v8170 = vpop.f32.mrb[0].mxu0
        %v8171 = vpop.f32.mrb[0].mxu0
        %v8172 = vadd.f32 0.0, %v8171
        %v8173 = vpop.f32.mrb[0].mxu0
        %8174 = vmatprep.mubr.bf16.mxu0 0
        %8175 = vmatmul.mubr.bf16.gmra.mrb[0].mxu0 %v7833
        %v8176 = vpop.f32.mrb[0].mxu0
        %v8177 = vadd.f32 0.0, %v8176
        %v8178 = vpop.f32.mrb[0].mxu0
        %v8179 = vpop.f32.mrb[0].mxu0
        %v8180 = vadd.f32 0.0, %v8179
        %v8181 = vpop.f32.mrb[0].mxu0
        %8182 = vmatprep.mubr.bf16.mxu0 0
        %8183 = vmatmul.mubr.bf16.gmra.mrb[0].mxu0 %v7836
        %v8184 = vpop.f32.mrb[0].mxu0
        %v8185 = vadd.f32 0.0, %v8184
        %v8186 = vpop.f32.mrb[0].mxu0
        %v8187 = vpop.f32.mrb[0].mxu0
        %v8188 = vadd.f32 0.0, %v8187
        %v8189 = vpop.f32.mrb[0].mxu0
        %8190 = vmatprep.mubr.bf16.mxu0 0
        %8191 = vmatmul.mubr.bf16.gmra.mrb[0].mxu0 %v7839
        %v8192 = vpop.f32.mrb[0].mxu0
        %v8193 = vadd.f32 0.0, %v8192
        %v8194 = vpop.f32.mrb[0].mxu0
        %v8195 = vpop.f32.mrb[0].mxu0
        %v8196 = vadd.f32 0.0, %v8195
        %v8197 = vpop.f32.mrb[0].mxu0
        %8198 = vmatprep.mubr.bf16.mxu0 0
        %8199 = vmatmul.mubr.bf16.gmra.mrb[0].mxu0 %v7842
        %v8200 = vpop.f32.mrb[0].mxu0
        %v8201 = vadd.f32 0.0, %v8200
        %v8202 = vpop.f32.mrb[0].mxu0
        %v8203 = vpop.f32.mrb[0].mxu0
        %v8204 = vadd.f32 0.0, %v8203
        %v8205 = vpop.f32.mrb[0].mxu0
        %8206 = vmatprep.mubr.bf16.mxu0 0
        %8207 = vmatmul.mubr.bf16.gmra.mrb[0].mxu0 %v7845
        %v8208 = vpop.f32.mrb[0].mxu0
        %v8209 = vadd.f32 0.0, %v8208
        %v8210 = vpop.f32.mrb[0].mxu0
        %v8211 = vpop.f32.mrb[0].mxu0
        %v8212 = vadd.f32 0.0, %v8211
        %v8213 = vpop.f32.mrb[0].mxu0
        %8214 = vmatprep.mubr.bf16.mxu0 0
        %8215 = vmatmul.mubr.bf16.gmra.mrb[0].mxu0 %v7848
        %v8216 = vpop.f32.mrb[0].mxu0
        %v8217 = vadd.f32 0.0, %v8216
        %v8218 = vpop.f32.mrb[0].mxu0
        %v8219 = vpop.f32.mrb[0].mxu0
        %v8220 = vadd.f32 0.0, %v8219
        %v8221 = vpop.f32.mrb[0].mxu0
        %8222 = vmatprep.mubr.bf16.mxu0 0
        %8223 = vmatmul.mubr.bf16.gmra.mrb[0].mxu0 %v7851
        %v8224 = vpop.f32.mrb[0].mxu0
        %v8225 = vadd.f32 0.0, %v8224
        %v8226 = vpop.f32.mrb[0].mxu0
        %v8227 = vpop.f32.mrb[0].mxu0
        %v8228 = vadd.f32 0.0, %v8227
        %v8229 = vpop.f32.mrb[0].mxu0
        %8230 = vmatprep.mubr.bf16.mxu0 0
        %8231 = vmatmul.mubr.bf16.gmra.mrb[0].mxu0 %v7854
        %v8232 = vpop.f32.mrb[0].mxu0
        %v8233 = vadd.f32 0.0, %v8232
        %v8234 = vpop.f32.mrb[0].mxu0
        %v8235 = vpop.f32.mrb[0].mxu0
        %v8236 = vadd.f32 0.0, %v8235
        %v8237 = vpop.f32.mrb[0].mxu0
        %8238 = vmatprep.mubr.bf16.mxu0 0
        %8239 = vmatmul.mubr.bf16.gmra.mrb[0].mxu0 %v7857
        %v8240 = vpop.f32.mrb[0].mxu0
        %v8241 = vadd.f32 0.0, %v8240
        %v8242 = vpop.f32.mrb[0].mxu0
        %v8243 = vpop.f32.mrb[0].mxu0
        %v8244 = vadd.f32 0.0, %v8243
        %v8245 = vpop.f32.mrb[0].mxu0
        %8246 = vmatprep.mubr.bf16.mxu0 0
        %8247 = vmatmul.mubr.bf16.gmra.mrb[0].mxu0 %v7860
        %v8248 = vpop.f32.mrb[0].mxu0
        %v8249 = vadd.f32 0.0, %v8248
        %v8250 = vpop.f32.mrb[0].mxu0
        %v8251 = vpop.f32.mrb[0].mxu0
        %v8252 = vadd.f32 0.0, %v8251
        %v8253 = vpop.f32.mrb[0].mxu0
        %8254 = vmatprep.mubr.bf16.mxu0 0
        %8255 = vmatmul.mubr.bf16.gmra.mrb[0].mxu0 %v7863
        %v8256 = vpop.f32.mrb[0].mxu0
        %v8257 = vadd.f32 0.0, %v8256
        %v8258 = vpop.f32.mrb[0].mxu0
        %v8259 = vpop.f32.mrb[0].mxu0
        %v8260 = vadd.f32 0.0, %v8259
        %v8261 = vpop.f32.mrb[0].mxu0
        %8262 = vmatprep.mubr.bf16.mxu0 0
        %8263 = vmatmul.mubr.bf16.gmra.mrb[0].mxu0 %v7866
        %v8264 = vpop.f32.mrb[0].mxu0
        %v8265 = vadd.f32 0.0, %v8264
        %v8266 = vpop.f32.mrb[0].mxu0
        %v8267 = vpop.f32.mrb[0].mxu0
        %v8268 = vadd.f32 0.0, %v8267
        %v8269 = vpop.f32.mrb[0].mxu0
        %8270 = vmatprep.mubr.bf16.mxu0 0
        %8271 = vmatmul.mubr.bf16.gmra.mrb[0].mxu0 %v7869
        %v8272 = vpop.f32.mrb[0].mxu0
        %v8273 = vadd.f32 0.0, %v8272
        %v8274 = vpop.f32.mrb[0].mxu0
        %v8275 = vpop.f32.mrb[0].mxu0
        %v8276 = vadd.f32 0.0, %v8275
        %v8277 = vpop.f32.mrb[0].mxu0
        %8278 = vmatprep.mubr.bf16.mxu0 0
        %8279 = vmatmul.mubr.bf16.gmra.mrb[0].mxu0 %v7872
        %v8280 = vpop.f32.mrb[0].mxu0
        %v8281 = vadd.f32 0.0, %v8280
        %v8282 = vpop.f32.mrb[0].mxu0
        %v8283 = vpop.f32.mrb[0].mxu0
        %v8284 = vadd.f32 0.0, %v8283
        %v8285 = vpop.f32.mrb[0].mxu0
        %8286 = vmatprep.mubr.bf16.mxu0 0
        %8287 = vmatmul.mubr.bf16.gmra.mrb[0].mxu0 %v7875
        %v8288 = vpop.f32.mrb[0].mxu0
        %v8289 = vadd.f32 0.0, %v8288
        %v8290 = vpop.f32.mrb[0].mxu0
        %v8291 = vpop.f32.mrb[0].mxu0
        %v8292 = vadd.f32 0.0, %v8291
        %v8293 = vpop.f32.mrb[0].mxu0
        %8294 = vmatprep.mubr.bf16.mxu0 0
        %8295 = vmatmul.mubr.bf16.gmra.mrb[0].mxu0 %v7878
        %v8296 = vpop.f32.mrb[0].mxu0
        %v8297 = vadd.f32 0.0, %v8296
        %v8298 = vpop.f32.mrb[0].mxu0
        %v8299 = vpop.f32.mrb[0].mxu0
        %v8300 = vadd.f32 0.0, %v8299
        %v8301 = vpop.f32.mrb[0].mxu0
        %8302 = vmatprep.mubr.bf16.mxu0 0
        %8303 = vmatmul.mubr.bf16.gmra.mrb[0].mxu0 %v7881
        %v8304 = vpop.f32.mrb[0].mxu0
        %v8305 = vadd.f32 0.0, %v8304
        %v8306 = vpop.f32.mrb[0].mxu0
        %v8307 = vpop.f32.mrb[0].mxu0
        %v8308 = vadd.f32 0.0, %v8307
        %v8309 = vpop.f32.mrb[0].mxu0
        %8310 = vmatprep.mubr.bf16.mxu0 0
        %8311 = vmatmul.mubr.bf16.gmra.mrb[0].mxu0 %v7884
        %v8312 = vpop.f32.mrb[0].mxu0
        %v8313 = vadd.f32 0.0, %v8312
        %v8314 = vpop.f32.mrb[0].mxu0
        %v8315 = vpop.f32.mrb[0].mxu0
        %v8316 = vadd.f32 0.0, %v8315
        %v8317 = vpop.f32.mrb[0].mxu0
        %8318 = vmatprep.mubr.bf16.mxu0 0
        %8319 = vmatmul.mubr.bf16.gmra.mrb[0].mxu0 %v7887
        %v8320 = vpop.f32.mrb[0].mxu0
        %v8321 = vadd.f32 0.0, %v8320
        %v8322 = vpop.f32.mrb[0].mxu0
        %v8323 = vpop.f32.mrb[0].mxu0
        %v8324 = vadd.f32 0.0, %v8323
        %v8325 = vpop.f32.mrb[0].mxu0
        %8326 = vmatprep.mubr.bf16.mxu0 0
        %8327 = vmatmul.mubr.bf16.gmra.mrb[0].mxu0 %v7890
        %v8328 = vpop.f32.mrb[0].mxu0
        %v8329 = vadd.f32 0.0, %v8328
        %v8330 = vpop.f32.mrb[0].mxu0
        %v8331 = vpop.f32.mrb[0].mxu0
        %v8332 = vadd.f32 0.0, %v8331
        %v8333 = vpop.f32.mrb[0].mxu0
        %8334 = vmatprep.mubr.bf16.mxu0 0
        %8335 = vmatmul.mubr.bf16.gmra.mrb[0].mxu0 %v7893
        %v8336 = vpop.f32.mrb[0].mxu0
        %v8337 = vadd.f32 0.0, %v8336
        %v8338 = vpop.f32.mrb[0].mxu0
        %v8339 = vpop.f32.mrb[0].mxu0
        %v8340 = vadd.f32 0.0, %v8339
        %v8341 = vpop.f32.mrb[0].mxu0
        %8342 = vmatprep.mubr.bf16.mxu0 0
        %8343 = vmatmul.mubr.bf16.gmra.mrb[0].mxu0 %v7896
        %v8344 = vpop.f32.mrb[0].mxu0
        %v8345 = vadd.f32 0.0, %v8344
        %v8346 = vpop.f32.mrb[0].mxu0
        %v8347 = vpop.f32.mrb[0].mxu0
        %v8348 = vadd.f32 0.0, %v8347
        %v8349 = vpop.f32.mrb[0].mxu0
        %8350 = vmatprep.mubr.bf16.mxu0 0
        %8351 = vmatmul.mubr.bf16.gmra.mrb[0].mxu0 %v7899
        %v8352 = vpop.f32.mrb[0].mxu0
        %v8353 = vadd.f32 0.0, %v8352
        %v8354 = vpop.f32.mrb[0].mxu0
        %v8355 = vpop.f32.mrb[0].mxu0
        %v8356 = vadd.f32 0.0, %v8355
        %v8357 = vpop.f32.mrb[0].mxu0
        %8358 = vmatprep.mubr.bf16.mxu0 0
        %8359 = vmatmul.mubr.bf16.gmra.mrb[0].mxu0 %v7902
        %v8360 = vpop.f32.mrb[0].mxu0
        %v8361 = vadd.f32 0.0, %v8360
        %v8362 = vpop.f32.mrb[0].mxu0
        %v8363 = vpop.f32.mrb[0].mxu0
        %v8364 = vadd.f32 0.0, %v8363
        %v8365 = vpop.f32.mrb[0].mxu0
        %8366 = vmatprep.mubr.bf16.mxu0 0
        %8367 = vmatmul.mubr.bf16.gmra.mrb[0].mxu0 %v7905
        %v8368 = vpop.f32.mrb[0].mxu0
        %v8369 = vadd.f32 0.0, %v8368
        %v8370 = vpop.f32.mrb[0].mxu0
        %v8371 = vpop.f32.mrb[0].mxu0
        %v8372 = vadd.f32 0.0, %v8371
        %v8373 = vpop.f32.mrb[0].mxu0
        %8374 = vmatprep.mubr.bf16.mxu0 0
        %8375 = vmatmul.mubr.bf16.gmra.mrb[0].mxu0 %v7908
        %v8376 = vpop.f32.mrb[0].mxu0
        %v8377 = vadd.f32 0.0, %v8376
        %v8378 = vpop.f32.mrb[0].mxu0
        %v8379 = vpop.f32.mrb[0].mxu0
        %v8380 = vadd.f32 0.0, %v8379
        %v8381 = vpop.f32.mrb[0].mxu0
        %8382 = vmatprep.mubr.bf16.mxu0 0
        %8383 = vmatmul.mubr.bf16.gmra.mrb[0].mxu0 %v7911
        %v8384 = vpop.f32.mrb[0].mxu0
        %v8385 = vadd.f32 0.0, %v8384
        %v8386 = vpop.f32.mrb[0].mxu0
        %v8387 = vpop.f32.mrb[0].mxu0
        %v8388 = vadd.f32 0.0, %v8387
        %v8389 = vpop.f32.mrb[0].mxu0
        %8390 = vmatprep.mubr.bf16.mxu0 0
        %8391 = vmatmul.mubr.bf16.gmra.mrb[0].mxu0 %v7914
        %v8392 = vpop.f32.mrb[0].mxu0
        %v8393 = vadd.f32 0.0, %v8392
        %v8394 = vpop.f32.mrb[0].mxu0
        %v8395 = vpop.f32.mrb[0].mxu0
        %v8396 = vadd.f32 0.0, %v8395
        %v8397 = vpop.f32.mrb[0].mxu0
        %8398 = vmatprep.mubr.bf16.mxu0 0
        %8399 = vmatmul.mubr.bf16.gmra.mrb[0].mxu0 %v7917
        %v8400 = vpop.f32.mrb[0].mxu0
        %v8401 = vadd.f32 0.0, %v8400
        %v8402 = vpop.f32.mrb[0].mxu0
        %v8403 = vpop.f32.mrb[0].mxu0
        %v8404 = vadd.f32 0.0, %v8403
        %v8405 = vpop.f32.mrb[0].mxu0
        %8406 = vmatprep.mubr.bf16.mxu0 0
        %8407 = vmatmul.mubr.bf16.gmra.mrb[0].mxu0 %v7920
        %v8408 = vpop.f32.mrb[0].mxu0
        %v8409 = vadd.f32 0.0, %v8408
        %v8410 = vpop.f32.mrb[0].mxu0
        %v8411 = vpop.f32.mrb[0].mxu0
        %v8412 = vadd.f32 0.0, %v8411
        %v8413 = vpop.f32.mrb[0].mxu0
        %8414 = vmatprep.mubr.bf16.mxu0 0
        %8415 = vmatmul.mubr.bf16.gmra.mrb[0].mxu0 %v7923
        %v8416 = vpop.f32.mrb[0].mxu0
        %v8417 = vadd.f32 0.0, %v8416
        %v8418 = vpop.f32.mrb[0].mxu0
        %v8419 = vpop.f32.mrb[0].mxu0
        %v8420 = vadd.f32 0.0, %v8419
        %v8421 = vpop.f32.mrb[0].mxu0
        %8422 = vmatprep.mubr.bf16.mxu0 0
        %8423 = vmatmul.mubr.bf16.gmra.mrb[0].mxu0 %v7926
        %v8424 = vpop.f32.mrb[0].mxu0
        %v8425 = vadd.f32 0.0, %v8424
        %v8426 = vpop.f32.mrb[0].mxu0
        %v8427 = vpop.f32.mrb[0].mxu0
        %v8428 = vadd.f32 0.0, %v8427
        %v8429 = vpop.f32.mrb[0].mxu0
        %8430 = vmatprep.mubr.bf16.mxu0 0
        %8431 = vmatmul.mubr.bf16.gmra.mrb[0].mxu0 %v7929
        %v8432 = vpop.f32.mrb[0].mxu0
        %v8433 = vadd.f32 0.0, %v8432
        %v8434 = vpop.f32.mrb[0].mxu0
        %v8435 = vpop.f32.mrb[0].mxu0
        %v8436 = vadd.f32 0.0, %v8435
        %v8437 = vpop.f32.mrb[0].mxu0
        %8438 = vmatprep.mubr.bf16.mxu0 0
        %8439 = vmatmul.mubr.bf16.gmra.mrb[0].mxu0 %v7932
        %v8440 = vpop.f32.mrb[0].mxu0
        %v8441 = vadd.f32 0.0, %v8440
        %v8442 = vpop.f32.mrb[0].mxu0
        %v8443 = vpop.f32.mrb[0].mxu0
        %v8444 = vadd.f32 0.0, %v8443
        %v8445 = vpop.f32.mrb[0].mxu0
        %8446 = vmatprep.mubr.bf16.mxu0 0
        %8447 = vmatmul.mubr.bf16.gmra.mrb[0].mxu0 %v7935
        %v8448 = vpop.f32.mrb[0].mxu0
        %v8449 = vadd.f32 0.0, %v8448
        %v8450 = vpop.f32.mrb[0].mxu0
        %v8451 = vpop.f32.mrb[0].mxu0
        %v8452 = vadd.f32 0.0, %v8451
        %v8453 = vpop.f32.mrb[0].mxu0
        %8454 = vmatprep.mubr.bf16.mxu0 0
        %8455 = vmatmul.mubr.bf16.gmra.mrb[0].mxu0 %v7938
        %v8456 = vpop.f32.mrb[0].mxu0
        %v8457 = vadd.f32 0.0, %v8456
        %v8458 = vpop.f32.mrb[0].mxu0
        %v8459 = vpop.f32.mrb[0].mxu0
        %v8460 = vadd.f32 0.0, %v8459
        %v8461 = vpop.f32.mrb[0].mxu0
        %8462 = vmatprep.mubr.bf16.mxu0 0
        %8463 = vmatmul.mubr.bf16.gmra.mrb[0].mxu0 %v7941
        %v8464 = vpop.f32.mrb[0].mxu0
        %v8465 = vadd.f32 0.0, %v8464
        %v8466 = vpop.f32.mrb[0].mxu0
        %v8467 = vpop.f32.mrb[0].mxu0
        %v8468 = vadd.f32 0.0, %v8467
        %v8469 = vpop.f32.mrb[0].mxu0
        %8470 = vmatprep.mubr.bf16.mxu0 0
        %8471 = vmatmul.mubr.bf16.gmra.mrb[0].mxu0 %v7944
        %v8472 = vpop.f32.mrb[0].mxu0
        %v8473 = vadd.f32 0.0, %v8472
        %v8474 = vpop.f32.mrb[0].mxu0
        %v8475 = vpop.f32.mrb[0].mxu0
        %v8476 = vadd.f32 0.0, %v8475
        %v8477 = vpop.f32.mrb[0].mxu0
        %8478 = vmatprep.mubr.bf16.mxu0 0
        %8479 = vmatmul.mubr.bf16.gmra.mrb[0].mxu0 %v7947
        %v8480 = vpop.f32.mrb[0].mxu0
        %v8481 = vadd.f32 0.0, %v8480
        %v8482 = vpop.f32.mrb[0].mxu0
        %v8483 = vpop.f32.mrb[0].mxu0
        %v8484 = vadd.f32 0.0, %v8483
        %v8485 = vpop.f32.mrb[0].mxu0
        %8486 = vmatprep.mubr.bf16.mxu0 0
        %8487 = vmatmul.mubr.bf16.gmra.mrb[0].mxu0 %v7950
        %v8488 = vpop.f32.mrb[0].mxu0
        %v8489 = vadd.f32 0.0, %v8488
        %v8490 = vpop.f32.mrb[0].mxu0
        %v8491 = vpop.f32.mrb[0].mxu0
        %v8492 = vadd.f32 0.0, %v8491
        %v8493 = vpop.f32.mrb[0].mxu0
        %8494 = vmatprep.mubr.bf16.mxu0 0
        %8495 = vmatmul.mubr.bf16.gmra.mrb[0].mxu0 %v7953
        %v8496 = vpop.f32.mrb[0].mxu0
        %v8497 = vadd.f32 0.0, %v8496
        %v8498 = vpop.f32.mrb[0].mxu0
        %v8499 = vpop.f32.mrb[0].mxu0
        %v8500 = vadd.f32 0.0, %v8499
        %v8501 = vpop.f32.mrb[0].mxu0
        %8502 = vdwg.mxu0
        %v8503 = vadd.f32 %v7441, %v7993
        %v8504 = vadd.f32 %v7442, %v7996
        %v8505 = vadd.f32 %v7443, %v8001
        %v8506 = vadd.f32 %v7444, %v8004
        %v8507 = vadd.f32 %v7445, %v8009
        %v8508 = vadd.f32 %v7446, %v8012
        %v8509 = vadd.f32 %v7447, %v8017
        %v8510 = vadd.f32 %v7448, %v8020
        %v8511 = vadd.f32 %v7449, %v8025
        %v8512 = vadd.f32 %v7450, %v8028
        %v8513 = vadd.f32 %v7451, %v8033
        %v8514 = vadd.f32 %v7452, %v8036
        %v8515 = vadd.f32 %v7453, %v8041
        %v8516 = vadd.f32 %v7454, %v8044
        %v8517 = vadd.f32 %v7455, %v8049
        %v8518 = vadd.f32 %v7456, %v8052
        %v8519 = vadd.f32 %v7457, %v8057
        %v8520 = vadd.f32 %v7458, %v8060
        %v8521 = vadd.f32 %v7459, %v8065
        %v8522 = vadd.f32 %v7460, %v8068
        %v8523 = vadd.f32 %v7461, %v8073
        %v8524 = vadd.f32 %v7462, %v8076
        %v8525 = vadd.f32 %v7463, %v8081
        %v8526 = vadd.f32 %v7464, %v8084
        %v8527 = vadd.f32 %v7465, %v8089
        %v8528 = vadd.f32 %v7466, %v8092
        %v8529 = vadd.f32 %v7467, %v8097
        %v8530 = vadd.f32 %v7468, %v8100
        %v8531 = vadd.f32 %v7469, %v8105
        %v8532 = vadd.f32 %v7470, %v8108
        %v8533 = vadd.f32 %v7471, %v8113
        %v8534 = vadd.f32 %v7472, %v8116
        %v8535 = vadd.f32 %v7473, %v8121
        %v8536 = vadd.f32 %v7474, %v8124
        %v8537 = vadd.f32 %v7475, %v8129
        %v8538 = vadd.f32 %v7476, %v8132
        %v8539 = vadd.f32 %v7477, %v8137
        %v8540 = vadd.f32 %v7478, %v8140
        %v8541 = vadd.f32 %v7479, %v8145
        %v8542 = vadd.f32 %v7480, %v8148
        %v8543 = vadd.f32 %v7481, %v8153
        %v8544 = vadd.f32 %v7482, %v8156
        %v8545 = vadd.f32 %v7483, %v8161
        %v8546 = vadd.f32 %v7484, %v8164
        %v8547 = vadd.f32 %v7485, %v8169
        %v8548 = vadd.f32 %v7486, %v8172
        %v8549 = vadd.f32 %v7487, %v8177
        %v8550 = vadd.f32 %v7488, %v8180
        %v8551 = vadd.f32 %v7489, %v8185
        %v8552 = vadd.f32 %v7490, %v8188
        %v8553 = vadd.f32 %v7491, %v8193
        %v8554 = vadd.f32 %v7492, %v8196
        %v8555 = vadd.f32 %v7493, %v8201
        %v8556 = vadd.f32 %v7494, %v8204
        %v8557 = vadd.f32 %v7495, %v8209
        %v8558 = vadd.f32 %v7496, %v8212
        %v8559 = vadd.f32 %v7497, %v8217
        %v8560 = vadd.f32 %v7498, %v8220
        %v8561 = vadd.f32 %v7499, %v8225
        %v8562 = vadd.f32 %v7500, %v8228
        %v8563 = vadd.f32 %v7501, %v8233
        %v8564 = vadd.f32 %v7502, %v8236
        %v8565 = vadd.f32 %v7503, %v8241
        %v8566 = vadd.f32 %v7504, %v8244
        %v8567 = vadd.f32 %v7505, %v8249
        %v8568 = vadd.f32 %v7506, %v8252
        %v8569 = vadd.f32 %v7507, %v8257
        %v8570 = vadd.f32 %v7508, %v8260
        %v8571 = vadd.f32 %v7509, %v8265
        %v8572 = vadd.f32 %v7510, %v8268
        %v8573 = vadd.f32 %v7511, %v8273
        %v8574 = vadd.f32 %v7512, %v8276
        %v8575 = vadd.f32 %v7513, %v8281
        %v8576 = vadd.f32 %v7514, %v8284
        %v8577 = vadd.f32 %v7515, %v8289
        %v8578 = vadd.f32 %v7516, %v8292
        %v8579 = vadd.f32 %v7517, %v8297
        %v8580 = vadd.f32 %v7518, %v8300
        %v8581 = vadd.f32 %v7519, %v8305
        %v8582 = vadd.f32 %v7520, %v8308
        %v8583 = vadd.f32 %v7521, %v8313
        %v8584 = vadd.f32 %v7522, %v8316
        %v8585 = vadd.f32 %v7523, %v8321
        %v8586 = vadd.f32 %v7524, %v8324
        %v8587 = vadd.f32 %v7525, %v8329
        %v8588 = vadd.f32 %v7526, %v8332
        %v8589 = vadd.f32 %v7527, %v8337
        %v8590 = vadd.f32 %v7528, %v8340
        %v8591 = vadd.f32 %v7529, %v8345
        %v8592 = vadd.f32 %v7530, %v8348
        %v8593 = vadd.f32 %v7531, %v8353
        %v8594 = vadd.f32 %v7532, %v8356
        %v8595 = vadd.f32 %v7533, %v8361
        %v8596 = vadd.f32 %v7534, %v8364
        %v8597 = vadd.f32 %v7535, %v8369
        %v8598 = vadd.f32 %v7536, %v8372
        %v8599 = vadd.f32 %v7537, %v8377
        %v8600 = vadd.f32 %v7538, %v8380
        %v8601 = vadd.f32 %v7539, %v8385
        %v8602 = vadd.f32 %v7540, %v8388
        %v8603 = vadd.f32 %v7541, %v8393
        %v8604 = vadd.f32 %v7542, %v8396
        %v8605 = vadd.f32 %v7543, %v8401
        %v8606 = vadd.f32 %v7544, %v8404
        %v8607 = vadd.f32 %v7545, %v8409
        %v8608 = vadd.f32 %v7546, %v8412
        %v8609 = vadd.f32 %v7547, %v8417
        %v8610 = vadd.f32 %v7548, %v8420
        %v8611 = vadd.f32 %v7549, %v8425
        %v8612 = vadd.f32 %v7550, %v8428
        %v8613 = vadd.f32 %v7551, %v8433
        %v8614 = vadd.f32 %v7552, %v8436
        %v8615 = vadd.f32 %v7553, %v8441
        %v8616 = vadd.f32 %v7554, %v8444
        %v8617 = vadd.f32 %v7555, %v8449
        %v8618 = vadd.f32 %v7556, %v8452
        %v8619 = vadd.f32 %v7557, %v8457
        %v8620 = vadd.f32 %v7558, %v8460
        %v8621 = vadd.f32 %v7559, %v8465
        %v8622 = vadd.f32 %v7560, %v8468
        %v8623 = vadd.f32 %v7561, %v8473
        %v8624 = vadd.f32 %v7562, %v8476
        %v8625 = vadd.f32 %v7563, %v8481
        %v8626 = vadd.f32 %v7564, %v8484
        %v8627 = vadd.f32 %v7565, %v8489
        %v8628 = vadd.f32 %v7566, %v8492
        %v8629 = vadd.f32 %v7567, %v8497
        %v8630 = vadd.f32 %v7568, %v8500
        %v8631 = vld [vmem:[%s6506 + $0x2] sm:$0xff]
        %v8632 = vld [vmem:[%s6506 + $0xa] sm:$0xff]
        %v8633 = vld [vmem:[%s6506 + $0x12] sm:$0xff]
        %v8634 = vld [vmem:[%s6506 + $0x1a] sm:$0xff]
        %v8635 = vld [vmem:[%s6506 + $0x2a] sm:$0xff]
        %v8636 = vld [vmem:[%s6506 + $0x32] sm:$0xff]
        %v8637 = vld [vmem:[%s6506 + $0x3a] sm:$0xff]
        %v8638 = vld [vmem:[%s6506 + $0x42] sm:$0xff]
        %v8639 = vld [vmem:[%s6506 + $0x52] sm:$0xff]
        %v8640 = vld [vmem:[%s6506 + $0x5a] sm:$0xff]
        %v8641 = vld [vmem:[%s6506 + $0x62] sm:$0xff]
        %v8642 = vld [vmem:[%s6506 + $0x6a] sm:$0xff]
        %v8643 = vld [vmem:[%s6506 + $0x7a] sm:$0xff]
        %v8644 = vld [vmem:[%s6506 + $0x82] sm:$0xff]
        %v8645 = vld [vmem:[%s6506 + $0x8a] sm:$0xff]
        %v8646 = vld [vmem:[%s6506 + $0x92] sm:$0xff]
        %v8647 = vld [vmem:[%s6506 + $0xa2] sm:$0xff]
        %v8648 = vld [vmem:[%s6506 + $0xaa] sm:$0xff]
        %v8649 = vld [vmem:[%s6506 + $0xb2] sm:$0xff]
        %v8650 = vld [vmem:[%s6506 + $0xba] sm:$0xff]
        %v8651 = vld [vmem:[%s6506 + $0xca] sm:$0xff]
        %v8652 = vld [vmem:[%s6506 + $0xd2] sm:$0xff]
        %v8653 = vld [vmem:[%s6506 + $0xda] sm:$0xff]
        %v8654 = vld [vmem:[%s6506 + $0xe2] sm:$0xff]
        %v8655 = vld [vmem:[%s6506 + $0xf2] sm:$0xff]
        %v8656 = vld [vmem:[%s6506 + $0xfa] sm:$0xff]
        %v8657 = vld [vmem:[%s6506 + $0x102] sm:$0xff]
        %v8658 = vld [vmem:[%s6506 + $0x10a] sm:$0xff]
        %v8659 = vld [vmem:[%s6506 + $0x11a] sm:$0xff]
        %v8660 = vld [vmem:[%s6506 + $0x122] sm:$0xff]
        %v8661 = vld [vmem:[%s6506 + $0x12a] sm:$0xff]
        %v8662 = vld [vmem:[%s6506 + $0x132] sm:$0xff]
        %v8663 = vld [vmem:[%s6506 + $0x142] sm:$0xff]
        %v8664 = vld [vmem:[%s6506 + $0x14a] sm:$0xff]
        %v8665 = vld [vmem:[%s6506 + $0x152] sm:$0xff]
        %v8666 = vld [vmem:[%s6506 + $0x15a] sm:$0xff]
        %v8667 = vld [vmem:[%s6506 + $0x16a] sm:$0xff]
        %v8668 = vld [vmem:[%s6506 + $0x172] sm:$0xff]
        %v8669 = vld [vmem:[%s6506 + $0x17a] sm:$0xff]
        %v8670 = vld [vmem:[%s6506 + $0x182] sm:$0xff]
        %v8671 = vld [vmem:[%s6506 + $0x192] sm:$0xff]
        %v8672 = vld [vmem:[%s6506 + $0x19a] sm:$0xff]
        %v8673 = vld [vmem:[%s6506 + $0x1a2] sm:$0xff]
        %v8674 = vld [vmem:[%s6506 + $0x1aa] sm:$0xff]
        %v8675 = vld [vmem:[%s6506 + $0x1ba] sm:$0xff]
        %v8676 = vld [vmem:[%s6506 + $0x1c2] sm:$0xff]
        %v8677 = vld [vmem:[%s6506 + $0x1ca] sm:$0xff]
        %v8678 = vld [vmem:[%s6506 + $0x1d2] sm:$0xff]
        %v8679 = vld [vmem:[%s6506 + $0x1e2] sm:$0xff]
        %v8680 = vld [vmem:[%s6506 + $0x1ea] sm:$0xff]
        %v8681 = vld [vmem:[%s6506 + $0x1f2] sm:$0xff]
        %v8682 = vld [vmem:[%s6506 + $0x1fa] sm:$0xff]
        %v8683 = vld [vmem:[%s6506 + $0x20a] sm:$0xff]
        %v8684 = vld [vmem:[%s6506 + $0x212] sm:$0xff]
        %v8685 = vld [vmem:[%s6506 + $0x21a] sm:$0xff]
        %v8686 = vld [vmem:[%s6506 + $0x222] sm:$0xff]
        %v8687 = vld [vmem:[%s6506 + $0x232] sm:$0xff]
        %v8688 = vld [vmem:[%s6506 + $0x23a] sm:$0xff]
        %v8689 = vld [vmem:[%s6506 + $0x242] sm:$0xff]
        %v8690 = vld [vmem:[%s6506 + $0x24a] sm:$0xff]
        %v8691 = vld [vmem:[%s6506 + $0x25a] sm:$0xff]
        %v8692 = vld [vmem:[%s6506 + $0x262] sm:$0xff]
        %v8693 = vld [vmem:[%s6506 + $0x26a] sm:$0xff]
        %v8694 = vld [vmem:[%s6506 + $0x272] sm:$0xff]
        %v8695 = vld [vmem:[%s6506 + $0x282] sm:$0xff]
        %v8696 = vld [vmem:[%s6506 + $0x28a] sm:$0xff]
        %v8697 = vld [vmem:[%s6506 + $0x292] sm:$0xff]
        %v8698 = vld [vmem:[%s6506 + $0x29a] sm:$0xff]
        %v8699 = vld [vmem:[%s6506 + $0x2aa] sm:$0xff]
        %v8700 = vld [vmem:[%s6506 + $0x2b2] sm:$0xff]
        %v8701 = vld [vmem:[%s6506 + $0x2ba] sm:$0xff]
        %v8702 = vld [vmem:[%s6506 + $0x2c2] sm:$0xff]
        %v8703 = vld [vmem:[%s6506 + $0x2d2] sm:$0xff]
        %v8704 = vld [vmem:[%s6506 + $0x2da] sm:$0xff]
        %v8705 = vld [vmem:[%s6506 + $0x2e2] sm:$0xff]
        %v8706 = vld [vmem:[%s6506 + $0x2ea] sm:$0xff]
        %v8707 = vld [vmem:[%s6506 + $0x2fa] sm:$0xff]
        %v8708 = vld [vmem:[%s6506 + $0x302] sm:$0xff]
        %v8709 = vld [vmem:[%s6506 + $0x30a] sm:$0xff]
        %v8710 = vld [vmem:[%s6506 + $0x312] sm:$0xff]
        %v8711 = vld [vmem:[%s6506 + $0x322] sm:$0xff]
        %v8712 = vld [vmem:[%s6506 + $0x32a] sm:$0xff]
        %v8713 = vld [vmem:[%s6506 + $0x332] sm:$0xff]
        %v8714 = vld [vmem:[%s6506 + $0x33a] sm:$0xff]
        %v8715 = vld [vmem:[%s6506 + $0x34a] sm:$0xff]
        %v8716 = vld [vmem:[%s6506 + $0x352] sm:$0xff]
        %v8717 = vld [vmem:[%s6506 + $0x35a] sm:$0xff]
        %v8718 = vld [vmem:[%s6506 + $0x362] sm:$0xff]
        %v8719 = vld [vmem:[%s6506 + $0x372] sm:$0xff]
        %v8720 = vld [vmem:[%s6506 + $0x37a] sm:$0xff]
        %v8721 = vld [vmem:[%s6506 + $0x382] sm:$0xff]
        %v8722 = vld [vmem:[%s6506 + $0x38a] sm:$0xff]
        %v8723 = vld [vmem:[%s6506 + $0x39a] sm:$0xff]
        %v8724 = vld [vmem:[%s6506 + $0x3a2] sm:$0xff]
        %v8725 = vld [vmem:[%s6506 + $0x3aa] sm:$0xff]
        %v8726 = vld [vmem:[%s6506 + $0x3b2] sm:$0xff]
        %v8727 = vld [vmem:[%s6506 + $0x3c2] sm:$0xff]
        %v8728 = vld [vmem:[%s6506 + $0x3ca] sm:$0xff]
        %v8729 = vld [vmem:[%s6506 + $0x3d2] sm:$0xff]
        %v8730 = vld [vmem:[%s6506 + $0x3da] sm:$0xff]
        %v8731 = vld [vmem:[%s6506 + $0x3ea] sm:$0xff]
        %v8732 = vld [vmem:[%s6506 + $0x3f2] sm:$0xff]
        %v8733 = vld [vmem:[%s6506 + $0x3fa] sm:$0xff]
        %v8734 = vld [vmem:[%s6506 + $0x402] sm:$0xff]
        %v8735 = vld [vmem:[%s6506 + $0x412] sm:$0xff]
        %v8736 = vld [vmem:[%s6506 + $0x41a] sm:$0xff]
        %v8737 = vld [vmem:[%s6506 + $0x422] sm:$0xff]
        %v8738 = vld [vmem:[%s6506 + $0x42a] sm:$0xff]
        %v8739 = vld [vmem:[%s6506 + $0x43a] sm:$0xff]
        %v8740 = vld [vmem:[%s6506 + $0x442] sm:$0xff]
        %v8741 = vld [vmem:[%s6506 + $0x44a] sm:$0xff]
        %v8742 = vld [vmem:[%s6506 + $0x452] sm:$0xff]
        %v8743 = vld [vmem:[%s6506 + $0x462] sm:$0xff]
        %v8744 = vld [vmem:[%s6506 + $0x46a] sm:$0xff]
        %v8745 = vld [vmem:[%s6506 + $0x472] sm:$0xff]
        %v8746 = vld [vmem:[%s6506 + $0x47a] sm:$0xff]
        %v8747 = vld [vmem:[%s6506 + $0x48a] sm:$0xff]
        %v8748 = vld [vmem:[%s6506 + $0x492] sm:$0xff]
        %v8749 = vld [vmem:[%s6506 + $0x49a] sm:$0xff]
        %v8750 = vld [vmem:[%s6506 + $0x4a2] sm:$0xff]
        %v8751 = vld [vmem:[%s6506 + $0x4b2] sm:$0xff]
        %v8752 = vld [vmem:[%s6506 + $0x4ba] sm:$0xff]
        %v8753 = vld [vmem:[%s6506 + $0x4c2] sm:$0xff]
        %v8754 = vld [vmem:[%s6506 + $0x4ca] sm:$0xff]
        %v8755 = vld [vmem:[%s6506 + $0x4da] sm:$0xff]
        %v8756 = vld [vmem:[%s6506 + $0x4e2] sm:$0xff]
        %v8757 = vld [vmem:[%s6506 + $0x4ea] sm:$0xff]
        %v8758 = vld [vmem:[%s6506 + $0x4f2] sm:$0xff]
        %v8759 = vpack.c.bf16 %v8632, %v8631
        %v8760 = vpack.c.bf16 %v8634, %v8633
        %v8761 = vpack.c.bf16 %v8636, %v8635
        %v8762 = vpack.c.bf16 %v8638, %v8637
        %v8763 = vpack.c.bf16 %v8640, %v8639
        %v8764 = vpack.c.bf16 %v8642, %v8641
        %v8765 = vpack.c.bf16 %v8644, %v8643
        %v8766 = vpack.c.bf16 %v8646, %v8645
        %v8767 = vpack.c.bf16 %v8648, %v8647
        %v8768 = vpack.c.bf16 %v8650, %v8649
        %v8769 = vpack.c.bf16 %v8652, %v8651
        %v8770 = vpack.c.bf16 %v8654, %v8653
        %v8771 = vpack.c.bf16 %v8656, %v8655
        %v8772 = vpack.c.bf16 %v8658, %v8657
        %v8773 = vpack.c.bf16 %v8660, %v8659
        %v8774 = vpack.c.bf16 %v8662, %v8661
        %v8775 = vpack.c.bf16 %v8664, %v8663
        %v8776 = vpack.c.bf16 %v8666, %v8665
        %v8777 = vpack.c.bf16 %v8668, %v8667
        %v8778 = vpack.c.bf16 %v8670, %v8669
        %v8779 = vpack.c.bf16 %v8672, %v8671
        %v8780 = vpack.c.bf16 %v8674, %v8673
        %v8781 = vpack.c.bf16 %v8676, %v8675
        %v8782 = vpack.c.bf16 %v8678, %v8677
        %v8783 = vpack.c.bf16 %v8680, %v8679
        %v8784 = vpack.c.bf16 %v8682, %v8681
        %v8785 = vpack.c.bf16 %v8684, %v8683
        %v8786 = vpack.c.bf16 %v8686, %v8685
        %v8787 = vpack.c.bf16 %v8688, %v8687
        %v8788 = vpack.c.bf16 %v8690, %v8689
        %v8789 = vpack.c.bf16 %v8692, %v8691
        %v8790 = vpack.c.bf16 %v8694, %v8693
        %v8791 = vpack.c.bf16 %v8696, %v8695
        %v8792 = vpack.c.bf16 %v8698, %v8697
        %v8793 = vpack.c.bf16 %v8700, %v8699
        %v8794 = vpack.c.bf16 %v8702, %v8701
        %v8795 = vpack.c.bf16 %v8704, %v8703
        %v8796 = vpack.c.bf16 %v8706, %v8705
        %v8797 = vpack.c.bf16 %v8708, %v8707
        %v8798 = vpack.c.bf16 %v8710, %v8709
        %v8799 = vpack.c.bf16 %v8712, %v8711
        %v8800 = vpack.c.bf16 %v8714, %v8713
        %v8801 = vpack.c.bf16 %v8716, %v8715
        %v8802 = vpack.c.bf16 %v8718, %v8717
        %v8803 = vpack.c.bf16 %v8720, %v8719
        %v8804 = vpack.c.bf16 %v8722, %v8721
        %v8805 = vpack.c.bf16 %v8724, %v8723
        %v8806 = vpack.c.bf16 %v8726, %v8725
        %v8807 = vpack.c.bf16 %v8728, %v8727
        %v8808 = vpack.c.bf16 %v8730, %v8729
        %v8809 = vpack.c.bf16 %v8732, %v8731
        %v8810 = vpack.c.bf16 %v8734, %v8733
        %v8811 = vpack.c.bf16 %v8736, %v8735
        %v8812 = vpack.c.bf16 %v8738, %v8737
        %v8813 = vpack.c.bf16 %v8740, %v8739
        %v8814 = vpack.c.bf16 %v8742, %v8741
        %v8815 = vpack.c.bf16 %v8744, %v8743
        %v8816 = vpack.c.bf16 %v8746, %v8745
        %v8817 = vpack.c.bf16 %v8748, %v8747
        %v8818 = vpack.c.bf16 %v8750, %v8749
        %v8819 = vpack.c.bf16 %v8752, %v8751
        %v8820 = vpack.c.bf16 %v8754, %v8753
        %v8821 = vpack.c.bf16 %v8756, %v8755
        %v8822 = vpack.c.bf16 %v8758, %v8757
        %s8823 = scalar_lea.vmem %s1, 16
        %v8824 = vld [vmem:[%s8823] sm:$0x3]
        %v8826 = vsel %vm772, %v8759, 0
        %v8829 = vsel %vm772, %v8760, 0
        %v8832 = vsel %vm772, %v8761, 0
        %v8835 = vsel %vm772, %v8762, 0
        %v8838 = vsel %vm772, %v8763, 0
        %v8841 = vsel %vm772, %v8764, 0
        %v8844 = vsel %vm772, %v8765, 0
        %v8847 = vsel %vm772, %v8766, 0
        %v8850 = vsel %vm772, %v8767, 0
        %v8853 = vsel %vm772, %v8768, 0
        %v8856 = vsel %vm772, %v8769, 0
        %v8859 = vsel %vm772, %v8770, 0
        %v8862 = vsel %vm772, %v8771, 0
        %v8865 = vsel %vm772, %v8772, 0
        %v8868 = vsel %vm772, %v8773, 0
        %v8871 = vsel %vm772, %v8774, 0
        %v8874 = vsel %vm772, %v8775, 0
        %v8877 = vsel %vm772, %v8776, 0
        %v8880 = vsel %vm772, %v8777, 0
        %v8883 = vsel %vm772, %v8778, 0
        %v8886 = vsel %vm772, %v8779, 0
        %v8889 = vsel %vm772, %v8780, 0
        %v8892 = vsel %vm772, %v8781, 0
        %v8895 = vsel %vm772, %v8782, 0
        %v8898 = vsel %vm772, %v8783, 0
        %v8901 = vsel %vm772, %v8784, 0
        %v8904 = vsel %vm772, %v8785, 0
        %v8907 = vsel %vm772, %v8786, 0
        %v8910 = vsel %vm772, %v8787, 0
        %v8913 = vsel %vm772, %v8788, 0
        %v8916 = vsel %vm772, %v8789, 0
        %v8919 = vsel %vm772, %v8790, 0
        %v8922 = vsel %vm772, %v8791, 0
        %v8925 = vsel %vm772, %v8792, 0
        %v8928 = vsel %vm772, %v8793, 0
        %v8931 = vsel %vm772, %v8794, 0
        %v8934 = vsel %vm772, %v8795, 0
        %v8937 = vsel %vm772, %v8796, 0
        %v8940 = vsel %vm772, %v8797, 0
        %v8943 = vsel %vm772, %v8798, 0
        %v8946 = vsel %vm772, %v8799, 0
        %v8949 = vsel %vm772, %v8800, 0
        %v8952 = vsel %vm772, %v8801, 0
        %v8955 = vsel %vm772, %v8802, 0
        %v8958 = vsel %vm772, %v8803, 0
        %v8961 = vsel %vm772, %v8804, 0
        %v8964 = vsel %vm772, %v8805, 0
        %v8967 = vsel %vm772, %v8806, 0
        %v8970 = vsel %vm772, %v8807, 0
        %v8973 = vsel %vm772, %v8808, 0
        %v8976 = vsel %vm772, %v8809, 0
        %v8979 = vsel %vm772, %v8810, 0
        %v8982 = vsel %vm772, %v8811, 0
        %v8985 = vsel %vm772, %v8812, 0
        %v8988 = vsel %vm772, %v8813, 0
        %v8991 = vsel %vm772, %v8814, 0
        %v8994 = vsel %vm772, %v8815, 0
        %v8997 = vsel %vm772, %v8816, 0
        %v9000 = vsel %vm772, %v8817, 0
        %v9003 = vsel %vm772, %v8818, 0
        %v9006 = vsel %vm772, %v8819, 0
        %v9009 = vsel %vm772, %v8820, 0
        %v9012 = vsel %vm772, %v8821, 0
        %v9015 = vsel %vm772, %v8822, 0
        %v9018 = vand.u32 %v8824, %v968
        %9020 = vmatprep.subr.bf16.mxu0 0
        %9021 = vmatpush1.bf16.msra.mxu0 %v9018
        %9022 = vmatprep.subr.bf16.mxu0 0
        %9023 = vmatpush1.bf16.msra.mxu0 0
        %9024 = vmatprep.subr.bf16.mxu0 0
        %9025 = vmatpush1.bf16.msra.mxu0 0
        %9026 = vmatprep.subr.bf16.mxu0 0
        %9027 = vmatpush1.bf16.msra.mxu0 0
        %9028 = vmatprep.subr.bf16.mxu0 0
        %9029 = vmatpush1.bf16.msra.mxu0 0
        %9030 = vmatprep.subr.bf16.mxu0 0
        %9031 = vmatpush1.bf16.msra.mxu0 0
        %9032 = vmatprep.subr.bf16.mxu0 0
        %9033 = vmatpush1.bf16.msra.mxu0 0
        %9034 = vmatprep.subr.bf16.mxu0 0
        %9035 = vmatpush1.bf16.msra.mxu0 0
        %9036 = vmatprep.subr.bf16.mxu0 0
        %9037 = vmatpush1.bf16.msra.mxu0 0
        %9038 = vmatprep.subr.bf16.mxu0 0
        %9039 = vmatpush1.bf16.msra.mxu0 0
        %9040 = vmatprep.subr.bf16.mxu0 0
        %9041 = vmatpush1.bf16.msra.mxu0 0
        %9042 = vmatprep.subr.bf16.mxu0 0
        %9043 = vmatpush1.bf16.msra.mxu0 0
        %9044 = vmatprep.subr.bf16.mxu0 0
        %9045 = vmatpush1.bf16.msra.mxu0 0
        %9046 = vmatprep.subr.bf16.mxu0 0
        %9047 = vmatpush1.bf16.msra.mxu0 0
        %9048 = vmatprep.subr.bf16.mxu0 0
        %9049 = vmatpush1.bf16.msra.mxu0 0
        %9050 = vmatprep.subr.bf16.mxu0 0
        %9051 = vmatpush1.bf16.msra.mxu0 0
        %9052 = vmatprep.mubr.bf16.mxu0 0
        %9053 = vmatmul.mubr.bf16.gmra.mrb[0].mxu0 %v8826
        %v9054 = vpop.f32.mrb[0].mxu0
        %v9055 = vadd.f32 0.0, %v9054
        %v9056 = vpop.f32.mrb[0].mxu0
        %v9057 = vpop.f32.mrb[0].mxu0
        %v9058 = vadd.f32 0.0, %v9057
        %v9059 = vpop.f32.mrb[0].mxu0
        %9060 = vmatprep.mubr.bf16.mxu0 0
        %9061 = vmatmul.mubr.bf16.gmra.mrb[0].mxu0 %v8829
        %v9062 = vpop.f32.mrb[0].mxu0
        %v9063 = vadd.f32 0.0, %v9062
        %v9064 = vpop.f32.mrb[0].mxu0
        %v9065 = vpop.f32.mrb[0].mxu0
        %v9066 = vadd.f32 0.0, %v9065
        %v9067 = vpop.f32.mrb[0].mxu0
        %9068 = vmatprep.mubr.bf16.mxu0 0
        %9069 = vmatmul.mubr.bf16.gmra.mrb[0].mxu0 %v8832
        %v9070 = vpop.f32.mrb[0].mxu0
        %v9071 = vadd.f32 0.0, %v9070
        %v9072 = vpop.f32.mrb[0].mxu0
        %v9073 = vpop.f32.mrb[0].mxu0
        %v9074 = vadd.f32 0.0, %v9073
        %v9075 = vpop.f32.mrb[0].mxu0
        %9076 = vmatprep.mubr.bf16.mxu0 0
        %9077 = vmatmul.mubr.bf16.gmra.mrb[0].mxu0 %v8835
        %v9078 = vpop.f32.mrb[0].mxu0
        %v9079 = vadd.f32 0.0, %v9078
        %v9080 = vpop.f32.mrb[0].mxu0
        %v9081 = vpop.f32.mrb[0].mxu0
        %v9082 = vadd.f32 0.0, %v9081
        %v9083 = vpop.f32.mrb[0].mxu0
        %9084 = vmatprep.mubr.bf16.mxu0 0
        %9085 = vmatmul.mubr.bf16.gmra.mrb[0].mxu0 %v8838
        %v9086 = vpop.f32.mrb[0].mxu0
        %v9087 = vadd.f32 0.0, %v9086
        %v9088 = vpop.f32.mrb[0].mxu0
        %v9089 = vpop.f32.mrb[0].mxu0
        %v9090 = vadd.f32 0.0, %v9089
        %v9091 = vpop.f32.mrb[0].mxu0
        %9092 = vmatprep.mubr.bf16.mxu0 0
        %9093 = vmatmul.mubr.bf16.gmra.mrb[0].mxu0 %v8841
        %v9094 = vpop.f32.mrb[0].mxu0
        %v9095 = vadd.f32 0.0, %v9094
        %v9096 = vpop.f32.mrb[0].mxu0
        %v9097 = vpop.f32.mrb[0].mxu0
        %v9098 = vadd.f32 0.0, %v9097
        %v9099 = vpop.f32.mrb[0].mxu0
        %9100 = vmatprep.mubr.bf16.mxu0 0
        %9101 = vmatmul.mubr.bf16.gmra.mrb[0].mxu0 %v8844
        %v9102 = vpop.f32.mrb[0].mxu0
        %v9103 = vadd.f32 0.0, %v9102
        %v9104 = vpop.f32.mrb[0].mxu0
        %v9105 = vpop.f32.mrb[0].mxu0
        %v9106 = vadd.f32 0.0, %v9105
        %v9107 = vpop.f32.mrb[0].mxu0
        %9108 = vmatprep.mubr.bf16.mxu0 0
        %9109 = vmatmul.mubr.bf16.gmra.mrb[0].mxu0 %v8847
        %v9110 = vpop.f32.mrb[0].mxu0
        %v9111 = vadd.f32 0.0, %v9110
        %v9112 = vpop.f32.mrb[0].mxu0
        %v9113 = vpop.f32.mrb[0].mxu0
        %v9114 = vadd.f32 0.0, %v9113
        %v9115 = vpop.f32.mrb[0].mxu0
        %9116 = vmatprep.mubr.bf16.mxu0 0
        %9117 = vmatmul.mubr.bf16.gmra.mrb[0].mxu0 %v8850
        %v9118 = vpop.f32.mrb[0].mxu0
        %v9119 = vadd.f32 0.0, %v9118
        %v9120 = vpop.f32.mrb[0].mxu0
        %v9121 = vpop.f32.mrb[0].mxu0
        %v9122 = vadd.f32 0.0, %v9121
        %v9123 = vpop.f32.mrb[0].mxu0
        %9124 = vmatprep.mubr.bf16.mxu0 0
        %9125 = vmatmul.mubr.bf16.gmra.mrb[0].mxu0 %v8853
        %v9126 = vpop.f32.mrb[0].mxu0
        %v9127 = vadd.f32 0.0, %v9126
        %v9128 = vpop.f32.mrb[0].mxu0
        %v9129 = vpop.f32.mrb[0].mxu0
        %v9130 = vadd.f32 0.0, %v9129
        %v9131 = vpop.f32.mrb[0].mxu0
        %9132 = vmatprep.mubr.bf16.mxu0 0
        %9133 = vmatmul.mubr.bf16.gmra.mrb[0].mxu0 %v8856
        %v9134 = vpop.f32.mrb[0].mxu0
        %v9135 = vadd.f32 0.0, %v9134
        %v9136 = vpop.f32.mrb[0].mxu0
        %v9137 = vpop.f32.mrb[0].mxu0
        %v9138 = vadd.f32 0.0, %v9137
        %v9139 = vpop.f32.mrb[0].mxu0
        %9140 = vmatprep.mubr.bf16.mxu0 0
        %9141 = vmatmul.mubr.bf16.gmra.mrb[0].mxu0 %v8859
        %v9142 = vpop.f32.mrb[0].mxu0
        %v9143 = vadd.f32 0.0, %v9142
        %v9144 = vpop.f32.mrb[0].mxu0
        %v9145 = vpop.f32.mrb[0].mxu0
        %v9146 = vadd.f32 0.0, %v9145
        %v9147 = vpop.f32.mrb[0].mxu0
        %9148 = vmatprep.mubr.bf16.mxu0 0
        %9149 = vmatmul.mubr.bf16.gmra.mrb[0].mxu0 %v8862
        %v9150 = vpop.f32.mrb[0].mxu0
        %v9151 = vadd.f32 0.0, %v9150
        %v9152 = vpop.f32.mrb[0].mxu0
        %v9153 = vpop.f32.mrb[0].mxu0
        %v9154 = vadd.f32 0.0, %v9153
        %v9155 = vpop.f32.mrb[0].mxu0
        %9156 = vmatprep.mubr.bf16.mxu0 0
        %9157 = vmatmul.mubr.bf16.gmra.mrb[0].mxu0 %v8865
        %v9158 = vpop.f32.mrb[0].mxu0
        %v9159 = vadd.f32 0.0, %v9158
        %v9160 = vpop.f32.mrb[0].mxu0
        %v9161 = vpop.f32.mrb[0].mxu0
        %v9162 = vadd.f32 0.0, %v9161
        %v9163 = vpop.f32.mrb[0].mxu0
        %9164 = vmatprep.mubr.bf16.mxu0 0
        %9165 = vmatmul.mubr.bf16.gmra.mrb[0].mxu0 %v8868
        %v9166 = vpop.f32.mrb[0].mxu0
        %v9167 = vadd.f32 0.0, %v9166
        %v9168 = vpop.f32.mrb[0].mxu0
        %v9169 = vpop.f32.mrb[0].mxu0
        %v9170 = vadd.f32 0.0, %v9169
        %v9171 = vpop.f32.mrb[0].mxu0
        %9172 = vmatprep.mubr.bf16.mxu0 0
        %9173 = vmatmul.mubr.bf16.gmra.mrb[0].mxu0 %v8871
        %v9174 = vpop.f32.mrb[0].mxu0
        %v9175 = vadd.f32 0.0, %v9174
        %v9176 = vpop.f32.mrb[0].mxu0
        %v9177 = vpop.f32.mrb[0].mxu0
        %v9178 = vadd.f32 0.0, %v9177
        %v9179 = vpop.f32.mrb[0].mxu0
        %9180 = vmatprep.mubr.bf16.mxu0 0
        %9181 = vmatmul.mubr.bf16.gmra.mrb[0].mxu0 %v8874
        %v9182 = vpop.f32.mrb[0].mxu0
        %v9183 = vadd.f32 0.0, %v9182
        %v9184 = vpop.f32.mrb[0].mxu0
        %v9185 = vpop.f32.mrb[0].mxu0
        %v9186 = vadd.f32 0.0, %v9185
        %v9187 = vpop.f32.mrb[0].mxu0
        %9188 = vmatprep.mubr.bf16.mxu0 0
        %9189 = vmatmul.mubr.bf16.gmra.mrb[0].mxu0 %v8877
        %v9190 = vpop.f32.mrb[0].mxu0
        %v9191 = vadd.f32 0.0, %v9190
        %v9192 = vpop.f32.mrb[0].mxu0
        %v9193 = vpop.f32.mrb[0].mxu0
        %v9194 = vadd.f32 0.0, %v9193
        %v9195 = vpop.f32.mrb[0].mxu0
        %9196 = vmatprep.mubr.bf16.mxu0 0
        %9197 = vmatmul.mubr.bf16.gmra.mrb[0].mxu0 %v8880
        %v9198 = vpop.f32.mrb[0].mxu0
        %v9199 = vadd.f32 0.0, %v9198
        %v9200 = vpop.f32.mrb[0].mxu0
        %v9201 = vpop.f32.mrb[0].mxu0
        %v9202 = vadd.f32 0.0, %v9201
        %v9203 = vpop.f32.mrb[0].mxu0
        %9204 = vmatprep.mubr.bf16.mxu0 0
        %9205 = vmatmul.mubr.bf16.gmra.mrb[0].mxu0 %v8883
        %v9206 = vpop.f32.mrb[0].mxu0
        %v9207 = vadd.f32 0.0, %v9206
        %v9208 = vpop.f32.mrb[0].mxu0
        %v9209 = vpop.f32.mrb[0].mxu0
        %v9210 = vadd.f32 0.0, %v9209
        %v9211 = vpop.f32.mrb[0].mxu0
        %9212 = vmatprep.mubr.bf16.mxu0 0
        %9213 = vmatmul.mubr.bf16.gmra.mrb[0].mxu0 %v8886
        %v9214 = vpop.f32.mrb[0].mxu0
        %v9215 = vadd.f32 0.0, %v9214
        %v9216 = vpop.f32.mrb[0].mxu0
        %v9217 = vpop.f32.mrb[0].mxu0
        %v9218 = vadd.f32 0.0, %v9217
        %v9219 = vpop.f32.mrb[0].mxu0
        %9220 = vmatprep.mubr.bf16.mxu0 0
        %9221 = vmatmul.mubr.bf16.gmra.mrb[0].mxu0 %v8889
        %v9222 = vpop.f32.mrb[0].mxu0
        %v9223 = vadd.f32 0.0, %v9222
        %v9224 = vpop.f32.mrb[0].mxu0
        %v9225 = vpop.f32.mrb[0].mxu0
        %v9226 = vadd.f32 0.0, %v9225
        %v9227 = vpop.f32.mrb[0].mxu0
        %9228 = vmatprep.mubr.bf16.mxu0 0
        %9229 = vmatmul.mubr.bf16.gmra.mrb[0].mxu0 %v8892
        %v9230 = vpop.f32.mrb[0].mxu0
        %v9231 = vadd.f32 0.0, %v9230
        %v9232 = vpop.f32.mrb[0].mxu0
        %v9233 = vpop.f32.mrb[0].mxu0
        %v9234 = vadd.f32 0.0, %v9233
        %v9235 = vpop.f32.mrb[0].mxu0
        %9236 = vmatprep.mubr.bf16.mxu0 0
        %9237 = vmatmul.mubr.bf16.gmra.mrb[0].mxu0 %v8895
        %v9238 = vpop.f32.mrb[0].mxu0
        %v9239 = vadd.f32 0.0, %v9238
        %v9240 = vpop.f32.mrb[0].mxu0
        %v9241 = vpop.f32.mrb[0].mxu0
        %v9242 = vadd.f32 0.0, %v9241
        %v9243 = vpop.f32.mrb[0].mxu0
        %9244 = vmatprep.mubr.bf16.mxu0 0
        %9245 = vmatmul.mubr.bf16.gmra.mrb[0].mxu0 %v8898
        %v9246 = vpop.f32.mrb[0].mxu0
        %v9247 = vadd.f32 0.0, %v9246
        %v9248 = vpop.f32.mrb[0].mxu0
        %v9249 = vpop.f32.mrb[0].mxu0
        %v9250 = vadd.f32 0.0, %v9249
        %v9251 = vpop.f32.mrb[0].mxu0
        %9252 = vmatprep.mubr.bf16.mxu0 0
        %9253 = vmatmul.mubr.bf16.gmra.mrb[0].mxu0 %v8901
        %v9254 = vpop.f32.mrb[0].mxu0
        %v9255 = vadd.f32 0.0, %v9254
        %v9256 = vpop.f32.mrb[0].mxu0
        %v9257 = vpop.f32.mrb[0].mxu0
        %v9258 = vadd.f32 0.0, %v9257
        %v9259 = vpop.f32.mrb[0].mxu0
        %9260 = vmatprep.mubr.bf16.mxu0 0
        %9261 = vmatmul.mubr.bf16.gmra.mrb[0].mxu0 %v8904
        %v9262 = vpop.f32.mrb[0].mxu0
        %v9263 = vadd.f32 0.0, %v9262
        %v9264 = vpop.f32.mrb[0].mxu0
        %v9265 = vpop.f32.mrb[0].mxu0
        %v9266 = vadd.f32 0.0, %v9265
        %v9267 = vpop.f32.mrb[0].mxu0
        %9268 = vmatprep.mubr.bf16.mxu0 0
        %9269 = vmatmul.mubr.bf16.gmra.mrb[0].mxu0 %v8907
        %v9270 = vpop.f32.mrb[0].mxu0
        %v9271 = vadd.f32 0.0, %v9270
        %v9272 = vpop.f32.mrb[0].mxu0
        %v9273 = vpop.f32.mrb[0].mxu0
        %v9274 = vadd.f32 0.0, %v9273
        %v9275 = vpop.f32.mrb[0].mxu0
        %9276 = vmatprep.mubr.bf16.mxu0 0
        %9277 = vmatmul.mubr.bf16.gmra.mrb[0].mxu0 %v8910
        %v9278 = vpop.f32.mrb[0].mxu0
        %v9279 = vadd.f32 0.0, %v9278
        %v9280 = vpop.f32.mrb[0].mxu0
        %v9281 = vpop.f32.mrb[0].mxu0
        %v9282 = vadd.f32 0.0, %v9281
        %v9283 = vpop.f32.mrb[0].mxu0
        %9284 = vmatprep.mubr.bf16.mxu0 0
        %9285 = vmatmul.mubr.bf16.gmra.mrb[0].mxu0 %v8913
        %v9286 = vpop.f32.mrb[0].mxu0
        %v9287 = vadd.f32 0.0, %v9286
        %v9288 = vpop.f32.mrb[0].mxu0
        %v9289 = vpop.f32.mrb[0].mxu0
        %v9290 = vadd.f32 0.0, %v9289
        %v9291 = vpop.f32.mrb[0].mxu0
        %9292 = vmatprep.mubr.bf16.mxu0 0
        %9293 = vmatmul.mubr.bf16.gmra.mrb[0].mxu0 %v8916
        %v9294 = vpop.f32.mrb[0].mxu0
        %v9295 = vadd.f32 0.0, %v9294
        %v9296 = vpop.f32.mrb[0].mxu0
        %v9297 = vpop.f32.mrb[0].mxu0
        %v9298 = vadd.f32 0.0, %v9297
        %v9299 = vpop.f32.mrb[0].mxu0
        %9300 = vmatprep.mubr.bf16.mxu0 0
        %9301 = vmatmul.mubr.bf16.gmra.mrb[0].mxu0 %v8919
        %v9302 = vpop.f32.mrb[0].mxu0
        %v9303 = vadd.f32 0.0, %v9302
        %v9304 = vpop.f32.mrb[0].mxu0
        %v9305 = vpop.f32.mrb[0].mxu0
        %v9306 = vadd.f32 0.0, %v9305
        %v9307 = vpop.f32.mrb[0].mxu0
        %9308 = vmatprep.mubr.bf16.mxu0 0
        %9309 = vmatmul.mubr.bf16.gmra.mrb[0].mxu0 %v8922
        %v9310 = vpop.f32.mrb[0].mxu0
        %v9311 = vadd.f32 0.0, %v9310
        %v9312 = vpop.f32.mrb[0].mxu0
        %v9313 = vpop.f32.mrb[0].mxu0
        %v9314 = vadd.f32 0.0, %v9313
        %v9315 = vpop.f32.mrb[0].mxu0
        %9316 = vmatprep.mubr.bf16.mxu0 0
        %9317 = vmatmul.mubr.bf16.gmra.mrb[0].mxu0 %v8925
        %v9318 = vpop.f32.mrb[0].mxu0
        %v9319 = vadd.f32 0.0, %v9318
        %v9320 = vpop.f32.mrb[0].mxu0
        %v9321 = vpop.f32.mrb[0].mxu0
        %v9322 = vadd.f32 0.0, %v9321
        %v9323 = vpop.f32.mrb[0].mxu0
        %9324 = vmatprep.mubr.bf16.mxu0 0
        %9325 = vmatmul.mubr.bf16.gmra.mrb[0].mxu0 %v8928
        %v9326 = vpop.f32.mrb[0].mxu0
        %v9327 = vadd.f32 0.0, %v9326
        %v9328 = vpop.f32.mrb[0].mxu0
        %v9329 = vpop.f32.mrb[0].mxu0
        %v9330 = vadd.f32 0.0, %v9329
        %v9331 = vpop.f32.mrb[0].mxu0
        %9332 = vmatprep.mubr.bf16.mxu0 0
        %9333 = vmatmul.mubr.bf16.gmra.mrb[0].mxu0 %v8931
        %v9334 = vpop.f32.mrb[0].mxu0
        %v9335 = vadd.f32 0.0, %v9334
        %v9336 = vpop.f32.mrb[0].mxu0
        %v9337 = vpop.f32.mrb[0].mxu0
        %v9338 = vadd.f32 0.0, %v9337
        %v9339 = vpop.f32.mrb[0].mxu0
        %9340 = vmatprep.mubr.bf16.mxu0 0
        %9341 = vmatmul.mubr.bf16.gmra.mrb[0].mxu0 %v8934
        %v9342 = vpop.f32.mrb[0].mxu0
        %v9343 = vadd.f32 0.0, %v9342
        %v9344 = vpop.f32.mrb[0].mxu0
        %v9345 = vpop.f32.mrb[0].mxu0
        %v9346 = vadd.f32 0.0, %v9345
        %v9347 = vpop.f32.mrb[0].mxu0
        %9348 = vmatprep.mubr.bf16.mxu0 0
        %9349 = vmatmul.mubr.bf16.gmra.mrb[0].mxu0 %v8937
        %v9350 = vpop.f32.mrb[0].mxu0
        %v9351 = vadd.f32 0.0, %v9350
        %v9352 = vpop.f32.mrb[0].mxu0
        %v9353 = vpop.f32.mrb[0].mxu0
        %v9354 = vadd.f32 0.0, %v9353
        %v9355 = vpop.f32.mrb[0].mxu0
        %9356 = vmatprep.mubr.bf16.mxu0 0
        %9357 = vmatmul.mubr.bf16.gmra.mrb[0].mxu0 %v8940
        %v9358 = vpop.f32.mrb[0].mxu0
        %v9359 = vadd.f32 0.0, %v9358
        %v9360 = vpop.f32.mrb[0].mxu0
        %v9361 = vpop.f32.mrb[0].mxu0
        %v9362 = vadd.f32 0.0, %v9361
        %v9363 = vpop.f32.mrb[0].mxu0
        %9364 = vmatprep.mubr.bf16.mxu0 0
        %9365 = vmatmul.mubr.bf16.gmra.mrb[0].mxu0 %v8943
        %v9366 = vpop.f32.mrb[0].mxu0
        %v9367 = vadd.f32 0.0, %v9366
        %v9368 = vpop.f32.mrb[0].mxu0
        %v9369 = vpop.f32.mrb[0].mxu0
        %v9370 = vadd.f32 0.0, %v9369
        %v9371 = vpop.f32.mrb[0].mxu0
        %9372 = vmatprep.mubr.bf16.mxu0 0
        %9373 = vmatmul.mubr.bf16.gmra.mrb[0].mxu0 %v8946
        %v9374 = vpop.f32.mrb[0].mxu0
        %v9375 = vadd.f32 0.0, %v9374
        %v9376 = vpop.f32.mrb[0].mxu0
        %v9377 = vpop.f32.mrb[0].mxu0
        %v9378 = vadd.f32 0.0, %v9377
        %v9379 = vpop.f32.mrb[0].mxu0
        %9380 = vmatprep.mubr.bf16.mxu0 0
        %9381 = vmatmul.mubr.bf16.gmra.mrb[0].mxu0 %v8949
        %v9382 = vpop.f32.mrb[0].mxu0
        %v9383 = vadd.f32 0.0, %v9382
        %v9384 = vpop.f32.mrb[0].mxu0
        %v9385 = vpop.f32.mrb[0].mxu0
        %v9386 = vadd.f32 0.0, %v9385
        %v9387 = vpop.f32.mrb[0].mxu0
        %9388 = vmatprep.mubr.bf16.mxu0 0
        %9389 = vmatmul.mubr.bf16.gmra.mrb[0].mxu0 %v8952
        %v9390 = vpop.f32.mrb[0].mxu0
        %v9391 = vadd.f32 0.0, %v9390
        %v9392 = vpop.f32.mrb[0].mxu0
        %v9393 = vpop.f32.mrb[0].mxu0
        %v9394 = vadd.f32 0.0, %v9393
        %v9395 = vpop.f32.mrb[0].mxu0
        %9396 = vmatprep.mubr.bf16.mxu0 0
        %9397 = vmatmul.mubr.bf16.gmra.mrb[0].mxu0 %v8955
        %v9398 = vpop.f32.mrb[0].mxu0
        %v9399 = vadd.f32 0.0, %v9398
        %v9400 = vpop.f32.mrb[0].mxu0
        %v9401 = vpop.f32.mrb[0].mxu0
        %v9402 = vadd.f32 0.0, %v9401
        %v9403 = vpop.f32.mrb[0].mxu0
        %9404 = vmatprep.mubr.bf16.mxu0 0
        %9405 = vmatmul.mubr.bf16.gmra.mrb[0].mxu0 %v8958
        %v9406 = vpop.f32.mrb[0].mxu0
        %v9407 = vadd.f32 0.0, %v9406
        %v9408 = vpop.f32.mrb[0].mxu0
        %v9409 = vpop.f32.mrb[0].mxu0
        %v9410 = vadd.f32 0.0, %v9409
        %v9411 = vpop.f32.mrb[0].mxu0
        %9412 = vmatprep.mubr.bf16.mxu0 0
        %9413 = vmatmul.mubr.bf16.gmra.mrb[0].mxu0 %v8961
        %v9414 = vpop.f32.mrb[0].mxu0
        %v9415 = vadd.f32 0.0, %v9414
        %v9416 = vpop.f32.mrb[0].mxu0
        %v9417 = vpop.f32.mrb[0].mxu0
        %v9418 = vadd.f32 0.0, %v9417
        %v9419 = vpop.f32.mrb[0].mxu0
        %9420 = vmatprep.mubr.bf16.mxu0 0
        %9421 = vmatmul.mubr.bf16.gmra.mrb[0].mxu0 %v8964
        %v9422 = vpop.f32.mrb[0].mxu0
        %v9423 = vadd.f32 0.0, %v9422
        %v9424 = vpop.f32.mrb[0].mxu0
        %v9425 = vpop.f32.mrb[0].mxu0
        %v9426 = vadd.f32 0.0, %v9425
        %v9427 = vpop.f32.mrb[0].mxu0
        %9428 = vmatprep.mubr.bf16.mxu0 0
        %9429 = vmatmul.mubr.bf16.gmra.mrb[0].mxu0 %v8967
        %v9430 = vpop.f32.mrb[0].mxu0
        %v9431 = vadd.f32 0.0, %v9430
        %v9432 = vpop.f32.mrb[0].mxu0
        %v9433 = vpop.f32.mrb[0].mxu0
        %v9434 = vadd.f32 0.0, %v9433
        %v9435 = vpop.f32.mrb[0].mxu0
        %9436 = vmatprep.mubr.bf16.mxu0 0
        %9437 = vmatmul.mubr.bf16.gmra.mrb[0].mxu0 %v8970
        %v9438 = vpop.f32.mrb[0].mxu0
        %v9439 = vadd.f32 0.0, %v9438
        %v9440 = vpop.f32.mrb[0].mxu0
        %v9441 = vpop.f32.mrb[0].mxu0
        %v9442 = vadd.f32 0.0, %v9441
        %v9443 = vpop.f32.mrb[0].mxu0
        %9444 = vmatprep.mubr.bf16.mxu0 0
        %9445 = vmatmul.mubr.bf16.gmra.mrb[0].mxu0 %v8973
        %v9446 = vpop.f32.mrb[0].mxu0
        %v9447 = vadd.f32 0.0, %v9446
        %v9448 = vpop.f32.mrb[0].mxu0
        %v9449 = vpop.f32.mrb[0].mxu0
        %v9450 = vadd.f32 0.0, %v9449
        %v9451 = vpop.f32.mrb[0].mxu0
        %9452 = vmatprep.mubr.bf16.mxu0 0
        %9453 = vmatmul.mubr.bf16.gmra.mrb[0].mxu0 %v8976
        %v9454 = vpop.f32.mrb[0].mxu0
        %v9455 = vadd.f32 0.0, %v9454
        %v9456 = vpop.f32.mrb[0].mxu0
        %v9457 = vpop.f32.mrb[0].mxu0
        %v9458 = vadd.f32 0.0, %v9457
        %v9459 = vpop.f32.mrb[0].mxu0
        %9460 = vmatprep.mubr.bf16.mxu0 0
        %9461 = vmatmul.mubr.bf16.gmra.mrb[0].mxu0 %v8979
        %v9462 = vpop.f32.mrb[0].mxu0
        %v9463 = vadd.f32 0.0, %v9462
        %v9464 = vpop.f32.mrb[0].mxu0
        %v9465 = vpop.f32.mrb[0].mxu0
        %v9466 = vadd.f32 0.0, %v9465
        %v9467 = vpop.f32.mrb[0].mxu0
        %9468 = vmatprep.mubr.bf16.mxu0 0
        %9469 = vmatmul.mubr.bf16.gmra.mrb[0].mxu0 %v8982
        %v9470 = vpop.f32.mrb[0].mxu0
        %v9471 = vadd.f32 0.0, %v9470
        %v9472 = vpop.f32.mrb[0].mxu0
        %v9473 = vpop.f32.mrb[0].mxu0
        %v9474 = vadd.f32 0.0, %v9473
        %v9475 = vpop.f32.mrb[0].mxu0
        %9476 = vmatprep.mubr.bf16.mxu0 0
        %9477 = vmatmul.mubr.bf16.gmra.mrb[0].mxu0 %v8985
        %v9478 = vpop.f32.mrb[0].mxu0
        %v9479 = vadd.f32 0.0, %v9478
        %v9480 = vpop.f32.mrb[0].mxu0
        %v9481 = vpop.f32.mrb[0].mxu0
        %v9482 = vadd.f32 0.0, %v9481
        %v9483 = vpop.f32.mrb[0].mxu0
        %9484 = vmatprep.mubr.bf16.mxu0 0
        %9485 = vmatmul.mubr.bf16.gmra.mrb[0].mxu0 %v8988
        %v9486 = vpop.f32.mrb[0].mxu0
        %v9487 = vadd.f32 0.0, %v9486
        %v9488 = vpop.f32.mrb[0].mxu0
        %v9489 = vpop.f32.mrb[0].mxu0
        %v9490 = vadd.f32 0.0, %v9489
        %v9491 = vpop.f32.mrb[0].mxu0
        %9492 = vmatprep.mubr.bf16.mxu0 0
        %9493 = vmatmul.mubr.bf16.gmra.mrb[0].mxu0 %v8991
        %v9494 = vpop.f32.mrb[0].mxu0
        %v9495 = vadd.f32 0.0, %v9494
        %v9496 = vpop.f32.mrb[0].mxu0
        %v9497 = vpop.f32.mrb[0].mxu0
        %v9498 = vadd.f32 0.0, %v9497
        %v9499 = vpop.f32.mrb[0].mxu0
        %9500 = vmatprep.mubr.bf16.mxu0 0
        %9501 = vmatmul.mubr.bf16.gmra.mrb[0].mxu0 %v8994
        %v9502 = vpop.f32.mrb[0].mxu0
        %v9503 = vadd.f32 0.0, %v9502
        %v9504 = vpop.f32.mrb[0].mxu0
        %v9505 = vpop.f32.mrb[0].mxu0
        %v9506 = vadd.f32 0.0, %v9505
        %v9507 = vpop.f32.mrb[0].mxu0
        %9508 = vmatprep.mubr.bf16.mxu0 0
        %9509 = vmatmul.mubr.bf16.gmra.mrb[0].mxu0 %v8997
        %v9510 = vpop.f32.mrb[0].mxu0
        %v9511 = vadd.f32 0.0, %v9510
        %v9512 = vpop.f32.mrb[0].mxu0
        %v9513 = vpop.f32.mrb[0].mxu0
        %v9514 = vadd.f32 0.0, %v9513
        %v9515 = vpop.f32.mrb[0].mxu0
        %9516 = vmatprep.mubr.bf16.mxu0 0
        %9517 = vmatmul.mubr.bf16.gmra.mrb[0].mxu0 %v9000
        %v9518 = vpop.f32.mrb[0].mxu0
        %v9519 = vadd.f32 0.0, %v9518
        %v9520 = vpop.f32.mrb[0].mxu0
        %v9521 = vpop.f32.mrb[0].mxu0
        %v9522 = vadd.f32 0.0, %v9521
        %v9523 = vpop.f32.mrb[0].mxu0
        %9524 = vmatprep.mubr.bf16.mxu0 0
        %9525 = vmatmul.mubr.bf16.gmra.mrb[0].mxu0 %v9003
        %v9526 = vpop.f32.mrb[0].mxu0
        %v9527 = vadd.f32 0.0, %v9526
        %v9528 = vpop.f32.mrb[0].mxu0
        %v9529 = vpop.f32.mrb[0].mxu0
        %v9530 = vadd.f32 0.0, %v9529
        %v9531 = vpop.f32.mrb[0].mxu0
        %9532 = vmatprep.mubr.bf16.mxu0 0
        %9533 = vmatmul.mubr.bf16.gmra.mrb[0].mxu0 %v9006
        %v9534 = vpop.f32.mrb[0].mxu0
        %v9535 = vadd.f32 0.0, %v9534
        %v9536 = vpop.f32.mrb[0].mxu0
        %v9537 = vpop.f32.mrb[0].mxu0
        %v9538 = vadd.f32 0.0, %v9537
        %v9539 = vpop.f32.mrb[0].mxu0
        %9540 = vmatprep.mubr.bf16.mxu0 0
        %9541 = vmatmul.mubr.bf16.gmra.mrb[0].mxu0 %v9009
        %v9542 = vpop.f32.mrb[0].mxu0
        %v9543 = vadd.f32 0.0, %v9542
        %v9544 = vpop.f32.mrb[0].mxu0
        %v9545 = vpop.f32.mrb[0].mxu0
        %v9546 = vadd.f32 0.0, %v9545
        %v9547 = vpop.f32.mrb[0].mxu0
        %9548 = vmatprep.mubr.bf16.mxu0 0
        %9549 = vmatmul.mubr.bf16.gmra.mrb[0].mxu0 %v9012
        %v9550 = vpop.f32.mrb[0].mxu0
        %v9551 = vadd.f32 0.0, %v9550
        %v9552 = vpop.f32.mrb[0].mxu0
        %v9553 = vpop.f32.mrb[0].mxu0
        %v9554 = vadd.f32 0.0, %v9553
        %v9555 = vpop.f32.mrb[0].mxu0
        %9556 = vmatprep.mubr.bf16.mxu0 0
        %9557 = vmatmul.mubr.bf16.gmra.mrb[0].mxu0 %v9015
        %v9558 = vpop.f32.mrb[0].mxu0
        %v9559 = vadd.f32 0.0, %v9558
        %v9560 = vpop.f32.mrb[0].mxu0
        %v9561 = vpop.f32.mrb[0].mxu0
        %v9562 = vadd.f32 0.0, %v9561
        %v9563 = vpop.f32.mrb[0].mxu0
        %9564 = vdwg.mxu0
        %v9565 = vadd.f32 %v8503, %v9055
        %v9566 = vadd.f32 %v8504, %v9058
        %v9567 = vadd.f32 %v8505, %v9063
        %v9568 = vadd.f32 %v8506, %v9066
        %v9569 = vadd.f32 %v8507, %v9071
        %v9570 = vadd.f32 %v8508, %v9074
        %v9571 = vadd.f32 %v8509, %v9079
        %v9572 = vadd.f32 %v8510, %v9082
        %v9573 = vadd.f32 %v8511, %v9087
        %v9574 = vadd.f32 %v8512, %v9090
        %v9575 = vadd.f32 %v8513, %v9095
        %v9576 = vadd.f32 %v8514, %v9098
        %v9577 = vadd.f32 %v8515, %v9103
        %v9578 = vadd.f32 %v8516, %v9106
        %v9579 = vadd.f32 %v8517, %v9111
        %v9580 = vadd.f32 %v8518, %v9114
        %v9581 = vadd.f32 %v8519, %v9119
        %v9582 = vadd.f32 %v8520, %v9122
        %v9583 = vadd.f32 %v8521, %v9127
        %v9584 = vadd.f32 %v8522, %v9130
        %v9585 = vadd.f32 %v8523, %v9135
        %v9586 = vadd.f32 %v8524, %v9138
        %v9587 = vadd.f32 %v8525, %v9143
        %v9588 = vadd.f32 %v8526, %v9146
        %v9589 = vadd.f32 %v8527, %v9151
        %v9590 = vadd.f32 %v8528, %v9154
        %v9591 = vadd.f32 %v8529, %v9159
        %v9592 = vadd.f32 %v8530, %v9162
        %v9593 = vadd.f32 %v8531, %v9167
        %v9594 = vadd.f32 %v8532, %v9170
        %v9595 = vadd.f32 %v8533, %v9175
        %v9596 = vadd.f32 %v8534, %v9178
        %v9597 = vadd.f32 %v8535, %v9183
        %v9598 = vadd.f32 %v8536, %v9186
        %v9599 = vadd.f32 %v8537, %v9191
        %v9600 = vadd.f32 %v8538, %v9194
        %v9601 = vadd.f32 %v8539, %v9199
        %v9602 = vadd.f32 %v8540, %v9202
        %v9603 = vadd.f32 %v8541, %v9207
        %v9604 = vadd.f32 %v8542, %v9210
        %v9605 = vadd.f32 %v8543, %v9215
        %v9606 = vadd.f32 %v8544, %v9218
        %v9607 = vadd.f32 %v8545, %v9223
        %v9608 = vadd.f32 %v8546, %v9226
        %v9609 = vadd.f32 %v8547, %v9231
        %v9610 = vadd.f32 %v8548, %v9234
        %v9611 = vadd.f32 %v8549, %v9239
        %v9612 = vadd.f32 %v8550, %v9242
        %v9613 = vadd.f32 %v8551, %v9247
        %v9614 = vadd.f32 %v8552, %v9250
        %v9615 = vadd.f32 %v8553, %v9255
        %v9616 = vadd.f32 %v8554, %v9258
        %v9617 = vadd.f32 %v8555, %v9263
        %v9618 = vadd.f32 %v8556, %v9266
        %v9619 = vadd.f32 %v8557, %v9271
        %v9620 = vadd.f32 %v8558, %v9274
        %v9621 = vadd.f32 %v8559, %v9279
        %v9622 = vadd.f32 %v8560, %v9282
        %v9623 = vadd.f32 %v8561, %v9287
        %v9624 = vadd.f32 %v8562, %v9290
        %v9625 = vadd.f32 %v8563, %v9295
        %v9626 = vadd.f32 %v8564, %v9298
        %v9627 = vadd.f32 %v8565, %v9303
        %v9628 = vadd.f32 %v8566, %v9306
        %v9629 = vadd.f32 %v8567, %v9311
        %v9630 = vadd.f32 %v8568, %v9314
        %v9631 = vadd.f32 %v8569, %v9319
        %v9632 = vadd.f32 %v8570, %v9322
        %v9633 = vadd.f32 %v8571, %v9327
        %v9634 = vadd.f32 %v8572, %v9330
        %v9635 = vadd.f32 %v8573, %v9335
        %v9636 = vadd.f32 %v8574, %v9338
        %v9637 = vadd.f32 %v8575, %v9343
        %v9638 = vadd.f32 %v8576, %v9346
        %v9639 = vadd.f32 %v8577, %v9351
        %v9640 = vadd.f32 %v8578, %v9354
        %v9641 = vadd.f32 %v8579, %v9359
        %v9642 = vadd.f32 %v8580, %v9362
        %v9643 = vadd.f32 %v8581, %v9367
        %v9644 = vadd.f32 %v8582, %v9370
        %v9645 = vadd.f32 %v8583, %v9375
        %v9646 = vadd.f32 %v8584, %v9378
        %v9647 = vadd.f32 %v8585, %v9383
        %v9648 = vadd.f32 %v8586, %v9386
        %v9649 = vadd.f32 %v8587, %v9391
        %v9650 = vadd.f32 %v8588, %v9394
        %v9651 = vadd.f32 %v8589, %v9399
        %v9652 = vadd.f32 %v8590, %v9402
        %v9653 = vadd.f32 %v8591, %v9407
        %v9654 = vadd.f32 %v8592, %v9410
        %v9655 = vadd.f32 %v8593, %v9415
        %v9656 = vadd.f32 %v8594, %v9418
        %v9657 = vadd.f32 %v8595, %v9423
        %v9658 = vadd.f32 %v8596, %v9426
        %v9659 = vadd.f32 %v8597, %v9431
        %v9660 = vadd.f32 %v8598, %v9434
        %v9661 = vadd.f32 %v8599, %v9439
        %v9662 = vadd.f32 %v8600, %v9442
        %v9663 = vadd.f32 %v8601, %v9447
        %v9664 = vadd.f32 %v8602, %v9450
        %v9665 = vadd.f32 %v8603, %v9455
        %v9666 = vadd.f32 %v8604, %v9458
        %v9667 = vadd.f32 %v8605, %v9463
        %v9668 = vadd.f32 %v8606, %v9466
        %v9669 = vadd.f32 %v8607, %v9471
        %v9670 = vadd.f32 %v8608, %v9474
        %v9671 = vadd.f32 %v8609, %v9479
        %v9672 = vadd.f32 %v8610, %v9482
        %v9673 = vadd.f32 %v8611, %v9487
        %v9674 = vadd.f32 %v8612, %v9490
        %v9675 = vadd.f32 %v8613, %v9495
        %v9676 = vadd.f32 %v8614, %v9498
        %v9677 = vadd.f32 %v8615, %v9503
        %v9678 = vadd.f32 %v8616, %v9506
        %v9679 = vadd.f32 %v8617, %v9511
        %v9680 = vadd.f32 %v8618, %v9514
        %v9681 = vadd.f32 %v8619, %v9519
        %v9682 = vadd.f32 %v8620, %v9522
        %v9683 = vadd.f32 %v8621, %v9527
        %v9684 = vadd.f32 %v8622, %v9530
        %v9685 = vadd.f32 %v8623, %v9535
        %v9686 = vadd.f32 %v8624, %v9538
        %v9687 = vadd.f32 %v8625, %v9543
        %v9688 = vadd.f32 %v8626, %v9546
        %v9689 = vadd.f32 %v8627, %v9551
        %v9690 = vadd.f32 %v8628, %v9554
        %v9691 = vadd.f32 %v8629, %v9559
        %v9692 = vadd.f32 %v8630, %v9562
        %v9693 = vld [vmem:[%s2] sm:$0x1]
        %v9695 = vlaneseq
        %v9696 = vshrl.u32 %v9695, 7
        %v9697 = vsub.s32 0, %v9696
        %v9698 = vrot.slane %v9693, %v9697
        %v9700 = vadd.f32 %v9565, %v9698
        %v9701 = vadd.f32 %v9566, %v9698
        %v9702 = vadd.f32 %v9567, %v9698
        %v9703 = vadd.f32 %v9568, %v9698
        %v9704 = vadd.f32 %v9569, %v9698
        %v9705 = vadd.f32 %v9570, %v9698
        %v9706 = vadd.f32 %v9571, %v9698
        %v9707 = vadd.f32 %v9572, %v9698
        %v9708 = vadd.f32 %v9573, %v9698
        %v9709 = vadd.f32 %v9574, %v9698
        %v9710 = vadd.f32 %v9575, %v9698
        %v9711 = vadd.f32 %v9576, %v9698
        %v9712 = vadd.f32 %v9577, %v9698
        %v9713 = vadd.f32 %v9578, %v9698
        %v9714 = vadd.f32 %v9579, %v9698
        %v9715 = vadd.f32 %v9580, %v9698
        %v9716 = vadd.f32 %v9581, %v9698
        %v9717 = vadd.f32 %v9582, %v9698
        %v9718 = vadd.f32 %v9583, %v9698
        %v9719 = vadd.f32 %v9584, %v9698
        %v9720 = vadd.f32 %v9585, %v9698
        %v9721 = vadd.f32 %v9586, %v9698
        %v9722 = vadd.f32 %v9587, %v9698
        %v9723 = vadd.f32 %v9588, %v9698
        %v9724 = vadd.f32 %v9589, %v9698
        %v9725 = vadd.f32 %v9590, %v9698
        %v9726 = vadd.f32 %v9591, %v9698
        %v9727 = vadd.f32 %v9592, %v9698
        %v9728 = vadd.f32 %v9593, %v9698
        %v9729 = vadd.f32 %v9594, %v9698
        %v9730 = vadd.f32 %v9595, %v9698
        %v9731 = vadd.f32 %v9596, %v9698
        %v9732 = vadd.f32 %v9597, %v9698
        %v9733 = vadd.f32 %v9598, %v9698
        %v9734 = vadd.f32 %v9599, %v9698
        %v9735 = vadd.f32 %v9600, %v9698
        %v9736 = vadd.f32 %v9601, %v9698
        %v9737 = vadd.f32 %v9602, %v9698
        %v9738 = vadd.f32 %v9603, %v9698
        %v9739 = vadd.f32 %v9604, %v9698
        %v9740 = vadd.f32 %v9605, %v9698
        %v9741 = vadd.f32 %v9606, %v9698
        %v9742 = vadd.f32 %v9607, %v9698
        %v9743 = vadd.f32 %v9608, %v9698
        %v9744 = vadd.f32 %v9609, %v9698
        %v9745 = vadd.f32 %v9610, %v9698
        %v9746 = vadd.f32 %v9611, %v9698
        %v9747 = vadd.f32 %v9612, %v9698
        %v9748 = vadd.f32 %v9613, %v9698
        %v9749 = vadd.f32 %v9614, %v9698
        %v9750 = vadd.f32 %v9615, %v9698
        %v9751 = vadd.f32 %v9616, %v9698
        %v9752 = vadd.f32 %v9617, %v9698
        %v9753 = vadd.f32 %v9618, %v9698
        %v9754 = vadd.f32 %v9619, %v9698
        %v9755 = vadd.f32 %v9620, %v9698
        %v9756 = vadd.f32 %v9621, %v9698
        %v9757 = vadd.f32 %v9622, %v9698
        %v9758 = vadd.f32 %v9623, %v9698
        %v9759 = vadd.f32 %v9624, %v9698
        %v9760 = vadd.f32 %v9625, %v9698
        %v9761 = vadd.f32 %v9626, %v9698
        %v9762 = vadd.f32 %v9627, %v9698
        %v9763 = vadd.f32 %v9628, %v9698
        %v9764 = vadd.f32 %v9629, %v9698
        %v9765 = vadd.f32 %v9630, %v9698
        %v9766 = vadd.f32 %v9631, %v9698
        %v9767 = vadd.f32 %v9632, %v9698
        %v9768 = vadd.f32 %v9633, %v9698
        %v9769 = vadd.f32 %v9634, %v9698
        %v9770 = vadd.f32 %v9635, %v9698
        %v9771 = vadd.f32 %v9636, %v9698
        %v9772 = vadd.f32 %v9637, %v9698
        %v9773 = vadd.f32 %v9638, %v9698
        %v9774 = vadd.f32 %v9639, %v9698
        %v9775 = vadd.f32 %v9640, %v9698
        %v9776 = vadd.f32 %v9641, %v9698
        %v9777 = vadd.f32 %v9642, %v9698
        %v9778 = vadd.f32 %v9643, %v9698
        %v9779 = vadd.f32 %v9644, %v9698
        %v9780 = vadd.f32 %v9645, %v9698
        %v9781 = vadd.f32 %v9646, %v9698
        %v9782 = vadd.f32 %v9647, %v9698
        %v9783 = vadd.f32 %v9648, %v9698
        %v9784 = vadd.f32 %v9649, %v9698
        %v9785 = vadd.f32 %v9650, %v9698
        %v9786 = vadd.f32 %v9651, %v9698
        %v9787 = vadd.f32 %v9652, %v9698
        %v9788 = vadd.f32 %v9653, %v9698
        %v9789 = vadd.f32 %v9654, %v9698
        %v9790 = vadd.f32 %v9655, %v9698
        %v9791 = vadd.f32 %v9656, %v9698
        %v9792 = vadd.f32 %v9657, %v9698
        %v9793 = vadd.f32 %v9658, %v9698
        %v9794 = vadd.f32 %v9659, %v9698
        %v9795 = vadd.f32 %v9660, %v9698
        %v9796 = vadd.f32 %v9661, %v9698
        %v9797 = vadd.f32 %v9662, %v9698
        %v9798 = vadd.f32 %v9663, %v9698
        %v9799 = vadd.f32 %v9664, %v9698
        %v9800 = vadd.f32 %v9665, %v9698
        %v9801 = vadd.f32 %v9666, %v9698
        %v9802 = vadd.f32 %v9667, %v9698
        %v9803 = vadd.f32 %v9668, %v9698
        %v9804 = vadd.f32 %v9669, %v9698
        %v9805 = vadd.f32 %v9670, %v9698
        %v9806 = vadd.f32 %v9671, %v9698
        %v9807 = vadd.f32 %v9672, %v9698
        %v9808 = vadd.f32 %v9673, %v9698
        %v9809 = vadd.f32 %v9674, %v9698
        %v9810 = vadd.f32 %v9675, %v9698
        %v9811 = vadd.f32 %v9676, %v9698
        %v9812 = vadd.f32 %v9677, %v9698
        %v9813 = vadd.f32 %v9678, %v9698
        %v9814 = vadd.f32 %v9679, %v9698
        %v9815 = vadd.f32 %v9680, %v9698
        %v9816 = vadd.f32 %v9681, %v9698
        %v9817 = vadd.f32 %v9682, %v9698
        %v9818 = vadd.f32 %v9683, %v9698
        %v9819 = vadd.f32 %v9684, %v9698
        %v9820 = vadd.f32 %v9685, %v9698
        %v9821 = vadd.f32 %v9686, %v9698
        %v9822 = vadd.f32 %v9687, %v9698
        %v9823 = vadd.f32 %v9688, %v9698
        %v9824 = vadd.f32 %v9689, %v9698
        %v9825 = vadd.f32 %v9690, %v9698
        %v9826 = vadd.f32 %v9691, %v9698
        %v9827 = vadd.f32 %v9692, %v9698
        %v9828 = vmax.f32 %v9700, 0.0
        %v9829 = vmax.f32 %v9701, 0.0
        %v9830 = vmax.f32 %v9702, 0.0
        %v9831 = vmax.f32 %v9703, 0.0
        %v9832 = vmax.f32 %v9704, 0.0
        %v9833 = vmax.f32 %v9705, 0.0
        %v9834 = vmax.f32 %v9706, 0.0
        %v9835 = vmax.f32 %v9707, 0.0
        %v9836 = vmax.f32 %v9708, 0.0
        %v9837 = vmax.f32 %v9709, 0.0
        %v9838 = vmax.f32 %v9710, 0.0
        %v9839 = vmax.f32 %v9711, 0.0
        %v9840 = vmax.f32 %v9712, 0.0
        %v9841 = vmax.f32 %v9713, 0.0
        %v9842 = vmax.f32 %v9714, 0.0
        %v9843 = vmax.f32 %v9715, 0.0
        %v9844 = vmax.f32 %v9716, 0.0
        %v9845 = vmax.f32 %v9717, 0.0
        %v9846 = vmax.f32 %v9718, 0.0
        %v9847 = vmax.f32 %v9719, 0.0
        %v9848 = vmax.f32 %v9720, 0.0
        %v9849 = vmax.f32 %v9721, 0.0
        %v9850 = vmax.f32 %v9722, 0.0
        %v9851 = vmax.f32 %v9723, 0.0
        %v9852 = vmax.f32 %v9724, 0.0
        %v9853 = vmax.f32 %v9725, 0.0
        %v9854 = vmax.f32 %v9726, 0.0
        %v9855 = vmax.f32 %v9727, 0.0
        %v9856 = vmax.f32 %v9728, 0.0
        %v9857 = vmax.f32 %v9729, 0.0
        %v9858 = vmax.f32 %v9730, 0.0
        %v9859 = vmax.f32 %v9731, 0.0
        %v9860 = vmax.f32 %v9732, 0.0
        %v9861 = vmax.f32 %v9733, 0.0
        %v9862 = vmax.f32 %v9734, 0.0
        %v9863 = vmax.f32 %v9735, 0.0
        %v9864 = vmax.f32 %v9736, 0.0
        %v9865 = vmax.f32 %v9737, 0.0
        %v9866 = vmax.f32 %v9738, 0.0
        %v9867 = vmax.f32 %v9739, 0.0
        %v9868 = vmax.f32 %v9740, 0.0
        %v9869 = vmax.f32 %v9741, 0.0
        %v9870 = vmax.f32 %v9742, 0.0
        %v9871 = vmax.f32 %v9743, 0.0
        %v9872 = vmax.f32 %v9744, 0.0
        %v9873 = vmax.f32 %v9745, 0.0
        %v9874 = vmax.f32 %v9746, 0.0
        %v9875 = vmax.f32 %v9747, 0.0
        %v9876 = vmax.f32 %v9748, 0.0
        %v9877 = vmax.f32 %v9749, 0.0
        %v9878 = vmax.f32 %v9750, 0.0
        %v9879 = vmax.f32 %v9751, 0.0
        %v9880 = vmax.f32 %v9752, 0.0
        %v9881 = vmax.f32 %v9753, 0.0
        %v9882 = vmax.f32 %v9754, 0.0
        %v9883 = vmax.f32 %v9755, 0.0
        %v9884 = vmax.f32 %v9756, 0.0
        %v9885 = vmax.f32 %v9757, 0.0
        %v9886 = vmax.f32 %v9758, 0.0
        %v9887 = vmax.f32 %v9759, 0.0
        %v9888 = vmax.f32 %v9760, 0.0
        %v9889 = vmax.f32 %v9761, 0.0
        %v9890 = vmax.f32 %v9762, 0.0
        %v9891 = vmax.f32 %v9763, 0.0
        %v9892 = vmax.f32 %v9764, 0.0
        %v9893 = vmax.f32 %v9765, 0.0
        %v9894 = vmax.f32 %v9766, 0.0
        %v9895 = vmax.f32 %v9767, 0.0
        %v9896 = vmax.f32 %v9768, 0.0
        %v9897 = vmax.f32 %v9769, 0.0
        %v9898 = vmax.f32 %v9770, 0.0
        %v9899 = vmax.f32 %v9771, 0.0
        %v9900 = vmax.f32 %v9772, 0.0
        %v9901 = vmax.f32 %v9773, 0.0
        %v9902 = vmax.f32 %v9774, 0.0
        %v9903 = vmax.f32 %v9775, 0.0
        %v9904 = vmax.f32 %v9776, 0.0
        %v9905 = vmax.f32 %v9777, 0.0
        %v9906 = vmax.f32 %v9778, 0.0
        %v9907 = vmax.f32 %v9779, 0.0
        %v9908 = vmax.f32 %v9780, 0.0
        %v9909 = vmax.f32 %v9781, 0.0
        %v9910 = vmax.f32 %v9782, 0.0
        %v9911 = vmax.f32 %v9783, 0.0
        %v9912 = vmax.f32 %v9784, 0.0
        %v9913 = vmax.f32 %v9785, 0.0
        %v9914 = vmax.f32 %v9786, 0.0
        %v9915 = vmax.f32 %v9787, 0.0
        %v9916 = vmax.f32 %v9788, 0.0
        %v9917 = vmax.f32 %v9789, 0.0
        %v9918 = vmax.f32 %v9790, 0.0
        %v9919 = vmax.f32 %v9791, 0.0
        %v9920 = vmax.f32 %v9792, 0.0
        %v9921 = vmax.f32 %v9793, 0.0
        %v9922 = vmax.f32 %v9794, 0.0
        %v9923 = vmax.f32 %v9795, 0.0
        %v9924 = vmax.f32 %v9796, 0.0
        %v9925 = vmax.f32 %v9797, 0.0
        %v9926 = vmax.f32 %v9798, 0.0
        %v9927 = vmax.f32 %v9799, 0.0
        %v9928 = vmax.f32 %v9800, 0.0
        %v9929 = vmax.f32 %v9801, 0.0
        %v9930 = vmax.f32 %v9802, 0.0
        %v9931 = vmax.f32 %v9803, 0.0
        %v9932 = vmax.f32 %v9804, 0.0
        %v9933 = vmax.f32 %v9805, 0.0
        %v9934 = vmax.f32 %v9806, 0.0
        %v9935 = vmax.f32 %v9807, 0.0
        %v9936 = vmax.f32 %v9808, 0.0
        %v9937 = vmax.f32 %v9809, 0.0
        %v9938 = vmax.f32 %v9810, 0.0
        %v9939 = vmax.f32 %v9811, 0.0
        %v9940 = vmax.f32 %v9812, 0.0
        %v9941 = vmax.f32 %v9813, 0.0
        %v9942 = vmax.f32 %v9814, 0.0
        %v9943 = vmax.f32 %v9815, 0.0
        %v9944 = vmax.f32 %v9816, 0.0
        %v9945 = vmax.f32 %v9817, 0.0
        %v9946 = vmax.f32 %v9818, 0.0
        %v9947 = vmax.f32 %v9819, 0.0
        %v9948 = vmax.f32 %v9820, 0.0
        %v9949 = vmax.f32 %v9821, 0.0
        %v9950 = vmax.f32 %v9822, 0.0
        %v9951 = vmax.f32 %v9823, 0.0
        %v9952 = vmax.f32 %v9824, 0.0
        %v9953 = vmax.f32 %v9825, 0.0
        %v9954 = vmax.f32 %v9826, 0.0
        %v9955 = vmax.f32 %v9827, 0.0
        %vm9956 = vcmask 130048
        %v9957 = vsel %vm9956, %v9828, -inf
        %v9958 = vsel %vm9956, %v9832, -inf
        %v9959 = vmax.f32 %v9957, %v9958
        %v9960 = vsel %vm9956, %v9836, -inf
        %v9961 = vmax.f32 %v9959, %v9960
        %v9962 = vsel %vm9956, %v9840, -inf
        %v9963 = vmax.f32 %v9961, %v9962
        %v9964 = vsel %vm9956, %v9844, -inf
        %v9965 = vmax.f32 %v9963, %v9964
        %v9966 = vsel %vm9956, %v9848, -inf
        %v9967 = vmax.f32 %v9965, %v9966
        %v9968 = vsel %vm9956, %v9852, -inf
        %v9969 = vmax.f32 %v9967, %v9968
        %v9970 = vsel %vm9956, %v9856, -inf
        %v9971 = vmax.f32 %v9969, %v9970
        %v9972 = vsel %vm9956, %v9829, -inf
        %v9973 = vsel %vm9956, %v9833, -inf
        %v9974 = vmax.f32 %v9972, %v9973
        %v9975 = vsel %vm9956, %v9837, -inf
        %v9976 = vmax.f32 %v9974, %v9975
        %v9977 = vsel %vm9956, %v9841, -inf
        %v9978 = vmax.f32 %v9976, %v9977
        %v9979 = vsel %vm9956, %v9845, -inf
        %v9980 = vmax.f32 %v9978, %v9979
        %v9981 = vsel %vm9956, %v9849, -inf
        %v9982 = vmax.f32 %v9980, %v9981
        %v9983 = vsel %vm9956, %v9853, -inf
        %v9984 = vmax.f32 %v9982, %v9983
        %v9985 = vsel %vm9956, %v9857, -inf
        %v9986 = vmax.f32 %v9984, %v9985
        %v9987 = vsel %vm9956, %v9830, -inf
        %v9988 = vsel %vm9956, %v9834, -inf
        %v9989 = vmax.f32 %v9987, %v9988
        %v9990 = vsel %vm9956, %v9838, -inf
        %v9991 = vmax.f32 %v9989, %v9990
        %v9992 = vsel %vm9956, %v9842, -inf
        %v9993 = vmax.f32 %v9991, %v9992
        %v9994 = vsel %vm9956, %v9846, -inf
        %v9995 = vmax.f32 %v9993, %v9994
        %v9996 = vsel %vm9956, %v9850, -inf
        %v9997 = vmax.f32 %v9995, %v9996
        %v9998 = vsel %vm9956, %v9854, -inf
        %v9999 = vmax.f32 %v9997, %v9998
        %v10000 = vsel %vm9956, %v9858, -inf
        %v10001 = vmax.f32 %v9999, %v10000
        %v10002 = vsel %vm9956, %v9831, -inf
        %v10003 = vsel %vm9956, %v9835, -inf
        %v10004 = vmax.f32 %v10002, %v10003
        %v10005 = vsel %vm9956, %v9839, -inf
        %v10006 = vmax.f32 %v10004, %v10005
        %v10007 = vsel %vm9956, %v9843, -inf
        %v10008 = vmax.f32 %v10006, %v10007
        %v10009 = vsel %vm9956, %v9847, -inf
        %v10010 = vmax.f32 %v10008, %v10009
        %v10011 = vsel %vm9956, %v9851, -inf
        %v10012 = vmax.f32 %v10010, %v10011
        %v10013 = vsel %vm9956, %v9855, -inf
        %v10014 = vmax.f32 %v10012, %v10013
        %v10015 = vsel %vm9956, %v9859, -inf
        %v10016 = vmax.f32 %v10014, %v10015
        %v10017 = vsel %vm9956, %v9860, -inf
        %v10018 = vsel %vm9956, %v9864, -inf
        %v10019 = vmax.f32 %v10017, %v10018
        %v10020 = vsel %vm9956, %v9868, -inf
        %v10021 = vmax.f32 %v10019, %v10020
        %v10022 = vsel %vm9956, %v9872, -inf
        %v10023 = vmax.f32 %v10021, %v10022
        %v10024 = vsel %vm9956, %v9876, -inf
        %v10025 = vmax.f32 %v10023, %v10024
        %v10026 = vsel %vm9956, %v9880, -inf
        %v10027 = vmax.f32 %v10025, %v10026
        %v10028 = vsel %vm9956, %v9884, -inf
        %v10029 = vmax.f32 %v10027, %v10028
        %v10030 = vsel %vm9956, %v9888, -inf
        %v10031 = vmax.f32 %v10029, %v10030
        %v10032 = vsel %vm9956, %v9861, -inf
        %v10033 = vsel %vm9956, %v9865, -inf
        %v10034 = vmax.f32 %v10032, %v10033
        %v10035 = vsel %vm9956, %v9869, -inf
        %v10036 = vmax.f32 %v10034, %v10035
        %v10037 = vsel %vm9956, %v9873, -inf
        %v10038 = vmax.f32 %v10036, %v10037
        %v10039 = vsel %vm9956, %v9877, -inf
        %v10040 = vmax.f32 %v10038, %v10039
        %v10041 = vsel %vm9956, %v9881, -inf
        %v10042 = vmax.f32 %v10040, %v10041
        %v10043 = vsel %vm9956, %v9885, -inf
        %v10044 = vmax.f32 %v10042, %v10043
        %v10045 = vsel %vm9956, %v9889, -inf
        %v10046 = vmax.f32 %v10044, %v10045
        %v10047 = vsel %vm9956, %v9862, -inf
        %v10048 = vsel %vm9956, %v9866, -inf
        %v10049 = vmax.f32 %v10047, %v10048
        %v10050 = vsel %vm9956, %v9870, -inf
        %v10051 = vmax.f32 %v10049, %v10050
        %v10052 = vsel %vm9956, %v9874, -inf
        %v10053 = vmax.f32 %v10051, %v10052
        %v10054 = vsel %vm9956, %v9878, -inf
        %v10055 = vmax.f32 %v10053, %v10054
        %v10056 = vsel %vm9956, %v9882, -inf
        %v10057 = vmax.f32 %v10055, %v10056
        %v10058 = vsel %vm9956, %v9886, -inf
        %v10059 = vmax.f32 %v10057, %v10058
        %v10060 = vsel %vm9956, %v9890, -inf
        %v10061 = vmax.f32 %v10059, %v10060
        %v10062 = vsel %vm9956, %v9863, -inf
        %v10063 = vsel %vm9956, %v9867, -inf
        %v10064 = vmax.f32 %v10062, %v10063
        %v10065 = vsel %vm9956, %v9871, -inf
        %v10066 = vmax.f32 %v10064, %v10065
        %v10067 = vsel %vm9956, %v9875, -inf
        %v10068 = vmax.f32 %v10066, %v10067
        %v10069 = vsel %vm9956, %v9879, -inf
        %v10070 = vmax.f32 %v10068, %v10069
        %v10071 = vsel %vm9956, %v9883, -inf
        %v10072 = vmax.f32 %v10070, %v10071
        %v10073 = vsel %vm9956, %v9887, -inf
        %v10074 = vmax.f32 %v10072, %v10073
        %v10075 = vsel %vm9956, %v9891, -inf
        %v10076 = vmax.f32 %v10074, %v10075
        %v10077 = vsel %vm9956, %v9892, -inf
        %v10078 = vsel %vm9956, %v9896, -inf
        %v10079 = vmax.f32 %v10077, %v10078
        %v10080 = vsel %vm9956, %v9900, -inf
        %v10081 = vmax.f32 %v10079, %v10080
        %v10082 = vsel %vm9956, %v9904, -inf
        %v10083 = vmax.f32 %v10081, %v10082
        %v10084 = vsel %vm9956, %v9908, -inf
        %v10085 = vmax.f32 %v10083, %v10084
        %v10086 = vsel %vm9956, %v9912, -inf
        %v10087 = vmax.f32 %v10085, %v10086
        %v10088 = vsel %vm9956, %v9916, -inf
        %v10089 = vmax.f32 %v10087, %v10088
        %v10090 = vsel %vm9956, %v9920, -inf
        %v10091 = vmax.f32 %v10089, %v10090
        %v10092 = vsel %vm9956, %v9893, -inf
        %v10093 = vsel %vm9956, %v9897, -inf
        %v10094 = vmax.f32 %v10092, %v10093
        %v10095 = vsel %vm9956, %v9901, -inf
        %v10096 = vmax.f32 %v10094, %v10095
        %v10097 = vsel %vm9956, %v9905, -inf
        %v10098 = vmax.f32 %v10096, %v10097
        %v10099 = vsel %vm9956, %v9909, -inf
        %v10100 = vmax.f32 %v10098, %v10099
        %v10101 = vsel %vm9956, %v9913, -inf
        %v10102 = vmax.f32 %v10100, %v10101
        %v10103 = vsel %vm9956, %v9917, -inf
        %v10104 = vmax.f32 %v10102, %v10103
        %v10105 = vsel %vm9956, %v9921, -inf
        %v10106 = vmax.f32 %v10104, %v10105
        %v10107 = vsel %vm9956, %v9894, -inf
        %v10108 = vsel %vm9956, %v9898, -inf
        %v10109 = vmax.f32 %v10107, %v10108
        %v10110 = vsel %vm9956, %v9902, -inf
        %v10111 = vmax.f32 %v10109, %v10110
        %v10112 = vsel %vm9956, %v9906, -inf
        %v10113 = vmax.f32 %v10111, %v10112
        %v10114 = vsel %vm9956, %v9910, -inf
        %v10115 = vmax.f32 %v10113, %v10114
        %v10116 = vsel %vm9956, %v9914, -inf
        %v10117 = vmax.f32 %v10115, %v10116
        %v10118 = vsel %vm9956, %v9918, -inf
        %v10119 = vmax.f32 %v10117, %v10118
        %v10120 = vsel %vm9956, %v9922, -inf
        %v10121 = vmax.f32 %v10119, %v10120
        %v10122 = vsel %vm9956, %v9895, -inf
        %v10123 = vsel %vm9956, %v9899, -inf
        %v10124 = vmax.f32 %v10122, %v10123
        %v10125 = vsel %vm9956, %v9903, -inf
        %v10126 = vmax.f32 %v10124, %v10125
        %v10127 = vsel %vm9956, %v9907, -inf
        %v10128 = vmax.f32 %v10126, %v10127
        %v10129 = vsel %vm9956, %v9911, -inf
        %v10130 = vmax.f32 %v10128, %v10129
        %v10131 = vsel %vm9956, %v9915, -inf
        %v10132 = vmax.f32 %v10130, %v10131
        %v10133 = vsel %vm9956, %v9919, -inf
        %v10134 = vmax.f32 %v10132, %v10133
        %v10135 = vsel %vm9956, %v9923, -inf
        %v10136 = vmax.f32 %v10134, %v10135
        %v10137 = vsel %vm9956, %v9924, -inf
        %v10138 = vsel %vm9956, %v9928, -inf
        %v10139 = vmax.f32 %v10137, %v10138
        %v10140 = vsel %vm9956, %v9932, -inf
        %v10141 = vmax.f32 %v10139, %v10140
        %v10142 = vsel %vm9956, %v9936, -inf
        %v10143 = vmax.f32 %v10141, %v10142
        %v10144 = vsel %vm9956, %v9940, -inf
        %v10145 = vmax.f32 %v10143, %v10144
        %v10146 = vsel %vm9956, %v9944, -inf
        %v10147 = vmax.f32 %v10145, %v10146
        %v10148 = vsel %vm9956, %v9948, -inf
        %v10149 = vmax.f32 %v10147, %v10148
        %v10150 = vsel %vm9956, %v9952, -inf
        %v10151 = vmax.f32 %v10149, %v10150
        %v10152 = vsel %vm9956, %v9925, -inf
        %v10153 = vsel %vm9956, %v9929, -inf
        %v10154 = vmax.f32 %v10152, %v10153
        %v10155 = vsel %vm9956, %v9933, -inf
        %v10156 = vmax.f32 %v10154, %v10155
        %v10157 = vsel %vm9956, %v9937, -inf
        %v10158 = vmax.f32 %v10156, %v10157
        %v10159 = vsel %vm9956, %v9941, -inf
        %v10160 = vmax.f32 %v10158, %v10159
        %v10161 = vsel %vm9956, %v9945, -inf
        %v10162 = vmax.f32 %v10160, %v10161
        %v10163 = vsel %vm9956, %v9949, -inf
        %v10164 = vmax.f32 %v10162, %v10163
        %v10165 = vsel %vm9956, %v9953, -inf
        %v10166 = vmax.f32 %v10164, %v10165
        %v10167 = vsel %vm9956, %v9926, -inf
        %v10168 = vsel %vm9956, %v9930, -inf
        %v10169 = vmax.f32 %v10167, %v10168
        %v10170 = vsel %vm9956, %v9934, -inf
        %v10171 = vmax.f32 %v10169, %v10170
        %v10172 = vsel %vm9956, %v9938, -inf
        %v10173 = vmax.f32 %v10171, %v10172
        %v10174 = vsel %vm9956, %v9942, -inf
        %v10175 = vmax.f32 %v10173, %v10174
        %v10176 = vsel %vm9956, %v9946, -inf
        %v10177 = vmax.f32 %v10175, %v10176
        %v10178 = vsel %vm9956, %v9950, -inf
        %v10179 = vmax.f32 %v10177, %v10178
        %v10180 = vsel %vm9956, %v9954, -inf
        %v10181 = vmax.f32 %v10179, %v10180
        %v10182 = vsel %vm9956, %v9927, -inf
        %v10183 = vsel %vm9956, %v9931, -inf
        %v10184 = vmax.f32 %v10182, %v10183
        %v10185 = vsel %vm9956, %v9935, -inf
        %v10186 = vmax.f32 %v10184, %v10185
        %v10187 = vsel %vm9956, %v9939, -inf
        %v10188 = vmax.f32 %v10186, %v10187
        %v10189 = vsel %vm9956, %v9943, -inf
        %v10190 = vmax.f32 %v10188, %v10189
        %v10191 = vsel %vm9956, %v9947, -inf
        %v10192 = vmax.f32 %v10190, %v10191
        %v10193 = vsel %vm9956, %v9951, -inf
        %v10194 = vmax.f32 %v10192, %v10193
        %v10195 = vsel %vm9956, %v9955, -inf
        %v10196 = vmax.f32 %v10194, %v10195
        %v10197 = vsel %vm9956, %v9971, -inf
        %v10198 = vrot.slane %v10197, 4
        %v10199 = vmax.f32 %v10197, %v10198
        %v10200 = vrot.slane %v10199, 2
        %v10201 = vmax.f32 %v10199, %v10200
        %v10202 = vrot.slane %v10201, 1
        %v10203 = vmax.f32 %v10201, %v10202
        %v10204 = vsel %vm9956, %v9986, -inf
        %v10205 = vrot.slane %v10204, 4
        %v10206 = vmax.f32 %v10204, %v10205
        %v10207 = vrot.slane %v10206, 2
        %v10208 = vmax.f32 %v10206, %v10207
        %v10209 = vrot.slane %v10208, 1
        %v10210 = vmax.f32 %v10208, %v10209
        %v10211 = vsel %vm9956, %v10001, -inf
        %v10212 = vrot.slane %v10211, 4
        %v10213 = vmax.f32 %v10211, %v10212
        %v10214 = vrot.slane %v10213, 2
        %v10215 = vmax.f32 %v10213, %v10214
        %v10216 = vrot.slane %v10215, 1
        %v10217 = vmax.f32 %v10215, %v10216
        %v10218 = vsel %vm9956, %v10016, -inf
        %v10219 = vrot.slane %v10218, 4
        %v10220 = vmax.f32 %v10218, %v10219
        %v10221 = vrot.slane %v10220, 2
        %v10222 = vmax.f32 %v10220, %v10221
        %v10223 = vrot.slane %v10222, 1
        %v10224 = vmax.f32 %v10222, %v10223
        %v10225 = vsel %vm9956, %v10031, -inf
        %v10226 = vrot.slane %v10225, 4
        %v10227 = vmax.f32 %v10225, %v10226
        %v10228 = vrot.slane %v10227, 2
        %v10229 = vmax.f32 %v10227, %v10228
        %v10230 = vrot.slane %v10229, 1
        %v10231 = vmax.f32 %v10229, %v10230
        %v10232 = vsel %vm9956, %v10046, -inf
        %v10233 = vrot.slane %v10232, 4
        %v10234 = vmax.f32 %v10232, %v10233
        %v10235 = vrot.slane %v10234, 2
        %v10236 = vmax.f32 %v10234, %v10235
        %v10237 = vrot.slane %v10236, 1
        %v10238 = vmax.f32 %v10236, %v10237
        %v10239 = vsel %vm9956, %v10061, -inf
        %v10240 = vrot.slane %v10239, 4
        %v10241 = vmax.f32 %v10239, %v10240
        %v10242 = vrot.slane %v10241, 2
        %v10243 = vmax.f32 %v10241, %v10242
        %v10244 = vrot.slane %v10243, 1
        %v10245 = vmax.f32 %v10243, %v10244
        %v10246 = vsel %vm9956, %v10076, -inf
        %v10247 = vrot.slane %v10246, 4
        %v10248 = vmax.f32 %v10246, %v10247
        %v10249 = vrot.slane %v10248, 2
        %v10250 = vmax.f32 %v10248, %v10249
        %v10251 = vrot.slane %v10250, 1
        %v10252 = vmax.f32 %v10250, %v10251
        %v10253 = vsel %vm9956, %v10091, -inf
        %v10254 = vrot.slane %v10253, 4
        %v10255 = vmax.f32 %v10253, %v10254
        %v10256 = vrot.slane %v10255, 2
        %v10257 = vmax.f32 %v10255, %v10256
        %v10258 = vrot.slane %v10257, 1
        %v10259 = vmax.f32 %v10257, %v10258
        %v10260 = vsel %vm9956, %v10106, -inf
        %v10261 = vrot.slane %v10260, 4
        %v10262 = vmax.f32 %v10260, %v10261
        %v10263 = vrot.slane %v10262, 2
        %v10264 = vmax.f32 %v10262, %v10263
        %v10265 = vrot.slane %v10264, 1
        %v10266 = vmax.f32 %v10264, %v10265
        %v10267 = vsel %vm9956, %v10121, -inf
        %v10268 = vrot.slane %v10267, 4
        %v10269 = vmax.f32 %v10267, %v10268
        %v10270 = vrot.slane %v10269, 2
        %v10271 = vmax.f32 %v10269, %v10270
        %v10272 = vrot.slane %v10271, 1
        %v10273 = vmax.f32 %v10271, %v10272
        %v10274 = vsel %vm9956, %v10136, -inf
        %v10275 = vrot.slane %v10274, 4
        %v10276 = vmax.f32 %v10274, %v10275
        %v10277 = vrot.slane %v10276, 2
        %v10278 = vmax.f32 %v10276, %v10277
        %v10279 = vrot.slane %v10278, 1
        %v10280 = vmax.f32 %v10278, %v10279
        %v10281 = vsel %vm9956, %v10151, -inf
        %v10282 = vrot.slane %v10281, 4
        %v10283 = vmax.f32 %v10281, %v10282
        %v10284 = vrot.slane %v10283, 2
        %v10285 = vmax.f32 %v10283, %v10284
        %v10286 = vrot.slane %v10285, 1
        %v10287 = vmax.f32 %v10285, %v10286
        %v10288 = vsel %vm9956, %v10166, -inf
        %v10289 = vrot.slane %v10288, 4
        %v10290 = vmax.f32 %v10288, %v10289
        %v10291 = vrot.slane %v10290, 2
        %v10292 = vmax.f32 %v10290, %v10291
        %v10293 = vrot.slane %v10292, 1
        %v10294 = vmax.f32 %v10292, %v10293
        %v10295 = vsel %vm9956, %v10181, -inf
        %v10296 = vrot.slane %v10295, 4
        %v10297 = vmax.f32 %v10295, %v10296
        %v10298 = vrot.slane %v10297, 2
        %v10299 = vmax.f32 %v10297, %v10298
        %v10300 = vrot.slane %v10299, 1
        %v10301 = vmax.f32 %v10299, %v10300
        %v10302 = vsel %vm9956, %v10196, -inf
        %v10303 = vrot.slane %v10302, 4
        %v10304 = vmax.f32 %v10302, %v10303
        %v10305 = vrot.slane %v10304, 2
        %v10306 = vmax.f32 %v10304, %v10305
        %v10307 = vrot.slane %v10306, 1
        %v10308 = vmax.f32 %v10306, %v10307
        %10309 = vst.msk [vmem:[#allocation2] sm:$0xff] %vm9956, 0.0
        %10310 = vst.msk [vmem:[#allocation2 + $0x8] sm:$0xff] %vm9956, 0.0
        %10311 = vst.msk [vmem:[#allocation2 + $0x10] sm:$0xff] %vm9956, 0.0
        %10312 = vst.msk [vmem:[#allocation2 + $0x18] sm:$0xff] %vm9956, 0.0
        %vm10313 = vcmask 125952
        %10314 = vst.msk [vmem:[#allocation2 + $0x20] sm:$0xf] %vm10313, 0.0
        %vm10319 = vcmask 1041409
        %v10320 = vsel %vm10319, %v10210, %v10203
        %vm10321 = vcmask 1042434
        %v10322 = vsel %vm10321, %v10217, %v10320
        %vm10323 = vcmask 1043459
        %v10324 = vsel %vm10323, %v10224, %v10322
        %10326 = vst.msk [vmem:[#allocation2 + $0x7] sm:$0xf] %vm10313, %v10324
        %v10331 = vsel %vm10319, %v10238, %v10231
        %v10332 = vsel %vm10321, %v10245, %v10331
        %v10333 = vsel %vm10323, %v10252, %v10332
        %10335 = vst.msk [vmem:[#allocation2 + $0xd] sm:$0xf] %vm10313, %v10333
        %v10340 = vsel %vm10319, %v10266, %v10259
        %v10341 = vsel %vm10321, %v10273, %v10340
        %v10342 = vsel %vm10323, %v10280, %v10341
        %10344 = vst.msk [vmem:[#allocation2 + $0x13] sm:$0xf] %vm10313, %v10342
        %v10349 = vsel %vm10319, %v10294, %v10287
        %v10350 = vsel %vm10321, %v10301, %v10349
        %v10351 = vsel %vm10323, %v10308, %v10350
        %10353 = vst.msk [vmem:[#allocation2 + $0x19] sm:$0xf] %vm10313, %v10351
        %v10354 = vld [vmem:[#allocation2] sm:$0xff]
        %v10355 = vld [vmem:[#allocation2 + $0x8] sm:$0xff]
        %v10356 = vld [vmem:[#allocation2 + $0x10] sm:$0x3f]
        %v10357 = vpack.c.bf16 %v10355, %v10354
        %v10358 = vpack.c.bf16 %v10356, %v10356
        %v10359 = vld [vmem:[%s3] sm:$0xf]
        %v10360 = vld [vmem:[%s3 + $0x4] sm:$0xf]
        %v10361 = vld [vmem:[#allocation2 + $0x1] sm:$0xff]
        %v10362 = vld [vmem:[#allocation2 + $0x9] sm:$0xff]
        %v10363 = vld [vmem:[#allocation2 + $0x11] sm:$0x3f]
        %v10364 = vpack.c.bf16 %v10362, %v10361
        %v10365 = vpack.c.bf16 %v10363, %v10363
        %s10366 = scalar_lea.vmem %s3, 8
        %v10367 = vld [vmem:[%s10366] sm:$0xf]
        %v10368 = vld [vmem:[%s10366 + $0x4] sm:$0xf]
        %v10371 = vunpack.c.l.b16 %v10367
        %v10372 = vunpack.c.l.b16 %v10368
        %v10373 = vpack.c.b16 %v10372, %v10371
        %v10376 = vsel %vm9956, %v10364, 0
        %v10379 = vsel %vm9956, %v10365, 0
        %10381 = vmatprep.subr.bf16.mxu0 0
        %10382 = vmatpush1.bf16.msra.mxu0 %v10373
        %10383 = vmatprep.subr.bf16.mxu0 0
        %10384 = vmatpush1.bf16.msra.mxu0 0
        %10385 = vmatprep.subr.bf16.mxu0 0
        %10386 = vmatpush1.bf16.msra.mxu0 0
        %10387 = vmatprep.subr.bf16.mxu0 0
        %10388 = vmatpush1.bf16.msra.mxu0 0
        %10389 = vmatprep.subr.bf16.mxu0 0
        %10390 = vmatpush1.bf16.msra.mxu0 0
        %10391 = vmatprep.subr.bf16.mxu0 0
        %10392 = vmatpush1.bf16.msra.mxu0 0
        %10393 = vmatprep.subr.bf16.mxu0 0
        %10394 = vmatpush1.bf16.msra.mxu0 0
        %10395 = vmatprep.subr.bf16.mxu0 0
        %10396 = vmatpush1.bf16.msra.mxu0 0
        %10397 = vmatprep.subr.bf16.mxu0 0
        %10398 = vmatpush1.bf16.msra.mxu0 0
        %10399 = vmatprep.subr.bf16.mxu0 0
        %10400 = vmatpush1.bf16.msra.mxu0 0
        %10401 = vmatprep.subr.bf16.mxu0 0
        %10402 = vmatpush1.bf16.msra.mxu0 0
        %10403 = vmatprep.subr.bf16.mxu0 0
        %10404 = vmatpush1.bf16.msra.mxu0 0
        %10405 = vmatprep.subr.bf16.mxu0 0
        %10406 = vmatpush1.bf16.msra.mxu0 0
        %10407 = vmatprep.subr.bf16.mxu0 0
        %10408 = vmatpush1.bf16.msra.mxu0 0
        %10409 = vmatprep.subr.bf16.mxu0 0
        %10410 = vmatpush1.bf16.msra.mxu0 0
        %10411 = vmatprep.subr.bf16.mxu0 0
        %10412 = vmatpush1.bf16.msra.mxu0 0
        %10413 = vmatprep.mubr.bf16.mxu0 0
        %10414 = vmatmul.mubr.bf16.gmra.mrb[0].mxu0 %v10376
        %v10415 = vpop.f32.mrb[0].mxu0
        %v10416 = vadd.f32 0.0, %v10415
        %v10417 = vpop.f32.mrb[0].mxu0
        %v10418 = vpop.f32.mrb[0].mxu0
        %v10419 = vadd.f32 0.0, %v10418
        %v10420 = vpop.f32.mrb[0].mxu0
        %10421 = vmatprep.mubr.bf16.mxu0 0
        %10422 = vmatmul.mubr.bf16.gmra.mrb[0].mxu0 %v10379
        %v10423 = vpop.f32.mrb[0].mxu0
        %v10424 = vadd.f32 0.0, %v10423
        %v10425 = vpop.f32.mrb[0].mxu0
        %v10426 = vpop.f32.mrb[0].mxu0
        %v10427 = vpop.f32.mrb[0].mxu0
        %10428 = vdwg.mxu0
        %v10431 = vunpack.c.l.b16 %v10359
        %v10432 = vunpack.c.l.b16 %v10360
        %v10433 = vpack.c.b16 %v10432, %v10431
        %v10436 = vsel %vm9956, %v10357, 0
        %v10439 = vsel %vm9956, %v10358, 0
        %10441 = vmatprep.subr.bf16.mxu0 0
        %10442 = vmatpush1.bf16.msra.mxu0 %v10433
        %10443 = vmatprep.subr.bf16.mxu0 0
        %10444 = vmatpush1.bf16.msra.mxu0 0
        %10445 = vmatprep.subr.bf16.mxu0 0
        %10446 = vmatpush1.bf16.msra.mxu0 0
        %10447 = vmatprep.subr.bf16.mxu0 0
        %10448 = vmatpush1.bf16.msra.mxu0 0
        %10449 = vmatprep.subr.bf16.mxu0 0
        %10450 = vmatpush1.bf16.msra.mxu0 0
        %10451 = vmatprep.subr.bf16.mxu0 0
        %10452 = vmatpush1.bf16.msra.mxu0 0
        %10453 = vmatprep.subr.bf16.mxu0 0
        %10454 = vmatpush1.bf16.msra.mxu0 0
        %10455 = vmatprep.subr.bf16.mxu0 0
        %10456 = vmatpush1.bf16.msra.mxu0 0
        %10457 = vmatprep.subr.bf16.mxu0 0
        %10458 = vmatpush1.bf16.msra.mxu0 0
        %10459 = vmatprep.subr.bf16.mxu0 0
        %10460 = vmatpush1.bf16.msra.mxu0 0
        %10461 = vmatprep.subr.bf16.mxu0 0
        %10462 = vmatpush1.bf16.msra.mxu0 0
        %10463 = vmatprep.subr.bf16.mxu0 0
        %10464 = vmatpush1.bf16.msra.mxu0 0
        %10465 = vmatprep.subr.bf16.mxu0 0
        %10466 = vmatpush1.bf16.msra.mxu0 0
        %10467 = vmatprep.subr.bf16.mxu0 0
        %10468 = vmatpush1.bf16.msra.mxu0 0
        %10469 = vmatprep.subr.bf16.mxu0 0
        %10470 = vmatpush1.bf16.msra.mxu0 0
        %10471 = vmatprep.subr.bf16.mxu0 0
        %10472 = vmatpush1.bf16.msra.mxu0 0
        %10473 = vmatprep.mubr.bf16.mxu0 0
        %10474 = vmatmul.mubr.bf16.gmra.mrb[0].mxu0 %v10436
        %v10475 = vpop.f32.mrb[0].mxu0
        %v10476 = vadd.f32 %v10416, %v10475
        %v10477 = vpop.f32.mrb[0].mxu0
        %v10478 = vpop.f32.mrb[0].mxu0
        %v10479 = vadd.f32 %v10419, %v10478
        %v10480 = vpop.f32.mrb[0].mxu0
        %10481 = vmatprep.mubr.bf16.mxu0 0
        %10482 = vmatmul.mubr.bf16.gmra.mrb[0].mxu0 %v10439
        %v10483 = vpop.f32.mrb[0].mxu0
        %v10484 = vadd.f32 %v10424, %v10483
        %v10485 = vpop.f32.mrb[0].mxu0
        %v10486 = vpop.f32.mrb[0].mxu0
        %v10487 = vpop.f32.mrb[0].mxu0
        %10488 = vdwg.mxu0
        %v10489 = vld [vmem:[#allocation2 + $0x2] sm:$0xff]
        %v10490 = vld [vmem:[#allocation2 + $0xa] sm:$0xff]
        %v10491 = vld [vmem:[#allocation2 + $0x12] sm:$0x3f]
        %v10492 = vpack.c.bf16 %v10490, %v10489
        %v10493 = vpack.c.bf16 %v10491, %v10491
        %s10494 = scalar_lea.vmem %s3, 16
        %v10495 = vld [vmem:[%s10494] sm:$0xf]
        %v10496 = vld [vmem:[%s10494 + $0x4] sm:$0xf]
        %v10499 = vunpack.c.l.b16 %v10495
        %v10500 = vunpack.c.l.b16 %v10496
        %v10501 = vpack.c.b16 %v10500, %v10499
        %v10504 = vsel %vm9956, %v10492, 0
        %v10507 = vsel %vm9956, %v10493, 0
        %10509 = vmatprep.subr.bf16.mxu0 0
        %10510 = vmatpush1.bf16.msra.mxu0 %v10501
        %10511 = vmatprep.subr.bf16.mxu0 0
        %10512 = vmatpush1.bf16.msra.mxu0 0
        %10513 = vmatprep.subr.bf16.mxu0 0
        %10514 = vmatpush1.bf16.msra.mxu0 0
        %10515 = vmatprep.subr.bf16.mxu0 0
        %10516 = vmatpush1.bf16.msra.mxu0 0
        %10517 = vmatprep.subr.bf16.mxu0 0
        %10518 = vmatpush1.bf16.msra.mxu0 0
        %10519 = vmatprep.subr.bf16.mxu0 0
        %10520 = vmatpush1.bf16.msra.mxu0 0
        %10521 = vmatprep.subr.bf16.mxu0 0
        %10522 = vmatpush1.bf16.msra.mxu0 0
        %10523 = vmatprep.subr.bf16.mxu0 0
        %10524 = vmatpush1.bf16.msra.mxu0 0
        %10525 = vmatprep.subr.bf16.mxu0 0
        %10526 = vmatpush1.bf16.msra.mxu0 0
        %10527 = vmatprep.subr.bf16.mxu0 0
        %10528 = vmatpush1.bf16.msra.mxu0 0
        %10529 = vmatprep.subr.bf16.mxu0 0
        %10530 = vmatpush1.bf16.msra.mxu0 0
        %10531 = vmatprep.subr.bf16.mxu0 0
        %10532 = vmatpush1.bf16.msra.mxu0 0
        %10533 = vmatprep.subr.bf16.mxu0 0
        %10534 = vmatpush1.bf16.msra.mxu0 0
        %10535 = vmatprep.subr.bf16.mxu0 0
        %10536 = vmatpush1.bf16.msra.mxu0 0
        %10537 = vmatprep.subr.bf16.mxu0 0
        %10538 = vmatpush1.bf16.msra.mxu0 0
        %10539 = vmatprep.subr.bf16.mxu0 0
        %10540 = vmatpush1.bf16.msra.mxu0 0
        %10541 = vmatprep.mubr.bf16.mxu0 0
        %10542 = vmatmul.mubr.bf16.gmra.mrb[0].mxu0 %v10504
        %v10543 = vpop.f32.mrb[0].mxu0
        %v10544 = vadd.f32 0.0, %v10543
        %v10545 = vpop.f32.mrb[0].mxu0
        %v10546 = vpop.f32.mrb[0].mxu0
        %v10547 = vadd.f32 0.0, %v10546
        %v10548 = vpop.f32.mrb[0].mxu0
        %10549 = vmatprep.mubr.bf16.mxu0 0
        %10550 = vmatmul.mubr.bf16.gmra.mrb[0].mxu0 %v10507
        %v10551 = vpop.f32.mrb[0].mxu0
        %v10552 = vadd.f32 0.0, %v10551
        %v10553 = vpop.f32.mrb[0].mxu0
        %v10554 = vpop.f32.mrb[0].mxu0
        %v10555 = vpop.f32.mrb[0].mxu0
        %10556 = vdwg.mxu0
        %v10557 = vadd.f32 %v10476, %v10544
        %v10558 = vadd.f32 %v10479, %v10547
        %v10559 = vadd.f32 %v10484, %v10552
        %v10560 = vld [vmem:[#allocation2 + $0x6] sm:$0xff]
        %v10561 = vld [vmem:[#allocation2 + $0xe] sm:$0xff]
        %v10562 = vld [vmem:[#allocation2 + $0x16] sm:$0x3f]
        %v10563 = vpack.c.bf16 %v10561, %v10560
        %v10564 = vpack.c.bf16 %v10562, %v10562
        %s10565 = scalar_lea.vmem %s3, 24
        %v10566 = vld [vmem:[%s10565] sm:$0xf]
        %v10567 = vld [vmem:[%s10565 + $0x4] sm:$0xf]
        %v10570 = vunpack.c.l.b16 %v10566
        %v10571 = vunpack.c.l.b16 %v10567
        %v10572 = vpack.c.b16 %v10571, %v10570
        %v10575 = vsel %vm9956, %v10563, 0
        %v10578 = vsel %vm9956, %v10564, 0
        %10580 = vmatprep.subr.bf16.mxu0 0
        %10581 = vmatpush1.bf16.msra.mxu0 %v10572
        %10582 = vmatprep.subr.bf16.mxu0 0
        %10583 = vmatpush1.bf16.msra.mxu0 0
        %10584 = vmatprep.subr.bf16.mxu0 0
        %10585 = vmatpush1.bf16.msra.mxu0 0
        %10586 = vmatprep.subr.bf16.mxu0 0
        %10587 = vmatpush1.bf16.msra.mxu0 0
        %10588 = vmatprep.subr.bf16.mxu0 0
        %10589 = vmatpush1.bf16.msra.mxu0 0
        %10590 = vmatprep.subr.bf16.mxu0 0
        %10591 = vmatpush1.bf16.msra.mxu0 0
        %10592 = vmatprep.subr.bf16.mxu0 0
        %10593 = vmatpush1.bf16.msra.mxu0 0
        %10594 = vmatprep.subr.bf16.mxu0 0
        %10595 = vmatpush1.bf16.msra.mxu0 0
        %10596 = vmatprep.subr.bf16.mxu0 0
        %10597 = vmatpush1.bf16.msra.mxu0 0
        %10598 = vmatprep.subr.bf16.mxu0 0
        %10599 = vmatpush1.bf16.msra.mxu0 0
        %10600 = vmatprep.subr.bf16.mxu0 0
        %10601 = vmatpush1.bf16.msra.mxu0 0
        %10602 = vmatprep.subr.bf16.mxu0 0
        %10603 = vmatpush1.bf16.msra.mxu0 0
        %10604 = vmatprep.subr.bf16.mxu0 0
        %10605 = vmatpush1.bf16.msra.mxu0 0
        %10606 = vmatprep.subr.bf16.mxu0 0
        %10607 = vmatpush1.bf16.msra.mxu0 0
        %10608 = vmatprep.subr.bf16.mxu0 0
        %10609 = vmatpush1.bf16.msra.mxu0 0
        %10610 = vmatprep.subr.bf16.mxu0 0
        %10611 = vmatpush1.bf16.msra.mxu0 0
        %10612 = vmatprep.mubr.bf16.mxu0 0
        %10613 = vmatmul.mubr.bf16.gmra.mrb[0].mxu0 %v10575
        %v10614 = vpop.f32.mrb[0].mxu0
        %v10615 = vadd.f32 0.0, %v10614
        %v10616 = vpop.f32.mrb[0].mxu0
        %v10617 = vpop.f32.mrb[0].mxu0
        %v10618 = vadd.f32 0.0, %v10617
        %v10619 = vpop.f32.mrb[0].mxu0
        %10620 = vmatprep.mubr.bf16.mxu0 0
        %10621 = vmatmul.mubr.bf16.gmra.mrb[0].mxu0 %v10578
        %v10622 = vpop.f32.mrb[0].mxu0
        %v10623 = vadd.f32 0.0, %v10622
        %v10624 = vpop.f32.mrb[0].mxu0
        %v10625 = vpop.f32.mrb[0].mxu0
        %v10626 = vpop.f32.mrb[0].mxu0
        %10627 = vdwg.mxu0
        %v10628 = vadd.f32 %v10557, %v10615
        %v10629 = vadd.f32 %v10558, %v10618
        %v10630 = vadd.f32 %v10559, %v10623
        %v10631 = vld [vmem:[#allocation2 + $0x7] sm:$0xff]
        %v10632 = vld [vmem:[#allocation2 + $0xf] sm:$0xff]
        %v10633 = vld [vmem:[#allocation2 + $0x17] sm:$0x3f]
        %v10634 = vpack.c.bf16 %v10632, %v10631
        %v10635 = vpack.c.bf16 %v10633, %v10633
        %s10636 = scalar_lea.vmem %s3, 32
        %v10637 = vld [vmem:[%s10636] sm:$0xf]
        %v10638 = vld [vmem:[%s10636 + $0x4] sm:$0xf]
        %v10641 = vunpack.c.l.b16 %v10637
        %v10642 = vunpack.c.l.b16 %v10638
        %v10643 = vpack.c.b16 %v10642, %v10641
        %v10646 = vsel %vm9956, %v10634, 0
        %v10649 = vsel %vm9956, %v10635, 0
        %10651 = vmatprep.subr.bf16.mxu0 0
        %10652 = vmatpush1.bf16.msra.mxu0 %v10643
        %10653 = vmatprep.subr.bf16.mxu0 0
        %10654 = vmatpush1.bf16.msra.mxu0 0
        %10655 = vmatprep.subr.bf16.mxu0 0
        %10656 = vmatpush1.bf16.msra.mxu0 0
        %10657 = vmatprep.subr.bf16.mxu0 0
        %10658 = vmatpush1.bf16.msra.mxu0 0
        %10659 = vmatprep.subr.bf16.mxu0 0
        %10660 = vmatpush1.bf16.msra.mxu0 0
        %10661 = vmatprep.subr.bf16.mxu0 0
        %10662 = vmatpush1.bf16.msra.mxu0 0
        %10663 = vmatprep.subr.bf16.mxu0 0
        %10664 = vmatpush1.bf16.msra.mxu0 0
        %10665 = vmatprep.subr.bf16.mxu0 0
        %10666 = vmatpush1.bf16.msra.mxu0 0
        %10667 = vmatprep.subr.bf16.mxu0 0
        %10668 = vmatpush1.bf16.msra.mxu0 0
        %10669 = vmatprep.subr.bf16.mxu0 0
        %10670 = vmatpush1.bf16.msra.mxu0 0
        %10671 = vmatprep.subr.bf16.mxu0 0
        %10672 = vmatpush1.bf16.msra.mxu0 0
        %10673 = vmatprep.subr.bf16.mxu0 0
        %10674 = vmatpush1.bf16.msra.mxu0 0
        %10675 = vmatprep.subr.bf16.mxu0 0
        %10676 = vmatpush1.bf16.msra.mxu0 0
        %10677 = vmatprep.subr.bf16.mxu0 0
        %10678 = vmatpush1.bf16.msra.mxu0 0
        %10679 = vmatprep.subr.bf16.mxu0 0
        %10680 = vmatpush1.bf16.msra.mxu0 0
        %10681 = vmatprep.subr.bf16.mxu0 0
        %10682 = vmatpush1.bf16.msra.mxu0 0
        %10683 = vmatprep.mubr.bf16.mxu0 0
        %10684 = vmatmul.mubr.bf16.gmra.mrb[0].mxu0 %v10646
        %v10685 = vpop.f32.mrb[0].mxu0
        %v10686 = vadd.f32 0.0, %v10685
        %v10687 = vpop.f32.mrb[0].mxu0
        %v10688 = vpop.f32.mrb[0].mxu0
        %v10689 = vadd.f32 0.0, %v10688
        %v10690 = vpop.f32.mrb[0].mxu0
        %10691 = vmatprep.mubr.bf16.mxu0 0
        %10692 = vmatmul.mubr.bf16.gmra.mrb[0].mxu0 %v10649
        %v10693 = vpop.f32.mrb[0].mxu0
        %v10694 = vadd.f32 0.0, %v10693
        %v10695 = vpop.f32.mrb[0].mxu0
        %v10696 = vpop.f32.mrb[0].mxu0
        %v10697 = vpop.f32.mrb[0].mxu0
        %10698 = vdwg.mxu0
        %v10699 = vadd.f32 %v10628, %v10686
        %v10700 = vadd.f32 %v10629, %v10689
        %v10701 = vadd.f32 %v10630, %v10694
        %v10702 = vld [vmem:[#allocation2 + $0x8] sm:$0xff]
        %v10703 = vld [vmem:[#allocation2 + $0x10] sm:$0xff]
        %v10704 = vld [vmem:[#allocation2 + $0x18] sm:$0x3f]
        %v10705 = vpack.c.bf16 %v10703, %v10702
        %v10706 = vpack.c.bf16 %v10704, %v10704
        %s10707 = scalar_lea.vmem %s3, 40
        %v10708 = vld [vmem:[%s10707] sm:$0xf]
        %v10709 = vld [vmem:[%s10707 + $0x4] sm:$0xf]
        %v10712 = vunpack.c.l.b16 %v10708
        %v10713 = vunpack.c.l.b16 %v10709
        %v10714 = vpack.c.b16 %v10713, %v10712
        %v10717 = vsel %vm9956, %v10705, 0
        %v10720 = vsel %vm9956, %v10706, 0
        %10722 = vmatprep.subr.bf16.mxu0 0
        %10723 = vmatpush1.bf16.msra.mxu0 %v10714
        %10724 = vmatprep.subr.bf16.mxu0 0
        %10725 = vmatpush1.bf16.msra.mxu0 0
        %10726 = vmatprep.subr.bf16.mxu0 0
        %10727 = vmatpush1.bf16.msra.mxu0 0
        %10728 = vmatprep.subr.bf16.mxu0 0
        %10729 = vmatpush1.bf16.msra.mxu0 0
        %10730 = vmatprep.subr.bf16.mxu0 0
        %10731 = vmatpush1.bf16.msra.mxu0 0
        %10732 = vmatprep.subr.bf16.mxu0 0
        %10733 = vmatpush1.bf16.msra.mxu0 0
        %10734 = vmatprep.subr.bf16.mxu0 0
        %10735 = vmatpush1.bf16.msra.mxu0 0
        %10736 = vmatprep.subr.bf16.mxu0 0
        %10737 = vmatpush1.bf16.msra.mxu0 0
        %10738 = vmatprep.subr.bf16.mxu0 0
        %10739 = vmatpush1.bf16.msra.mxu0 0
        %10740 = vmatprep.subr.bf16.mxu0 0
        %10741 = vmatpush1.bf16.msra.mxu0 0
        %10742 = vmatprep.subr.bf16.mxu0 0
        %10743 = vmatpush1.bf16.msra.mxu0 0
        %10744 = vmatprep.subr.bf16.mxu0 0
        %10745 = vmatpush1.bf16.msra.mxu0 0
        %10746 = vmatprep.subr.bf16.mxu0 0
        %10747 = vmatpush1.bf16.msra.mxu0 0
        %10748 = vmatprep.subr.bf16.mxu0 0
        %10749 = vmatpush1.bf16.msra.mxu0 0
        %10750 = vmatprep.subr.bf16.mxu0 0
        %10751 = vmatpush1.bf16.msra.mxu0 0
        %10752 = vmatprep.subr.bf16.mxu0 0
        %10753 = vmatpush1.bf16.msra.mxu0 0
        %10754 = vmatprep.mubr.bf16.mxu0 0
        %10755 = vmatmul.mubr.bf16.gmra.mrb[0].mxu0 %v10717
        %v10756 = vpop.f32.mrb[0].mxu0
        %v10757 = vadd.f32 0.0, %v10756
        %v10758 = vpop.f32.mrb[0].mxu0
        %v10759 = vpop.f32.mrb[0].mxu0
        %v10760 = vadd.f32 0.0, %v10759
        %v10761 = vpop.f32.mrb[0].mxu0
        %10762 = vmatprep.mubr.bf16.mxu0 0
        %10763 = vmatmul.mubr.bf16.gmra.mrb[0].mxu0 %v10720
        %v10764 = vpop.f32.mrb[0].mxu0
        %v10765 = vadd.f32 0.0, %v10764
        %v10766 = vpop.f32.mrb[0].mxu0
        %v10767 = vpop.f32.mrb[0].mxu0
        %v10768 = vpop.f32.mrb[0].mxu0
        %10769 = vdwg.mxu0
        %v10770 = vadd.f32 %v10699, %v10757
        %v10771 = vadd.f32 %v10700, %v10760
        %v10772 = vadd.f32 %v10701, %v10765
        %v10773 = vld [vmem:[#allocation2 + $0xc] sm:$0xff]
        %v10774 = vld [vmem:[#allocation2 + $0x14] sm:$0xff]
        %v10775 = vld [vmem:[#allocation2 + $0x1c] sm:$0x3f]
        %v10776 = vpack.c.bf16 %v10774, %v10773
        %v10777 = vpack.c.bf16 %v10775, %v10775
        %s10778 = scalar_lea.vmem %s3, 48
        %v10779 = vld [vmem:[%s10778] sm:$0xf]
        %v10780 = vld [vmem:[%s10778 + $0x4] sm:$0xf]
        %v10783 = vunpack.c.l.b16 %v10779
        %v10784 = vunpack.c.l.b16 %v10780
        %v10785 = vpack.c.b16 %v10784, %v10783
        %v10788 = vsel %vm9956, %v10776, 0
        %v10791 = vsel %vm9956, %v10777, 0
        %10793 = vmatprep.subr.bf16.mxu0 0
        %10794 = vmatpush1.bf16.msra.mxu0 %v10785
        %10795 = vmatprep.subr.bf16.mxu0 0
        %10796 = vmatpush1.bf16.msra.mxu0 0
        %10797 = vmatprep.subr.bf16.mxu0 0
        %10798 = vmatpush1.bf16.msra.mxu0 0
        %10799 = vmatprep.subr.bf16.mxu0 0
        %10800 = vmatpush1.bf16.msra.mxu0 0
        %10801 = vmatprep.subr.bf16.mxu0 0
        %10802 = vmatpush1.bf16.msra.mxu0 0
        %10803 = vmatprep.subr.bf16.mxu0 0
        %10804 = vmatpush1.bf16.msra.mxu0 0
        %10805 = vmatprep.subr.bf16.mxu0 0
        %10806 = vmatpush1.bf16.msra.mxu0 0
        %10807 = vmatprep.subr.bf16.mxu0 0
        %10808 = vmatpush1.bf16.msra.mxu0 0
        %10809 = vmatprep.subr.bf16.mxu0 0
        %10810 = vmatpush1.bf16.msra.mxu0 0
        %10811 = vmatprep.subr.bf16.mxu0 0
        %10812 = vmatpush1.bf16.msra.mxu0 0
        %10813 = vmatprep.subr.bf16.mxu0 0
        %10814 = vmatpush1.bf16.msra.mxu0 0
        %10815 = vmatprep.subr.bf16.mxu0 0
        %10816 = vmatpush1.bf16.msra.mxu0 0
        %10817 = vmatprep.subr.bf16.mxu0 0
        %10818 = vmatpush1.bf16.msra.mxu0 0
        %10819 = vmatprep.subr.bf16.mxu0 0
        %10820 = vmatpush1.bf16.msra.mxu0 0
        %10821 = vmatprep.subr.bf16.mxu0 0
        %10822 = vmatpush1.bf16.msra.mxu0 0
        %10823 = vmatprep.subr.bf16.mxu0 0
        %10824 = vmatpush1.bf16.msra.mxu0 0
        %10825 = vmatprep.mubr.bf16.mxu0 0
        %10826 = vmatmul.mubr.bf16.gmra.mrb[0].mxu0 %v10788
        %v10827 = vpop.f32.mrb[0].mxu0
        %v10828 = vadd.f32 0.0, %v10827
        %v10829 = vpop.f32.mrb[0].mxu0
        %v10830 = vpop.f32.mrb[0].mxu0
        %v10831 = vadd.f32 0.0, %v10830
        %v10832 = vpop.f32.mrb[0].mxu0
        %10833 = vmatprep.mubr.bf16.mxu0 0
        %10834 = vmatmul.mubr.bf16.gmra.mrb[0].mxu0 %v10791
        %v10835 = vpop.f32.mrb[0].mxu0
        %v10836 = vadd.f32 0.0, %v10835
        %v10837 = vpop.f32.mrb[0].mxu0
        %v10838 = vpop.f32.mrb[0].mxu0
        %v10839 = vpop.f32.mrb[0].mxu0
        %10840 = vdwg.mxu0
        %v10841 = vadd.f32 %v10770, %v10828
        %v10842 = vadd.f32 %v10771, %v10831
        %v10843 = vadd.f32 %v10772, %v10836
        %v10844 = vld [vmem:[#allocation2 + $0xd] sm:$0xff]
        %v10845 = vld [vmem:[#allocation2 + $0x15] sm:$0xff]
        %v10846 = vld [vmem:[#allocation2 + $0x1d] sm:$0x3f]
        %v10847 = vpack.c.bf16 %v10845, %v10844
        %v10848 = vpack.c.bf16 %v10846, %v10846
        %s10849 = scalar_lea.vmem %s3, 56
        %v10850 = vld [vmem:[%s10849] sm:$0xf]
        %v10851 = vld [vmem:[%s10849 + $0x4] sm:$0xf]
        %v10854 = vunpack.c.l.b16 %v10850
        %v10855 = vunpack.c.l.b16 %v10851
        %v10856 = vpack.c.b16 %v10855, %v10854
        %v10859 = vsel %vm9956, %v10847, 0
        %v10862 = vsel %vm9956, %v10848, 0
        %10864 = vmatprep.subr.bf16.mxu0 0
        %10865 = vmatpush1.bf16.msra.mxu0 %v10856
        %10866 = vmatprep.subr.bf16.mxu0 0
        %10867 = vmatpush1.bf16.msra.mxu0 0
        %10868 = vmatprep.subr.bf16.mxu0 0
        %10869 = vmatpush1.bf16.msra.mxu0 0
        %10870 = vmatprep.subr.bf16.mxu0 0
        %10871 = vmatpush1.bf16.msra.mxu0 0
        %10872 = vmatprep.subr.bf16.mxu0 0
        %10873 = vmatpush1.bf16.msra.mxu0 0
        %10874 = vmatprep.subr.bf16.mxu0 0
        %10875 = vmatpush1.bf16.msra.mxu0 0
        %10876 = vmatprep.subr.bf16.mxu0 0
        %10877 = vmatpush1.bf16.msra.mxu0 0
        %10878 = vmatprep.subr.bf16.mxu0 0
        %10879 = vmatpush1.bf16.msra.mxu0 0
        %10880 = vmatprep.subr.bf16.mxu0 0
        %10881 = vmatpush1.bf16.msra.mxu0 0
        %10882 = vmatprep.subr.bf16.mxu0 0
        %10883 = vmatpush1.bf16.msra.mxu0 0
        %10884 = vmatprep.subr.bf16.mxu0 0
        %10885 = vmatpush1.bf16.msra.mxu0 0
        %10886 = vmatprep.subr.bf16.mxu0 0
        %10887 = vmatpush1.bf16.msra.mxu0 0
        %10888 = vmatprep.subr.bf16.mxu0 0
        %10889 = vmatpush1.bf16.msra.mxu0 0
        %10890 = vmatprep.subr.bf16.mxu0 0
        %10891 = vmatpush1.bf16.msra.mxu0 0
        %10892 = vmatprep.subr.bf16.mxu0 0
        %10893 = vmatpush1.bf16.msra.mxu0 0
        %10894 = vmatprep.subr.bf16.mxu0 0
        %10895 = vmatpush1.bf16.msra.mxu0 0
        %10896 = vmatprep.mubr.bf16.mxu0 0
        %10897 = vmatmul.mubr.bf16.gmra.mrb[0].mxu0 %v10859
        %v10898 = vpop.f32.mrb[0].mxu0
        %v10899 = vadd.f32 0.0, %v10898
        %v10900 = vpop.f32.mrb[0].mxu0
        %v10901 = vpop.f32.mrb[0].mxu0
        %v10902 = vadd.f32 0.0, %v10901
        %v10903 = vpop.f32.mrb[0].mxu0
        %10904 = vmatprep.mubr.bf16.mxu0 0
        %10905 = vmatmul.mubr.bf16.gmra.mrb[0].mxu0 %v10862
        %v10906 = vpop.f32.mrb[0].mxu0
        %v10907 = vadd.f32 0.0, %v10906
        %v10908 = vpop.f32.mrb[0].mxu0
        %v10909 = vpop.f32.mrb[0].mxu0
        %v10910 = vpop.f32.mrb[0].mxu0
        %10911 = vdwg.mxu0
        %v10912 = vadd.f32 %v10841, %v10899
        %v10913 = vadd.f32 %v10842, %v10902
        %v10914 = vadd.f32 %v10843, %v10907
        %v10915 = vld [vmem:[#allocation2 + $0xe] sm:$0xff]
        %v10916 = vld [vmem:[#allocation2 + $0x16] sm:$0xff]
        %v10917 = vld [vmem:[#allocation2 + $0x1e] sm:$0x3f]
        %v10918 = vpack.c.bf16 %v10916, %v10915
        %v10919 = vpack.c.bf16 %v10917, %v10917
        %s10920 = scalar_lea.vmem %s3, 64
        %v10921 = vld [vmem:[%s10920] sm:$0xf]
        %v10922 = vld [vmem:[%s10920 + $0x4] sm:$0xf]
        %v10925 = vunpack.c.l.b16 %v10921
        %v10926 = vunpack.c.l.b16 %v10922
        %v10927 = vpack.c.b16 %v10926, %v10925
        %v10930 = vsel %vm9956, %v10918, 0
        %v10933 = vsel %vm9956, %v10919, 0
        %10935 = vmatprep.subr.bf16.mxu0 0
        %10936 = vmatpush1.bf16.msra.mxu0 %v10927
        %10937 = vmatprep.subr.bf16.mxu0 0
        %10938 = vmatpush1.bf16.msra.mxu0 0
        %10939 = vmatprep.subr.bf16.mxu0 0
        %10940 = vmatpush1.bf16.msra.mxu0 0
        %10941 = vmatprep.subr.bf16.mxu0 0
        %10942 = vmatpush1.bf16.msra.mxu0 0
        %10943 = vmatprep.subr.bf16.mxu0 0
        %10944 = vmatpush1.bf16.msra.mxu0 0
        %10945 = vmatprep.subr.bf16.mxu0 0
        %10946 = vmatpush1.bf16.msra.mxu0 0
        %10947 = vmatprep.subr.bf16.mxu0 0
        %10948 = vmatpush1.bf16.msra.mxu0 0
        %10949 = vmatprep.subr.bf16.mxu0 0
        %10950 = vmatpush1.bf16.msra.mxu0 0
        %10951 = vmatprep.subr.bf16.mxu0 0
        %10952 = vmatpush1.bf16.msra.mxu0 0
        %10953 = vmatprep.subr.bf16.mxu0 0
        %10954 = vmatpush1.bf16.msra.mxu0 0
        %10955 = vmatprep.subr.bf16.mxu0 0
        %10956 = vmatpush1.bf16.msra.mxu0 0
        %10957 = vmatprep.subr.bf16.mxu0 0
        %10958 = vmatpush1.bf16.msra.mxu0 0
        %10959 = vmatprep.subr.bf16.mxu0 0
        %10960 = vmatpush1.bf16.msra.mxu0 0
        %10961 = vmatprep.subr.bf16.mxu0 0
        %10962 = vmatpush1.bf16.msra.mxu0 0
        %10963 = vmatprep.subr.bf16.mxu0 0
        %10964 = vmatpush1.bf16.msra.mxu0 0
        %10965 = vmatprep.subr.bf16.mxu0 0
        %10966 = vmatpush1.bf16.msra.mxu0 0
        %10967 = vmatprep.mubr.bf16.mxu0 0
        %10968 = vmatmul.mubr.bf16.gmra.mrb[0].mxu0 %v10930
        %v10969 = vpop.f32.mrb[0].mxu0
        %v10970 = vadd.f32 0.0, %v10969
        %v10971 = vpop.f32.mrb[0].mxu0
        %v10972 = vpop.f32.mrb[0].mxu0
        %v10973 = vadd.f32 0.0, %v10972
        %v10974 = vpop.f32.mrb[0].mxu0
        %10975 = vmatprep.mubr.bf16.mxu0 0
        %10976 = vmatmul.mubr.bf16.gmra.mrb[0].mxu0 %v10933
        %v10977 = vpop.f32.mrb[0].mxu0
        %v10978 = vadd.f32 0.0, %v10977
        %v10979 = vpop.f32.mrb[0].mxu0
        %v10980 = vpop.f32.mrb[0].mxu0
        %v10981 = vpop.f32.mrb[0].mxu0
        %10982 = vdwg.mxu0
        %v10983 = vadd.f32 %v10912, %v10970
        %v10984 = vadd.f32 %v10913, %v10973
        %v10985 = vadd.f32 %v10914, %v10978
        %v10986 = vld [vmem:[%s4] sm:$0x1]
        %v10988 = vlaneseq
        %v10989 = vshrl.u32 %v10988, 7
        %v10990 = vsub.s32 0, %v10989
        %v10991 = vrot.slane %v10986, %v10990
        %v10993 = vadd.f32 %v10983, %v10991
        %v10994 = vadd.f32 %v10984, %v10991
        %v10995 = vadd.f32 %v10985, %v10991
        %v10996 = vmax.f32 %v10993, 0.0
        %v10997 = vmax.f32 %v10994, 0.0
        %v10998 = vmax.f32 %v10995, 0.0
        %v10999 = vlaneseq
        %v11000 = vshrl.u32 %v10999, 7
        %v11001 = vadd.s32 %v11000, 8
        %v11002 = vadd.s32 %v11000, 16
        %vm11003 = vcmp.lt.s32.totalorder %v11000, 4
        %vm11004 = vcmp.lt.s32.totalorder %v11001, 4
        %vm11005 = vcmp.lt.s32.totalorder %v11002, 4
        %vm11006 = vcmp.ge.s32.totalorder %v11000, 6
        %vm11007 = vcmp.ge.s32.totalorder %v11001, 6
        %vm11008 = vcmp.ge.s32.totalorder %v11002, 6
        %vm11009 = vcmp.lt.s32.totalorder %v11000, 10
        %vm11010 = vcmp.lt.s32.totalorder %v11001, 10
        %vm11011 = vcmp.lt.s32.totalorder %v11002, 10
        %vm11012 = vmand %vm11006, %vm11009
        %vm11013 = vmand %vm11007, %vm11010
        %vm11014 = vmand %vm11008, %vm11011
        %vm11015 = vmor %vm11003, %vm11012
        %vm11016 = vmor %vm11004, %vm11013
        %vm11017 = vmor %vm11005, %vm11014
        %vm11018 = vcmp.ge.s32.totalorder %v11000, 12
        %vm11019 = vcmp.ge.s32.totalorder %v11001, 12
        %vm11020 = vcmp.ge.s32.totalorder %v11002, 12
        %vm11021 = vcmp.lt.s32.totalorder %v11000, 16
        %vm11022 = vcmp.lt.s32.totalorder %v11001, 16
        %vm11023 = vcmp.lt.s32.totalorder %v11002, 16
        %vm11024 = vmand %vm11018, %vm11021
        %vm11025 = vmand %vm11019, %vm11022
        %vm11026 = vmand %vm11020, %vm11023
        %vm11027 = vmor %vm11015, %vm11024
        %vm11028 = vmor %vm11016, %vm11025
        %vm11029 = vmor %vm11017, %vm11026
        %vm11030 = vcmp.ge.s32.totalorder %v11000, 18
        %vm11031 = vcmp.ge.s32.totalorder %v11001, 18
        %vm11032 = vcmp.ge.s32.totalorder %v11002, 18
        %vm11033 = vcmp.lt.s32.totalorder %v11000, 22
        %vm11034 = vcmp.lt.s32.totalorder %v11001, 22
        %vm11035 = vcmp.lt.s32.totalorder %v11002, 22
        %vm11036 = vmand %vm11030, %vm11033
        %vm11037 = vmand %vm11031, %vm11034
        %vm11038 = vmand %vm11032, %vm11035
        %vm11039 = vmor %vm11027, %vm11036
        %vm11040 = vmor %vm11028, %vm11037
        %vm11041 = vmor %vm11029, %vm11038
        %v11042 = vsel %vm11039, 1, 0
        %v11043 = vsel %vm11040, 1, 0
        %v11044 = vsel %vm11041, 1, 0
        %vm11045 = vcmp.eq.s32.totalorder %v11042, 1
        %vm11046 = vcmp.eq.s32.totalorder %v11043, 1
        %vm11047 = vcmp.eq.s32.totalorder %v11044, 1
        %v11048 = vsel %vm11045, %v10996, 0.0
        %v11049 = vsel %vm11046, %v10997, 0.0
        %v11050 = vsel %vm11047, %v10998, 0.0
        %vm11051 = vcmask 261120
        %v11052 = vsel %vm11051, %v11048, -inf
        %v11053 = vsel %vm11051, %v11049, -inf
        %vm11054 = vcmask 259072
        %v11055 = vsel %vm11054, %v11050, -inf
        %v11056 = vmax.f32 %v11052, %v11053
        %v11057 = vmax.f32 %v11056, %v11055
        %v11058 = vrot.slane %v11057, 4
        %v11059 = vmax.f32 %v11057, %v11058
        %v11060 = vrot.slane %v11059, 2
        %v11061 = vmax.f32 %v11059, %v11060
        %v11062 = vrot.slane %v11061, 1
        %v11063 = vmax.f32 %v11061, %v11062
        %v11064 = vld [vmem:[%s5] sm:$0xff]
        %v11065 = vld [vmem:[%s5 + $0x8] sm:$0xff]
        %v11066 = vld [vmem:[%s5 + $0x10] sm:$0xff]
        %v11067 = vld [vmem:[%s5 + $0x18] sm:$0xff]
        %v11068 = vld [vmem:[%s6] sm:$0x1]
        %v11070 = vsel %vm11051, %v11063, 0
        %11072 = vmatprep.subr.mxu0 0.0
        %11073 = vmatpush1.msra.mxu0 %v11064
        %11074 = vmatprep.subr.mxu0 0.0
        %11075 = vmatpush1.msra.mxu0 %v11065
        %11076 = vmatprep.subr.mxu0 0.0
        %11077 = vmatpush1.msra.mxu0 %v11066
        %11078 = vmatprep.subr.mxu0 0.0
        %11079 = vmatpush1.msra.mxu0 %v11067
        %11080 = vmatprep.subr.mxu0 0.0
        %11081 = vmatpush1.msra.mxu0 0.0
        %11082 = vmatprep.subr.mxu0 0.0
        %11083 = vmatpush1.msra.mxu0 0.0
        %11084 = vmatprep.subr.mxu0 0.0
        %11085 = vmatpush1.msra.mxu0 0.0
        %11086 = vmatprep.subr.mxu0 0.0
        %11087 = vmatpush1.msra.mxu0 0.0
        %11088 = vmatprep.subr.mxu0 0.0
        %11089 = vmatpush1.msra.mxu0 0.0
        %11090 = vmatprep.subr.mxu0 0.0
        %11091 = vmatpush1.msra.mxu0 0.0
        %11092 = vmatprep.subr.mxu0 0.0
        %11093 = vmatpush1.msra.mxu0 0.0
        %11094 = vmatprep.subr.mxu0 0.0
        %11095 = vmatpush1.msra.mxu0 0.0
        %11096 = vmatprep.subr.mxu0 0.0
        %11097 = vmatpush1.msra.mxu0 0.0
        %11098 = vmatprep.subr.mxu0 0.0
        %11099 = vmatpush1.msra.mxu0 0.0
        %11100 = vmatprep.subr.mxu0 0.0
        %11101 = vmatpush1.msra.mxu0 0.0
        %11102 = vmatprep.subr.mxu0 0.0
        %11103 = vmatpush1.msra.mxu0 0.0
        %11104 = vmatprep.subr.mxu0 0.0
        %11105 = vmatpush1.msra.mxu0 0.0
        %11106 = vmatprep.subr.mxu0 0.0
        %11107 = vmatpush1.msra.mxu0 0.0
        %11108 = vmatprep.subr.mxu0 0.0
        %11109 = vmatpush1.msra.mxu0 0.0
        %11110 = vmatprep.subr.mxu0 0.0
        %11111 = vmatpush1.msra.mxu0 0.0
        %11112 = vmatprep.subr.mxu0 0.0
        %11113 = vmatpush1.msra.mxu0 0.0
        %11114 = vmatprep.subr.mxu0 0.0
        %11115 = vmatpush1.msra.mxu0 0.0
        %11116 = vmatprep.subr.mxu0 0.0
        %11117 = vmatpush1.msra.mxu0 0.0
        %11118 = vmatprep.subr.mxu0 0.0
        %11119 = vmatpush1.msra.mxu0 0.0
        %11120 = vmatprep.subr.mxu0 0.0
        %11121 = vmatpush1.msra.mxu0 0.0
        %11122 = vmatprep.subr.mxu0 0.0
        %11123 = vmatpush1.msra.mxu0 0.0
        %11124 = vmatprep.subr.mxu0 0.0
        %11125 = vmatpush1.msra.mxu0 0.0
        %11126 = vmatprep.subr.mxu0 0.0
        %11127 = vmatpush1.msra.mxu0 0.0
        %11128 = vmatprep.subr.mxu0 0.0
        %11129 = vmatpush1.msra.mxu0 0.0
        %11130 = vmatprep.subr.mxu0 0.0
        %11131 = vmatpush1.msra.mxu0 0.0
        %11132 = vmatprep.subr.mxu0 0.0
        %11133 = vmatpush1.msra.mxu0 0.0
        %11134 = vmatprep.subr.mxu0 0.0
        %11135 = vmatpush1.msra.mxu0 0.0
        %11136 = vmatprep.mubr.f32.mxu0 0.0
        %11137 = vmatmul.mubr.f32.gmra.mrb[0].mxu0 %v11070
        %v11138 = vpop.f32.mrb[0].mxu0
        %v11139 = vadd.f32 %v11068, %v11138
        %v11140 = vpop.f32.mrb[0].mxu0
        %11141 = vdwg.mxu0
        %v11142 = vmax.f32 %v11139, 0.0
        %v11143 = vld [vmem:[%s7] sm:$0xff]
        %v11144 = vld [vmem:[%s7 + $0x8] sm:$0xff]
        %v11145 = vld [vmem:[%s7 + $0x10] sm:$0xff]
        %v11146 = vld [vmem:[%s7 + $0x18] sm:$0xff]
        %v11147 = vld [vmem:[%s7 + $0x20] sm:$0xff]
        %v11148 = vld [vmem:[%s7 + $0x28] sm:$0xff]
        %v11149 = vld [vmem:[%s7 + $0x30] sm:$0xff]
        %v11150 = vld [vmem:[%s7 + $0x38] sm:$0xff]
        %v11151 = vld [vmem:[%s8] sm:$0x1]
        %vm11152 = vcmask 523264
        %v11154 = vsel %vm11152, %v11142, 0
        %11156 = vmatprep.subr.mxu0 0.0
        %11157 = vmatpush1.msra.mxu0 %v11143
        %11158 = vmatprep.subr.mxu0 0.0
        %11159 = vmatpush1.msra.mxu0 %v11144
        %11160 = vmatprep.subr.mxu0 0.0
        %11161 = vmatpush1.msra.mxu0 %v11145
        %11162 = vmatprep.subr.mxu0 0.0
        %11163 = vmatpush1.msra.mxu0 %v11146
        %11164 = vmatprep.subr.mxu0 0.0
        %11165 = vmatpush1.msra.mxu0 %v11147
        %11166 = vmatprep.subr.mxu0 0.0
        %11167 = vmatpush1.msra.mxu0 %v11148
        %11168 = vmatprep.subr.mxu0 0.0
        %11169 = vmatpush1.msra.mxu0 %v11149
        %11170 = vmatprep.subr.mxu0 0.0
        %11171 = vmatpush1.msra.mxu0 %v11150
        %11172 = vmatprep.subr.mxu0 0.0
        %11173 = vmatpush1.msra.mxu0 0.0
        %11174 = vmatprep.subr.mxu0 0.0
        %11175 = vmatpush1.msra.mxu0 0.0
        %11176 = vmatprep.subr.mxu0 0.0
        %11177 = vmatpush1.msra.mxu0 0.0
        %11178 = vmatprep.subr.mxu0 0.0
        %11179 = vmatpush1.msra.mxu0 0.0
        %11180 = vmatprep.subr.mxu0 0.0
        %11181 = vmatpush1.msra.mxu0 0.0
        %11182 = vmatprep.subr.mxu0 0.0
        %11183 = vmatpush1.msra.mxu0 0.0
        %11184 = vmatprep.subr.mxu0 0.0
        %11185 = vmatpush1.msra.mxu0 0.0
        %11186 = vmatprep.subr.mxu0 0.0
        %11187 = vmatpush1.msra.mxu0 0.0
        %11188 = vmatprep.subr.mxu0 0.0
        %11189 = vmatpush1.msra.mxu0 0.0
        %11190 = vmatprep.subr.mxu0 0.0
        %11191 = vmatpush1.msra.mxu0 0.0
        %11192 = vmatprep.subr.mxu0 0.0
        %11193 = vmatpush1.msra.mxu0 0.0
        %11194 = vmatprep.subr.mxu0 0.0
        %11195 = vmatpush1.msra.mxu0 0.0
        %11196 = vmatprep.subr.mxu0 0.0
        %11197 = vmatpush1.msra.mxu0 0.0
        %11198 = vmatprep.subr.mxu0 0.0
        %11199 = vmatpush1.msra.mxu0 0.0
        %11200 = vmatprep.subr.mxu0 0.0
        %11201 = vmatpush1.msra.mxu0 0.0
        %11202 = vmatprep.subr.mxu0 0.0
        %11203 = vmatpush1.msra.mxu0 0.0
        %11204 = vmatprep.subr.mxu0 0.0
        %11205 = vmatpush1.msra.mxu0 0.0
        %11206 = vmatprep.subr.mxu0 0.0
        %11207 = vmatpush1.msra.mxu0 0.0
        %11208 = vmatprep.subr.mxu0 0.0
        %11209 = vmatpush1.msra.mxu0 0.0
        %11210 = vmatprep.subr.mxu0 0.0
        %11211 = vmatpush1.msra.mxu0 0.0
        %11212 = vmatprep.subr.mxu0 0.0
        %11213 = vmatpush1.msra.mxu0 0.0
        %11214 = vmatprep.subr.mxu0 0.0
        %11215 = vmatpush1.msra.mxu0 0.0
        %11216 = vmatprep.subr.mxu0 0.0
        %11217 = vmatpush1.msra.mxu0 0.0
        %11218 = vmatprep.subr.mxu0 0.0
        %11219 = vmatpush1.msra.mxu0 0.0
        %11220 = vmatprep.mubr.f32.mxu0 0.0
        %11221 = vmatmul.mubr.f32.gmra.mrb[0].mxu0 %v11154
        %v11222 = vpop.f32.mrb[0].mxu0
        %v11223 = vadd.f32 %v11151, %v11222
        %v11224 = vpop.f32.mrb[0].mxu0
        %11225 = vdwg.mxu0
        %v11226 = vmax.f32 %v11223, 0.0
        %v11227 = vld [vmem:[%s9] sm:$0xff]
        %v11228 = vld [vmem:[%s9 + $0x8] sm:$0xff]
        %v11229 = vld [vmem:[%s9 + $0x10] sm:$0xff]
        %v11230 = vld [vmem:[%s9 + $0x18] sm:$0xff]
        %v11231 = vld [vmem:[%s9 + $0x20] sm:$0xff]
        %v11232 = vld [vmem:[%s9 + $0x28] sm:$0xff]
        %v11233 = vld [vmem:[%s9 + $0x30] sm:$0xff]
        %v11234 = vld [vmem:[%s9 + $0x38] sm:$0xff]
        %v11235 = vld [vmem:[%s10] sm:$0x1]
        %v11237 = vsel %vm11152, %v11226, 0
        %11239 = vmatprep.subr.mxu0 0.0
        %11240 = vmatpush1.msra.mxu0 %v11227
        %11241 = vmatprep.subr.mxu0 0.0
        %11242 = vmatpush1.msra.mxu0 %v11228
        %11243 = vmatprep.subr.mxu0 0.0
        %11244 = vmatpush1.msra.mxu0 %v11229
        %11245 = vmatprep.subr.mxu0 0.0
        %11246 = vmatpush1.msra.mxu0 %v11230
        %11247 = vmatprep.subr.mxu0 0.0
        %11248 = vmatpush1.msra.mxu0 %v11231
        %11249 = vmatprep.subr.mxu0 0.0
        %11250 = vmatpush1.msra.mxu0 %v11232
        %11251 = vmatprep.subr.mxu0 0.0
        %11252 = vmatpush1.msra.mxu0 %v11233
        %11253 = vmatprep.subr.mxu0 0.0
        %11254 = vmatpush1.msra.mxu0 %v11234
        %11255 = vmatprep.subr.mxu0 0.0
        %11256 = vmatpush1.msra.mxu0 0.0
        %11257 = vmatprep.subr.mxu0 0.0
        %11258 = vmatpush1.msra.mxu0 0.0
        %11259 = vmatprep.subr.mxu0 0.0
        %11260 = vmatpush1.msra.mxu0 0.0
        %11261 = vmatprep.subr.mxu0 0.0
        %11262 = vmatpush1.msra.mxu0 0.0
        %11263 = vmatprep.subr.mxu0 0.0
        %11264 = vmatpush1.msra.mxu0 0.0
        %11265 = vmatprep.subr.mxu0 0.0
        %11266 = vmatpush1.msra.mxu0 0.0
        %11267 = vmatprep.subr.mxu0 0.0
        %11268 = vmatpush1.msra.mxu0 0.0
        %11269 = vmatprep.subr.mxu0 0.0
        %11270 = vmatpush1.msra.mxu0 0.0
        %11271 = vmatprep.subr.mxu0 0.0
        %11272 = vmatpush1.msra.mxu0 0.0
        %11273 = vmatprep.subr.mxu0 0.0
        %11274 = vmatpush1.msra.mxu0 0.0
        %11275 = vmatprep.subr.mxu0 0.0
        %11276 = vmatpush1.msra.mxu0 0.0
        %11277 = vmatprep.subr.mxu0 0.0
        %11278 = vmatpush1.msra.mxu0 0.0
        %11279 = vmatprep.subr.mxu0 0.0
        %11280 = vmatpush1.msra.mxu0 0.0
        %11281 = vmatprep.subr.mxu0 0.0
        %11282 = vmatpush1.msra.mxu0 0.0
        %11283 = vmatprep.subr.mxu0 0.0
        %11284 = vmatpush1.msra.mxu0 0.0
        %11285 = vmatprep.subr.mxu0 0.0
        %11286 = vmatpush1.msra.mxu0 0.0
        %11287 = vmatprep.subr.mxu0 0.0
        %11288 = vmatpush1.msra.mxu0 0.0
        %11289 = vmatprep.subr.mxu0 0.0
        %11290 = vmatpush1.msra.mxu0 0.0
        %11291 = vmatprep.subr.mxu0 0.0
        %11292 = vmatpush1.msra.mxu0 0.0
        %11293 = vmatprep.subr.mxu0 0.0
        %11294 = vmatpush1.msra.mxu0 0.0
        %11295 = vmatprep.subr.mxu0 0.0
        %11296 = vmatpush1.msra.mxu0 0.0
        %11297 = vmatprep.subr.mxu0 0.0
        %11298 = vmatpush1.msra.mxu0 0.0
        %11299 = vmatprep.subr.mxu0 0.0
        %11300 = vmatpush1.msra.mxu0 0.0
        %11301 = vmatprep.subr.mxu0 0.0
        %11302 = vmatpush1.msra.mxu0 0.0
        %11303 = vmatprep.mubr.f32.mxu0 0.0
        %11304 = vmatmul.mubr.f32.gmra.mrb[0].mxu0 %v11237
        %v11305 = vpop.f32.mrb[0].mxu0
        %v11306 = vadd.f32 %v11235, %v11305
        %v11307 = vpop.f32.mrb[0].mxu0
        %11308 = vdwg.mxu0
        %vm11309 = vcmask 73728
        %11310 = vst.msk [vmem:[%s378] sm:$0x1] %vm11309, %v11306
        %s11311 = sand.u32 %s269, 1
        %s11312 = scalar_lea.sflag [#allocation4], %s11311
        %s11313 = sand.u32 %s269, 1
        %s11314 = scalar_lea.vmem [#allocation3], %s11313
        // Predicated region
        $region65: #{tpu_custom_call.1} parent=63 // pred_check
          %p11315 = pneg %p279
        $region66: #{tpu_custom_call.1} parent=63 // pred_check_branch
          %11317 = sbr.rel (%p11315) target = $region68
        $region67: #{tpu_custom_call.1} parent=63 // pred_region
          %s11319 = ssub.s32 16, 16
          %11320 = vsyncadd %s11312, %s11319
          %s11321 = smul.addr %s25, 16
          %s11322 = scalar_lea.hbm %s11, %s11321
          %s11324 = sshll.u32 %s11314, 4
          %s11325 = int_to_ptr.vmem [resolvable:$true] %s11324
          %11327 = dma.vmem_to_hbm [thread:$0]  %s11325, 16, %s11322, %s11312
        $region68: #{tpu_custom_call.1} parent=63 // pred_fallthru
          _
      $region64: #{tpu_custom_call.1} parent=5 // pred_fallthru
        _
      %p11328 = scmp.le.s32.totalorder 2, %s20
      // Predicated region
      $region69: #{tpu_custom_call.1} parent=5 // pred_check
        %p11329 = pneg %p11328
      $region70: #{tpu_custom_call.1} parent=5 // pred_check_branch
        %11331 = sbr.rel (%p11329) target = $region72
      $region71: #{tpu_custom_call.1} parent=5 // pred_region
        %s11332 = ssub.s32 %s20, 2
        // Predicated region
        $region73: #{tpu_custom_call.1} parent=71 // pred_check
          %p11333 = pneg %p285
        $region74: #{tpu_custom_call.1} parent=71 // pred_check_branch
          %11335 = sbr.rel (%p11333) target = $region76
        $region75: #{tpu_custom_call.1} parent=71 // pred_region
          %s11336 = sand.u32 %s270, 1
          %s11337 = scalar_lea.sflag [#allocation4], %s11336
          %s11338 = sand.u32 %s270, 1
          %s11339 = scalar_lea.vmem [#allocation3], %s11338
          %11340 = dma.done %s11337, 16
        $region76: #{tpu_custom_call.1} parent=71 // pred_fallthru
          _
      $region72: #{tpu_custom_call.1} parent=5 // pred_fallthru
        _
    $region6: #{tpu_custom_call.1} parent=1 // loop_footer
      %s24 = sadd.s32 1, %s20
    $region7: #{tpu_custom_call.1} parent=1 // loop_footer_branch
      %19 = sbr.rel target = $region3
    $region8: #{tpu_custom_call.1} parent=1 // loop_exit
      _
    %11341 = vsyncpa [#allocation4], 1
    %s11342 = scalar_lea.sflag [#allocation4], 1
    %11343 = vsyncpa %s11342, 1

</llo_original>
